<compile_context>
chip_gen: v6e
topology: v6e:2x2x1
jax: 0.10.0
libtpu: 0.0.40
codegen_flags: <defaults>
</compile_context>

<pallas_src>
import math
import functools

import jax
import jax.numpy as jnp
from jax.experimental import pallas as pl
from jax.experimental.pallas import tpu as pltpu


# ------------------------- tiling helper -------------------------

def _pick_tile(dim, candidates):
    """Largest candidate tile that divides dim; otherwise the full dim."""
    for c in candidates:
        if dim >= c and dim % c == 0:
            return c
    return dim


# ------------------------- tiled dense (matmul + bias + act) -------------------------

def _dense_kernel(x_ref, w_ref, b_ref, o_ref, acc_ref, *, act):
    k = pl.program_id(2)

    @pl.when(k == 0)
    def _():
        acc_ref[...] = jnp.zeros_like(acc_ref)

    acc_ref[...] += jnp.dot(x_ref[...], w_ref[...],
                            preferred_element_type=jnp.float32)

    @pl.when(k == pl.num_programs(2) - 1)
    def _():
        y = acc_ref[...] + b_ref[...].astype(jnp.float32)
        if act == "relu":
            y = jnp.maximum(y, 0.0)
        elif act == "gelu":
            # TODO(synk): HF BERT uses exact erf GELU; tanh approximation used here.
            y = jax.nn.gelu(y, approximate=True)
        o_ref[...] = y.astype(o_ref.dtype)


def dense(x, w, b, act=None, out_dtype=None):
    """x: [M, K] (bf16), w: [K, N] (bf16), b: [N] (f32) -> [M, N]."""
    M, K = x.shape
    N = w.shape[1]
    out_dtype = out_dtype or x.dtype
    tm = _pick_tile(M, (256, 128))
    tn = _pick_tile(N, (512, 256, 128))
    tk = _pick_tile(K, (512, 256, 128))
    grid = (M // tm, N // tn, K // tk)
    kern = functools.partial(_dense_kernel, act=act)
    return pl.pallas_call(
        kern,
        out_shape=jax.ShapeDtypeStruct((M, N), out_dtype),
        grid=grid,
        in_specs=[pl.BlockSpec((tm, tk), lambda i, j, k: (i, k)),
                  pl.BlockSpec((tk, tn), lambda i, j, k: (k, j)),
                  pl.BlockSpec((1, tn), lambda i, j, k: (0, j))],
        out_specs=pl.BlockSpec((tm, tn), lambda i, j, k: (i, j)),
        scratch_shapes=[pltpu.VMEM((tm, tn), jnp.float32)],
        compiler_params=pltpu.CompilerParams(
            dimension_semantics=("parallel", "parallel", "arbitrary")),
    )(x, w, b.reshape(1, N))


# ------------------------- LayerNorm / fused residual + LayerNorm -------------------------

def _ln_math(x, g, b, eps):
    mu = jnp.mean(x, axis=-1, keepdims=True)
    var = jnp.mean(jnp.square(x - mu), axis=-1, keepdims=True)
    return (x - mu) * jax.lax.rsqrt(var + eps) * g + b


def _ln_kernel(x_ref, g_ref, b_ref, o_ref, *, eps):
    x = x_ref[...].astype(jnp.float32)
    y = _ln_math(x, g_ref[...].astype(jnp.float32),
                 b_ref[...].astype(jnp.float32), eps)
    o_ref[...] = y.astype(o_ref.dtype)


def _add_ln_kernel(x_ref, r_ref, g_ref, b_ref, o_ref, *, eps):
    x = x_ref[...].astype(jnp.float32) + r_ref[...].astype(jnp.float32)
    y = _ln_math(x, g_ref[...].astype(jnp.float32),
                 b_ref[...].astype(jnp.float32), eps)
    o_ref[...] = y.astype(o_ref.dtype)


def layernorm(x, g, b, eps):
    """x: [M, D] row-wise LayerNorm."""
    M, D = x.shape
    tm = _pick_tile(M, (512, 256, 128))
    kern = functools.partial(_ln_kernel, eps=eps)
    return pl.pallas_call(
        kern,
        out_shape=jax.ShapeDtypeStruct((M, D), x.dtype),
        grid=(M // tm,),
        in_specs=[pl.BlockSpec((tm, D), lambda i: (i, 0)),
                  pl.BlockSpec((1, D), lambda i: (0, 0)),
                  pl.BlockSpec((1, D), lambda i: (0, 0))],
        out_specs=pl.BlockSpec((tm, D), lambda i: (i, 0)),
        compiler_params=pltpu.CompilerParams(dimension_semantics=("parallel",)),
    )(x, g.reshape(1, D), b.reshape(1, D))


def add_layernorm(x, r, g, b, eps):
    """Fused residual add + LayerNorm: LN(x + r); x, r: [M, D]."""
    M, D = x.shape
    tm = _pick_tile(M, (512, 256, 128))
    kern = functools.partial(_add_ln_kernel, eps=eps)
    return pl.pallas_call(
        kern,
        out_shape=jax.ShapeDtypeStruct((M, D), x.dtype),
        grid=(M // tm,),
        in_specs=[pl.BlockSpec((tm, D), lambda i: (i, 0)),
                  pl.BlockSpec((tm, D), lambda i: (i, 0)),
                  pl.BlockSpec((1, D), lambda i: (0, 0)),
                  pl.BlockSpec((1, D), lambda i: (0, 0))],
        out_specs=pl.BlockSpec((tm, D), lambda i: (i, 0)),
        compiler_params=pltpu.CompilerParams(dimension_semantics=("parallel",)),
    )(x, r, g.reshape(1, D), b.reshape(1, D))


# ------------------------- multi-head self-attention -------------------------

def _attn_body(q_ref, k_ref, v_ref, m, o_ref, *, scale, H):
    D = q_ref.shape[2]
    hd = D // H
    q = q_ref[0].astype(jnp.float32) * scale      # scale folded into q once (S*D muls)
    k = k_ref[0].astype(jnp.float32)
    v = v_ref[0].astype(jnp.float32)
    dn = (((1,), (1,)), ((), ()))                 # contract last dims: q @ k^T without .T
    outs = []
    for h in range(H):                            # static unroll over heads
        sl = slice(h * hd, (h + 1) * hd)
        s = jax.lax.dot_general(q[:, sl], k[:, sl], dn,
                                preferred_element_type=jnp.float32)   # [S, S]
        if m is not None:
            s = s + m
        s = s - jnp.max(s, axis=-1, keepdims=True)
        p = jnp.exp(s)
        p = p * pl.reciprocal(jnp.sum(p, axis=-1, keepdims=True), approx=True)
        outs.append(jnp.dot(p, v[:, sl], preferred_element_type=jnp.float32))  # [S, hd]
    o_ref[0] = jnp.concatenate(outs, axis=-1).astype(o_ref.dtype)   # lane-dense [S, D]


def _attn_kernel_masked(q_ref, k_ref, v_ref, m_ref, o_ref, *, scale, H):
    _attn_body(q_ref, k_ref, v_ref, m_ref[0], o_ref, scale=scale, H=H)


def _attn_kernel_nomask(q_ref, k_ref, v_ref, o_ref, *, scale, H):
    _attn_body(q_ref, k_ref, v_ref, None, o_ref, scale=scale, H=H)


def mha_core(qkv, mask3, scale, H):
    """qkv: [B, S, 3D] (Q|K|V along last axis); mask3: [B, 1, S] fp32 or None -> [B, S, D]."""
    B, S, D3 = qkv.shape
    D = D3 // 3
    qspec = pl.BlockSpec((1, S, D), lambda b: (b, 0, 0))
    kspec = pl.BlockSpec((1, S, D), lambda b: (b, 0, 1))
    vspec = pl.BlockSpec((1, S, D), lambda b: (b, 0, 2))
    ospec = pl.BlockSpec((1, S, D), lambda b: (b, 0, 0))
    # TODO(synk): for long sequences, switch to an online-softmax (flash) kernel tiled
    #             over the KV axis instead of materializing the full SxS scores.
    if mask3 is None:
        kern = functools.partial(_attn_kernel_nomask, scale=scale, H=H)
        in_specs = [qspec, kspec, vspec]
        args = (qkv, qkv, qkv)
    else:
        kern = functools.partial(_attn_kernel_masked, scale=scale, H=H)
        mspec = pl.BlockSpec((1, 1, S), lambda b: (b, 0, 0))
        in_specs = [qspec, kspec, vspec, mspec]
        args = (qkv, qkv, qkv, mask3)
    return pl.pallas_call(
        kern,
        out_shape=jax.ShapeDtypeStruct((B, S, D), qkv.dtype),
        grid=(B,),
        in_specs=in_specs,
        out_specs=ospec,
        compiler_params=pltpu.CompilerParams(dimension_semantics=("parallel",)),
    )(*args)


# ------------------------- mean pooling -------------------------

def _mean_kernel(x_ref, o_ref):
    x = x_ref[...].astype(jnp.float32)
    o_ref[...] = jnp.mean(x, axis=1).astype(o_ref.dtype)


def mean_pool(x):
    """x: [B, S, D] -> mean over seq dim -> [B, D]."""
    B, S, D = x.shape
    return pl.pallas_call(
        _mean_kernel,
        out_shape=jax.ShapeDtypeStruct((B, D), x.dtype),
        grid=(1,),
        in_specs=[pl.BlockSpec((B, S, D), lambda i: (0, 0, 0))],
        out_specs=pl.BlockSpec((B, D), lambda i: (0, 0)),
    )(x)


# ------------------------- model glue (plain JAX between kernels) -------------------------

def multi_head_attention(x, p, mask3, H):
    B, S, D = x.shape
    xf = x.reshape(B * S, D)
    qkv = dense(xf, p["wqkv"], p["bqkv"]).reshape(B, S, 3 * D)   # fused Q/K/V projection
    ctx = mha_core(qkv, mask3, 1.0 / math.sqrt(D // H), H)       # [B, S, D], no transposes
    out = dense(ctx.reshape(B * S, D), p["wo"], p["bo"])
    return out.reshape(B, S, D)


def bert_layer(x, p, mask3, H):
    """HuggingFace-style BERT layer: post-LN, GELU FFN, additive attention mask."""
    B, S, D = x.shape
    a = multi_head_attention(x, p["attn"], mask3, H)
    h = add_layernorm(x.reshape(B * S, D), a.reshape(B * S, D),
                      p["ln1_g"], p["ln1_b"], 1e-12)
    f = dense(h, p["w_in"], p["b_in"], act="gelu")
    f = dense(f, p["w_out"], p["b_out"])
    out = add_layernorm(h, f, p["ln2_g"], p["ln2_b"], 1e-12)
    return out.reshape(B, S, D)


def torch_encoder_layer(x, p, H):
    """nn.TransformerEncoderLayer defaults: post-LN, ReLU FFN, no mask."""
    B, S, D = x.shape
    a = multi_head_attention(x, p["attn"], None, H)              # mask-free attention kernel
    h = add_layernorm(x.reshape(B * S, D), a.reshape(B * S, D),
                      p["ln1_g"], p["ln1_b"], 1e-5)
    f = dense(h, p["w1"], p["b1"], act="relu")
    f = dense(f, p["w2"], p["b2"])
    out = add_layernorm(h, f, p["ln2_g"], p["ln2_b"], 1e-5)
    return out.reshape(B, S, D)


def bert_forward(params, input_ids, attention_mask, H):
    B, S = input_ids.shape
    D = params["word_emb"].shape[1]
    # Embedding gather stays in plain JAX (glue); everything else runs in Pallas kernels.
    we = jnp.take(params["word_emb"], input_ids, axis=0)                  # [B, S, D]
    pe = params["pos_emb"][:S][None, :, :]                                # [1, S, D]
    te = params["type_emb"][0][None, None, :]                             # token_type_ids == 0
    x = (we.astype(jnp.float32) + pe.astype(jnp.float32)
         + te.astype(jnp.float32)).astype(jnp.bfloat16)
    x = layernorm(x.reshape(B * S, D), params["emb_ln_g"], params["emb_ln_b"],
                  1e-12).reshape(B, S, D)
    mask3 = ((1.0 - attention_mask.astype(jnp.float32)) * -1e9).reshape(B, 1, S)
    for lp in params["layers"]:
        x = bert_layer(x, lp, mask3, H)
    return x


def model_forward(params, input_ids, attention_mask, H, n_classes):
    x = bert_forward(params["bert"], input_ids, attention_mask, H)        # last_hidden_state
    for lp in params["encoder"]:
        x = torch_encoder_layer(x, lp, H)
    pooled = mean_pool(x)                                                 # mean over dim=1
    # TODO(synk): nn.Dropout(p=0.2) is identity in eval mode; training-mode dropout not replicated.
    # Pad the classifier to lane-dense 128 output columns; slice the real classes outside.
    D = x.shape[-1]
    n_pad = max(128, ((n_classes + 127) // 128) * 128)
    w_pad = jnp.zeros((D, n_pad), params["out_w"].dtype).at[:, :n_classes].set(params["out_w"])
    b_pad = jnp.zeros((n_pad,), jnp.float32).at[:n_classes].set(params["out_b"])
    logits = dense(pooled, w_pad, b_pad, out_dtype=jnp.float32)
    return logits[:, :n_classes]


# ------------------------- parameter init -------------------------

def init_params(key, *, vocab, max_pos, D, H, ffn_bert, ffn_enc,
                n_bert_layers, n_enc_layers, n_classes):
    keys = iter(jax.random.split(key, 4096))

    def nrm(shape, scale=0.02):
        return (scale * jax.random.normal(next(keys), shape)).astype(jnp.bfloat16)

    def zeros(shape):
        return jnp.zeros(shape, jnp.float32)

    def ones(shape):
        return jnp.ones(shape, jnp.float32)

    def attn_params():
        return dict(wqkv=nrm((D, 3 * D)), bqkv=zeros((3 * D,)),   # fused Q|K|V
                    wo=nrm((D, D)), bo=zeros((D,)))

    def bert_layer_params():
        return dict(attn=attn_params(),
                    ln1_g=ones((D,)), ln1_b=zeros((D,)),
                    w_in=nrm((D, ffn_bert)), b_in=zeros((ffn_bert,)),
                    w_out=nrm((ffn_bert, D)), b_out=zeros((D,)),
                    ln2_g=ones((D,)), ln2_b=zeros((D,)))

    def enc_layer_params():
        return dict(attn=attn_params(),
                    ln1_g=ones((D,)), ln1_b=zeros((D,)),
                    w1=nrm((D, ffn_enc)), b1=zeros((ffn_enc,)),
                    w2=nrm((ffn_enc, D)), b2=zeros((D,)),
                    ln2_g=ones((D,)), ln2_b=zeros((D,)))

    bert = dict(word_emb=nrm((vocab, D)),
                pos_emb=nrm((max_pos, D)),
                type_emb=nrm((2, D)),
                emb_ln_g=ones((D,)), emb_ln_b=zeros((D,)),
                layers=[bert_layer_params() for _ in range(n_bert_layers)])

    return dict(bert=bert,
                encoder=[enc_layer_params() for _ in range(n_enc_layers)],
                out_w=nrm((D, n_classes)), out_b=zeros((n_classes,)))


# ------------------------- main -------------------------

if __name__ == "__main__":
    B, S = 2, 8
    D, H = 128, 8               # head_dim = 16; small stand-in for d_model=768, nhead=8
    VOCAB, MAX_POS = 100, 32
    N_CLASSES = 3
    N_BERT_LAYERS = 2           # small stand-in for 12 BERT layers
    N_ENC_LAYERS = 2            # small stand-in for num_layers=6
    FFN_BERT, FFN_ENC = 512, 512

    key = jax.random.PRNGKey(0)
    k_par, k_ids, k_mask = jax.random.split(key, 3)

    params = init_params(k_par, vocab=VOCAB, max_pos=MAX_POS, D=D, H=H,
                         ffn_bert=FFN_BERT, ffn_enc=FFN_ENC,
                         n_bert_layers=N_BERT_LAYERS, n_enc_layers=N_ENC_LAYERS,
                         n_classes=N_CLASSES)

    input_ids = jax.random.randint(k_ids, (B, S), 0, VOCAB, dtype=jnp.int32)
    # valid tokens = 1, padding = 0 (last two positions of batch element 1 masked)
    attention_mask = jnp.ones((B, S), jnp.int32).at[1, S - 2:].set(0)

    fwd = jax.jit(functools.partial(model_forward, H=H, n_classes=N_CLASSES))
    logits = fwd(params, input_ids, attention_mask)
    jax.block_until_ready(logits)

    assert logits.shape == (B, N_CLASSES)
    assert bool(jnp.all(jnp.isfinite(logits)))
    print("KERNEL_OK")
</pallas_src>

<mosaic_0001>
module attributes {stable_mosaic.version = 11 : i64} {
  func.func @_dense_kernel(%arg0: i32, %arg1: i32, %arg2: i32, %arg3: memref<16x128xbf16, #tpu.memory_space<vmem>>, %arg4: memref<128x128xbf16, #tpu.memory_space<vmem>>, %arg5: memref<1x128xf32, #tpu.memory_space<vmem>>, %arg6: memref<16x128xbf16, #tpu.memory_space<vmem>>, %arg7: memref<16x128xf32, #tpu.memory_space<vmem>>) attributes {dimension_semantics = [#tpu.dimension_semantics<parallel>, #tpu.dimension_semantics<parallel>, #tpu.dimension_semantics<arbitrary>], iteration_bounds = array<i64: 1, 1, 1>, scalar_prefetch = 0 : i64, scratch_operands = 1 : i64, tpu.core_type = #tpu.core_type<tc>, window_params = [{transform_indices = @transform_0, window_bounds = array<i64: 16, 128>}, {transform_indices = @transform_1, window_bounds = array<i64: 128, 128>}, {transform_indices = @transform_2, window_bounds = array<i64: 1, 128>}, {transform_indices = @transform_3, window_bounds = array<i64: 16, 128>}]} {
    %c0_i32 = arith.constant 0 : i32
    %0 = arith.cmpi eq, %arg2, %c0_i32 : i32
    %1 = arith.extui %0 : i1 to i32
    %c0_i32_0 = arith.constant 0 : i32
    %2 = arith.cmpi ne, %1, %c0_i32_0 : i32
    scf.if %2 {
      %cst_10 = arith.constant 0.000000e+00 : f32
      %12 = vector.broadcast %cst_10 : f32 to vector<16x128xf32>
      %c0_11 = arith.constant 0 : index
      %c0_12 = arith.constant 0 : index
      %13 = vector.load %arg7[%c0_11, %c0_12] : memref<16x128xf32, #tpu.memory_space<vmem>>, vector<16x128xf32>
      tpu.vector_store %arg7[%c0_11, %c0_12], %12 {strides = array<i32>} : memref<16x128xf32, #tpu.memory_space<vmem>>, vector<16x128xf32>,
    } else {
    }
    %c0 = arith.constant 0 : index
    %c0_1 = arith.constant 0 : index
    %3 = vector.load %arg7[%c0, %c0_1] : memref<16x128xf32, #tpu.memory_space<vmem>>, vector<16x128xf32>
    %c0_2 = arith.constant 0 : index
    %c0_3 = arith.constant 0 : index
    %4 = vector.load %arg3[%c0_2, %c0_3] : memref<16x128xbf16, #tpu.memory_space<vmem>>, vector<16x128xbf16>
    %c0_4 = arith.constant 0 : index
    %c0_5 = arith.constant 0 : index
    %5 = vector.load %arg4[%c0_4, %c0_5] : memref<128x128xbf16, #tpu.memory_space<vmem>>, vector<128x128xbf16>
    %cst = arith.constant dense<0.000000e+00> : vector<16x128xf32>
    %6 = tpu.matmul %4, %5, %cst {dimension_numbers = #tpu.dot_dimension_numbers<[1], [0], [0], [1], [0, 0, 1, 1], [], []>} : vector<16x128xbf16>, vector<128x128xbf16>, vector<16x128xf32> -> vector<16x128xf32>
    %7 = arith.addf %3, %6 : vector<16x128xf32>
    %c0_6 = arith.constant 0 : index
    %c0_7 = arith.constant 0 : index
    %8 = vector.load %arg7[%c0_6, %c0_7] : memref<16x128xf32, #tpu.memory_space<vmem>>, vector<16x128xf32>
    tpu.vector_store %arg7[%c0_6, %c0_7], %7 {strides = array<i32>} : memref<16x128xf32, #tpu.memory_space<vmem>>, vector<16x128xf32>,
    %c0_i32_8 = arith.constant 0 : i32
    %9 = arith.cmpi eq, %arg2, %c0_i32_8 : i32
    %10 = arith.extui %9 : i1 to i32
    %c0_i32_9 = arith.constant 0 : i32
    %11 = arith.cmpi ne, %10, %c0_i32_9 : i32
    scf.if %11 {
      %c0_10 = arith.constant 0 : index
      %c0_11 = arith.constant 0 : index
      %12 = vector.load %arg7[%c0_10, %c0_11] : memref<16x128xf32, #tpu.memory_space<vmem>>, vector<16x128xf32>
      %c0_12 = arith.constant 0 : index
      %c0_13 = arith.constant 0 : index
      %13 = vector.load %arg5[%c0_12, %c0_13] : memref<1x128xf32, #tpu.memory_space<vmem>>, vector<1x128xf32>
      %14 = vector.broadcast %13 : vector<1x128xf32> to vector<16x128xf32>
      %15 = arith.addf %12, %14 : vector<16x128xf32>
      %16 = arith.truncf %15 : vector<16x128xf32> to vector<16x128xbf16>
      %c0_14 = arith.constant 0 : index
      %c0_15 = arith.constant 0 : index
      %17 = vector.load %arg6[%c0_14, %c0_15] : memref<16x128xbf16, #tpu.memory_space<vmem>>, vector<16x128xbf16>
      tpu.vector_store %arg6[%c0_14, %c0_15], %16 {strides = array<i32>} : memref<16x128xbf16, #tpu.memory_space<vmem>>, vector<16x128xbf16>,
    } else {
    }
    return
  }
  func.func @transform_0(%arg0: i32, %arg1: i32, %arg2: i32) -> (i32, i32) {
    %c0_i32 = arith.constant 0 : i32
    return %arg0, %arg2 : i32, i32
  }
  func.func @transform_1(%arg0: i32, %arg1: i32, %arg2: i32) -> (i32, i32) {
    %c0_i32 = arith.constant 0 : i32
    return %arg2, %arg1 : i32, i32
  }
  func.func @transform_2(%arg0: i32, %arg1: i32, %arg2: i32) -> (i32, i32) {
    %c0_i32 = arith.constant 0 : i32
    %c0_i32_0 = arith.constant 0 : i32
    return %c0_i32, %arg1 : i32, i32
  }
  func.func @transform_3(%arg0: i32, %arg1: i32, %arg2: i32) -> (i32, i32) {
    %c0_i32 = arith.constant 0 : i32
    return %arg0, %arg1 : i32, i32
  }
}

module attributes {stable_mosaic.version = 11 : i64} {
  func.func @_dense_kernel(%arg0: i32, %arg1: i32, %arg2: i32, %arg3: memref<16x128xbf16, #tpu.memory_space<vmem>>, %arg4: memref<128x128xbf16, #tpu.memory_space<vmem>>, %arg5: memref<1x128xf32, #tpu.memory_space<vmem>>, %arg6: memref<16x128xbf16, #tpu.memory_space<vmem>>, %arg7: memref<16x128xf32, #tpu.memory_space<vmem>>) attributes {dimension_semantics = [#tpu.dimension_semantics<parallel>, #tpu.dimension_semantics<parallel>, #tpu.dimension_semantics<arbitrary>], iteration_bounds = array<i64: 1, 3, 1>, scalar_prefetch = 0 : i64, scratch_operands = 1 : i64, tpu.core_type = #tpu.core_type<tc>, window_params = [{transform_indices = @transform_0, window_bounds = array<i64: 16, 128>}, {transform_indices = @transform_1, window_bounds = array<i64: 128, 128>}, {transform_indices = @transform_2, window_bounds = array<i64: 1, 128>}, {transform_indices = @transform_3, window_bounds = array<i64: 16, 128>}]} {
    %c0_i32 = arith.constant 0 : i32
    %0 = arith.cmpi eq, %arg2, %c0_i32 : i32
    %1 = arith.extui %0 : i1 to i32
    %c0_i32_0 = arith.constant 0 : i32
    %2 = arith.cmpi ne, %1, %c0_i32_0 : i32
    scf.if %2 {
      %cst_10 = arith.constant 0.000000e+00 : f32
      %12 = vector.broadcast %cst_10 : f32 to vector<16x128xf32>
      %c0_11 = arith.constant 0 : index
      %c0_12 = arith.constant 0 : index
      %13 = vector.load %arg7[%c0_11, %c0_12] : memref<16x128xf32, #tpu.memory_space<vmem>>, vector<16x128xf32>
      tpu.vector_store %arg7[%c0_11, %c0_12], %12 {strides = array<i32>} : memref<16x128xf32, #tpu.memory_space<vmem>>, vector<16x128xf32>,
    } else {
    }
    %c0 = arith.constant 0 : index
    %c0_1 = arith.constant 0 : index
    %3 = vector.load %arg7[%c0, %c0_1] : memref<16x128xf32, #tpu.memory_space<vmem>>, vector<16x128xf32>
    %c0_2 = arith.constant 0 : index
    %c0_3 = arith.constant 0 : index
    %4 = vector.load %arg3[%c0_2, %c0_3] : memref<16x128xbf16, #tpu.memory_space<vmem>>, vector<16x128xbf16>
    %c0_4 = arith.constant 0 : index
    %c0_5 = arith.constant 0 : index
    %5 = vector.load %arg4[%c0_4, %c0_5] : memref<128x128xbf16, #tpu.memory_space<vmem>>, vector<128x128xbf16>
    %cst = arith.constant dense<0.000000e+00> : vector<16x128xf32>
    %6 = tpu.matmul %4, %5, %cst {dimension_numbers = #tpu.dot_dimension_numbers<[1], [0], [0], [1], [0, 0, 1, 1], [], []>} : vector<16x128xbf16>, vector<128x128xbf16>, vector<16x128xf32> -> vector<16x128xf32>
    %7 = arith.addf %3, %6 : vector<16x128xf32>
    %c0_6 = arith.constant 0 : index
    %c0_7 = arith.constant 0 : index
    %8 = vector.load %arg7[%c0_6, %c0_7] : memref<16x128xf32, #tpu.memory_space<vmem>>, vector<16x128xf32>
    tpu.vector_store %arg7[%c0_6, %c0_7], %7 {strides = array<i32>} : memref<16x128xf32, #tpu.memory_space<vmem>>, vector<16x128xf32>,
    %c0_i32_8 = arith.constant 0 : i32
    %9 = arith.cmpi eq, %arg2, %c0_i32_8 : i32
    %10 = arith.extui %9 : i1 to i32
    %c0_i32_9 = arith.constant 0 : i32
    %11 = arith.cmpi ne, %10, %c0_i32_9 : i32
    scf.if %11 {
      %c0_10 = arith.constant 0 : index
      %c0_11 = arith.constant 0 : index
      %12 = vector.load %arg7[%c0_10, %c0_11] : memref<16x128xf32, #tpu.memory_space<vmem>>, vector<16x128xf32>
      %c0_12 = arith.constant 0 : index
      %c0_13 = arith.constant 0 : index
      %13 = vector.load %arg5[%c0_12, %c0_13] : memref<1x128xf32, #tpu.memory_space<vmem>>, vector<1x128xf32>
      %14 = vector.broadcast %13 : vector<1x128xf32> to vector<16x128xf32>
      %15 = arith.addf %12, %14 : vector<16x128xf32>
      %16 = arith.truncf %15 : vector<16x128xf32> to vector<16x128xbf16>
      %c0_14 = arith.constant 0 : index
      %c0_15 = arith.constant 0 : index
      %17 = vector.load %arg6[%c0_14, %c0_15] : memref<16x128xbf16, #tpu.memory_space<vmem>>, vector<16x128xbf16>
      tpu.vector_store %arg6[%c0_14, %c0_15], %16 {strides = array<i32>} : memref<16x128xbf16, #tpu.memory_space<vmem>>, vector<16x128xbf16>,
    } else {
    }
    return
  }
  func.func @transform_0(%arg0: i32, %arg1: i32, %arg2: i32) -> (i32, i32) {
    %c0_i32 = arith.constant 0 : i32
    return %arg0, %arg2 : i32, i32
  }
  func.func @transform_1(%arg0: i32, %arg1: i32, %arg2: i32) -> (i32, i32) {
    %c0_i32 = arith.constant 0 : i32
    return %arg2, %arg1 : i32, i32
  }
  func.func @transform_2(%arg0: i32, %arg1: i32, %arg2: i32) -> (i32, i32) {
    %c0_i32 = arith.constant 0 : i32
    %c0_i32_0 = arith.constant 0 : i32
    return %c0_i32, %arg1 : i32, i32
  }
  func.func @transform_3(%arg0: i32, %arg1: i32, %arg2: i32) -> (i32, i32) {
    %c0_i32 = arith.constant 0 : i32
    return %arg0, %arg1 : i32, i32
  }
}

module attributes {stable_mosaic.version = 11 : i64} {
  func.func @_ln_kernel(%arg0: i32, %arg1: memref<16x128xbf16, #tpu.memory_space<vmem>>, %arg2: memref<1x128xf32, #tpu.memory_space<vmem>>, %arg3: memref<1x128xf32, #tpu.memory_space<vmem>>, %arg4: memref<16x128xbf16, #tpu.memory_space<vmem>>) attributes {dimension_semantics = [#tpu.dimension_semantics<parallel>], iteration_bounds = array<i64: 1>, scalar_prefetch = 0 : i64, scratch_operands = 0 : i64, tpu.core_type = #tpu.core_type<tc>, window_params = [{transform_indices = @transform_0, window_bounds = array<i64: 16, 128>}, {pipeline_mode = #tpu.pipeline_mode<synchronous>, transform_indices = @transform_1, window_bounds = array<i64: 1, 128>}, {pipeline_mode = #tpu.pipeline_mode<synchronous>, transform_indices = @transform_2, window_bounds = array<i64: 1, 128>}, {transform_indices = @transform_3, window_bounds = array<i64: 16, 128>}]} {
    %c0 = arith.constant 0 : index
    %c0_0 = arith.constant 0 : index
    %0 = vector.load %arg1[%c0, %c0_0] : memref<16x128xbf16, #tpu.memory_space<vmem>>, vector<16x128xbf16>
    %1 = arith.extf %0 : vector<16x128xbf16> to vector<16x128xf32>
    %c0_1 = arith.constant 0 : index
    %c0_2 = arith.constant 0 : index
    %2 = vector.load %arg2[%c0_1, %c0_2] : memref<1x128xf32, #tpu.memory_space<vmem>>, vector<1x128xf32>
    %c0_3 = arith.constant 0 : index
    %c0_4 = arith.constant 0 : index
    %3 = vector.load %arg3[%c0_3, %c0_4] : memref<1x128xf32, #tpu.memory_space<vmem>>, vector<1x128xf32>
    %cst = arith.constant dense<0.000000e+00> : vector<16xf32>
    %4 = vector.multi_reduction <add>, %1, %cst [1] : vector<16x128xf32> to vector<16xf32>
    %5 = vector.shape_cast %4 : vector<16xf32> to vector<16x1xf32>
    %cst_5 = arith.constant 1.280000e+02 : f32
    %6 = vector.broadcast %cst_5 : f32 to vector<16x1xf32>
    %7 = arith.divf %5, %6 : vector<16x1xf32>
    %8 = vector.broadcast %7 : vector<16x1xf32> to vector<16x128xf32>
    %9 = arith.subf %1, %8 : vector<16x128xf32>
    %10 = arith.mulf %9, %9 : vector<16x128xf32>
    %cst_6 = arith.constant dense<0.000000e+00> : vector<16xf32>
    %11 = vector.multi_reduction <add>, %10, %cst_6 [1] : vector<16x128xf32> to vector<16xf32>
    %12 = vector.shape_cast %11 : vector<16xf32> to vector<16x1xf32>
    %cst_7 = arith.constant 1.280000e+02 : f32
    %13 = vector.broadcast %cst_7 : f32 to vector<16x1xf32>
    %14 = arith.divf %12, %13 : vector<16x1xf32>
    %15 = vector.broadcast %7 : vector<16x1xf32> to vector<16x128xf32>
    %16 = arith.subf %1, %15 : vector<16x128xf32>
    %cst_8 = arith.constant 9.99999996E-13 : f32
    %17 = vector.broadcast %cst_8 : f32 to vector<16x1xf32>
    %18 = arith.addf %14, %17 : vector<16x1xf32>
    %19 = math.rsqrt %18 : vector<16x1xf32>
    %20 = vector.broadcast %19 : vector<16x1xf32> to vector<16x128xf32>
    %21 = arith.mulf %16, %20 : vector<16x128xf32>
    %22 = vector.broadcast %2 : vector<1x128xf32> to vector<16x128xf32>
    %23 = arith.mulf %21, %22 : vector<16x128xf32>
    %24 = vector.broadcast %3 : vector<1x128xf32> to vector<16x128xf32>
    %25 = arith.addf %23, %24 : vector<16x128xf32>
    %26 = arith.truncf %25 : vector<16x128xf32> to vector<16x128xbf16>
    %c0_9 = arith.constant 0 : index
    %c0_10 = arith.constant 0 : index
    %27 = vector.load %arg4[%c0_9, %c0_10] : memref<16x128xbf16, #tpu.memory_space<vmem>>, vector<16x128xbf16>
    tpu.vector_store %arg4[%c0_9, %c0_10], %26 {strides = array<i32>} : memref<16x128xbf16, #tpu.memory_space<vmem>>, vector<16x128xbf16>,
    return
  }
  func.func @transform_0(%arg0: i32) -> (i32, i32) {
    %c0_i32 = arith.constant 0 : i32
    %c0_i32_0 = arith.constant 0 : i32
    return %arg0, %c0_i32 : i32, i32
  }
  func.func @transform_1(%arg0: i32) -> (i32, i32) {
    %c0_i32 = arith.constant 0 : i32
    %c0_i32_0 = arith.constant 0 : i32
    %c0_i32_1 = arith.constant 0 : i32
    return %c0_i32, %c0_i32_0 : i32, i32
  }
  func.func @transform_2(%arg0: i32) -> (i32, i32) {
    %c0_i32 = arith.constant 0 : i32
    %c0_i32_0 = arith.constant 0 : i32
    %c0_i32_1 = arith.constant 0 : i32
    return %c0_i32, %c0_i32_0 : i32, i32
  }
  func.func @transform_3(%arg0: i32) -> (i32, i32) {
    %c0_i32 = arith.constant 0 : i32
    %c0_i32_0 = arith.constant 0 : i32
    return %arg0, %c0_i32 : i32, i32
  }
}

module attributes {stable_mosaic.version = 11 : i64} {
  func.func @_attn_kernel_masked(%arg0: i32, %arg1: memref<1x8x128xbf16, #tpu.memory_space<vmem>>, %arg2: memref<1x8x128xbf16, #tpu.memory_space<vmem>>, %arg3: memref<1x8x128xbf16, #tpu.memory_space<vmem>>, %arg4: memref<1x1x8xf32, #tpu.memory_space<vmem>>, %arg5: memref<1x8x128xbf16, #tpu.memory_space<vmem>>) attributes {dimension_semantics = [#tpu.dimension_semantics<parallel>], iteration_bounds = array<i64: 2>, scalar_prefetch = 0 : i64, scratch_operands = 0 : i64, tpu.core_type = #tpu.core_type<tc>, window_params = [{transform_indices = @transform_0, window_bounds = array<i64: 1, 8, 128>}, {transform_indices = @transform_1, window_bounds = array<i64: 1, 8, 128>}, {transform_indices = @transform_2, window_bounds = array<i64: 1, 8, 128>}, {transform_indices = @transform_3, window_bounds = array<i64: 1, 1, 8>}, {transform_indices = @transform_4, window_bounds = array<i64: 1, 8, 128>}]} {
    %c0 = arith.constant 0 : index
    %c0_0 = arith.constant 0 : index
    %c0_1 = arith.constant 0 : index
    %0 = vector.load %arg4[%c0, %c0_0, %c0_1] : memref<1x1x8xf32, #tpu.memory_space<vmem>>, vector<1x1x8xf32>
    %1 = vector.shape_cast %0 : vector<1x1x8xf32> to vector<1x8xf32>
    %c0_2 = arith.constant 0 : index
    %c0_3 = arith.constant 0 : index
    %c0_4 = arith.constant 0 : index
    %2 = vector.load %arg1[%c0_2, %c0_3, %c0_4] : memref<1x8x128xbf16, #tpu.memory_space<vmem>>, vector<1x8x128xbf16>
    %3 = vector.shape_cast %2 : vector<1x8x128xbf16> to vector<8x128xbf16>
    %4 = arith.extf %3 : vector<8x128xbf16> to vector<8x128xf32>
    %cst = arith.constant 2.500000e-01 : f32
    %5 = vector.broadcast %cst : f32 to vector<8x128xf32>
    %6 = arith.mulf %4, %5 : vector<8x128xf32>
    %c0_5 = arith.constant 0 : index
    %c0_6 = arith.constant 0 : index
    %c0_7 = arith.constant 0 : index
    %7 = vector.load %arg2[%c0_5, %c0_6, %c0_7] : memref<1x8x128xbf16, #tpu.memory_space<vmem>>, vector<1x8x128xbf16>
    %8 = vector.shape_cast %7 : vector<1x8x128xbf16> to vector<8x128xbf16>
    %9 = arith.extf %8 : vector<8x128xbf16> to vector<8x128xf32>
    %c0_8 = arith.constant 0 : index
    %c0_9 = arith.constant 0 : index
    %c0_10 = arith.constant 0 : index
    %10 = vector.load %arg3[%c0_8, %c0_9, %c0_10] : memref<1x8x128xbf16, #tpu.memory_space<vmem>>, vector<1x8x128xbf16>
    %11 = vector.shape_cast %10 : vector<1x8x128xbf16> to vector<8x128xbf16>
    %12 = arith.extf %11 : vector<8x128xbf16> to vector<8x128xf32>
    %13 = vector.extract_strided_slice %6 {offsets = [0, 0], sizes = [8, 16], strides = [1, 1]} : vector<8x128xf32> to vector<8x16xf32>
    %14 = vector.extract_strided_slice %9 {offsets = [0, 0], sizes = [8, 16], strides = [1, 1]} : vector<8x128xf32> to vector<8x16xf32>
    %cst_11 = arith.constant dense<0.000000e+00> : vector<8x8xf32>
    %15 = tpu.matmul %13, %14, %cst_11 {dimension_numbers = #tpu.dot_dimension_numbers<[1], [1], [0], [0], [0, 0, 1, 0], [], []>} : vector<8x16xf32>, vector<8x16xf32>, vector<8x8xf32> -> vector<8x8xf32>
    %16 = vector.broadcast %1 : vector<1x8xf32> to vector<8x8xf32>
    %17 = arith.addf %15, %16 : vector<8x8xf32>
    %cst_12 = arith.constant dense<0xFF800000> : vector<8xf32>
    %18 = vector.multi_reduction <maximumf>, %17, %cst_12 [1] : vector<8x8xf32> to vector<8xf32>
    %19 = vector.shape_cast %18 : vector<8xf32> to vector<8x1xf32>
    %20 = vector.broadcast %19 : vector<8x1xf32> to vector<8x8xf32>
    %21 = arith.subf %17, %20 : vector<8x8xf32>
    %22 = math.exp %21 : vector<8x8xf32>
    %cst_13 = arith.constant dense<0.000000e+00> : vector<8xf32>
    %23 = vector.multi_reduction <add>, %22, %cst_13 [1] : vector<8x8xf32> to vector<8xf32>
    %24 = vector.shape_cast %23 : vector<8xf32> to vector<8x1xf32>
    %25 = tpu.reciprocal %24 {approx = true} : vector<8x1xf32> -> vector<8x1xf32>
    %26 = vector.broadcast %25 : vector<8x1xf32> to vector<8x8xf32>
    %27 = arith.mulf %22, %26 : vector<8x8xf32>
    %28 = vector.extract_strided_slice %12 {offsets = [0, 0], sizes = [8, 16], strides = [1, 1]} : vector<8x128xf32> to vector<8x16xf32>
    %cst_14 = arith.constant dense<0.000000e+00> : vector<8x16xf32>
    %29 = tpu.matmul %27, %28, %cst_14 {dimension_numbers = #tpu.dot_dimension_numbers<[1], [0], [0], [1], [0, 0, 1, 1], [], []>} : vector<8x8xf32>, vector<8x16xf32>, vector<8x16xf32> -> vector<8x16xf32>
    %30 = vector.extract_strided_slice %6 {offsets = [0, 16], sizes = [8, 16], strides = [1, 1]} : vector<8x128xf32> to vector<8x16xf32>
    %31 = vector.extract_strided_slice %9 {offsets = [0, 16], sizes = [8, 16], strides = [1, 1]} : vector<8x128xf32> to vector<8x16xf32>
    %cst_15 = arith.constant dense<0.000000e+00> : vector<8x8xf32>
    %32 = tpu.matmul %30, %31, %cst_15 {dimension_numbers = #tpu.dot_dimension_numbers<[1], [1], [0], [0], [0, 0, 1, 0], [], []>} : vector<8x16xf32>, vector<8x16xf32>, vector<8x8xf32> -> vector<8x8xf32>
    %33 = vector.broadcast %1 : vector<1x8xf32> to vector<8x8xf32>
    %34 = arith.addf %32, %33 : vector<8x8xf32>
    %cst_16 = arith.constant dense<0xFF800000> : vector<8xf32>
    %35 = vector.multi_reduction <maximumf>, %34, %cst_16 [1] : vector<8x8xf32> to vector<8xf32>
    %36 = vector.shape_cast %35 : vector<8xf32> to vector<8x1xf32>
    %37 = vector.broadcast %36 : vector<8x1xf32> to vector<8x8xf32>
    %38 = arith.subf %34, %37 : vector<8x8xf32>
    %39 = math.exp %38 : vector<8x8xf32>
    %cst_17 = arith.constant dense<0.000000e+00> : vector<8xf32>
    %40 = vector.multi_reduction <add>, %39, %cst_17 [1] : vector<8x8xf32> to vector<8xf32>
    %41 = vector.shape_cast %40 : vector<8xf32> to vector<8x1xf32>
    %42 = tpu.reciprocal %41 {approx = true} : vector<8x1xf32> -> vector<8x1xf32>
    %43 = vector.broadcast %42 : vector<8x1xf32> to vector<8x8xf32>
    %44 = arith.mulf %39, %43 : vector<8x8xf32>
    %45 = vector.extract_strided_slice %12 {offsets = [0, 16], sizes = [8, 16], strides = [1, 1]} : vector<8x128xf32> to vector<8x16xf32>
    %cst_18 = arith.constant dense<0.000000e+00> : vector<8x16xf32>
    %46 = tpu.matmul %44, %45, %cst_18 {dimension_numbers = #tpu.dot_dimension_numbers<[1], [0], [0], [1], [0, 0, 1, 1], [], []>} : vector<8x8xf32>, vector<8x16xf32>, vector<8x16xf32> -> vector<8x16xf32>
    %47 = vector.extract_strided_slice %6 {offsets = [0, 32], sizes = [8, 16], strides = [1, 1]} : vector<8x128xf32> to vector<8x16xf32>
    %48 = vector.extract_strided_slice %9 {offsets = [0, 32], sizes = [8, 16], strides = [1, 1]} : vector<8x128xf32> to vector<8x16xf32>
    %cst_19 = arith.constant dense<0.000000e+00> : vector<8x8xf32>
    %49 = tpu.matmul %47, %48, %cst_19 {dimension_numbers = #tpu.dot_dimension_numbers<[1], [1], [0], [0], [0, 0, 1, 0], [], []>} : vector<8x16xf32>, vector<8x16xf32>, vector<8x8xf32> -> vector<8x8xf32>
    %50 = vector.broadcast %1 : vector<1x8xf32> to vector<8x8xf32>
    %51 = arith.addf %49, %50 : vector<8x8xf32>
    %cst_20 = arith.constant dense<0xFF800000> : vector<8xf32>
    %52 = vector.multi_reduction <maximumf>, %51, %cst_20 [1] : vector<8x8xf32> to vector<8xf32>
    %53 = vector.shape_cast %52 : vector<8xf32> to vector<8x1xf32>
    %54 = vector.broadcast %53 : vector<8x1xf32> to vector<8x8xf32>
    %55 = arith.subf %51, %54 : vector<8x8xf32>
    %56 = math.exp %55 : vector<8x8xf32>
    %cst_21 = arith.constant dense<0.000000e+00> : vector<8xf32>
    %57 = vector.multi_reduction <add>, %56, %cst_21 [1] : vector<8x8xf32> to vector<8xf32>
    %58 = vector.shape_cast %57 : vector<8xf32> to vector<8x1xf32>
    %59 = tpu.reciprocal %58 {approx = true} : vector<8x1xf32> -> vector<8x1xf32>
    %60 = vector.broadcast %59 : vector<8x1xf32> to vector<8x8xf32>
    %61 = arith.mulf %56, %60 : vector<8x8xf32>
    %62 = vector.extract_strided_slice %12 {offsets = [0, 32], sizes = [8, 16], strides = [1, 1]} : vector<8x128xf32> to vector<8x16xf32>
    %cst_22 = arith.constant dense<0.000000e+00> : vector<8x16xf32>
    %63 = tpu.matmul %61, %62, %cst_22 {dimension_numbers = #tpu.dot_dimension_numbers<[1], [0], [0], [1], [0, 0, 1, 1], [], []>} : vector<8x8xf32>, vector<8x16xf32>, vector<8x16xf32> -> vector<8x16xf32>
    %64 = vector.extract_strided_slice %6 {offsets = [0, 48], sizes = [8, 16], strides = [1, 1]} : vector<8x128xf32> to vector<8x16xf32>
    %65 = vector.extract_strided_slice %9 {offsets = [0, 48], sizes = [8, 16], strides = [1, 1]} : vector<8x128xf32> to vector<8x16xf32>
    %cst_23 = arith.constant dense<0.000000e+00> : vector<8x8xf32>
    %66 = tpu.matmul %64, %65, %cst_23 {dimension_numbers = #tpu.dot_dimension_numbers<[1], [1], [0], [0], [0, 0, 1, 0], [], []>} : vector<8x16xf32>, vector<8x16xf32>, vector<8x8xf32> -> vector<8x8xf32>
    %67 = vector.broadcast %1 : vector<1x8xf32> to vector<8x8xf32>
    %68 = arith.addf %66, %67 : vector<8x8xf32>
    %cst_24 = arith.constant dense<0xFF800000> : vector<8xf32>
    %69 = vector.multi_reduction <maximumf>, %68, %cst_24 [1] : vector<8x8xf32> to vector<8xf32>
    %70 = vector.shape_cast %69 : vector<8xf32> to vector<8x1xf32>
    %71 = vector.broadcast %70 : vector<8x1xf32> to vector<8x8xf32>
    %72 = arith.subf %68, %71 : vector<8x8xf32>
    %73 = math.exp %72 : vector<8x8xf32>
    %cst_25 = arith.constant dense<0.000000e+00> : vector<8xf32>
    %74 = vector.multi_reduction <add>, %73, %cst_25 [1] : vector<8x8xf32> to vector<8xf32>
    %75 = vector.shape_cast %74 : vector<8xf32> to vector<8x1xf32>
    %76 = tpu.reciprocal %75 {approx = true} : vector<8x1xf32> -> vector<8x1xf32>
    %77 = vector.broadcast %76 : vector<8x1xf32> to vector<8x8xf32>
    %78 = arith.mulf %73, %77 : vector<8x8xf32>
    %79 = vector.extract_strided_slice %12 {offsets = [0, 48], sizes = [8, 16], strides = [1, 1]} : vector<8x128xf32> to vector<8x16xf32>
    %cst_26 = arith.constant dense<0.000000e+00> : vector<8x16xf32>
    %80 = tpu.matmul %78, %79, %cst_26 {dimension_numbers = #tpu.dot_dimension_numbers<[1], [0], [0], [1], [0, 0, 1, 1], [], []>} : vector<8x8xf32>, vector<8x16xf32>, vector<8x16xf32> -> vector<8x16xf32>
    %81 = vector.extract_strided_slice %6 {offsets = [0, 64], sizes = [8, 16], strides = [1, 1]} : vector<8x128xf32> to vector<8x16xf32>
    %82 = vector.extract_strided_slice %9 {offsets = [0, 64], sizes = [8, 16], strides = [1, 1]} : vector<8x128xf32> to vector<8x16xf32>
    %cst_27 = arith.constant dense<0.000000e+00> : vector<8x8xf32>
    %83 = tpu.matmul %81, %82, %cst_27 {dimension_numbers = #tpu.dot_dimension_numbers<[1], [1], [0], [0], [0, 0, 1, 0], [], []>} : vector<8x16xf32>, vector<8x16xf32>, vector<8x8xf32> -> vector<8x8xf32>
    %84 = vector.broadcast %1 : vector<1x8xf32> to vector<8x8xf32>
    %85 = arith.addf %83, %84 : vector<8x8xf32>
    %cst_28 = arith.constant dense<0xFF800000> : vector<8xf32>
    %86 = vector.multi_reduction <maximumf>, %85, %cst_28 [1] : vector<8x8xf32> to vector<8xf32>
    %87 = vector.shape_cast %86 : vector<8xf32> to vector<8x1xf32>
    %88 = vector.broadcast %87 : vector<8x1xf32> to vector<8x8xf32>
    %89 = arith.subf %85, %88 : vector<8x8xf32>
    %90 = math.exp %89 : vector<8x8xf32>
    %cst_29 = arith.constant dense<0.000000e+00> : vector<8xf32>
    %91 = vector.multi_reduction <add>, %90, %cst_29 [1] : vector<8x8xf32> to vector<8xf32>
    %92 = vector.shape_cast %91 : vector<8xf32> to vector<8x1xf32>
    %93 = tpu.reciprocal %92 {approx = true} : vector<8x1xf32> -> vector<8x1xf32>
    %94 = vector.broadcast %93 : vector<8x1xf32> to vector<8x8xf32>
    %95 = arith.mulf %90, %94 : vector<8x8xf32>
    %96 = vector.extract_strided_slice %12 {offsets = [0, 64], sizes = [8, 16], strides = [1, 1]} : vector<8x128xf32> to vector<8x16xf32>
    %cst_30 = arith.constant dense<0.000000e+00> : vector<8x16xf32>
    %97 = tpu.matmul %95, %96, %cst_30 {dimension_numbers = #tpu.dot_dimension_numbers<[1], [0], [0], [1], [0, 0, 1, 1], [], []>} : vector<8x8xf32>, vector<8x16xf32>, vector<8x16xf32> -> vector<8x16xf32>
    %98 = vector.extract_strided_slice %6 {offsets = [0, 80], sizes = [8, 16], strides = [1, 1]} : vector<8x128xf32> to vector<8x16xf32>
    %99 = vector.extract_strided_slice %9 {offsets = [0, 80], sizes = [8, 16], strides = [1, 1]} : vector<8x128xf32> to vector<8x16xf32>
    %cst_31 = arith.constant dense<0.000000e+00> : vector<8x8xf32>
    %100 = tpu.matmul %98, %99, %cst_31 {dimension_numbers = #tpu.dot_dimension_numbers<[1], [1], [0], [0], [0, 0, 1, 0], [], []>} : vector<8x16xf32>, vector<8x16xf32>, vector<8x8xf32> -> vector<8x8xf32>
    %101 = vector.broadcast %1 : vector<1x8xf32> to vector<8x8xf32>
    %102 = arith.addf %100, %101 : vector<8x8xf32>
    %cst_32 = arith.constant dense<0xFF800000> : vector<8xf32>
    %103 = vector.multi_reduction <maximumf>, %102, %cst_32 [1] : vector<8x8xf32> to vector<8xf32>
    %104 = vector.shape_cast %103 : vector<8xf32> to vector<8x1xf32>
    %105 = vector.broadcast %104 : vector<8x1xf32> to vector<8x8xf32>
    %106 = arith.subf %102, %105 : vector<8x8xf32>
    %107 = math.exp %106 : vector<8x8xf32>
    %cst_33 = arith.constant dense<0.000000e+00> : vector<8xf32>
    %108 = vector.multi_reduction <add>, %107, %cst_33 [1] : vector<8x8xf32> to vector<8xf32>
    %109 = vector.shape_cast %108 : vector<8xf32> to vector<8x1xf32>
    %110 = tpu.reciprocal %109 {approx = true} : vector<8x1xf32> -> vector<8x1xf32>
    %111 = vector.broadcast %110 : vector<8x1xf32> to vector<8x8xf32>
    %112 = arith.mulf %107, %111 : vector<8x8xf32>
    %113 = vector.extract_strided_slice %12 {offsets = [0, 80], sizes = [8, 16], strides = [1, 1]} : vector<8x128xf32> to vector<8x16xf32>
    %cst_34 = arith.constant dense<0.000000e+00> : vector<8x16xf32>
    %114 = tpu.matmul %112, %113, %cst_34 {dimension_numbers = #tpu.dot_dimension_numbers<[1], [0], [0], [1], [0, 0, 1, 1], [], []>} : vector<8x8xf32>, vector<8x16xf32>, vector<8x16xf32> -> vector<8x16xf32>
    %115 = vector.extract_strided_slice %6 {offsets = [0, 96], sizes = [8, 16], strides = [1, 1]} : vector<8x128xf32> to vector<8x16xf32>
    %116 = vector.extract_strided_slice %9 {offsets = [0, 96], sizes = [8, 16], strides = [1, 1]} : vector<8x128xf32> to vector<8x16xf32>
    %cst_35 = arith.constant dense<0.000000e+00> : vector<8x8xf32>
    %117 = tpu.matmul %115, %116, %cst_35 {dimension_numbers = #tpu.dot_dimension_numbers<[1], [1], [0], [0], [0, 0, 1, 0], [], []>} : vector<8x16xf32>, vector<8x16xf32>, vector<8x8xf32> -> vector<8x8xf32>
    %118 = vector.broadcast %1 : vector<1x8xf32> to vector<8x8xf32>
    %119 = arith.addf %117, %118 : vector<8x8xf32>
    %cst_36 = arith.constant dense<0xFF800000> : vector<8xf32>
    %120 = vector.multi_reduction <maximumf>, %119, %cst_36 [1] : vector<8x8xf32> to vector<8xf32>
    %121 = vector.shape_cast %120 : vector<8xf32> to vector<8x1xf32>
    %122 = vector.broadcast %121 : vector<8x1xf32> to vector<8x8xf32>
    %123 = arith.subf %119, %122 : vector<8x8xf32>
    %124 = math.exp %123 : vector<8x8xf32>
    %cst_37 = arith.constant dense<0.000000e+00> : vector<8xf32>
    %125 = vector.multi_reduction <add>, %124, %cst_37 [1] : vector<8x8xf32> to vector<8xf32>
    %126 = vector.shape_cast %125 : vector<8xf32> to vector<8x1xf32>
    %127 = tpu.reciprocal %126 {approx = true} : vector<8x1xf32> -> vector<8x1xf32>
    %128 = vector.broadcast %127 : vector<8x1xf32> to vector<8x8xf32>
    %129 = arith.mulf %124, %128 : vector<8x8xf32>
    %130 = vector.extract_strided_slice %12 {offsets = [0, 96], sizes = [8, 16], strides = [1, 1]} : vector<8x128xf32> to vector<8x16xf32>
    %cst_38 = arith.constant dense<0.000000e+00> : vector<8x16xf32>
    %131 = tpu.matmul %129, %130, %cst_38 {dimension_numbers = #tpu.dot_dimension_numbers<[1], [0], [0], [1], [0, 0, 1, 1], [], []>} : vector<8x8xf32>, vector<8x16xf32>, vector<8x16xf32> -> vector<8x16xf32>
    %132 = vector.extract_strided_slice %6 {offsets = [0, 112], sizes = [8, 16], strides = [1, 1]} : vector<8x128xf32> to vector<8x16xf32>
    %133 = vector.extract_strided_slice %9 {offsets = [0, 112], sizes = [8, 16], strides = [1, 1]} : vector<8x128xf32> to vector<8x16xf32>
    %cst_39 = arith.constant dense<0.000000e+00> : vector<8x8xf32>
    %134 = tpu.matmul %132, %133, %cst_39 {dimension_numbers = #tpu.dot_dimension_numbers<[1], [1], [0], [0], [0, 0, 1, 0], [], []>} : vector<8x16xf32>, vector<8x16xf32>, vector<8x8xf32> -> vector<8x8xf32>
    %135 = vector.broadcast %1 : vector<1x8xf32> to vector<8x8xf32>
    %136 = arith.addf %134, %135 : vector<8x8xf32>
    %cst_40 = arith.constant dense<0xFF800000> : vector<8xf32>
    %137 = vector.multi_reduction <maximumf>, %136, %cst_40 [1] : vector<8x8xf32> to vector<8xf32>
    %138 = vector.shape_cast %137 : vector<8xf32> to vector<8x1xf32>
    %139 = vector.broadcast %138 : vector<8x1xf32> to vector<8x8xf32>
    %140 = arith.subf %136, %139 : vector<8x8xf32>
    %141 = math.exp %140 : vector<8x8xf32>
    %cst_41 = arith.constant dense<0.000000e+00> : vector<8xf32>
    %142 = vector.multi_reduction <add>, %141, %cst_41 [1] : vector<8x8xf32> to vector<8xf32>
    %143 = vector.shape_cast %142 : vector<8xf32> to vector<8x1xf32>
    %144 = tpu.reciprocal %143 {approx = true} : vector<8x1xf32> -> vector<8x1xf32>
    %145 = vector.broadcast %144 : vector<8x1xf32> to vector<8x8xf32>
    %146 = arith.mulf %141, %145 : vector<8x8xf32>
    %147 = vector.extract_strided_slice %12 {offsets = [0, 112], sizes = [8, 16], strides = [1, 1]} : vector<8x128xf32> to vector<8x16xf32>
    %cst_42 = arith.constant dense<0.000000e+00> : vector<8x16xf32>
    %148 = tpu.matmul %146, %147, %cst_42 {dimension_numbers = #tpu.dot_dimension_numbers<[1], [0], [0], [1], [0, 0, 1, 1], [], []>} : vector<8x8xf32>, vector<8x16xf32>, vector<8x16xf32> -> vector<8x16xf32>
    %149 = tpu.concatenate %29, %46, %63, %80, %97, %114, %131, %148 in 1 : vector<8x16xf32>, vector<8x16xf32>, vector<8x16xf32>, vector<8x16xf32>, vector<8x16xf32>, vector<8x16xf32>, vector<8x16xf32>, vector<8x16xf32> -> vector<8x128xf32>
    %150 = arith.truncf %149 : vector<8x128xf32> to vector<8x128xbf16>
    %c0_43 = arith.constant 0 : index
    %c0_44 = arith.constant 0 : index
    %c0_45 = arith.constant 0 : index
    %151 = vector.load %arg5[%c0_43, %c0_44, %c0_45] : memref<1x8x128xbf16, #tpu.memory_space<vmem>>, vector<1x8x128xbf16>
    %152 = vector.shape_cast %151 : vector<1x8x128xbf16> to vector<8x128xbf16>
    %153 = vector.shape_cast %150 : vector<8x128xbf16> to vector<1x8x128xbf16>
    tpu.vector_store %arg5[%c0_43, %c0_44, %c0_45], %153 {strides = array<i32>} : memref<1x8x128xbf16, #tpu.memory_space<vmem>>, vector<1x8x128xbf16>,
    return
  }
  func.func @transform_0(%arg0: i32) -> (i32, i32, i32) {
    %c0_i32 = arith.constant 0 : i32
    %c0_i32_0 = arith.constant 0 : i32
    %c0_i32_1 = arith.constant 0 : i32
    return %arg0, %c0_i32, %c0_i32_0 : i32, i32, i32
  }
  func.func @transform_1(%arg0: i32) -> (i32, i32, i32) {
    %c0_i32 = arith.constant 0 : i32
    %c1_i32 = arith.constant 1 : i32
    %c0_i32_0 = arith.constant 0 : i32
    return %arg0, %c0_i32, %c1_i32 : i32, i32, i32
  }
  func.func @transform_2(%arg0: i32) -> (i32, i32, i32) {
    %c0_i32 = arith.constant 0 : i32
    %c2_i32 = arith.constant 2 : i32
    %c0_i32_0 = arith.constant 0 : i32
    return %arg0, %c0_i32, %c2_i32 : i32, i32, i32
  }
  func.func @transform_3(%arg0: i32) -> (i32, i32, i32) {
    %c0_i32 = arith.constant 0 : i32
    %c0_i32_0 = arith.constant 0 : i32
    %c0_i32_1 = arith.constant 0 : i32
    return %arg0, %c0_i32, %c0_i32_0 : i32, i32, i32
  }
  func.func @transform_4(%arg0: i32) -> (i32, i32, i32) {
    %c0_i32 = arith.constant 0 : i32
    %c0_i32_0 = arith.constant 0 : i32
    %c0_i32_1 = arith.constant 0 : i32
    return %arg0, %c0_i32, %c0_i32_0 : i32, i32, i32
  }
}

module attributes {stable_mosaic.version = 11 : i64} {
  func.func @_dense_kernel(%arg0: i32, %arg1: i32, %arg2: i32, %arg3: memref<16x128xbf16, #tpu.memory_space<vmem>>, %arg4: memref<128x512xbf16, #tpu.memory_space<vmem>>, %arg5: memref<1x512xf32, #tpu.memory_space<vmem>>, %arg6: memref<16x512xbf16, #tpu.memory_space<vmem>>, %arg7: memref<16x512xf32, #tpu.memory_space<vmem>>) attributes {dimension_semantics = [#tpu.dimension_semantics<parallel>, #tpu.dimension_semantics<parallel>, #tpu.dimension_semantics<arbitrary>], iteration_bounds = array<i64: 1, 1, 1>, scalar_prefetch = 0 : i64, scratch_operands = 1 : i64, tpu.core_type = #tpu.core_type<tc>, window_params = [{transform_indices = @transform_0, window_bounds = array<i64: 16, 128>}, {transform_indices = @transform_1, window_bounds = array<i64: 128, 512>}, {transform_indices = @transform_2, window_bounds = array<i64: 1, 512>}, {transform_indices = @transform_3, window_bounds = array<i64: 16, 512>}]} {
    %c0_i32 = arith.constant 0 : i32
    %0 = arith.cmpi eq, %arg2, %c0_i32 : i32
    %1 = arith.extui %0 : i1 to i32
    %c0_i32_0 = arith.constant 0 : i32
    %2 = arith.cmpi ne, %1, %c0_i32_0 : i32
    scf.if %2 {
      %cst_10 = arith.constant 0.000000e+00 : f32
      %12 = vector.broadcast %cst_10 : f32 to vector<16x512xf32>
      %c0_11 = arith.constant 0 : index
      %c0_12 = arith.constant 0 : index
      %13 = vector.load %arg7[%c0_11, %c0_12] : memref<16x512xf32, #tpu.memory_space<vmem>>, vector<16x512xf32>
      tpu.vector_store %arg7[%c0_11, %c0_12], %12 {strides = array<i32>} : memref<16x512xf32, #tpu.memory_space<vmem>>, vector<16x512xf32>,
    } else {
    }
    %c0 = arith.constant 0 : index
    %c0_1 = arith.constant 0 : index
    %3 = vector.load %arg7[%c0, %c0_1] : memref<16x512xf32, #tpu.memory_space<vmem>>, vector<16x512xf32>
    %c0_2 = arith.constant 0 : index
    %c0_3 = arith.constant 0 : index
    %4 = vector.load %arg3[%c0_2, %c0_3] : memref<16x128xbf16, #tpu.memory_space<vmem>>, vector<16x128xbf16>
    %c0_4 = arith.constant 0 : index
    %c0_5 = arith.constant 0 : index
    %5 = vector.load %arg4[%c0_4, %c0_5] : memref<128x512xbf16, #tpu.memory_space<vmem>>, vector<128x512xbf16>
    %cst = arith.constant dense<0.000000e+00> : vector<16x512xf32>
    %6 = tpu.matmul %4, %5, %cst {dimension_numbers = #tpu.dot_dimension_numbers<[1], [0], [0], [1], [0, 0, 1, 1], [], []>} : vector<16x128xbf16>, vector<128x512xbf16>, vector<16x512xf32> -> vector<16x512xf32>
    %7 = arith.addf %3, %6 : vector<16x512xf32>
    %c0_6 = arith.constant 0 : index
    %c0_7 = arith.constant 0 : index
    %8 = vector.load %arg7[%c0_6, %c0_7] : memref<16x512xf32, #tpu.memory_space<vmem>>, vector<16x512xf32>
    tpu.vector_store %arg7[%c0_6, %c0_7], %7 {strides = array<i32>} : memref<16x512xf32, #tpu.memory_space<vmem>>, vector<16x512xf32>,
    %c0_i32_8 = arith.constant 0 : i32
    %9 = arith.cmpi eq, %arg2, %c0_i32_8 : i32
    %10 = arith.extui %9 : i1 to i32
    %c0_i32_9 = arith.constant 0 : i32
    %11 = arith.cmpi ne, %10, %c0_i32_9 : i32
    scf.if %11 {
      %c0_10 = arith.constant 0 : index
      %c0_11 = arith.constant 0 : index
      %12 = vector.load %arg7[%c0_10, %c0_11] : memref<16x512xf32, #tpu.memory_space<vmem>>, vector<16x512xf32>
      %c0_12 = arith.constant 0 : index
      %c0_13 = arith.constant 0 : index
      %13 = vector.load %arg5[%c0_12, %c0_13] : memref<1x512xf32, #tpu.memory_space<vmem>>, vector<1x512xf32>
      %14 = vector.broadcast %13 : vector<1x512xf32> to vector<16x512xf32>
      %15 = arith.addf %12, %14 : vector<16x512xf32>
      %16 = arith.mulf %15, %15 : vector<16x512xf32>
      %17 = arith.mulf %15, %16 : vector<16x512xf32>
      %cst_14 = arith.constant 4.471500e-02 : f32
      %18 = vector.broadcast %cst_14 : f32 to vector<16x512xf32>
      %19 = arith.mulf %18, %17 : vector<16x512xf32>
      %20 = arith.addf %15, %19 : vector<16x512xf32>
      %cst_15 = arith.constant 0.797884583 : f32
      %21 = vector.broadcast %cst_15 : f32 to vector<16x512xf32>
      %22 = arith.mulf %21, %20 : vector<16x512xf32>
      %23 = math.tanh %22 : vector<16x512xf32>
      %cst_16 = arith.constant 1.000000e+00 : f32
      %24 = vector.broadcast %cst_16 : f32 to vector<16x512xf32>
      %25 = arith.addf %24, %23 : vector<16x512xf32>
      %cst_17 = arith.constant 5.000000e-01 : f32
      %26 = vector.broadcast %cst_17 : f32 to vector<16x512xf32>
      %27 = arith.mulf %26, %25 : vector<16x512xf32>
      %28 = arith.mulf %15, %27 : vector<16x512xf32>
      %29 = arith.truncf %28 : vector<16x512xf32> to vector<16x512xbf16>
      %c0_18 = arith.constant 0 : index
      %c0_19 = arith.constant 0 : index
      %30 = vector.load %arg6[%c0_18, %c0_19] : memref<16x512xbf16, #tpu.memory_space<vmem>>, vector<16x512xbf16>
      tpu.vector_store %arg6[%c0_18, %c0_19], %29 {strides = array<i32>} : memref<16x512xbf16, #tpu.memory_space<vmem>>, vector<16x512xbf16>,
    } else {
    }
    return
  }
  func.func @transform_0(%arg0: i32, %arg1: i32, %arg2: i32) -> (i32, i32) {
    %c0_i32 = arith.constant 0 : i32
    return %arg0, %arg2 : i32, i32
  }
  func.func @transform_1(%arg0: i32, %arg1: i32, %arg2: i32) -> (i32, i32) {
    %c0_i32 = arith.constant 0 : i32
    return %arg2, %arg1 : i32, i32
  }
  func.func @transform_2(%arg0: i32, %arg1: i32, %arg2: i32) -> (i32, i32) {
    %c0_i32 = arith.constant 0 : i32
    %c0_i32_0 = arith.constant 0 : i32
    return %c0_i32, %arg1 : i32, i32
  }
  func.func @transform_3(%arg0: i32, %arg1: i32, %arg2: i32) -> (i32, i32) {
    %c0_i32 = arith.constant 0 : i32
    return %arg0, %arg1 : i32, i32
  }
}

module attributes {stable_mosaic.version = 11 : i64} {
  func.func @_dense_kernel(%arg0: i32, %arg1: i32, %arg2: i32, %arg3: memref<16x512xbf16, #tpu.memory_space<vmem>>, %arg4: memref<512x128xbf16, #tpu.memory_space<vmem>>, %arg5: memref<1x128xf32, #tpu.memory_space<vmem>>, %arg6: memref<16x128xbf16, #tpu.memory_space<vmem>>, %arg7: memref<16x128xf32, #tpu.memory_space<vmem>>) attributes {dimension_semantics = [#tpu.dimension_semantics<parallel>, #tpu.dimension_semantics<parallel>, #tpu.dimension_semantics<arbitrary>], iteration_bounds = array<i64: 1, 1, 1>, scalar_prefetch = 0 : i64, scratch_operands = 1 : i64, tpu.core_type = #tpu.core_type<tc>, window_params = [{transform_indices = @transform_0, window_bounds = array<i64: 16, 512>}, {transform_indices = @transform_1, window_bounds = array<i64: 512, 128>}, {transform_indices = @transform_2, window_bounds = array<i64: 1, 128>}, {transform_indices = @transform_3, window_bounds = array<i64: 16, 128>}]} {
    %c0_i32 = arith.constant 0 : i32
    %0 = arith.cmpi eq, %arg2, %c0_i32 : i32
    %1 = arith.extui %0 : i1 to i32
    %c0_i32_0 = arith.constant 0 : i32
    %2 = arith.cmpi ne, %1, %c0_i32_0 : i32
    scf.if %2 {
      %cst_10 = arith.constant 0.000000e+00 : f32
      %12 = vector.broadcast %cst_10 : f32 to vector<16x128xf32>
      %c0_11 = arith.constant 0 : index
      %c0_12 = arith.constant 0 : index
      %13 = vector.load %arg7[%c0_11, %c0_12] : memref<16x128xf32, #tpu.memory_space<vmem>>, vector<16x128xf32>
      tpu.vector_store %arg7[%c0_11, %c0_12], %12 {strides = array<i32>} : memref<16x128xf32, #tpu.memory_space<vmem>>, vector<16x128xf32>,
    } else {
    }
    %c0 = arith.constant 0 : index
    %c0_1 = arith.constant 0 : index
    %3 = vector.load %arg7[%c0, %c0_1] : memref<16x128xf32, #tpu.memory_space<vmem>>, vector<16x128xf32>
    %c0_2 = arith.constant 0 : index
    %c0_3 = arith.constant 0 : index
    %4 = vector.load %arg3[%c0_2, %c0_3] : memref<16x512xbf16, #tpu.memory_space<vmem>>, vector<16x512xbf16>
    %c0_4 = arith.constant 0 : index
    %c0_5 = arith.constant 0 : index
    %5 = vector.load %arg4[%c0_4, %c0_5] : memref<512x128xbf16, #tpu.memory_space<vmem>>, vector<512x128xbf16>
    %cst = arith.constant dense<0.000000e+00> : vector<16x128xf32>
    %6 = tpu.matmul %4, %5, %cst {dimension_numbers = #tpu.dot_dimension_numbers<[1], [0], [0], [1], [0, 0, 1, 1], [], []>} : vector<16x512xbf16>, vector<512x128xbf16>, vector<16x128xf32> -> vector<16x128xf32>
    %7 = arith.addf %3, %6 : vector<16x128xf32>
    %c0_6 = arith.constant 0 : index
    %c0_7 = arith.constant 0 : index
    %8 = vector.load %arg7[%c0_6, %c0_7] : memref<16x128xf32, #tpu.memory_space<vmem>>, vector<16x128xf32>
    tpu.vector_store %arg7[%c0_6, %c0_7], %7 {strides = array<i32>} : memref<16x128xf32, #tpu.memory_space<vmem>>, vector<16x128xf32>,
    %c0_i32_8 = arith.constant 0 : i32
    %9 = arith.cmpi eq, %arg2, %c0_i32_8 : i32
    %10 = arith.extui %9 : i1 to i32
    %c0_i32_9 = arith.constant 0 : i32
    %11 = arith.cmpi ne, %10, %c0_i32_9 : i32
    scf.if %11 {
      %c0_10 = arith.constant 0 : index
      %c0_11 = arith.constant 0 : index
      %12 = vector.load %arg7[%c0_10, %c0_11] : memref<16x128xf32, #tpu.memory_space<vmem>>, vector<16x128xf32>
      %c0_12 = arith.constant 0 : index
      %c0_13 = arith.constant 0 : index
      %13 = vector.load %arg5[%c0_12, %c0_13] : memref<1x128xf32, #tpu.memory_space<vmem>>, vector<1x128xf32>
      %14 = vector.broadcast %13 : vector<1x128xf32> to vector<16x128xf32>
      %15 = arith.addf %12, %14 : vector<16x128xf32>
      %16 = arith.truncf %15 : vector<16x128xf32> to vector<16x128xbf16>
      %c0_14 = arith.constant 0 : index
      %c0_15 = arith.constant 0 : index
      %17 = vector.load %arg6[%c0_14, %c0_15] : memref<16x128xbf16, #tpu.memory_space<vmem>>, vector<16x128xbf16>
      tpu.vector_store %arg6[%c0_14, %c0_15], %16 {strides = array<i32>} : memref<16x128xbf16, #tpu.memory_space<vmem>>, vector<16x128xbf16>,
    } else {
    }
    return
  }
  func.func @transform_0(%arg0: i32, %arg1: i32, %arg2: i32) -> (i32, i32) {
    %c0_i32 = arith.constant 0 : i32
    return %arg0, %arg2 : i32, i32
  }
  func.func @transform_1(%arg0: i32, %arg1: i32, %arg2: i32) -> (i32, i32) {
    %c0_i32 = arith.constant 0 : i32
    return %arg2, %arg1 : i32, i32
  }
  func.func @transform_2(%arg0: i32, %arg1: i32, %arg2: i32) -> (i32, i32) {
    %c0_i32 = arith.constant 0 : i32
    %c0_i32_0 = arith.constant 0 : i32
    return %c0_i32, %arg1 : i32, i32
  }
  func.func @transform_3(%arg0: i32, %arg1: i32, %arg2: i32) -> (i32, i32) {
    %c0_i32 = arith.constant 0 : i32
    return %arg0, %arg1 : i32, i32
  }
}

module attributes {stable_mosaic.version = 11 : i64} {
  func.func @_add_ln_kernel(%arg0: i32, %arg1: memref<16x128xbf16, #tpu.memory_space<vmem>>, %arg2: memref<16x128xbf16, #tpu.memory_space<vmem>>, %arg3: memref<1x128xf32, #tpu.memory_space<vmem>>, %arg4: memref<1x128xf32, #tpu.memory_space<vmem>>, %arg5: memref<16x128xbf16, #tpu.memory_space<vmem>>) attributes {dimension_semantics = [#tpu.dimension_semantics<parallel>], iteration_bounds = array<i64: 1>, scalar_prefetch = 0 : i64, scratch_operands = 0 : i64, tpu.core_type = #tpu.core_type<tc>, window_params = [{transform_indices = @transform_0, window_bounds = array<i64: 16, 128>}, {transform_indices = @transform_1, window_bounds = array<i64: 16, 128>}, {pipeline_mode = #tpu.pipeline_mode<synchronous>, transform_indices = @transform_2, window_bounds = array<i64: 1, 128>}, {pipeline_mode = #tpu.pipeline_mode<synchronous>, transform_indices = @transform_3, window_bounds = array<i64: 1, 128>}, {transform_indices = @transform_4, window_bounds = array<i64: 16, 128>}]} {
    %c0 = arith.constant 0 : index
    %c0_0 = arith.constant 0 : index
    %0 = vector.load %arg1[%c0, %c0_0] : memref<16x128xbf16, #tpu.memory_space<vmem>>, vector<16x128xbf16>
    %1 = arith.extf %0 : vector<16x128xbf16> to vector<16x128xf32>
    %c0_1 = arith.constant 0 : index
    %c0_2 = arith.constant 0 : index
    %2 = vector.load %arg2[%c0_1, %c0_2] : memref<16x128xbf16, #tpu.memory_space<vmem>>, vector<16x128xbf16>
    %3 = arith.extf %2 : vector<16x128xbf16> to vector<16x128xf32>
    %4 = arith.addf %1, %3 : vector<16x128xf32>
    %c0_3 = arith.constant 0 : index
    %c0_4 = arith.constant 0 : index
    %5 = vector.load %arg3[%c0_3, %c0_4] : memref<1x128xf32, #tpu.memory_space<vmem>>, vector<1x128xf32>
    %c0_5 = arith.constant 0 : index
    %c0_6 = arith.constant 0 : index
    %6 = vector.load %arg4[%c0_5, %c0_6] : memref<1x128xf32, #tpu.memory_space<vmem>>, vector<1x128xf32>
    %cst = arith.constant dense<0.000000e+00> : vector<16xf32>
    %7 = vector.multi_reduction <add>, %4, %cst [1] : vector<16x128xf32> to vector<16xf32>
    %8 = vector.shape_cast %7 : vector<16xf32> to vector<16x1xf32>
    %cst_7 = arith.constant 1.280000e+02 : f32
    %9 = vector.broadcast %cst_7 : f32 to vector<16x1xf32>
    %10 = arith.divf %8, %9 : vector<16x1xf32>
    %11 = vector.broadcast %10 : vector<16x1xf32> to vector<16x128xf32>
    %12 = arith.subf %4, %11 : vector<16x128xf32>
    %13 = arith.mulf %12, %12 : vector<16x128xf32>
    %cst_8 = arith.constant dense<0.000000e+00> : vector<16xf32>
    %14 = vector.multi_reduction <add>, %13, %cst_8 [1] : vector<16x128xf32> to vector<16xf32>
    %15 = vector.shape_cast %14 : vector<16xf32> to vector<16x1xf32>
    %cst_9 = arith.constant 1.280000e+02 : f32
    %16 = vector.broadcast %cst_9 : f32 to vector<16x1xf32>
    %17 = arith.divf %15, %16 : vector<16x1xf32>
    %18 = vector.broadcast %10 : vector<16x1xf32> to vector<16x128xf32>
    %19 = arith.subf %4, %18 : vector<16x128xf32>
    %cst_10 = arith.constant 9.99999996E-13 : f32
    %20 = vector.broadcast %cst_10 : f32 to vector<16x1xf32>
    %21 = arith.addf %17, %20 : vector<16x1xf32>
    %22 = math.rsqrt %21 : vector<16x1xf32>
    %23 = vector.broadcast %22 : vector<16x1xf32> to vector<16x128xf32>
    %24 = arith.mulf %19, %23 : vector<16x128xf32>
    %25 = vector.broadcast %5 : vector<1x128xf32> to vector<16x128xf32>
    %26 = arith.mulf %24, %25 : vector<16x128xf32>
    %27 = vector.broadcast %6 : vector<1x128xf32> to vector<16x128xf32>
    %28 = arith.addf %26, %27 : vector<16x128xf32>
    %29 = arith.truncf %28 : vector<16x128xf32> to vector<16x128xbf16>
    %c0_11 = arith.constant 0 : index
    %c0_12 = arith.constant 0 : index
    %30 = vector.load %arg5[%c0_11, %c0_12] : memref<16x128xbf16, #tpu.memory_space<vmem>>, vector<16x128xbf16>
    tpu.vector_store %arg5[%c0_11, %c0_12], %29 {strides = array<i32>} : memref<16x128xbf16, #tpu.memory_space<vmem>>, vector<16x128xbf16>,
    return
  }
  func.func @transform_0(%arg0: i32) -> (i32, i32) {
    %c0_i32 = arith.constant 0 : i32
    %c0_i32_0 = arith.constant 0 : i32
    return %arg0, %c0_i32 : i32, i32
  }
  func.func @transform_1(%arg0: i32) -> (i32, i32) {
    %c0_i32 = arith.constant 0 : i32
    %c0_i32_0 = arith.constant 0 : i32
    return %arg0, %c0_i32 : i32, i32
  }
  func.func @transform_2(%arg0: i32) -> (i32, i32) {
    %c0_i32 = arith.constant 0 : i32
    %c0_i32_0 = arith.constant 0 : i32
    %c0_i32_1 = arith.constant 0 : i32
    return %c0_i32, %c0_i32_0 : i32, i32
  }
  func.func @transform_3(%arg0: i32) -> (i32, i32) {
    %c0_i32 = arith.constant 0 : i32
    %c0_i32_0 = arith.constant 0 : i32
    %c0_i32_1 = arith.constant 0 : i32
    return %c0_i32, %c0_i32_0 : i32, i32
  }
  func.func @transform_4(%arg0: i32) -> (i32, i32) {
    %c0_i32 = arith.constant 0 : i32
    %c0_i32_0 = arith.constant 0 : i32
    return %arg0, %c0_i32 : i32, i32
  }
}

module attributes {stable_mosaic.version = 11 : i64} {
  func.func @_add_ln_kernel(%arg0: i32, %arg1: memref<16x128xbf16, #tpu.memory_space<vmem>>, %arg2: memref<16x128xbf16, #tpu.memory_space<vmem>>, %arg3: memref<1x128xf32, #tpu.memory_space<vmem>>, %arg4: memref<1x128xf32, #tpu.memory_space<vmem>>, %arg5: memref<16x128xbf16, #tpu.memory_space<vmem>>) attributes {dimension_semantics = [#tpu.dimension_semantics<parallel>], iteration_bounds = array<i64: 1>, scalar_prefetch = 0 : i64, scratch_operands = 0 : i64, tpu.core_type = #tpu.core_type<tc>, window_params = [{transform_indices = @transform_0, window_bounds = array<i64: 16, 128>}, {transform_indices = @transform_1, window_bounds = array<i64: 16, 128>}, {pipeline_mode = #tpu.pipeline_mode<synchronous>, transform_indices = @transform_2, window_bounds = array<i64: 1, 128>}, {pipeline_mode = #tpu.pipeline_mode<synchronous>, transform_indices = @transform_3, window_bounds = array<i64: 1, 128>}, {transform_indices = @transform_4, window_bounds = array<i64: 16, 128>}]} {
    %c0 = arith.constant 0 : index
    %c0_0 = arith.constant 0 : index
    %0 = vector.load %arg1[%c0, %c0_0] : memref<16x128xbf16, #tpu.memory_space<vmem>>, vector<16x128xbf16>
    %1 = arith.extf %0 : vector<16x128xbf16> to vector<16x128xf32>
    %c0_1 = arith.constant 0 : index
    %c0_2 = arith.constant 0 : index
    %2 = vector.load %arg2[%c0_1, %c0_2] : memref<16x128xbf16, #tpu.memory_space<vmem>>, vector<16x128xbf16>
    %3 = arith.extf %2 : vector<16x128xbf16> to vector<16x128xf32>
    %4 = arith.addf %1, %3 : vector<16x128xf32>
    %c0_3 = arith.constant 0 : index
    %c0_4 = arith.constant 0 : index
    %5 = vector.load %arg3[%c0_3, %c0_4] : memref<1x128xf32, #tpu.memory_space<vmem>>, vector<1x128xf32>
    %c0_5 = arith.constant 0 : index
    %c0_6 = arith.constant 0 : index
    %6 = vector.load %arg4[%c0_5, %c0_6] : memref<1x128xf32, #tpu.memory_space<vmem>>, vector<1x128xf32>
    %cst = arith.constant dense<0.000000e+00> : vector<16xf32>
    %7 = vector.multi_reduction <add>, %4, %cst [1] : vector<16x128xf32> to vector<16xf32>
    %8 = vector.shape_cast %7 : vector<16xf32> to vector<16x1xf32>
    %cst_7 = arith.constant 1.280000e+02 : f32
    %9 = vector.broadcast %cst_7 : f32 to vector<16x1xf32>
    %10 = arith.divf %8, %9 : vector<16x1xf32>
    %11 = vector.broadcast %10 : vector<16x1xf32> to vector<16x128xf32>
    %12 = arith.subf %4, %11 : vector<16x128xf32>
    %13 = arith.mulf %12, %12 : vector<16x128xf32>
    %cst_8 = arith.constant dense<0.000000e+00> : vector<16xf32>
    %14 = vector.multi_reduction <add>, %13, %cst_8 [1] : vector<16x128xf32> to vector<16xf32>
    %15 = vector.shape_cast %14 : vector<16xf32> to vector<16x1xf32>
    %cst_9 = arith.constant 1.280000e+02 : f32
    %16 = vector.broadcast %cst_9 : f32 to vector<16x1xf32>
    %17 = arith.divf %15, %16 : vector<16x1xf32>
    %18 = vector.broadcast %10 : vector<16x1xf32> to vector<16x128xf32>
    %19 = arith.subf %4, %18 : vector<16x128xf32>
    %cst_10 = arith.constant 9.99999974E-6 : f32
    %20 = vector.broadcast %cst_10 : f32 to vector<16x1xf32>
    %21 = arith.addf %17, %20 : vector<16x1xf32>
    %22 = math.rsqrt %21 : vector<16x1xf32>
    %23 = vector.broadcast %22 : vector<16x1xf32> to vector<16x128xf32>
    %24 = arith.mulf %19, %23 : vector<16x128xf32>
    %25 = vector.broadcast %5 : vector<1x128xf32> to vector<16x128xf32>
    %26 = arith.mulf %24, %25 : vector<16x128xf32>
    %27 = vector.broadcast %6 : vector<1x128xf32> to vector<16x128xf32>
    %28 = arith.addf %26, %27 : vector<16x128xf32>
    %29 = arith.truncf %28 : vector<16x128xf32> to vector<16x128xbf16>
    %c0_11 = arith.constant 0 : index
    %c0_12 = arith.constant 0 : index
    %30 = vector.load %arg5[%c0_11, %c0_12] : memref<16x128xbf16, #tpu.memory_space<vmem>>, vector<16x128xbf16>
    tpu.vector_store %arg5[%c0_11, %c0_12], %29 {strides = array<i32>} : memref<16x128xbf16, #tpu.memory_space<vmem>>, vector<16x128xbf16>,
    return
  }
  func.func @transform_0(%arg0: i32) -> (i32, i32) {
    %c0_i32 = arith.constant 0 : i32
    %c0_i32_0 = arith.constant 0 : i32
    return %arg0, %c0_i32 : i32, i32
  }
  func.func @transform_1(%arg0: i32) -> (i32, i32) {
    %c0_i32 = arith.constant 0 : i32
    %c0_i32_0 = arith.constant 0 : i32
    return %arg0, %c0_i32 : i32, i32
  }
  func.func @transform_2(%arg0: i32) -> (i32, i32) {
    %c0_i32 = arith.constant 0 : i32
    %c0_i32_0 = arith.constant 0 : i32
    %c0_i32_1 = arith.constant 0 : i32
    return %c0_i32, %c0_i32_0 : i32, i32
  }
  func.func @transform_3(%arg0: i32) -> (i32, i32) {
    %c0_i32 = arith.constant 0 : i32
    %c0_i32_0 = arith.constant 0 : i32
    %c0_i32_1 = arith.constant 0 : i32
    return %c0_i32, %c0_i32_0 : i32, i32
  }
  func.func @transform_4(%arg0: i32) -> (i32, i32) {
    %c0_i32 = arith.constant 0 : i32
    %c0_i32_0 = arith.constant 0 : i32
    return %arg0, %c0_i32 : i32, i32
  }
}

module attributes {stable_mosaic.version = 11 : i64} {
  func.func @_attn_kernel_nomask(%arg0: i32, %arg1: memref<1x8x128xbf16, #tpu.memory_space<vmem>>, %arg2: memref<1x8x128xbf16, #tpu.memory_space<vmem>>, %arg3: memref<1x8x128xbf16, #tpu.memory_space<vmem>>, %arg4: memref<1x8x128xbf16, #tpu.memory_space<vmem>>) attributes {dimension_semantics = [#tpu.dimension_semantics<parallel>], iteration_bounds = array<i64: 2>, scalar_prefetch = 0 : i64, scratch_operands = 0 : i64, tpu.core_type = #tpu.core_type<tc>, window_params = [{transform_indices = @transform_0, window_bounds = array<i64: 1, 8, 128>}, {transform_indices = @transform_1, window_bounds = array<i64: 1, 8, 128>}, {transform_indices = @transform_2, window_bounds = array<i64: 1, 8, 128>}, {transform_indices = @transform_3, window_bounds = array<i64: 1, 8, 128>}]} {
    %c0 = arith.constant 0 : index
    %c0_0 = arith.constant 0 : index
    %c0_1 = arith.constant 0 : index
    %0 = vector.load %arg1[%c0, %c0_0, %c0_1] : memref<1x8x128xbf16, #tpu.memory_space<vmem>>, vector<1x8x128xbf16>
    %1 = vector.shape_cast %0 : vector<1x8x128xbf16> to vector<8x128xbf16>
    %2 = arith.extf %1 : vector<8x128xbf16> to vector<8x128xf32>
    %cst = arith.constant 2.500000e-01 : f32
    %3 = vector.broadcast %cst : f32 to vector<8x128xf32>
    %4 = arith.mulf %2, %3 : vector<8x128xf32>
    %c0_2 = arith.constant 0 : index
    %c0_3 = arith.constant 0 : index
    %c0_4 = arith.constant 0 : index
    %5 = vector.load %arg2[%c0_2, %c0_3, %c0_4] : memref<1x8x128xbf16, #tpu.memory_space<vmem>>, vector<1x8x128xbf16>
    %6 = vector.shape_cast %5 : vector<1x8x128xbf16> to vector<8x128xbf16>
    %7 = arith.extf %6 : vector<8x128xbf16> to vector<8x128xf32>
    %c0_5 = arith.constant 0 : index
    %c0_6 = arith.constant 0 : index
    %c0_7 = arith.constant 0 : index
    %8 = vector.load %arg3[%c0_5, %c0_6, %c0_7] : memref<1x8x128xbf16, #tpu.memory_space<vmem>>, vector<1x8x128xbf16>
    %9 = vector.shape_cast %8 : vector<1x8x128xbf16> to vector<8x128xbf16>
    %10 = arith.extf %9 : vector<8x128xbf16> to vector<8x128xf32>
    %11 = vector.extract_strided_slice %4 {offsets = [0, 0], sizes = [8, 16], strides = [1, 1]} : vector<8x128xf32> to vector<8x16xf32>
    %12 = vector.extract_strided_slice %7 {offsets = [0, 0], sizes = [8, 16], strides = [1, 1]} : vector<8x128xf32> to vector<8x16xf32>
    %cst_8 = arith.constant dense<0.000000e+00> : vector<8x8xf32>
    %13 = tpu.matmul %11, %12, %cst_8 {dimension_numbers = #tpu.dot_dimension_numbers<[1], [1], [0], [0], [0, 0, 1, 0], [], []>} : vector<8x16xf32>, vector<8x16xf32>, vector<8x8xf32> -> vector<8x8xf32>
    %cst_9 = arith.constant dense<0xFF800000> : vector<8xf32>
    %14 = vector.multi_reduction <maximumf>, %13, %cst_9 [1] : vector<8x8xf32> to vector<8xf32>
    %15 = vector.shape_cast %14 : vector<8xf32> to vector<8x1xf32>
    %16 = vector.broadcast %15 : vector<8x1xf32> to vector<8x8xf32>
    %17 = arith.subf %13, %16 : vector<8x8xf32>
    %18 = math.exp %17 : vector<8x8xf32>
    %cst_10 = arith.constant dense<0.000000e+00> : vector<8xf32>
    %19 = vector.multi_reduction <add>, %18, %cst_10 [1] : vector<8x8xf32> to vector<8xf32>
    %20 = vector.shape_cast %19 : vector<8xf32> to vector<8x1xf32>
    %21 = tpu.reciprocal %20 {approx = true} : vector<8x1xf32> -> vector<8x1xf32>
    %22 = vector.broadcast %21 : vector<8x1xf32> to vector<8x8xf32>
    %23 = arith.mulf %18, %22 : vector<8x8xf32>
    %24 = vector.extract_strided_slice %10 {offsets = [0, 0], sizes = [8, 16], strides = [1, 1]} : vector<8x128xf32> to vector<8x16xf32>
    %cst_11 = arith.constant dense<0.000000e+00> : vector<8x16xf32>
    %25 = tpu.matmul %23, %24, %cst_11 {dimension_numbers = #tpu.dot_dimension_numbers<[1], [0], [0], [1], [0, 0, 1, 1], [], []>} : vector<8x8xf32>, vector<8x16xf32>, vector<8x16xf32> -> vector<8x16xf32>
    %26 = vector.extract_strided_slice %4 {offsets = [0, 16], sizes = [8, 16], strides = [1, 1]} : vector<8x128xf32> to vector<8x16xf32>
    %27 = vector.extract_strided_slice %7 {offsets = [0, 16], sizes = [8, 16], strides = [1, 1]} : vector<8x128xf32> to vector<8x16xf32>
    %cst_12 = arith.constant dense<0.000000e+00> : vector<8x8xf32>
    %28 = tpu.matmul %26, %27, %cst_12 {dimension_numbers = #tpu.dot_dimension_numbers<[1], [1], [0], [0], [0, 0, 1, 0], [], []>} : vector<8x16xf32>, vector<8x16xf32>, vector<8x8xf32> -> vector<8x8xf32>
    %cst_13 = arith.constant dense<0xFF800000> : vector<8xf32>
    %29 = vector.multi_reduction <maximumf>, %28, %cst_13 [1] : vector<8x8xf32> to vector<8xf32>
    %30 = vector.shape_cast %29 : vector<8xf32> to vector<8x1xf32>
    %31 = vector.broadcast %30 : vector<8x1xf32> to vector<8x8xf32>
    %32 = arith.subf %28, %31 : vector<8x8xf32>
    %33 = math.exp %32 : vector<8x8xf32>
    %cst_14 = arith.constant dense<0.000000e+00> : vector<8xf32>
    %34 = vector.multi_reduction <add>, %33, %cst_14 [1] : vector<8x8xf32> to vector<8xf32>
    %35 = vector.shape_cast %34 : vector<8xf32> to vector<8x1xf32>
    %36 = tpu.reciprocal %35 {approx = true} : vector<8x1xf32> -> vector<8x1xf32>
    %37 = vector.broadcast %36 : vector<8x1xf32> to vector<8x8xf32>
    %38 = arith.mulf %33, %37 : vector<8x8xf32>
    %39 = vector.extract_strided_slice %10 {offsets = [0, 16], sizes = [8, 16], strides = [1, 1]} : vector<8x128xf32> to vector<8x16xf32>
    %cst_15 = arith.constant dense<0.000000e+00> : vector<8x16xf32>
    %40 = tpu.matmul %38, %39, %cst_15 {dimension_numbers = #tpu.dot_dimension_numbers<[1], [0], [0], [1], [0, 0, 1, 1], [], []>} : vector<8x8xf32>, vector<8x16xf32>, vector<8x16xf32> -> vector<8x16xf32>
    %41 = vector.extract_strided_slice %4 {offsets = [0, 32], sizes = [8, 16], strides = [1, 1]} : vector<8x128xf32> to vector<8x16xf32>
    %42 = vector.extract_strided_slice %7 {offsets = [0, 32], sizes = [8, 16], strides = [1, 1]} : vector<8x128xf32> to vector<8x16xf32>
    %cst_16 = arith.constant dense<0.000000e+00> : vector<8x8xf32>
    %43 = tpu.matmul %41, %42, %cst_16 {dimension_numbers = #tpu.dot_dimension_numbers<[1], [1], [0], [0], [0, 0, 1, 0], [], []>} : vector<8x16xf32>, vector<8x16xf32>, vector<8x8xf32> -> vector<8x8xf32>
    %cst_17 = arith.constant dense<0xFF800000> : vector<8xf32>
    %44 = vector.multi_reduction <maximumf>, %43, %cst_17 [1] : vector<8x8xf32> to vector<8xf32>
    %45 = vector.shape_cast %44 : vector<8xf32> to vector<8x1xf32>
    %46 = vector.broadcast %45 : vector<8x1xf32> to vector<8x8xf32>
    %47 = arith.subf %43, %46 : vector<8x8xf32>
    %48 = math.exp %47 : vector<8x8xf32>
    %cst_18 = arith.constant dense<0.000000e+00> : vector<8xf32>
    %49 = vector.multi_reduction <add>, %48, %cst_18 [1] : vector<8x8xf32> to vector<8xf32>
    %50 = vector.shape_cast %49 : vector<8xf32> to vector<8x1xf32>
    %51 = tpu.reciprocal %50 {approx = true} : vector<8x1xf32> -> vector<8x1xf32>
    %52 = vector.broadcast %51 : vector<8x1xf32> to vector<8x8xf32>
    %53 = arith.mulf %48, %52 : vector<8x8xf32>
    %54 = vector.extract_strided_slice %10 {offsets = [0, 32], sizes = [8, 16], strides = [1, 1]} : vector<8x128xf32> to vector<8x16xf32>
    %cst_19 = arith.constant dense<0.000000e+00> : vector<8x16xf32>
    %55 = tpu.matmul %53, %54, %cst_19 {dimension_numbers = #tpu.dot_dimension_numbers<[1], [0], [0], [1], [0, 0, 1, 1], [], []>} : vector<8x8xf32>, vector<8x16xf32>, vector<8x16xf32> -> vector<8x16xf32>
    %56 = vector.extract_strided_slice %4 {offsets = [0, 48], sizes = [8, 16], strides = [1, 1]} : vector<8x128xf32> to vector<8x16xf32>
    %57 = vector.extract_strided_slice %7 {offsets = [0, 48], sizes = [8, 16], strides = [1, 1]} : vector<8x128xf32> to vector<8x16xf32>
    %cst_20 = arith.constant dense<0.000000e+00> : vector<8x8xf32>
    %58 = tpu.matmul %56, %57, %cst_20 {dimension_numbers = #tpu.dot_dimension_numbers<[1], [1], [0], [0], [0, 0, 1, 0], [], []>} : vector<8x16xf32>, vector<8x16xf32>, vector<8x8xf32> -> vector<8x8xf32>
    %cst_21 = arith.constant dense<0xFF800000> : vector<8xf32>
    %59 = vector.multi_reduction <maximumf>, %58, %cst_21 [1] : vector<8x8xf32> to vector<8xf32>
    %60 = vector.shape_cast %59 : vector<8xf32> to vector<8x1xf32>
    %61 = vector.broadcast %60 : vector<8x1xf32> to vector<8x8xf32>
    %62 = arith.subf %58, %61 : vector<8x8xf32>
    %63 = math.exp %62 : vector<8x8xf32>
    %cst_22 = arith.constant dense<0.000000e+00> : vector<8xf32>
    %64 = vector.multi_reduction <add>, %63, %cst_22 [1] : vector<8x8xf32> to vector<8xf32>
    %65 = vector.shape_cast %64 : vector<8xf32> to vector<8x1xf32>
    %66 = tpu.reciprocal %65 {approx = true} : vector<8x1xf32> -> vector<8x1xf32>
    %67 = vector.broadcast %66 : vector<8x1xf32> to vector<8x8xf32>
    %68 = arith.mulf %63, %67 : vector<8x8xf32>
    %69 = vector.extract_strided_slice %10 {offsets = [0, 48], sizes = [8, 16], strides = [1, 1]} : vector<8x128xf32> to vector<8x16xf32>
    %cst_23 = arith.constant dense<0.000000e+00> : vector<8x16xf32>
    %70 = tpu.matmul %68, %69, %cst_23 {dimension_numbers = #tpu.dot_dimension_numbers<[1], [0], [0], [1], [0, 0, 1, 1], [], []>} : vector<8x8xf32>, vector<8x16xf32>, vector<8x16xf32> -> vector<8x16xf32>
    %71 = vector.extract_strided_slice %4 {offsets = [0, 64], sizes = [8, 16], strides = [1, 1]} : vector<8x128xf32> to vector<8x16xf32>
    %72 = vector.extract_strided_slice %7 {offsets = [0, 64], sizes = [8, 16], strides = [1, 1]} : vector<8x128xf32> to vector<8x16xf32>
    %cst_24 = arith.constant dense<0.000000e+00> : vector<8x8xf32>
    %73 = tpu.matmul %71, %72, %cst_24 {dimension_numbers = #tpu.dot_dimension_numbers<[1], [1], [0], [0], [0, 0, 1, 0], [], []>} : vector<8x16xf32>, vector<8x16xf32>, vector<8x8xf32> -> vector<8x8xf32>
    %cst_25 = arith.constant dense<0xFF800000> : vector<8xf32>
    %74 = vector.multi_reduction <maximumf>, %73, %cst_25 [1] : vector<8x8xf32> to vector<8xf32>
    %75 = vector.shape_cast %74 : vector<8xf32> to vector<8x1xf32>
    %76 = vector.broadcast %75 : vector<8x1xf32> to vector<8x8xf32>
    %77 = arith.subf %73, %76 : vector<8x8xf32>
    %78 = math.exp %77 : vector<8x8xf32>
    %cst_26 = arith.constant dense<0.000000e+00> : vector<8xf32>
    %79 = vector.multi_reduction <add>, %78, %cst_26 [1] : vector<8x8xf32> to vector<8xf32>
    %80 = vector.shape_cast %79 : vector<8xf32> to vector<8x1xf32>
    %81 = tpu.reciprocal %80 {approx = true} : vector<8x1xf32> -> vector<8x1xf32>
    %82 = vector.broadcast %81 : vector<8x1xf32> to vector<8x8xf32>
    %83 = arith.mulf %78, %82 : vector<8x8xf32>
    %84 = vector.extract_strided_slice %10 {offsets = [0, 64], sizes = [8, 16], strides = [1, 1]} : vector<8x128xf32> to vector<8x16xf32>
    %cst_27 = arith.constant dense<0.000000e+00> : vector<8x16xf32>
    %85 = tpu.matmul %83, %84, %cst_27 {dimension_numbers = #tpu.dot_dimension_numbers<[1], [0], [0], [1], [0, 0, 1, 1], [], []>} : vector<8x8xf32>, vector<8x16xf32>, vector<8x16xf32> -> vector<8x16xf32>
    %86 = vector.extract_strided_slice %4 {offsets = [0, 80], sizes = [8, 16], strides = [1, 1]} : vector<8x128xf32> to vector<8x16xf32>
    %87 = vector.extract_strided_slice %7 {offsets = [0, 80], sizes = [8, 16], strides = [1, 1]} : vector<8x128xf32> to vector<8x16xf32>
    %cst_28 = arith.constant dense<0.000000e+00> : vector<8x8xf32>
    %88 = tpu.matmul %86, %87, %cst_28 {dimension_numbers = #tpu.dot_dimension_numbers<[1], [1], [0], [0], [0, 0, 1, 0], [], []>} : vector<8x16xf32>, vector<8x16xf32>, vector<8x8xf32> -> vector<8x8xf32>
    %cst_29 = arith.constant dense<0xFF800000> : vector<8xf32>
    %89 = vector.multi_reduction <maximumf>, %88, %cst_29 [1] : vector<8x8xf32> to vector<8xf32>
    %90 = vector.shape_cast %89 : vector<8xf32> to vector<8x1xf32>
    %91 = vector.broadcast %90 : vector<8x1xf32> to vector<8x8xf32>
    %92 = arith.subf %88, %91 : vector<8x8xf32>
    %93 = math.exp %92 : vector<8x8xf32>
    %cst_30 = arith.constant dense<0.000000e+00> : vector<8xf32>
    %94 = vector.multi_reduction <add>, %93, %cst_30 [1] : vector<8x8xf32> to vector<8xf32>
    %95 = vector.shape_cast %94 : vector<8xf32> to vector<8x1xf32>
    %96 = tpu.reciprocal %95 {approx = true} : vector<8x1xf32> -> vector<8x1xf32>
    %97 = vector.broadcast %96 : vector<8x1xf32> to vector<8x8xf32>
    %98 = arith.mulf %93, %97 : vector<8x8xf32>
    %99 = vector.extract_strided_slice %10 {offsets = [0, 80], sizes = [8, 16], strides = [1, 1]} : vector<8x128xf32> to vector<8x16xf32>
    %cst_31 = arith.constant dense<0.000000e+00> : vector<8x16xf32>
    %100 = tpu.matmul %98, %99, %cst_31 {dimension_numbers = #tpu.dot_dimension_numbers<[1], [0], [0], [1], [0, 0, 1, 1], [], []>} : vector<8x8xf32>, vector<8x16xf32>, vector<8x16xf32> -> vector<8x16xf32>
    %101 = vector.extract_strided_slice %4 {offsets = [0, 96], sizes = [8, 16], strides = [1, 1]} : vector<8x128xf32> to vector<8x16xf32>
    %102 = vector.extract_strided_slice %7 {offsets = [0, 96], sizes = [8, 16], strides = [1, 1]} : vector<8x128xf32> to vector<8x16xf32>
    %cst_32 = arith.constant dense<0.000000e+00> : vector<8x8xf32>
    %103 = tpu.matmul %101, %102, %cst_32 {dimension_numbers = #tpu.dot_dimension_numbers<[1], [1], [0], [0], [0, 0, 1, 0], [], []>} : vector<8x16xf32>, vector<8x16xf32>, vector<8x8xf32> -> vector<8x8xf32>
    %cst_33 = arith.constant dense<0xFF800000> : vector<8xf32>
    %104 = vector.multi_reduction <maximumf>, %103, %cst_33 [1] : vector<8x8xf32> to vector<8xf32>
    %105 = vector.shape_cast %104 : vector<8xf32> to vector<8x1xf32>
    %106 = vector.broadcast %105 : vector<8x1xf32> to vector<8x8xf32>
    %107 = arith.subf %103, %106 : vector<8x8xf32>
    %108 = math.exp %107 : vector<8x8xf32>
    %cst_34 = arith.constant dense<0.000000e+00> : vector<8xf32>
    %109 = vector.multi_reduction <add>, %108, %cst_34 [1] : vector<8x8xf32> to vector<8xf32>
    %110 = vector.shape_cast %109 : vector<8xf32> to vector<8x1xf32>
    %111 = tpu.reciprocal %110 {approx = true} : vector<8x1xf32> -> vector<8x1xf32>
    %112 = vector.broadcast %111 : vector<8x1xf32> to vector<8x8xf32>
    %113 = arith.mulf %108, %112 : vector<8x8xf32>
    %114 = vector.extract_strided_slice %10 {offsets = [0, 96], sizes = [8, 16], strides = [1, 1]} : vector<8x128xf32> to vector<8x16xf32>
    %cst_35 = arith.constant dense<0.000000e+00> : vector<8x16xf32>
    %115 = tpu.matmul %113, %114, %cst_35 {dimension_numbers = #tpu.dot_dimension_numbers<[1], [0], [0], [1], [0, 0, 1, 1], [], []>} : vector<8x8xf32>, vector<8x16xf32>, vector<8x16xf32> -> vector<8x16xf32>
    %116 = vector.extract_strided_slice %4 {offsets = [0, 112], sizes = [8, 16], strides = [1, 1]} : vector<8x128xf32> to vector<8x16xf32>
    %117 = vector.extract_strided_slice %7 {offsets = [0, 112], sizes = [8, 16], strides = [1, 1]} : vector<8x128xf32> to vector<8x16xf32>
    %cst_36 = arith.constant dense<0.000000e+00> : vector<8x8xf32>
    %118 = tpu.matmul %116, %117, %cst_36 {dimension_numbers = #tpu.dot_dimension_numbers<[1], [1], [0], [0], [0, 0, 1, 0], [], []>} : vector<8x16xf32>, vector<8x16xf32>, vector<8x8xf32> -> vector<8x8xf32>
    %cst_37 = arith.constant dense<0xFF800000> : vector<8xf32>
    %119 = vector.multi_reduction <maximumf>, %118, %cst_37 [1] : vector<8x8xf32> to vector<8xf32>
    %120 = vector.shape_cast %119 : vector<8xf32> to vector<8x1xf32>
    %121 = vector.broadcast %120 : vector<8x1xf32> to vector<8x8xf32>
    %122 = arith.subf %118, %121 : vector<8x8xf32>
    %123 = math.exp %122 : vector<8x8xf32>
    %cst_38 = arith.constant dense<0.000000e+00> : vector<8xf32>
    %124 = vector.multi_reduction <add>, %123, %cst_38 [1] : vector<8x8xf32> to vector<8xf32>
    %125 = vector.shape_cast %124 : vector<8xf32> to vector<8x1xf32>
    %126 = tpu.reciprocal %125 {approx = true} : vector<8x1xf32> -> vector<8x1xf32>
    %127 = vector.broadcast %126 : vector<8x1xf32> to vector<8x8xf32>
    %128 = arith.mulf %123, %127 : vector<8x8xf32>
    %129 = vector.extract_strided_slice %10 {offsets = [0, 112], sizes = [8, 16], strides = [1, 1]} : vector<8x128xf32> to vector<8x16xf32>
    %cst_39 = arith.constant dense<0.000000e+00> : vector<8x16xf32>
    %130 = tpu.matmul %128, %129, %cst_39 {dimension_numbers = #tpu.dot_dimension_numbers<[1], [0], [0], [1], [0, 0, 1, 1], [], []>} : vector<8x8xf32>, vector<8x16xf32>, vector<8x16xf32> -> vector<8x16xf32>
    %131 = tpu.concatenate %25, %40, %55, %70, %85, %100, %115, %130 in 1 : vector<8x16xf32>, vector<8x16xf32>, vector<8x16xf32>, vector<8x16xf32>, vector<8x16xf32>, vector<8x16xf32>, vector<8x16xf32>, vector<8x16xf32> -> vector<8x128xf32>
    %132 = arith.truncf %131 : vector<8x128xf32> to vector<8x128xbf16>
    %c0_40 = arith.constant 0 : index
    %c0_41 = arith.constant 0 : index
    %c0_42 = arith.constant 0 : index
    %133 = vector.load %arg4[%c0_40, %c0_41, %c0_42] : memref<1x8x128xbf16, #tpu.memory_space<vmem>>, vector<1x8x128xbf16>
    %134 = vector.shape_cast %133 : vector<1x8x128xbf16> to vector<8x128xbf16>
    %135 = vector.shape_cast %132 : vector<8x128xbf16> to vector<1x8x128xbf16>
    tpu.vector_store %arg4[%c0_40, %c0_41, %c0_42], %135 {strides = array<i32>} : memref<1x8x128xbf16, #tpu.memory_space<vmem>>, vector<1x8x128xbf16>,
    return
  }
  func.func @transform_0(%arg0: i32) -> (i32, i32, i32) {
    %c0_i32 = arith.constant 0 : i32
    %c0_i32_0 = arith.constant 0 : i32
    %c0_i32_1 = arith.constant 0 : i32
    return %arg0, %c0_i32, %c0_i32_0 : i32, i32, i32
  }
  func.func @transform_1(%arg0: i32) -> (i32, i32, i32) {
    %c0_i32 = arith.constant 0 : i32
    %c1_i32 = arith.constant 1 : i32
    %c0_i32_0 = arith.constant 0 : i32
    return %arg0, %c0_i32, %c1_i32 : i32, i32, i32
  }
  func.func @transform_2(%arg0: i32) -> (i32, i32, i32) {
    %c0_i32 = arith.constant 0 : i32
    %c2_i32 = arith.constant 2 : i32
    %c0_i32_0 = arith.constant 0 : i32
    return %arg0, %c0_i32, %c2_i32 : i32, i32, i32
  }
  func.func @transform_3(%arg0: i32) -> (i32, i32, i32) {
    %c0_i32 = arith.constant 0 : i32
    %c0_i32_0 = arith.constant 0 : i32
    %c0_i32_1 = arith.constant 0 : i32
    return %arg0, %c0_i32, %c0_i32_0 : i32, i32, i32
  }
}

module attributes {stable_mosaic.version = 11 : i64} {
  func.func @_dense_kernel(%arg0: i32, %arg1: i32, %arg2: i32, %arg3: memref<16x128xbf16, #tpu.memory_space<vmem>>, %arg4: memref<128x512xbf16, #tpu.memory_space<vmem>>, %arg5: memref<1x512xf32, #tpu.memory_space<vmem>>, %arg6: memref<16x512xbf16, #tpu.memory_space<vmem>>, %arg7: memref<16x512xf32, #tpu.memory_space<vmem>>) attributes {dimension_semantics = [#tpu.dimension_semantics<parallel>, #tpu.dimension_semantics<parallel>, #tpu.dimension_semantics<arbitrary>], iteration_bounds = array<i64: 1, 1, 1>, scalar_prefetch = 0 : i64, scratch_operands = 1 : i64, tpu.core_type = #tpu.core_type<tc>, window_params = [{transform_indices = @transform_0, window_bounds = array<i64: 16, 128>}, {transform_indices = @transform_1, window_bounds = array<i64: 128, 512>}, {transform_indices = @transform_2, window_bounds = array<i64: 1, 512>}, {transform_indices = @transform_3, window_bounds = array<i64: 16, 512>}]} {
    %c0_i32 = arith.constant 0 : i32
    %0 = arith.cmpi eq, %arg2, %c0_i32 : i32
    %1 = arith.extui %0 : i1 to i32
    %c0_i32_0 = arith.constant 0 : i32
    %2 = arith.cmpi ne, %1, %c0_i32_0 : i32
    scf.if %2 {
      %cst_10 = arith.constant 0.000000e+00 : f32
      %12 = vector.broadcast %cst_10 : f32 to vector<16x512xf32>
      %c0_11 = arith.constant 0 : index
      %c0_12 = arith.constant 0 : index
      %13 = vector.load %arg7[%c0_11, %c0_12] : memref<16x512xf32, #tpu.memory_space<vmem>>, vector<16x512xf32>
      tpu.vector_store %arg7[%c0_11, %c0_12], %12 {strides = array<i32>} : memref<16x512xf32, #tpu.memory_space<vmem>>, vector<16x512xf32>,
    } else {
    }
    %c0 = arith.constant 0 : index
    %c0_1 = arith.constant 0 : index
    %3 = vector.load %arg7[%c0, %c0_1] : memref<16x512xf32, #tpu.memory_space<vmem>>, vector<16x512xf32>
    %c0_2 = arith.constant 0 : index
    %c0_3 = arith.constant 0 : index
    %4 = vector.load %arg3[%c0_2, %c0_3] : memref<16x128xbf16, #tpu.memory_space<vmem>>, vector<16x128xbf16>
    %c0_4 = arith.constant 0 : index
    %c0_5 = arith.constant 0 : index
    %5 = vector.load %arg4[%c0_4, %c0_5] : memref<128x512xbf16, #tpu.memory_space<vmem>>, vector<128x512xbf16>
    %cst = arith.constant dense<0.000000e+00> : vector<16x512xf32>
    %6 = tpu.matmul %4, %5, %cst {dimension_numbers = #tpu.dot_dimension_numbers<[1], [0], [0], [1], [0, 0, 1, 1], [], []>} : vector<16x128xbf16>, vector<128x512xbf16>, vector<16x512xf32> -> vector<16x512xf32>
    %7 = arith.addf %3, %6 : vector<16x512xf32>
    %c0_6 = arith.constant 0 : index
    %c0_7 = arith.constant 0 : index
    %8 = vector.load %arg7[%c0_6, %c0_7] : memref<16x512xf32, #tpu.memory_space<vmem>>, vector<16x512xf32>
    tpu.vector_store %arg7[%c0_6, %c0_7], %7 {strides = array<i32>} : memref<16x512xf32, #tpu.memory_space<vmem>>, vector<16x512xf32>,
    %c0_i32_8 = arith.constant 0 : i32
    %9 = arith.cmpi eq, %arg2, %c0_i32_8 : i32
    %10 = arith.extui %9 : i1 to i32
    %c0_i32_9 = arith.constant 0 : i32
    %11 = arith.cmpi ne, %10, %c0_i32_9 : i32
    scf.if %11 {
      %c0_10 = arith.constant 0 : index
      %c0_11 = arith.constant 0 : index
      %12 = vector.load %arg7[%c0_10, %c0_11] : memref<16x512xf32, #tpu.memory_space<vmem>>, vector<16x512xf32>
      %c0_12 = arith.constant 0 : index
      %c0_13 = arith.constant 0 : index
      %13 = vector.load %arg5[%c0_12, %c0_13] : memref<1x512xf32, #tpu.memory_space<vmem>>, vector<1x512xf32>
      %14 = vector.broadcast %13 : vector<1x512xf32> to vector<16x512xf32>
      %15 = arith.addf %12, %14 : vector<16x512xf32>
      %cst_14 = arith.constant 0.000000e+00 : f32
      %16 = vector.broadcast %cst_14 : f32 to vector<16x512xf32>
      %17 = arith.maximumf %15, %16 : vector<16x512xf32>
      %18 = arith.truncf %17 : vector<16x512xf32> to vector<16x512xbf16>
      %c0_15 = arith.constant 0 : index
      %c0_16 = arith.constant 0 : index
      %19 = vector.load %arg6[%c0_15, %c0_16] : memref<16x512xbf16, #tpu.memory_space<vmem>>, vector<16x512xbf16>
      tpu.vector_store %arg6[%c0_15, %c0_16], %18 {strides = array<i32>} : memref<16x512xbf16, #tpu.memory_space<vmem>>, vector<16x512xbf16>,
    } else {
    }
    return
  }
  func.func @transform_0(%arg0: i32, %arg1: i32, %arg2: i32) -> (i32, i32) {
    %c0_i32 = arith.constant 0 : i32
    return %arg0, %arg2 : i32, i32
  }
  func.func @transform_1(%arg0: i32, %arg1: i32, %arg2: i32) -> (i32, i32) {
    %c0_i32 = arith.constant 0 : i32
    return %arg2, %arg1 : i32, i32
  }
  func.func @transform_2(%arg0: i32, %arg1: i32, %arg2: i32) -> (i32, i32) {
    %c0_i32 = arith.constant 0 : i32
    %c0_i32_0 = arith.constant 0 : i32
    return %c0_i32, %arg1 : i32, i32
  }
  func.func @transform_3(%arg0: i32, %arg1: i32, %arg2: i32) -> (i32, i32) {
    %c0_i32 = arith.constant 0 : i32
    return %arg0, %arg1 : i32, i32
  }
}

module attributes {stable_mosaic.version = 11 : i64} {
  func.func @_mean_kernel(%arg0: i32, %arg1: memref<2x8x128xbf16, #tpu.memory_space<vmem>>, %arg2: memref<2x128xbf16, #tpu.memory_space<vmem>>) attributes {dimension_semantics = [#tpu.dimension_semantics<arbitrary>], iteration_bounds = array<i64: 1>, scalar_prefetch = 0 : i64, scratch_operands = 0 : i64, tpu.core_type = #tpu.core_type<tc>, window_params = [{pipeline_mode = #tpu.pipeline_mode<synchronous>, transform_indices = @transform_0, window_bounds = array<i64: 2, 8, 128>}, {pipeline_mode = #tpu.pipeline_mode<synchronous>, transform_indices = @transform_1, window_bounds = array<i64: 2, 128>}]} {
    %c0 = arith.constant 0 : index
    %c0_0 = arith.constant 0 : index
    %c0_1 = arith.constant 0 : index
    %0 = vector.load %arg1[%c0, %c0_0, %c0_1] : memref<2x8x128xbf16, #tpu.memory_space<vmem>>, vector<2x8x128xbf16>
    %1 = arith.extf %0 : vector<2x8x128xbf16> to vector<2x8x128xf32>
    %cst = arith.constant dense<0.000000e+00> : vector<2x128xf32>
    %2 = vector.multi_reduction <add>, %1, %cst [1] : vector<2x8x128xf32> to vector<2x128xf32>
    %cst_2 = arith.constant 8.000000e+00 : f32
    %3 = vector.broadcast %cst_2 : f32 to vector<2x128xf32>
    %4 = arith.divf %2, %3 : vector<2x128xf32>
    %5 = arith.truncf %4 : vector<2x128xf32> to vector<2x128xbf16>
    %c0_3 = arith.constant 0 : index
    %c0_4 = arith.constant 0 : index
    %6 = vector.load %arg2[%c0_3, %c0_4] : memref<2x128xbf16, #tpu.memory_space<vmem>>, vector<2x128xbf16>
    tpu.vector_store %arg2[%c0_3, %c0_4], %5 {strides = array<i32>} : memref<2x128xbf16, #tpu.memory_space<vmem>>, vector<2x128xbf16>,
    return
  }
  func.func @transform_0(%arg0: i32) -> (i32, i32, i32) {
    %c0_i32 = arith.constant 0 : i32
    %c0_i32_0 = arith.constant 0 : i32
    %c0_i32_1 = arith.constant 0 : i32
    %c0_i32_2 = arith.constant 0 : i32
    return %c0_i32, %c0_i32_0, %c0_i32_1 : i32, i32, i32
  }
  func.func @transform_1(%arg0: i32) -> (i32, i32) {
    %c0_i32 = arith.constant 0 : i32
    %c0_i32_0 = arith.constant 0 : i32
    %c0_i32_1 = arith.constant 0 : i32
    return %c0_i32, %c0_i32_0 : i32, i32
  }
}

module attributes {stable_mosaic.version = 11 : i64} {
  func.func @_dense_kernel(%arg0: i32, %arg1: i32, %arg2: i32, %arg3: memref<2x128xbf16, #tpu.memory_space<vmem>>, %arg4: memref<128x128xbf16, #tpu.memory_space<vmem>>, %arg5: memref<1x128xf32, #tpu.memory_space<vmem>>, %arg6: memref<2x128xf32, #tpu.memory_space<vmem>>, %arg7: memref<2x128xf32, #tpu.memory_space<vmem>>) attributes {dimension_semantics = [#tpu.dimension_semantics<parallel>, #tpu.dimension_semantics<parallel>, #tpu.dimension_semantics<arbitrary>], iteration_bounds = array<i64: 1, 1, 1>, scalar_prefetch = 0 : i64, scratch_operands = 1 : i64, tpu.core_type = #tpu.core_type<tc>, window_params = [{transform_indices = @transform_0, window_bounds = array<i64: 2, 128>}, {transform_indices = @transform_1, window_bounds = array<i64: 128, 128>}, {transform_indices = @transform_2, window_bounds = array<i64: 1, 128>}, {transform_indices = @transform_3, window_bounds = array<i64: 2, 128>}]} {
    %c0_i32 = arith.constant 0 : i32
    %0 = arith.cmpi eq, %arg2, %c0_i32 : i32
    %1 = arith.extui %0 : i1 to i32
    %c0_i32_0 = arith.constant 0 : i32
    %2 = arith.cmpi ne, %1, %c0_i32_0 : i32
    scf.if %2 {
      %cst_10 = arith.constant 0.000000e+00 : f32
      %12 = vector.broadcast %cst_10 : f32 to vector<2x128xf32>
      %c0_11 = arith.constant 0 : index
      %c0_12 = arith.constant 0 : index
      %13 = vector.load %arg7[%c0_11, %c0_12] : memref<2x128xf32, #tpu.memory_space<vmem>>, vector<2x128xf32>
      tpu.vector_store %arg7[%c0_11, %c0_12], %12 {strides = array<i32>} : memref<2x128xf32, #tpu.memory_space<vmem>>, vector<2x128xf32>,
    } else {
    }
    %c0 = arith.constant 0 : index
    %c0_1 = arith.constant 0 : index
    %3 = vector.load %arg7[%c0, %c0_1] : memref<2x128xf32, #tpu.memory_space<vmem>>, vector<2x128xf32>
    %c0_2 = arith.constant 0 : index
    %c0_3 = arith.constant 0 : index
    %4 = vector.load %arg3[%c0_2, %c0_3] : memref<2x128xbf16, #tpu.memory_space<vmem>>, vector<2x128xbf16>
    %c0_4 = arith.constant 0 : index
    %c0_5 = arith.constant 0 : index
    %5 = vector.load %arg4[%c0_4, %c0_5] : memref<128x128xbf16, #tpu.memory_space<vmem>>, vector<128x128xbf16>
    %cst = arith.constant dense<0.000000e+00> : vector<2x128xf32>
    %6 = tpu.matmul %4, %5, %cst {dimension_numbers = #tpu.dot_dimension_numbers<[1], [0], [0], [1], [0, 0, 1, 1], [], []>} : vector<2x128xbf16>, vector<128x128xbf16>, vector<2x128xf32> -> vector<2x128xf32>
    %7 = arith.addf %3, %6 : vector<2x128xf32>
    %c0_6 = arith.constant 0 : index
    %c0_7 = arith.constant 0 : index
    %8 = vector.load %arg7[%c0_6, %c0_7] : memref<2x128xf32, #tpu.memory_space<vmem>>, vector<2x128xf32>
    tpu.vector_store %arg7[%c0_6, %c0_7], %7 {strides = array<i32>} : memref<2x128xf32, #tpu.memory_space<vmem>>, vector<2x128xf32>,
    %c0_i32_8 = arith.constant 0 : i32
    %9 = arith.cmpi eq, %arg2, %c0_i32_8 : i32
    %10 = arith.extui %9 : i1 to i32
    %c0_i32_9 = arith.constant 0 : i32
    %11 = arith.cmpi ne, %10, %c0_i32_9 : i32
    scf.if %11 {
      %c0_10 = arith.constant 0 : index
      %c0_11 = arith.constant 0 : index
      %12 = vector.load %arg7[%c0_10, %c0_11] : memref<2x128xf32, #tpu.memory_space<vmem>>, vector<2x128xf32>
      %c0_12 = arith.constant 0 : index
      %c0_13 = arith.constant 0 : index
      %13 = vector.load %arg5[%c0_12, %c0_13] : memref<1x128xf32, #tpu.memory_space<vmem>>, vector<1x128xf32>
      %14 = vector.broadcast %13 : vector<1x128xf32> to vector<2x128xf32>
      %15 = arith.addf %12, %14 : vector<2x128xf32>
      %c0_14 = arith.constant 0 : index
      %c0_15 = arith.constant 0 : index
      %16 = vector.load %arg6[%c0_14, %c0_15] : memref<2x128xf32, #tpu.memory_space<vmem>>, vector<2x128xf32>
      tpu.vector_store %arg6[%c0_14, %c0_15], %15 {strides = array<i32>} : memref<2x128xf32, #tpu.memory_space<vmem>>, vector<2x128xf32>,
    } else {
    }
    return
  }
  func.func @transform_0(%arg0: i32, %arg1: i32, %arg2: i32) -> (i32, i32) {
    %c0_i32 = arith.constant 0 : i32
    return %arg0, %arg2 : i32, i32
  }
  func.func @transform_1(%arg0: i32, %arg1: i32, %arg2: i32) -> (i32, i32) {
    %c0_i32 = arith.constant 0 : i32
    return %arg2, %arg1 : i32, i32
  }
  func.func @transform_2(%arg0: i32, %arg1: i32, %arg2: i32) -> (i32, i32) {
    %c0_i32 = arith.constant 0 : i32
    %c0_i32_0 = arith.constant 0 : i32
    return %c0_i32, %arg1 : i32, i32
  }
  func.func @transform_3(%arg0: i32, %arg1: i32, %arg2: i32) -> (i32, i32) {
    %c0_i32 = arith.constant 0 : i32
    return %arg0, %arg1 : i32, i32
  }
}

</mosaic_0001>

<llo_original>
// kernel: model_forward.31
$region0: #{model_forward.31}
  #allocation0 [shape = 'u32[]', space=smem, size = 0x4, offset = 0x4, fixed_abs, tag = 'smem constant byte address 0x4 - core index']
  #allocation1 [shape = 'u32[144,128]{1,0:T(1,128)}', space=vmem, size = 0x12000, scoped, tag = 'internal scratch']
  %s0 = inlined_call_operand.vmem [shape: bf16[16,128], index: 0, kind: input, shape index: {}]
  %s1 = inlined_call_operand.vmem [shape: f32[1,128], index: 1, kind: input, shape index: {}]
  %s2 = inlined_call_operand.vmem [shape: f32[1,128], index: 2, kind: input, shape index: {}]
  %s3 = inlined_call_operand.vmem [shape: bf16[16,128], index: 3, kind: output, shape index: {}]
  %s4 = sld [smem:[#allocation0]]
  $region22: #{model_forward.31} parent=0
    _
  %s6 = ssub.s32 1, %s4
  %s7 = scalar_select 0, %s6, %s4
  // Predicated region
  $region2: #{model_forward.31} parent=0 // pred_check
    _
  $region3: #{model_forward.31} parent=0 // pred_check_branch
    %9 = sbr.rel (0) target = $region5
  $region4: #{model_forward.31} parent=0 // pred_region
    _
  $region5: #{model_forward.31} parent=0 // pred_fallthru
    _
  // Predicated region
  $region6: #{model_forward.31} parent=0 // pred_check
    _
  $region7: #{model_forward.31} parent=0 // pred_check_branch
    %11 = sbr.rel (0) target = $region9
  $region8: #{model_forward.31} parent=0 // pred_region
    _
  $region9: #{model_forward.31} parent=0 // pred_fallthru
    _
  // Predicated region
  $region10: #{model_forward.31} parent=0 // pred_check
    _
  $region11: #{model_forward.31} parent=0 // pred_check_branch
    %13 = sbr.rel (0) target = $region13
  $region12: #{model_forward.31} parent=0 // pred_region
    _
  $region13: #{model_forward.31} parent=0 // pred_fallthru
    _
  %v14 = vld [vmem:[%s0] sm:$0xf]
  %v15 = vld [vmem:[%s0 + $0x4] sm:$0xf]
  %v16 = vunpack.c.l.bf16 %v14
  %v17 = vunpack.c.l.bf16 %v15
  %v18 = vld [vmem:[%s1] sm:$0x1]
  %v19 = vld [vmem:[%s2] sm:$0x1]
  %20 = vadd.xlane.f32.xlu0 %v16
  %v21 = vpop.xlane.xlu0 %20
  %22 = vadd.xlane.f32.xlu0 %v17
  %v23 = vpop.xlane.xlu0 %22
  %v24 = vrcp.pop 128.0
  %v25 = vmul.f32 %v21, %v24
  %v26 = vmul.f32 %v23, %v24
  %v27 = vsub.f32 %v16, %v25
  %v28 = vsub.f32 %v17, %v26
  %v29 = vmul.f32 %v27, %v27
  %v30 = vmul.f32 %v28, %v28
  %31 = vadd.xlane.f32.xlu0 %v29
  %v32 = vpop.xlane.xlu0 %31
  %33 = vadd.xlane.f32.xlu0 %v30
  %v34 = vpop.xlane.xlu0 %33
  %v35 = vmul.f32 %v32, %v24
  %v36 = vmul.f32 %v34, %v24
  %v37 = vadd.f32 %v35, 1e-12
  %v38 = vadd.f32 %v36, 1e-12
  %v39 = vrsqrt.pop %v37
  %v40 = vrsqrt.pop %v38
  %v41 = vmul.f32 %v27, %v39
  %v42 = vmul.f32 %v28, %v40
  %v44 = vlaneseq
  %v45 = vshrl.u32 %v44, 7
  %v46 = vsub.s32 0, %v45
  %v47 = vrot.slane %v18, %v46
  %v49 = vmul.f32 %v41, %v47
  %v50 = vmul.f32 %v42, %v47
  %v52 = vlaneseq
  %v53 = vshrl.u32 %v52, 7
  %v54 = vsub.s32 0, %v53
  %v55 = vrot.slane %v19, %v54
  %v57 = vadd.f32 %v49, %v55
  %v58 = vadd.f32 %v50, %v55
  %v59 = vpack.c.bf16 %v58, %v57
  %v61 = vunpack.c.l.b16 %v59
  %v62 = vunpack.c.h.b16 %v59
  %v63 = vpack.c.b16 %v61, %v61
  %v64 = vpack.c.b16 %v62, %v62
  %67 = vst [vmem:[%s3] sm:$0xf] %v63
  %68 = vst [vmem:[%s3 + $0x4] sm:$0xf] %v64
  // Predicated region
  $region14: #{model_forward.31} parent=0 // pred_check
    _
  $region15: #{model_forward.31} parent=0 // pred_check_branch
    %70 = sbr.rel (0) target = $region17
  $region16: #{model_forward.31} parent=0 // pred_region
    _
  $region17: #{model_forward.31} parent=0 // pred_fallthru
    _
  // Predicated region
  $region18: #{model_forward.31} parent=0 // pred_check
    _
  $region19: #{model_forward.31} parent=0 // pred_check_branch
    %72 = sbr.rel (0) target = $region21
  $region20: #{model_forward.31} parent=0 // pred_region
    _
  $region21: #{model_forward.31} parent=0 // pred_fallthru
    _

// kernel: model_forward.32
$region0: #{model_forward.32}
  #allocation0 [shape = 'u32[]', space=smem, size = 0x4, offset = 0x4, fixed_abs, tag = 'smem constant byte address 0x4 - core index']
  #allocation1 [shape = 'u32[144,128]{1,0:T(1,128)}', space=vmem, size = 0x12000, scoped, tag = 'internal scratch']
  #allocation2 [shape = 'f32[16,128]{1,0:T(8,128)}', space=vmem, size = 0x2000, scoped, tag = 'scratch operand']
  %s0 = inlined_call_operand.vmem [shape: bf16[16,128], index: 0, kind: input, shape index: {}]
  %s1 = inlined_call_operand.vmem [shape: bf16[128,384], index: 1, kind: input, shape index: {}]
  %s2 = inlined_call_operand.vmem [shape: f32[1,384], index: 2, kind: input, shape index: {}]
  %s3 = inlined_call_operand.vmem [shape: bf16[16,384], index: 3, kind: output, shape index: {}]
  %s4 = sld [smem:[#allocation0]]
  $region131: #{model_forward.32} parent=0
    _
  %s6 = ssub.s32 1, %s4
  %s7 = scalar_select 0, %s6, %s4
  $region1: #{model_forward.32} parent=0
    #allocation3 [shape = 'u8[65536]{0}', space=vmem, size = 0x10000, scoped, tag = 'input window, operand 1']
    #allocation4 [shape = 'u8[8192]{0}', space=vmem, size = 0x2000, scoped, tag = 'output window, operand 0']
    loop: start=0, step=1, limit=5
    $region2: #{model_forward.32} parent=1 // loop_pre_header
      _
    $region3: #{model_forward.32} parent=1 // loop_header
      %s9 = sphi 0, %s13
      %p10 = scmp.ge.s32.totalorder %s9, 5
      %s16 = sphi 0, %s35
      %s17 = sphi 0, %s31
      %s18 = sphi 0, %s27
      %s19 = sphi 0, %s16
      %s20 = sphi 0, %s17
      %s21 = sphi 0, %s18
      %s22 = sphi 0, %s19
      %s23 = sphi 0, %s20
      %s24 = sphi 0, %s21
      %s40 = sphi 0, %s42
      %s43 = sphi 0, %s40
      %s44 = sphi 0, %s43
      %s60 = sphi 0, %s44
      %s68 = sphi 0, %s70
      %s71 = sphi 0, %s68
      %s72 = sphi 0, %s71
      %s88 = sphi 0, %s72
      %s94 = sphi 0, %s96
      %s97 = sphi 0, %s94
      %s98 = sphi 0, %s97
      %s114 = sphi 0, %s98
      %s122 = sphi 0, %s124
      %s125 = sphi 0, %s122
      %s126 = sphi 0, %s125
      %s142 = sphi 0, %s126
    $region4: #{model_forward.32} parent=1 // loop_header_branch
      %12 = sbr.rel (%p10) target = $region8
    $region5: #{model_forward.32} parent=1 // loop_body
      %s14 = ssub.s32 %s9, 1
      %s15 = ssub.s32 %s9, 2
      %s25 = sadd.s32 1, %s18
      %p26 = scmp.ge.s32.totalorder %s25, 1
      %s27 = scalar_select %p26, 0, %s25
      %s28 = sadd.s32 1, %s17
      %s29 = scalar_select %p26, %s28, %s17
      %p30 = scmp.ge.s32.totalorder %s29, 3
      %s31 = scalar_select %p30, 0, %s29
      %s32 = sadd.s32 1, %s16
      %s33 = scalar_select %p30, %s32, %s16
      %p34 = scmp.ge.s32.totalorder %s33, 1
      %s35 = scalar_select %p34, 0, %s33
      %s36 = ssub.s32 %s16, %s35
      %s37 = ssub.s32 %s18, %s27
      %s38 = sor.u32 %s36, %s37
      %p39 = scmp.eq.s32.totalorder %s38, 0
      %s41 = sadd.s32 %s40, 1
      %s42 = scalar_select %p39, %s40, %s41
      %p45 = pneg %p39
      %p46 = scmp.eq.s32.totalorder %s9, 2
      %p47 = por %p45, %p46
      %p48 = scmp.ne.s32.totalorder %s40, %s43
      %p49 = scmp.eq.s32.totalorder %s9, 0
      %p50 = por %p48, %p49
      %p51 = scmp.ne.s32.totalorder %s40, %s43
      %p52 = scmp.eq.s32.totalorder %s14, 2
      %p53 = por %p51, %p52
      %p54 = scmp.ne.s32.totalorder %s43, %s44
      %p55 = scmp.eq.s32.totalorder %s14, 0
      %p56 = por %p54, %p55
      %p57 = scmp.ne.s32.totalorder %s43, %s44
      %p58 = scmp.eq.s32.totalorder %s15, 2
      %p59 = por %p57, %p58
      %p61 = scmp.ne.s32.totalorder %s44, %s60
      %p62 = scmp.eq.s32.totalorder %s15, 0
      %p63 = por %p61, %p62
      %s64 = ssub.s32 %s18, %s27
      %s65 = ssub.s32 %s17, %s31
      %s66 = sor.u32 %s64, %s65
      %p67 = scmp.eq.s32.totalorder %s66, 0
      %s69 = sadd.s32 %s68, 1
      %s70 = scalar_select %p67, %s68, %s69
      %p73 = pneg %p67
      %p74 = scmp.eq.s32.totalorder %s9, 2
      %p75 = por %p73, %p74
      %p76 = scmp.ne.s32.totalorder %s68, %s71
      %p77 = scmp.eq.s32.totalorder %s9, 0
      %p78 = por %p76, %p77
      %p79 = scmp.ne.s32.totalorder %s68, %s71
      %p80 = scmp.eq.s32.totalorder %s14, 2
      %p81 = por %p79, %p80
      %p82 = scmp.ne.s32.totalorder %s71, %s72
      %p83 = scmp.eq.s32.totalorder %s14, 0
      %p84 = por %p82, %p83
      %p85 = scmp.ne.s32.totalorder %s71, %s72
      %p86 = scmp.eq.s32.totalorder %s15, 2
      %p87 = por %p85, %p86
      %p89 = scmp.ne.s32.totalorder %s72, %s88
      %p90 = scmp.eq.s32.totalorder %s15, 0
      %p91 = por %p89, %p90
      %s92 = ssub.s32 %s17, %s31
      %p93 = scmp.eq.s32.totalorder %s92, 0
      %s95 = sadd.s32 %s94, 1
      %s96 = scalar_select %p93, %s94, %s95
      %p99 = pneg %p93
      %p100 = scmp.eq.s32.totalorder %s9, 2
      %p101 = por %p99, %p100
      %p102 = scmp.ne.s32.totalorder %s94, %s97
      %p103 = scmp.eq.s32.totalorder %s9, 0
      %p104 = por %p102, %p103
      %p105 = scmp.ne.s32.totalorder %s94, %s97
      %p106 = scmp.eq.s32.totalorder %s14, 2
      %p107 = por %p105, %p106
      %p108 = scmp.ne.s32.totalorder %s97, %s98
      %p109 = scmp.eq.s32.totalorder %s14, 0
      %p110 = por %p108, %p109
      %p111 = scmp.ne.s32.totalorder %s97, %s98
      %p112 = scmp.eq.s32.totalorder %s15, 2
      %p113 = por %p111, %p112
      %p115 = scmp.ne.s32.totalorder %s98, %s114
      %p116 = scmp.eq.s32.totalorder %s15, 0
      %p117 = por %p115, %p116
      %s118 = ssub.s32 %s16, %s35
      %s119 = ssub.s32 %s17, %s31
      %s120 = sor.u32 %s118, %s119
      %p121 = scmp.eq.s32.totalorder %s120, 0
      %s123 = sadd.s32 %s122, 1
      %s124 = scalar_select %p121, %s122, %s123
      %p127 = pneg %p121
      %p128 = scmp.eq.s32.totalorder %s9, 2
      %p129 = por %p127, %p128
      %p130 = scmp.ne.s32.totalorder %s122, %s125
      %p131 = scmp.eq.s32.totalorder %s9, 0
      %p132 = por %p130, %p131
      %p133 = scmp.ne.s32.totalorder %s122, %s125
      %p134 = scmp.eq.s32.totalorder %s14, 2
      %p135 = por %p133, %p134
      %p136 = scmp.ne.s32.totalorder %s125, %s126
      %p137 = scmp.eq.s32.totalorder %s14, 0
      %p138 = por %p136, %p137
      %p139 = scmp.ne.s32.totalorder %s125, %s126
      %p140 = scmp.eq.s32.totalorder %s15, 2
      %p141 = por %p139, %p140
      %p143 = scmp.ne.s32.totalorder %s126, %s142
      %p144 = scmp.eq.s32.totalorder %s15, 0
      %p145 = por %p143, %p144
      %p146 = scmp.le.s32.totalorder 1, %s9
      %p147 = scmp.lt.s32.totalorder %s9, 4
      %p148 = pnand %p146, %p147
      %p149 = pneg %p148
      // Predicated region
      $region9: #{model_forward.32} parent=5 // pred_check
        _
      $region10: #{model_forward.32} parent=5 // pred_check_branch
        %151 = sbr.rel (%p148) target = $region12
      $region11: #{model_forward.32} parent=5 // pred_region
        %s152 = ssub.s32 %s9, 1
        // Predicated region
        $region13: #{model_forward.32} parent=11 // pred_check
          %p153 = pneg %p56
        $region14: #{model_forward.32} parent=11 // pred_check_branch
          %155 = sbr.rel (%p153) target = $region16
        $region15: #{model_forward.32} parent=11 // pred_region
          %s156 = smul.u32 2, %s19
          %p157 = scmp.lt.s32.totalorder %s156, 1
          %s158 = scalar_select %p157, %s156, 1
          %p159 = scmp.lt.s32.totalorder %s21, 0
          %s160 = scalar_select %p159, %s21, 0
          %s161 = sadd.s32 %s160, %s158
          %s162 = smul.addr %s161, 4
          %s163 = scalar_lea.vmem %s0, %s162
          %s164 = smul.u32 2, %s19
        $region16: #{model_forward.32} parent=11 // pred_fallthru
          _
      $region12: #{model_forward.32} parent=5 // pred_fallthru
        _
      %p165 = scmp.lt.s32.totalorder %s9, 3
      // Predicated region
      $region17: #{model_forward.32} parent=5 // pred_check
        %p166 = pneg %p165
      $region18: #{model_forward.32} parent=5 // pred_check_branch
        %168 = sbr.rel (%p166) target = $region20
      $region19: #{model_forward.32} parent=5 // pred_region
        // Predicated region
        $region21: #{model_forward.32} parent=19 // pred_check
          %p169 = pneg %p78
        $region22: #{model_forward.32} parent=19 // pred_check_branch
          %171 = sbr.rel (%p169) target = $region24
        $region23: #{model_forward.32} parent=19 // pred_region
          %s172 = sand.u32 %s68, 1
          %s173 = sand.u32 %s68, 1
          %s174 = smul.addr %s173, 64
          %s175 = scalar_lea.vmem [#allocation3], %s174
          %s176 = smul.u32 16, %s18
          %s177 = smul.addr %s176, 3
          %s178 = sadd.s32 %s17, %s177
          %s179 = smul.addr %s178, 4
          %s180 = scalar_lea.vmem %s1, %s179
          // Predicated region
          $region25: #{model_forward.32} parent=23 // pred_check
            _
          $region26: #{model_forward.32} parent=23 // pred_check_branch
            %182 = sbr.rel (0) target = $region28
          $region27: #{model_forward.32} parent=23 // pred_region
            // Predicated region
            $region29: #{model_forward.32} parent=27 // pred_check
              _
            $region30: #{model_forward.32} parent=27 // pred_check_branch
              %184 = sbr.rel target = $region32
            $region31: #{model_forward.32} parent=27 // pred_region
              // Predicated region
              $region44: #{model_forward.32} parent=31 // pred_check
                _
              $region45: #{model_forward.32} parent=31 // pred_check_branch
                %230 = sbr.rel (0) target = $region47
              $region46: #{model_forward.32} parent=31 // pred_region
                loop: start=0, step=1, limit=1
                $region48: #{model_forward.32} parent=46 // loop_pre_header
                  _
                $region49: #{model_forward.32} parent=46 // loop_header
                  %s232 = sphi 0, %s236
                  %p233 = scmp.ge.s32.totalorder %s232, 1
                  %s237 = sphi %s180, %s180
                  %s238 = sphi %s175, %s175
                $region50: #{model_forward.32} parent=46 // loop_header_branch
                  %235 = sbr.rel (%p233) target = $region54
                $region51: #{model_forward.32} parent=46 // loop_body
                  _
                $region52: #{model_forward.32} parent=46 // loop_footer
                  %s236 = sadd.s32 1, %s232
                $region53: #{model_forward.32} parent=46 // loop_footer_branch
                  %231 = sbr.rel target = $region49
                $region54: #{model_forward.32} parent=46 // loop_exit
                  _
                %s240 = ssub.s32 16, 1
                loop: start=0, step=1, limit=1
                $region55: #{model_forward.32} parent=46 // loop_pre_header
                  _
                $region56: #{model_forward.32} parent=46 // loop_header
                  %s242 = sphi 0, %s246
                  %p243 = scmp.ge.s32.totalorder %s242, 1
                  %s247 = sphi %s180, %s180
                  %s248 = sphi %s175, %s175
                $region57: #{model_forward.32} parent=46 // loop_header_branch
                  %245 = sbr.rel (%p243) target = $region61
                $region58: #{model_forward.32} parent=46 // loop_body
                  %v249 = vld [vmem:[%s247] sm:%s240]
                  %250 = vst [vmem:[%s248] sm:%s240] %v249
                  %v251 = vld [vmem:[%s247 + $0xc] sm:%s240]
                  %252 = vst [vmem:[%s248 + $0x4] sm:%s240] %v251
                  %v253 = vld [vmem:[%s247 + $0x18] sm:%s240]
                  %254 = vst [vmem:[%s248 + $0x8] sm:%s240] %v253
                  %v255 = vld [vmem:[%s247 + $0x24] sm:%s240]
                  %256 = vst [vmem:[%s248 + $0xc] sm:%s240] %v255
                  %v257 = vld [vmem:[%s247 + $0x30] sm:%s240]
                  %258 = vst [vmem:[%s248 + $0x10] sm:%s240] %v257
                  %v259 = vld [vmem:[%s247 + $0x3c] sm:%s240]
                  %260 = vst [vmem:[%s248 + $0x14] sm:%s240] %v259
                  %v261 = vld [vmem:[%s247 + $0x48] sm:%s240]
                  %262 = vst [vmem:[%s248 + $0x18] sm:%s240] %v261
                  %v263 = vld [vmem:[%s247 + $0x54] sm:%s240]
                  %264 = vst [vmem:[%s248 + $0x1c] sm:%s240] %v263
                  %v265 = vld [vmem:[%s247 + $0x60] sm:%s240]
                  %266 = vst [vmem:[%s248 + $0x20] sm:%s240] %v265
                  %v267 = vld [vmem:[%s247 + $0x6c] sm:%s240]
                  %268 = vst [vmem:[%s248 + $0x24] sm:%s240] %v267
                  %v269 = vld [vmem:[%s247 + $0x78] sm:%s240]
                  %270 = vst [vmem:[%s248 + $0x28] sm:%s240] %v269
                  %v271 = vld [vmem:[%s247 + $0x84] sm:%s240]
                  %272 = vst [vmem:[%s248 + $0x2c] sm:%s240] %v271
                  %v273 = vld [vmem:[%s247 + $0x90] sm:%s240]
                  %274 = vst [vmem:[%s248 + $0x30] sm:%s240] %v273
                  %v275 = vld [vmem:[%s247 + $0x9c] sm:%s240]
                  %276 = vst [vmem:[%s248 + $0x34] sm:%s240] %v275
                  %v277 = vld [vmem:[%s247 + $0xa8] sm:%s240]
                  %278 = vst [vmem:[%s248 + $0x38] sm:%s240] %v277
                  %v279 = vld [vmem:[%s247 + $0xb4] sm:%s240]
                  %280 = vst [vmem:[%s248 + $0x3c] sm:%s240] %v279
                $region59: #{model_forward.32} parent=46 // loop_footer
                  %s246 = sadd.s32 1, %s242
                $region60: #{model_forward.32} parent=46 // loop_footer_branch
                  %241 = sbr.rel target = $region56
                $region61: #{model_forward.32} parent=46 // loop_exit
                  _
              $region47: #{model_forward.32} parent=31 // pred_fallthru
                _
            $region32: #{model_forward.32} parent=27 // pred_fallthru
              _
            // Predicated region
            $region33: #{model_forward.32} parent=27 // pred_check
              _
            $region34: #{model_forward.32} parent=27 // pred_check_branch
              %186 = sbr.rel (0) target = $region36
            $region35: #{model_forward.32} parent=27 // pred_region
              %s188 = ssub.s32 16, 1
              loop: start=0, step=1, limit=1
              $region37: #{model_forward.32} parent=35 // loop_pre_header
                _
              $region38: #{model_forward.32} parent=35 // loop_header
                %s190 = sphi 0, %s194
                %p191 = scmp.ge.s32.totalorder %s190, 1
                %s195 = sphi %s180, %s180
                %s196 = sphi %s175, %s175
              $region39: #{model_forward.32} parent=35 // loop_header_branch
                %193 = sbr.rel (%p191) target = $region43
              $region40: #{model_forward.32} parent=35 // loop_body
                %v197 = vld [vmem:[%s195] sm:%s188]
                %198 = vst [vmem:[%s196] sm:%s188] %v197
                %v199 = vld [vmem:[%s195 + $0xc] sm:%s188]
                %200 = vst [vmem:[%s196 + $0x4] sm:%s188] %v199
                %v201 = vld [vmem:[%s195 + $0x18] sm:%s188]
                %202 = vst [vmem:[%s196 + $0x8] sm:%s188] %v201
                %v203 = vld [vmem:[%s195 + $0x24] sm:%s188]
                %204 = vst [vmem:[%s196 + $0xc] sm:%s188] %v203
                %v205 = vld [vmem:[%s195 + $0x30] sm:%s188]
                %206 = vst [vmem:[%s196 + $0x10] sm:%s188] %v205
                %v207 = vld [vmem:[%s195 + $0x3c] sm:%s188]
                %208 = vst [vmem:[%s196 + $0x14] sm:%s188] %v207
                %v209 = vld [vmem:[%s195 + $0x48] sm:%s188]
                %210 = vst [vmem:[%s196 + $0x18] sm:%s188] %v209
                %v211 = vld [vmem:[%s195 + $0x54] sm:%s188]
                %212 = vst [vmem:[%s196 + $0x1c] sm:%s188] %v211
                %v213 = vld [vmem:[%s195 + $0x60] sm:%s188]
                %214 = vst [vmem:[%s196 + $0x20] sm:%s188] %v213
                %v215 = vld [vmem:[%s195 + $0x6c] sm:%s188]
                %216 = vst [vmem:[%s196 + $0x24] sm:%s188] %v215
                %v217 = vld [vmem:[%s195 + $0x78] sm:%s188]
                %218 = vst [vmem:[%s196 + $0x28] sm:%s188] %v217
                %v219 = vld [vmem:[%s195 + $0x84] sm:%s188]
                %220 = vst [vmem:[%s196 + $0x2c] sm:%s188] %v219
                %v221 = vld [vmem:[%s195 + $0x90] sm:%s188]
                %222 = vst [vmem:[%s196 + $0x30] sm:%s188] %v221
                %v223 = vld [vmem:[%s195 + $0x9c] sm:%s188]
                %224 = vst [vmem:[%s196 + $0x34] sm:%s188] %v223
                %v225 = vld [vmem:[%s195 + $0xa8] sm:%s188]
                %226 = vst [vmem:[%s196 + $0x38] sm:%s188] %v225
                %v227 = vld [vmem:[%s195 + $0xb4] sm:%s188]
                %228 = vst [vmem:[%s196 + $0x3c] sm:%s188] %v227
              $region41: #{model_forward.32} parent=35 // loop_footer
                %s194 = sadd.s32 1, %s190
              $region42: #{model_forward.32} parent=35 // loop_footer_branch
                %189 = sbr.rel target = $region38
              $region43: #{model_forward.32} parent=35 // loop_exit
                _
            $region36: #{model_forward.32} parent=27 // pred_fallthru
              _
          $region28: #{model_forward.32} parent=23 // pred_fallthru
            _
          %281 = vnop
        $region24: #{model_forward.32} parent=19 // pred_fallthru
          _
        // Predicated region
        $region62: #{model_forward.32} parent=19 // pred_check
          %p282 = pneg %p104
        $region63: #{model_forward.32} parent=19 // pred_check_branch
          %284 = sbr.rel (%p282) target = $region65
        $region64: #{model_forward.32} parent=19 // pred_region
          %p285 = scmp.lt.s32.totalorder %s17, 2
          %s286 = scalar_select %p285, %s17, 2
          %s287 = scalar_lea.vmem %s2, %s286
        $region65: #{model_forward.32} parent=19 // pred_fallthru
          _
      $region20: #{model_forward.32} parent=5 // pred_fallthru
        _
      %p288 = scmp.le.s32.totalorder 1, %s9
      %p289 = scmp.lt.s32.totalorder %s9, 4
      %p290 = pnand %p288, %p289
      %p291 = pneg %p290
      // Predicated region
      $region66: #{model_forward.32} parent=5 // pred_check
        _
      $region67: #{model_forward.32} parent=5 // pred_check_branch
        %293 = sbr.rel (%p290) target = $region69
      $region68: #{model_forward.32} parent=5 // pred_region
        %s294 = ssub.s32 %s9, 1
        %s295 = sand.u32 %s71, 1
        %s296 = sand.u32 %s71, 1
        %s297 = smul.addr %s296, 64
        %s298 = scalar_lea.vmem [#allocation3], %s297
        // Predicated region
        $region70: #{model_forward.32} parent=68 // pred_check
          %p299 = pneg %p84
        $region71: #{model_forward.32} parent=68 // pred_check_branch
          %301 = sbr.rel (%p299) target = $region73
        $region72: #{model_forward.32} parent=68 // pred_region
          _
        $region73: #{model_forward.32} parent=68 // pred_fallthru
          _
        %s302 = smul.u32 2, %s19
        %p303 = scmp.lt.s32.totalorder %s302, 1
        %s304 = scalar_select %p303, %s302, 1
        %p305 = scmp.lt.s32.totalorder %s21, 0
        %s306 = scalar_select %p305, %s21, 0
        %s307 = sadd.s32 %s306, %s304
        %s308 = smul.addr %s307, 4
        %s309 = scalar_lea.vmem %s0, %s308
        %p310 = pneg %p56
        %p311 = pneg %p53
        %s312 = sand.u32 %s71, 1
        %s313 = sand.u32 %s71, 1
        %s314 = smul.addr %s313, 64
        %s315 = scalar_lea.vmem [#allocation3], %s314
        %p316 = pneg %p84
        %p317 = pneg %p81
        %p318 = scmp.lt.s32.totalorder %s20, 2
        %s319 = scalar_select %p318, %s20, 2
        %s320 = scalar_lea.vmem %s2, %s319
        %p321 = pneg %p110
        %p322 = pneg %p107
        %p323 = pneg %p138
        %p324 = pneg %p135
        %s325 = sand.u32 %s125, 1
        %s326 = sand.u32 %s125, 1
        %s327 = smul.addr %s326, 8
        %s328 = scalar_lea.vmem [#allocation4], %s327
        %s329 = smul.u32 2, %s19
        %p330 = scmp.lt.s32.totalorder %s329, 1
        %s331 = scalar_select %p330, %s329, 1
        %p332 = scmp.lt.s32.totalorder %s21, 0
        %s333 = scalar_select %p332, %s21, 0
        %s334 = sadd.s32 %s333, %s331
        %s335 = smul.addr %s334, 4
        %s336 = scalar_lea.vmem %s0, %s335
        %s337 = smul.u32 2, %s19
        %s338 = smul.u32 16, %s21
        %p339 = scmp.lt.s32.totalorder %s20, 2
        %s340 = scalar_select %p339, %s20, 2
        %s341 = scalar_lea.vmem %s2, %s340
        %s342 = smul.u32 2, %s19
        %p344 = scmp.eq.s32.totalorder %s21, 0
        // Predicated region
        $region74: #{model_forward.32} parent=68 // pred_check
          %p345 = pneg %p344
        $region75: #{model_forward.32} parent=68 // pred_check_branch
          %347 = sbr.rel (%p345) target = $region77
        $region76: #{model_forward.32} parent=68 // pred_region
          %348 = vst [vmem:[#allocation2] sm:$0xff] 0.0
          %349 = vst [vmem:[#allocation2 + $0x8] sm:$0xff] 0.0
        $region77: #{model_forward.32} parent=68 // pred_fallthru
          _
        %v350 = vld [vmem:[#allocation2] sm:$0xff]
        %v351 = vld [vmem:[#allocation2 + $0x8] sm:$0xff]
        %v352 = vld [vmem:[%s336] sm:$0xf]
        %v353 = vld [vmem:[%s336 + $0x4] sm:$0xf]
        %v354 = vld [vmem:[%s298] sm:$0xf]
        %v355 = vld [vmem:[%s298 + $0x4] sm:$0xf]
        %v356 = vld [vmem:[%s298 + $0x8] sm:$0xf]
        %v357 = vld [vmem:[%s298 + $0xc] sm:$0xf]
        %v358 = vld [vmem:[%s298 + $0x10] sm:$0xf]
        %v359 = vld [vmem:[%s298 + $0x14] sm:$0xf]
        %v360 = vld [vmem:[%s298 + $0x18] sm:$0xf]
        %v361 = vld [vmem:[%s298 + $0x1c] sm:$0xf]
        %v362 = vld [vmem:[%s298 + $0x20] sm:$0xf]
        %v363 = vld [vmem:[%s298 + $0x24] sm:$0xf]
        %v364 = vld [vmem:[%s298 + $0x28] sm:$0xf]
        %v365 = vld [vmem:[%s298 + $0x2c] sm:$0xf]
        %v366 = vld [vmem:[%s298 + $0x30] sm:$0xf]
        %v367 = vld [vmem:[%s298 + $0x34] sm:$0xf]
        %v368 = vld [vmem:[%s298 + $0x38] sm:$0xf]
        %v369 = vld [vmem:[%s298 + $0x3c] sm:$0xf]
        %v372 = vunpack.c.l.b16 %v352
        %v373 = vunpack.c.l.b16 %v353
        %v374 = vpack.c.b16 %v373, %v372
        %v392 = vunpack.c.l.b16 %v354
        %v393 = vunpack.c.l.b16 %v355
        %v394 = vunpack.c.l.b16 %v356
        %v395 = vunpack.c.l.b16 %v357
        %v396 = vunpack.c.l.b16 %v358
        %v397 = vunpack.c.l.b16 %v359
        %v398 = vunpack.c.l.b16 %v360
        %v399 = vunpack.c.l.b16 %v361
        %v400 = vunpack.c.l.b16 %v362
        %v401 = vunpack.c.l.b16 %v363
        %v402 = vunpack.c.l.b16 %v364
        %v403 = vunpack.c.l.b16 %v365
        %v404 = vunpack.c.l.b16 %v366
        %v405 = vunpack.c.l.b16 %v367
        %v406 = vunpack.c.l.b16 %v368
        %v407 = vunpack.c.l.b16 %v369
        %v408 = vpack.c.b16 %v393, %v392
        %v409 = vpack.c.b16 %v395, %v394
        %v410 = vpack.c.b16 %v397, %v396
        %v411 = vpack.c.b16 %v399, %v398
        %v412 = vpack.c.b16 %v401, %v400
        %v413 = vpack.c.b16 %v403, %v402
        %v414 = vpack.c.b16 %v405, %v404
        %v415 = vpack.c.b16 %v407, %v406
        %424 = vmatprep.subr.bf16.mxu0 0
        %425 = vmatpush1.bf16.msra.mxu0 %v415
        %426 = vmatprep.subr.bf16.mxu0 0
        %427 = vmatpush1.bf16.msra.mxu0 %v414
        %428 = vmatprep.subr.bf16.mxu0 0
        %429 = vmatpush1.bf16.msra.mxu0 %v413
        %430 = vmatprep.subr.bf16.mxu0 0
        %431 = vmatpush1.bf16.msra.mxu0 %v412
        %432 = vmatprep.subr.bf16.mxu0 0
        %433 = vmatpush1.bf16.msra.mxu0 %v411
        %434 = vmatprep.subr.bf16.mxu0 0
        %435 = vmatpush1.bf16.msra.mxu0 %v410
        %436 = vmatprep.subr.bf16.mxu0 0
        %437 = vmatpush1.bf16.msra.mxu0 %v409
        %438 = vmatprep.subr.bf16.mxu0 0
        %439 = vmatpush1.bf16.msra.mxu0 %v408
        %440 = vmatprep.subr.bf16.mxu0 0
        %441 = vmatpush2.bf16.msra.mxu0 0
        %442 = vmatprep.subr.bf16.mxu0 0
        %443 = vmatpush2.bf16.msra.mxu0 0
        %444 = vmatprep.subr.bf16.mxu0 0
        %445 = vmatpush2.bf16.msra.mxu0 0
        %446 = vmatprep.subr.bf16.mxu0 0
        %447 = vmatpush2.bf16.msra.mxu0 0
        %448 = vmatprep.subr.bf16.mxu0 0
        %449 = vmatpush2.bf16.msra.mxu0 0
        %450 = vmatprep.subr.bf16.mxu0 0
        %451 = vmatpush2.bf16.msra.mxu0 0
        %452 = vmatprep.subr.bf16.mxu0 0
        %453 = vmatpush2.bf16.msra.mxu0 0
        %454 = vmatprep.subr.bf16.mxu0 0
        %455 = vmatpush2.bf16.msra.mxu0 0
        %456 = vmatprep.mubr.bf16.mxu0 0
        %457 = vmatmul.mubr.bf16.gmra.mxu0 %v374
        %v458 = vpop.f32.mrf.mxu0
        %v459 = vadd.f32 0.0, %v458
        %v460 = vpop.f32.mrf.mxu0
        %v461 = vpop.f32.mrf.mxu0
        %v462 = vadd.f32 0.0, %v461
        %v463 = vpop.f32.mrf.mxu0
        %464 = vdwg.mxu0
        %v465 = vadd.f32 %v350, %v459
        %v466 = vadd.f32 %v351, %v462
        %467 = vst [vmem:[#allocation2] sm:$0xff] %v465
        %468 = vst [vmem:[#allocation2 + $0x8] sm:$0xff] %v466
        // Predicated region
        $region78: #{model_forward.32} parent=68 // pred_check
          %p469 = pneg %p344
        $region79: #{model_forward.32} parent=68 // pred_check_branch
          %471 = sbr.rel (%p469) target = $region81
        $region80: #{model_forward.32} parent=68 // pred_region
          %v472 = vld [vmem:[#allocation2] sm:$0xff]
          %v473 = vld [vmem:[#allocation2 + $0x8] sm:$0xff]
          %v474 = vld [vmem:[%s341] sm:$0x1]
          %v476 = vlaneseq
          %v477 = vshrl.u32 %v476, 7
          %v478 = vsub.s32 0, %v477
          %v479 = vrot.slane %v474, %v478
          %v481 = vadd.f32 %v472, %v479
          %v482 = vadd.f32 %v473, %v479
          %v483 = vpack.c.bf16 %v482, %v481
          %v485 = vunpack.c.l.b16 %v483
          %v486 = vunpack.c.h.b16 %v483
          %v487 = vpack.c.b16 %v485, %v485
          %v488 = vpack.c.b16 %v486, %v486
          %491 = vst [vmem:[%s328] sm:$0xf] %v487
          %492 = vst [vmem:[%s328 + $0x4] sm:$0xf] %v488
        $region81: #{model_forward.32} parent=68 // pred_fallthru
          _
        %s493 = sand.u32 %s125, 1
        %s494 = sand.u32 %s125, 1
        %s495 = smul.addr %s494, 8
        %s496 = scalar_lea.vmem [#allocation4], %s495
        // Predicated region
        $region82: #{model_forward.32} parent=68 // pred_check
          %p497 = pneg %p135
        $region83: #{model_forward.32} parent=68 // pred_check_branch
          %499 = sbr.rel (%p497) target = $region85
        $region84: #{model_forward.32} parent=68 // pred_region
          %s500 = smul.u32 2, %s19
          %s501 = smul.addr %s500, 3
          %s502 = sadd.s32 %s20, %s501
          %s503 = smul.addr %s502, 4
          %s504 = scalar_lea.vmem %s3, %s503
          // Predicated region
          $region86: #{model_forward.32} parent=84 // pred_check
            _
          $region87: #{model_forward.32} parent=84 // pred_check_branch
            %506 = sbr.rel (0) target = $region89
          $region88: #{model_forward.32} parent=84 // pred_region
            // Predicated region
            $region90: #{model_forward.32} parent=88 // pred_check
              _
            $region91: #{model_forward.32} parent=88 // pred_check_branch
              %508 = sbr.rel target = $region93
            $region92: #{model_forward.32} parent=88 // pred_region
              // Predicated region
              $region105: #{model_forward.32} parent=92 // pred_check
                _
              $region106: #{model_forward.32} parent=92 // pred_check_branch
                %526 = sbr.rel (0) target = $region108
              $region107: #{model_forward.32} parent=92 // pred_region
                loop: start=0, step=1, limit=1
                $region109: #{model_forward.32} parent=107 // loop_pre_header
                  _
                $region110: #{model_forward.32} parent=107 // loop_header
                  %s528 = sphi 0, %s532
                  %p529 = scmp.ge.s32.totalorder %s528, 1
                  %s533 = sphi %s496, %s496
                  %s534 = sphi %s504, %s504
                $region111: #{model_forward.32} parent=107 // loop_header_branch
                  %531 = sbr.rel (%p529) target = $region115
                $region112: #{model_forward.32} parent=107 // loop_body
                  _
                $region113: #{model_forward.32} parent=107 // loop_footer
                  %s532 = sadd.s32 1, %s528
                $region114: #{model_forward.32} parent=107 // loop_footer_branch
                  %527 = sbr.rel target = $region110
                $region115: #{model_forward.32} parent=107 // loop_exit
                  _
                %s536 = ssub.s32 16, 1
                loop: start=0, step=1, limit=1
                $region116: #{model_forward.32} parent=107 // loop_pre_header
                  _
                $region117: #{model_forward.32} parent=107 // loop_header
                  %s538 = sphi 0, %s542
                  %p539 = scmp.ge.s32.totalorder %s538, 1
                  %s543 = sphi %s496, %s496
                  %s544 = sphi %s504, %s504
                $region118: #{model_forward.32} parent=107 // loop_header_branch
                  %541 = sbr.rel (%p539) target = $region122
                $region119: #{model_forward.32} parent=107 // loop_body
                  %v545 = vld [vmem:[%s543] sm:%s536]
                  %546 = vst [vmem:[%s544] sm:%s536] %v545
                  %v547 = vld [vmem:[%s543 + $0x4] sm:%s536]
                  %548 = vst [vmem:[%s544 + $0xc] sm:%s536] %v547
                $region120: #{model_forward.32} parent=107 // loop_footer
                  %s542 = sadd.s32 1, %s538
                $region121: #{model_forward.32} parent=107 // loop_footer_branch
                  %537 = sbr.rel target = $region117
                $region122: #{model_forward.32} parent=107 // loop_exit
                  _
              $region108: #{model_forward.32} parent=92 // pred_fallthru
                _
            $region93: #{model_forward.32} parent=88 // pred_fallthru
              _
            // Predicated region
            $region94: #{model_forward.32} parent=88 // pred_check
              _
            $region95: #{model_forward.32} parent=88 // pred_check_branch
              %510 = sbr.rel (0) target = $region97
            $region96: #{model_forward.32} parent=88 // pred_region
              %s512 = ssub.s32 16, 1
              loop: start=0, step=1, limit=1
              $region98: #{model_forward.32} parent=96 // loop_pre_header
                _
              $region99: #{model_forward.32} parent=96 // loop_header
                %s514 = sphi 0, %s518
                %p515 = scmp.ge.s32.totalorder %s514, 1
                %s519 = sphi %s496, %s496
                %s520 = sphi %s504, %s504
              $region100: #{model_forward.32} parent=96 // loop_header_branch
                %517 = sbr.rel (%p515) target = $region104
              $region101: #{model_forward.32} parent=96 // loop_body
                %v521 = vld [vmem:[%s519] sm:%s512]
                %522 = vst [vmem:[%s520] sm:%s512] %v521
                %v523 = vld [vmem:[%s519 + $0x4] sm:%s512]
                %524 = vst [vmem:[%s520 + $0xc] sm:%s512] %v523
              $region102: #{model_forward.32} parent=96 // loop_footer
                %s518 = sadd.s32 1, %s514
              $region103: #{model_forward.32} parent=96 // loop_footer_branch
                %513 = sbr.rel target = $region99
              $region104: #{model_forward.32} parent=96 // loop_exit
                _
            $region97: #{model_forward.32} parent=88 // pred_fallthru
              _
          $region89: #{model_forward.32} parent=84 // pred_fallthru
            _
          %549 = vnop
        $region85: #{model_forward.32} parent=68 // pred_fallthru
          _
      $region69: #{model_forward.32} parent=5 // pred_fallthru
        _
      %p550 = scmp.le.s32.totalorder 2, %s9
      // Predicated region
      $region123: #{model_forward.32} parent=5 // pred_check
        %p551 = pneg %p550
      $region124: #{model_forward.32} parent=5 // pred_check_branch
        %553 = sbr.rel (%p551) target = $region126
      $region125: #{model_forward.32} parent=5 // pred_region
        %s554 = ssub.s32 %s9, 2
        // Predicated region
        $region127: #{model_forward.32} parent=125 // pred_check
          %p555 = pneg %p141
        $region128: #{model_forward.32} parent=125 // pred_check_branch
          %557 = sbr.rel (%p555) target = $region130
        $region129: #{model_forward.32} parent=125 // pred_region
          %s558 = sand.u32 %s126, 1
          %s559 = sand.u32 %s126, 1
          %s560 = smul.addr %s559, 8
          %s561 = scalar_lea.vmem [#allocation4], %s560
        $region130: #{model_forward.32} parent=125 // pred_fallthru
          _
      $region126: #{model_forward.32} parent=5 // pred_fallthru
        _
    $region6: #{model_forward.32} parent=1 // loop_footer
      %s13 = sadd.s32 1, %s9
    $region7: #{model_forward.32} parent=1 // loop_footer_branch
      %8 = sbr.rel target = $region3
    $region8: #{model_forward.32} parent=1 // loop_exit
      _

// kernel: model_forward.34
$region0: #{model_forward.34}
  #allocation0 [shape = 'u32[]', space=smem, size = 0x4, offset = 0x4, fixed_abs, tag = 'smem constant byte address 0x4 - core index']
  #allocation1 [shape = 'u32[144,128]{1,0:T(1,128)}', space=vmem, size = 0x12000, scoped, tag = 'internal scratch']
  #allocation2 [shape = 'f32[16,128]{1,0:T(8,128)}', space=vmem, size = 0x2000, scoped, tag = 'scratch operand']
  %s0 = inlined_call_operand.vmem [shape: bf16[16,128], index: 0, kind: input, shape index: {}]
  %s1 = inlined_call_operand.vmem [shape: bf16[128,128], index: 1, kind: input, shape index: {}]
  %s2 = inlined_call_operand.vmem [shape: f32[1,128], index: 2, kind: input, shape index: {}]
  %s3 = inlined_call_operand.vmem [shape: bf16[16,128], index: 3, kind: output, shape index: {}]
  %s4 = sld [smem:[#allocation0]]
  $region30: #{model_forward.34} parent=0
    _
  %s6 = ssub.s32 1, %s4
  %s7 = scalar_select 0, %s6, %s4
  // Predicated region
  $region2: #{model_forward.34} parent=0 // pred_check
    _
  $region3: #{model_forward.34} parent=0 // pred_check_branch
    %9 = sbr.rel (0) target = $region5
  $region4: #{model_forward.34} parent=0 // pred_region
    _
  $region5: #{model_forward.34} parent=0 // pred_fallthru
    _
  // Predicated region
  $region6: #{model_forward.34} parent=0 // pred_check
    _
  $region7: #{model_forward.34} parent=0 // pred_check_branch
    %11 = sbr.rel (0) target = $region9
  $region8: #{model_forward.34} parent=0 // pred_region
    _
  $region9: #{model_forward.34} parent=0 // pred_fallthru
    _
  // Predicated region
  $region10: #{model_forward.34} parent=0 // pred_check
    _
  $region11: #{model_forward.34} parent=0 // pred_check_branch
    %13 = sbr.rel (0) target = $region13
  $region12: #{model_forward.34} parent=0 // pred_region
    _
  $region13: #{model_forward.34} parent=0 // pred_fallthru
    _
  %p15 = scmp.eq.s32.totalorder 0, 0
  // Predicated region
  $region14: #{model_forward.34} parent=0 // pred_check
    %p16 = pneg %p15
  $region15: #{model_forward.34} parent=0 // pred_check_branch
    %18 = sbr.rel (%p16) target = $region17
  $region16: #{model_forward.34} parent=0 // pred_region
    %19 = vst [vmem:[#allocation2] sm:$0xff] 0.0
    %20 = vst [vmem:[#allocation2 + $0x8] sm:$0xff] 0.0
  $region17: #{model_forward.34} parent=0 // pred_fallthru
    _
  %v21 = vld [vmem:[#allocation2] sm:$0xff]
  %v22 = vld [vmem:[#allocation2 + $0x8] sm:$0xff]
  %v23 = vld [vmem:[%s0] sm:$0xf]
  %v24 = vld [vmem:[%s0 + $0x4] sm:$0xf]
  %v25 = vld [vmem:[%s1] sm:$0xf]
  %v26 = vld [vmem:[%s1 + $0x4] sm:$0xf]
  %v27 = vld [vmem:[%s1 + $0x8] sm:$0xf]
  %v28 = vld [vmem:[%s1 + $0xc] sm:$0xf]
  %v29 = vld [vmem:[%s1 + $0x10] sm:$0xf]
  %v30 = vld [vmem:[%s1 + $0x14] sm:$0xf]
  %v31 = vld [vmem:[%s1 + $0x18] sm:$0xf]
  %v32 = vld [vmem:[%s1 + $0x1c] sm:$0xf]
  %v33 = vld [vmem:[%s1 + $0x20] sm:$0xf]
  %v34 = vld [vmem:[%s1 + $0x24] sm:$0xf]
  %v35 = vld [vmem:[%s1 + $0x28] sm:$0xf]
  %v36 = vld [vmem:[%s1 + $0x2c] sm:$0xf]
  %v37 = vld [vmem:[%s1 + $0x30] sm:$0xf]
  %v38 = vld [vmem:[%s1 + $0x34] sm:$0xf]
  %v39 = vld [vmem:[%s1 + $0x38] sm:$0xf]
  %v40 = vld [vmem:[%s1 + $0x3c] sm:$0xf]
  %v43 = vunpack.c.l.b16 %v23
  %v44 = vunpack.c.l.b16 %v24
  %v45 = vpack.c.b16 %v44, %v43
  %v63 = vunpack.c.l.b16 %v25
  %v64 = vunpack.c.l.b16 %v26
  %v65 = vunpack.c.l.b16 %v27
  %v66 = vunpack.c.l.b16 %v28
  %v67 = vunpack.c.l.b16 %v29
  %v68 = vunpack.c.l.b16 %v30
  %v69 = vunpack.c.l.b16 %v31
  %v70 = vunpack.c.l.b16 %v32
  %v71 = vunpack.c.l.b16 %v33
  %v72 = vunpack.c.l.b16 %v34
  %v73 = vunpack.c.l.b16 %v35
  %v74 = vunpack.c.l.b16 %v36
  %v75 = vunpack.c.l.b16 %v37
  %v76 = vunpack.c.l.b16 %v38
  %v77 = vunpack.c.l.b16 %v39
  %v78 = vunpack.c.l.b16 %v40
  %v79 = vpack.c.b16 %v64, %v63
  %v80 = vpack.c.b16 %v66, %v65
  %v81 = vpack.c.b16 %v68, %v67
  %v82 = vpack.c.b16 %v70, %v69
  %v83 = vpack.c.b16 %v72, %v71
  %v84 = vpack.c.b16 %v74, %v73
  %v85 = vpack.c.b16 %v76, %v75
  %v86 = vpack.c.b16 %v78, %v77
  %95 = vmatprep.subr.bf16.mxu0 0
  %96 = vmatpush1.bf16.msra.mxu0 %v86
  %97 = vmatprep.subr.bf16.mxu0 0
  %98 = vmatpush1.bf16.msra.mxu0 %v85
  %99 = vmatprep.subr.bf16.mxu0 0
  %100 = vmatpush1.bf16.msra.mxu0 %v84
  %101 = vmatprep.subr.bf16.mxu0 0
  %102 = vmatpush1.bf16.msra.mxu0 %v83
  %103 = vmatprep.subr.bf16.mxu0 0
  %104 = vmatpush1.bf16.msra.mxu0 %v82
  %105 = vmatprep.subr.bf16.mxu0 0
  %106 = vmatpush1.bf16.msra.mxu0 %v81
  %107 = vmatprep.subr.bf16.mxu0 0
  %108 = vmatpush1.bf16.msra.mxu0 %v80
  %109 = vmatprep.subr.bf16.mxu0 0
  %110 = vmatpush1.bf16.msra.mxu0 %v79
  %111 = vmatprep.subr.bf16.mxu0 0
  %112 = vmatpush2.bf16.msra.mxu0 0
  %113 = vmatprep.subr.bf16.mxu0 0
  %114 = vmatpush2.bf16.msra.mxu0 0
  %115 = vmatprep.subr.bf16.mxu0 0
  %116 = vmatpush2.bf16.msra.mxu0 0
  %117 = vmatprep.subr.bf16.mxu0 0
  %118 = vmatpush2.bf16.msra.mxu0 0
  %119 = vmatprep.subr.bf16.mxu0 0
  %120 = vmatpush2.bf16.msra.mxu0 0
  %121 = vmatprep.subr.bf16.mxu0 0
  %122 = vmatpush2.bf16.msra.mxu0 0
  %123 = vmatprep.subr.bf16.mxu0 0
  %124 = vmatpush2.bf16.msra.mxu0 0
  %125 = vmatprep.subr.bf16.mxu0 0
  %126 = vmatpush2.bf16.msra.mxu0 0
  %127 = vmatprep.mubr.bf16.mxu0 0
  %128 = vmatmul.mubr.bf16.gmra.mxu0 %v45
  %v129 = vpop.f32.mrf.mxu0
  %v130 = vadd.f32 0.0, %v129
  %v131 = vpop.f32.mrf.mxu0
  %v132 = vpop.f32.mrf.mxu0
  %v133 = vadd.f32 0.0, %v132
  %v134 = vpop.f32.mrf.mxu0
  %135 = vdwg.mxu0
  %v136 = vadd.f32 %v21, %v130
  %v137 = vadd.f32 %v22, %v133
  %138 = vst [vmem:[#allocation2] sm:$0xff] %v136
  %139 = vst [vmem:[#allocation2 + $0x8] sm:$0xff] %v137
  // Predicated region
  $region18: #{model_forward.34} parent=0 // pred_check
    %p140 = pneg %p15
  $region19: #{model_forward.34} parent=0 // pred_check_branch
    %142 = sbr.rel (%p140) target = $region21
  $region20: #{model_forward.34} parent=0 // pred_region
    %v143 = vld [vmem:[#allocation2] sm:$0xff]
    %v144 = vld [vmem:[#allocation2 + $0x8] sm:$0xff]
    %v145 = vld [vmem:[%s2] sm:$0x1]
    %v147 = vlaneseq
    %v148 = vshrl.u32 %v147, 7
    %v149 = vsub.s32 0, %v148
    %v150 = vrot.slane %v145, %v149
    %v152 = vadd.f32 %v143, %v150
    %v153 = vadd.f32 %v144, %v150
    %v154 = vpack.c.bf16 %v153, %v152
    %v156 = vunpack.c.l.b16 %v154
    %v157 = vunpack.c.h.b16 %v154
    %v158 = vpack.c.b16 %v156, %v156
    %v159 = vpack.c.b16 %v157, %v157
    %162 = vst [vmem:[%s3] sm:$0xf] %v158
    %163 = vst [vmem:[%s3 + $0x4] sm:$0xf] %v159
  $region21: #{model_forward.34} parent=0 // pred_fallthru
    _
  // Predicated region
  $region22: #{model_forward.34} parent=0 // pred_check
    _
  $region23: #{model_forward.34} parent=0 // pred_check_branch
    %165 = sbr.rel (0) target = $region25
  $region24: #{model_forward.34} parent=0 // pred_region
    _
  $region25: #{model_forward.34} parent=0 // pred_fallthru
    _
  // Predicated region
  $region26: #{model_forward.34} parent=0 // pred_check
    _
  $region27: #{model_forward.34} parent=0 // pred_check_branch
    %167 = sbr.rel (0) target = $region29
  $region28: #{model_forward.34} parent=0 // pred_region
    _
  $region29: #{model_forward.34} parent=0 // pred_fallthru
    _

// kernel: model_forward.36
$region0: #{model_forward.36}
  #allocation0 [shape = 'u32[]', space=smem, size = 0x4, offset = 0x4, fixed_abs, tag = 'smem constant byte address 0x4 - core index']
  #allocation1 [shape = 'u32[144,128]{1,0:T(1,128)}', space=vmem, size = 0x12000, scoped, tag = 'internal scratch']
  #allocation2 [shape = 'f32[16,512]{1,0:T(8,128)}', space=vmem, size = 0x8000, scoped, tag = 'scratch operand']
  %s0 = inlined_call_operand.vmem [shape: bf16[16,128], index: 0, kind: input, shape index: {}]
  %s1 = inlined_call_operand.vmem [shape: bf16[128,512], index: 1, kind: input, shape index: {}]
  %s2 = inlined_call_operand.vmem [shape: f32[1,512], index: 2, kind: input, shape index: {}]
  %s3 = inlined_call_operand.vmem [shape: bf16[16,512], index: 3, kind: output, shape index: {}]
  %s4 = sld [smem:[#allocation0]]
  $region30: #{model_forward.36} parent=0
    _
  %s6 = ssub.s32 1, %s4
  %s7 = scalar_select 0, %s6, %s4
  // Predicated region
  $region2: #{model_forward.36} parent=0 // pred_check
    _
  $region3: #{model_forward.36} parent=0 // pred_check_branch
    %9 = sbr.rel (0) target = $region5
  $region4: #{model_forward.36} parent=0 // pred_region
    _
  $region5: #{model_forward.36} parent=0 // pred_fallthru
    _
  // Predicated region
  $region6: #{model_forward.36} parent=0 // pred_check
    _
  $region7: #{model_forward.36} parent=0 // pred_check_branch
    %11 = sbr.rel (0) target = $region9
  $region8: #{model_forward.36} parent=0 // pred_region
    _
  $region9: #{model_forward.36} parent=0 // pred_fallthru
    _
  // Predicated region
  $region10: #{model_forward.36} parent=0 // pred_check
    _
  $region11: #{model_forward.36} parent=0 // pred_check_branch
    %13 = sbr.rel (0) target = $region13
  $region12: #{model_forward.36} parent=0 // pred_region
    _
  $region13: #{model_forward.36} parent=0 // pred_fallthru
    _
  %p15 = scmp.eq.s32.totalorder 0, 0
  // Predicated region
  $region14: #{model_forward.36} parent=0 // pred_check
    %p16 = pneg %p15
  $region15: #{model_forward.36} parent=0 // pred_check_branch
    %18 = sbr.rel (%p16) target = $region17
  $region16: #{model_forward.36} parent=0 // pred_region
    %19 = vst [vmem:[#allocation2] sm:$0xff] 0.0
    %20 = vst [vmem:[#allocation2 + $0x8] sm:$0xff] 0.0
    %21 = vst [vmem:[#allocation2 + $0x10] sm:$0xff] 0.0
    %22 = vst [vmem:[#allocation2 + $0x18] sm:$0xff] 0.0
    %23 = vst [vmem:[#allocation2 + $0x20] sm:$0xff] 0.0
    %24 = vst [vmem:[#allocation2 + $0x28] sm:$0xff] 0.0
    %25 = vst [vmem:[#allocation2 + $0x30] sm:$0xff] 0.0
    %26 = vst [vmem:[#allocation2 + $0x38] sm:$0xff] 0.0
  $region17: #{model_forward.36} parent=0 // pred_fallthru
    _
  %v27 = vld [vmem:[#allocation2] sm:$0xff]
  %v28 = vld [vmem:[#allocation2 + $0x8] sm:$0xff]
  %v29 = vld [vmem:[#allocation2 + $0x10] sm:$0xff]
  %v30 = vld [vmem:[#allocation2 + $0x18] sm:$0xff]
  %v31 = vld [vmem:[#allocation2 + $0x20] sm:$0xff]
  %v32 = vld [vmem:[#allocation2 + $0x28] sm:$0xff]
  %v33 = vld [vmem:[#allocation2 + $0x30] sm:$0xff]
  %v34 = vld [vmem:[#allocation2 + $0x38] sm:$0xff]
  %v35 = vld [vmem:[%s0] sm:$0xf]
  %v36 = vld [vmem:[%s0 + $0x4] sm:$0xf]
  %v37 = vld [vmem:[%s1] sm:$0xff]
  %v38 = vld [vmem:[%s1 + $0x8] sm:$0xff]
  %v39 = vld [vmem:[%s1 + $0x10] sm:$0xff]
  %v40 = vld [vmem:[%s1 + $0x18] sm:$0xff]
  %v41 = vld [vmem:[%s1 + $0x20] sm:$0xff]
  %v42 = vld [vmem:[%s1 + $0x28] sm:$0xff]
  %v43 = vld [vmem:[%s1 + $0x30] sm:$0xff]
  %v44 = vld [vmem:[%s1 + $0x38] sm:$0xff]
  %v45 = vld [vmem:[%s1 + $0x40] sm:$0xff]
  %v46 = vld [vmem:[%s1 + $0x48] sm:$0xff]
  %v47 = vld [vmem:[%s1 + $0x50] sm:$0xff]
  %v48 = vld [vmem:[%s1 + $0x58] sm:$0xff]
  %v49 = vld [vmem:[%s1 + $0x60] sm:$0xff]
  %v50 = vld [vmem:[%s1 + $0x68] sm:$0xff]
  %v51 = vld [vmem:[%s1 + $0x70] sm:$0xff]
  %v52 = vld [vmem:[%s1 + $0x78] sm:$0xff]
  %v53 = vld [vmem:[%s1 + $0x80] sm:$0xff]
  %v54 = vld [vmem:[%s1 + $0x88] sm:$0xff]
  %v55 = vld [vmem:[%s1 + $0x90] sm:$0xff]
  %v56 = vld [vmem:[%s1 + $0x98] sm:$0xff]
  %v57 = vld [vmem:[%s1 + $0xa0] sm:$0xff]
  %v58 = vld [vmem:[%s1 + $0xa8] sm:$0xff]
  %v59 = vld [vmem:[%s1 + $0xb0] sm:$0xff]
  %v60 = vld [vmem:[%s1 + $0xb8] sm:$0xff]
  %v61 = vld [vmem:[%s1 + $0xc0] sm:$0xff]
  %v62 = vld [vmem:[%s1 + $0xc8] sm:$0xff]
  %v63 = vld [vmem:[%s1 + $0xd0] sm:$0xff]
  %v64 = vld [vmem:[%s1 + $0xd8] sm:$0xff]
  %v65 = vld [vmem:[%s1 + $0xe0] sm:$0xff]
  %v66 = vld [vmem:[%s1 + $0xe8] sm:$0xff]
  %v67 = vld [vmem:[%s1 + $0xf0] sm:$0xff]
  %v68 = vld [vmem:[%s1 + $0xf8] sm:$0xff]
  %v71 = vunpack.c.l.b16 %v35
  %v72 = vunpack.c.l.b16 %v36
  %v73 = vpack.c.b16 %v72, %v71
  %v107 = vunpack.c.l.b16 %v37
  %v108 = vunpack.c.h.b16 %v37
  %v109 = vunpack.c.l.b16 %v38
  %v110 = vunpack.c.h.b16 %v38
  %v111 = vunpack.c.l.b16 %v39
  %v112 = vunpack.c.h.b16 %v39
  %v113 = vunpack.c.l.b16 %v40
  %v114 = vunpack.c.h.b16 %v40
  %v115 = vunpack.c.l.b16 %v41
  %v116 = vunpack.c.h.b16 %v41
  %v117 = vunpack.c.l.b16 %v42
  %v118 = vunpack.c.h.b16 %v42
  %v119 = vunpack.c.l.b16 %v43
  %v120 = vunpack.c.h.b16 %v43
  %v121 = vunpack.c.l.b16 %v44
  %v122 = vunpack.c.h.b16 %v44
  %v123 = vunpack.c.l.b16 %v45
  %v124 = vunpack.c.h.b16 %v45
  %v125 = vunpack.c.l.b16 %v46
  %v126 = vunpack.c.h.b16 %v46
  %v127 = vunpack.c.l.b16 %v47
  %v128 = vunpack.c.h.b16 %v47
  %v129 = vunpack.c.l.b16 %v48
  %v130 = vunpack.c.h.b16 %v48
  %v131 = vunpack.c.l.b16 %v49
  %v132 = vunpack.c.h.b16 %v49
  %v133 = vunpack.c.l.b16 %v50
  %v134 = vunpack.c.h.b16 %v50
  %v135 = vunpack.c.l.b16 %v51
  %v136 = vunpack.c.h.b16 %v51
  %v137 = vunpack.c.l.b16 %v52
  %v138 = vunpack.c.h.b16 %v52
  %v139 = vunpack.c.l.b16 %v53
  %v140 = vunpack.c.h.b16 %v53
  %v141 = vunpack.c.l.b16 %v54
  %v142 = vunpack.c.h.b16 %v54
  %v143 = vunpack.c.l.b16 %v55
  %v144 = vunpack.c.h.b16 %v55
  %v145 = vunpack.c.l.b16 %v56
  %v146 = vunpack.c.h.b16 %v56
  %v147 = vunpack.c.l.b16 %v57
  %v148 = vunpack.c.h.b16 %v57
  %v149 = vunpack.c.l.b16 %v58
  %v150 = vunpack.c.h.b16 %v58
  %v151 = vunpack.c.l.b16 %v59
  %v152 = vunpack.c.h.b16 %v59
  %v153 = vunpack.c.l.b16 %v60
  %v154 = vunpack.c.h.b16 %v60
  %v155 = vunpack.c.l.b16 %v61
  %v156 = vunpack.c.h.b16 %v61
  %v157 = vunpack.c.l.b16 %v62
  %v158 = vunpack.c.h.b16 %v62
  %v159 = vunpack.c.l.b16 %v63
  %v160 = vunpack.c.h.b16 %v63
  %v161 = vunpack.c.l.b16 %v64
  %v162 = vunpack.c.h.b16 %v64
  %v163 = vunpack.c.l.b16 %v65
  %v164 = vunpack.c.h.b16 %v65
  %v165 = vunpack.c.l.b16 %v66
  %v166 = vunpack.c.h.b16 %v66
  %v167 = vunpack.c.l.b16 %v67
  %v168 = vunpack.c.h.b16 %v67
  %v169 = vunpack.c.l.b16 %v68
  %v170 = vunpack.c.h.b16 %v68
  %v171 = vpack.c.b16 %v111, %v107
  %v172 = vpack.c.b16 %v112, %v108
  %v173 = vpack.c.b16 %v113, %v109
  %v174 = vpack.c.b16 %v114, %v110
  %v175 = vpack.c.b16 %v119, %v115
  %v176 = vpack.c.b16 %v120, %v116
  %v177 = vpack.c.b16 %v121, %v117
  %v178 = vpack.c.b16 %v122, %v118
  %v179 = vpack.c.b16 %v127, %v123
  %v180 = vpack.c.b16 %v128, %v124
  %v181 = vpack.c.b16 %v129, %v125
  %v182 = vpack.c.b16 %v130, %v126
  %v183 = vpack.c.b16 %v135, %v131
  %v184 = vpack.c.b16 %v136, %v132
  %v185 = vpack.c.b16 %v137, %v133
  %v186 = vpack.c.b16 %v138, %v134
  %v187 = vpack.c.b16 %v143, %v139
  %v188 = vpack.c.b16 %v144, %v140
  %v189 = vpack.c.b16 %v145, %v141
  %v190 = vpack.c.b16 %v146, %v142
  %v191 = vpack.c.b16 %v151, %v147
  %v192 = vpack.c.b16 %v152, %v148
  %v193 = vpack.c.b16 %v153, %v149
  %v194 = vpack.c.b16 %v154, %v150
  %v195 = vpack.c.b16 %v159, %v155
  %v196 = vpack.c.b16 %v160, %v156
  %v197 = vpack.c.b16 %v161, %v157
  %v198 = vpack.c.b16 %v162, %v158
  %v199 = vpack.c.b16 %v167, %v163
  %v200 = vpack.c.b16 %v168, %v164
  %v201 = vpack.c.b16 %v169, %v165
  %v202 = vpack.c.b16 %v170, %v166
  %235 = vmatprep.subr.bf16.mxu0 %v200
  %236 = vmatpush1.bf16.msra.mxu0 %v199
  %237 = vmatprep.subr.bf16.mxu0 %v196
  %238 = vmatpush1.bf16.msra.mxu0 %v195
  %239 = vmatprep.subr.bf16.mxu0 %v192
  %240 = vmatpush1.bf16.msra.mxu0 %v191
  %241 = vmatprep.subr.bf16.mxu0 %v188
  %242 = vmatpush1.bf16.msra.mxu0 %v187
  %243 = vmatprep.subr.bf16.mxu0 %v184
  %244 = vmatpush1.bf16.msra.mxu0 %v183
  %245 = vmatprep.subr.bf16.mxu0 %v180
  %246 = vmatpush1.bf16.msra.mxu0 %v179
  %247 = vmatprep.subr.bf16.mxu0 %v176
  %248 = vmatpush1.bf16.msra.mxu0 %v175
  %249 = vmatprep.subr.bf16.mxu0 %v172
  %250 = vmatpush1.bf16.msra.mxu0 %v171
  %251 = vmatprep.subr.bf16.mxu0 0
  %252 = vmatpush2.bf16.msra.mxu0 0
  %253 = vmatprep.subr.bf16.mxu0 0
  %254 = vmatpush2.bf16.msra.mxu0 0
  %255 = vmatprep.subr.bf16.mxu0 0
  %256 = vmatpush2.bf16.msra.mxu0 0
  %257 = vmatprep.subr.bf16.mxu0 0
  %258 = vmatpush2.bf16.msra.mxu0 0
  %259 = vmatprep.subr.bf16.mxu0 0
  %260 = vmatpush2.bf16.msra.mxu0 0
  %261 = vmatprep.subr.bf16.mxu0 0
  %262 = vmatpush2.bf16.msra.mxu0 0
  %263 = vmatprep.subr.bf16.mxu0 0
  %264 = vmatpush2.bf16.msra.mxu0 0
  %265 = vmatprep.subr.bf16.mxu0 0
  %266 = vmatpush2.bf16.msra.mxu0 0
  %267 = vmatprep.mubr.bf16.mxu0 0
  %268 = vmatmul.mubr.bf16.gmra.mxu0 %v73
  %v269 = vpop.f32.mrf.mxu0
  %v270 = vadd.f32 0.0, %v269
  %v271 = vpop.f32.mrf.mxu0
  %v272 = vadd.f32 0.0, %v271
  %v273 = vpop.f32.mrf.mxu0
  %v274 = vadd.f32 0.0, %v273
  %v275 = vpop.f32.mrf.mxu0
  %v276 = vadd.f32 0.0, %v275
  %277 = vdwg.mxu0
  %278 = vmatprep.subr.bf16.mxu0 %v202
  %279 = vmatpush1.bf16.msra.mxu0 %v201
  %280 = vmatprep.subr.bf16.mxu0 %v198
  %281 = vmatpush1.bf16.msra.mxu0 %v197
  %282 = vmatprep.subr.bf16.mxu0 %v194
  %283 = vmatpush1.bf16.msra.mxu0 %v193
  %284 = vmatprep.subr.bf16.mxu0 %v190
  %285 = vmatpush1.bf16.msra.mxu0 %v189
  %286 = vmatprep.subr.bf16.mxu0 %v186
  %287 = vmatpush1.bf16.msra.mxu0 %v185
  %288 = vmatprep.subr.bf16.mxu0 %v182
  %289 = vmatpush1.bf16.msra.mxu0 %v181
  %290 = vmatprep.subr.bf16.mxu0 %v178
  %291 = vmatpush1.bf16.msra.mxu0 %v177
  %292 = vmatprep.subr.bf16.mxu0 %v174
  %293 = vmatpush1.bf16.msra.mxu0 %v173
  %294 = vmatprep.subr.bf16.mxu0 0
  %295 = vmatpush2.bf16.msra.mxu0 0
  %296 = vmatprep.subr.bf16.mxu0 0
  %297 = vmatpush2.bf16.msra.mxu0 0
  %298 = vmatprep.subr.bf16.mxu0 0
  %299 = vmatpush2.bf16.msra.mxu0 0
  %300 = vmatprep.subr.bf16.mxu0 0
  %301 = vmatpush2.bf16.msra.mxu0 0
  %302 = vmatprep.subr.bf16.mxu0 0
  %303 = vmatpush2.bf16.msra.mxu0 0
  %304 = vmatprep.subr.bf16.mxu0 0
  %305 = vmatpush2.bf16.msra.mxu0 0
  %306 = vmatprep.subr.bf16.mxu0 0
  %307 = vmatpush2.bf16.msra.mxu0 0
  %308 = vmatprep.subr.bf16.mxu0 0
  %309 = vmatpush2.bf16.msra.mxu0 0
  %310 = vmatprep.mubr.bf16.mxu0 0
  %311 = vmatmul.mubr.bf16.gmra.mxu0 %v73
  %v312 = vpop.f32.mrf.mxu0
  %v313 = vadd.f32 0.0, %v312
  %v314 = vpop.f32.mrf.mxu0
  %v315 = vadd.f32 0.0, %v314
  %v316 = vpop.f32.mrf.mxu0
  %v317 = vadd.f32 0.0, %v316
  %v318 = vpop.f32.mrf.mxu0
  %v319 = vadd.f32 0.0, %v318
  %320 = vdwg.mxu0
  %v321 = vadd.f32 %v27, %v270
  %v322 = vadd.f32 %v28, %v272
  %v323 = vadd.f32 %v29, %v313
  %v324 = vadd.f32 %v30, %v315
  %v325 = vadd.f32 %v31, %v274
  %v326 = vadd.f32 %v32, %v276
  %v327 = vadd.f32 %v33, %v317
  %v328 = vadd.f32 %v34, %v319
  %329 = vst [vmem:[#allocation2] sm:$0xff] %v321
  %330 = vst [vmem:[#allocation2 + $0x8] sm:$0xff] %v322
  %331 = vst [vmem:[#allocation2 + $0x10] sm:$0xff] %v323
  %332 = vst [vmem:[#allocation2 + $0x18] sm:$0xff] %v324
  %333 = vst [vmem:[#allocation2 + $0x20] sm:$0xff] %v325
  %334 = vst [vmem:[#allocation2 + $0x28] sm:$0xff] %v326
  %335 = vst [vmem:[#allocation2 + $0x30] sm:$0xff] %v327
  %336 = vst [vmem:[#allocation2 + $0x38] sm:$0xff] %v328
  // Predicated region
  $region18: #{model_forward.36} parent=0 // pred_check
    %p337 = pneg %p15
  $region19: #{model_forward.36} parent=0 // pred_check_branch
    %339 = sbr.rel (%p337) target = $region21
  $region20: #{model_forward.36} parent=0 // pred_region
    %v340 = vld [vmem:[#allocation2] sm:$0xff]
    %v341 = vld [vmem:[#allocation2 + $0x8] sm:$0xff]
    %v342 = vld [vmem:[#allocation2 + $0x10] sm:$0xff]
    %v343 = vld [vmem:[#allocation2 + $0x18] sm:$0xff]
    %v344 = vld [vmem:[#allocation2 + $0x20] sm:$0xff]
    %v345 = vld [vmem:[#allocation2 + $0x28] sm:$0xff]
    %v346 = vld [vmem:[#allocation2 + $0x30] sm:$0xff]
    %v347 = vld [vmem:[#allocation2 + $0x38] sm:$0xff]
    %v348 = vld [vmem:[%s2] sm:$0xf]
    %v350 = vlaneseq
    %v351 = vshrl.u32 %v350, 7
    %v352 = vsub.s32 0, %v351
    %v353 = vrot.slane %v348, %v352
    %v354 = vlaneseq
    %v355 = vshrl.u32 %v354, 7
    %v356 = vsub.s32 1, %v355
    %v357 = vrot.slane %v348, %v356
    %v358 = vlaneseq
    %v359 = vshrl.u32 %v358, 7
    %v360 = vsub.s32 2, %v359
    %v361 = vrot.slane %v348, %v360
    %v362 = vlaneseq
    %v363 = vshrl.u32 %v362, 7
    %v364 = vsub.s32 3, %v363
    %v365 = vrot.slane %v348, %v364
    %v370 = vadd.f32 %v340, %v353
    %v371 = vadd.f32 %v341, %v357
    %v372 = vadd.f32 %v342, %v361
    %v373 = vadd.f32 %v343, %v365
    %v374 = vadd.f32 %v344, %v353
    %v375 = vadd.f32 %v345, %v357
    %v376 = vadd.f32 %v346, %v361
    %v377 = vadd.f32 %v347, %v365
    %v378 = vmul.f32 %v370, %v370
    %v379 = vmul.f32 %v371, %v371
    %v380 = vmul.f32 %v372, %v372
    %v381 = vmul.f32 %v373, %v373
    %v382 = vmul.f32 %v374, %v374
    %v383 = vmul.f32 %v375, %v375
    %v384 = vmul.f32 %v376, %v376
    %v385 = vmul.f32 %v377, %v377
    %v386 = vmul.f32 %v370, %v378
    %v387 = vmul.f32 %v371, %v379
    %v388 = vmul.f32 %v372, %v380
    %v389 = vmul.f32 %v373, %v381
    %v390 = vmul.f32 %v374, %v382
    %v391 = vmul.f32 %v375, %v383
    %v392 = vmul.f32 %v376, %v384
    %v393 = vmul.f32 %v377, %v385
    %v394 = vmul.f32 %v386, 0.044715
    %v395 = vmul.f32 %v387, 0.044715
    %v396 = vmul.f32 %v388, 0.044715
    %v397 = vmul.f32 %v389, 0.044715
    %v398 = vmul.f32 %v390, 0.044715
    %v399 = vmul.f32 %v391, 0.044715
    %v400 = vmul.f32 %v392, 0.044715
    %v401 = vmul.f32 %v393, 0.044715
    %v402 = vadd.f32 %v370, %v394
    %v403 = vadd.f32 %v371, %v395
    %v404 = vadd.f32 %v372, %v396
    %v405 = vadd.f32 %v373, %v397
    %v406 = vadd.f32 %v374, %v398
    %v407 = vadd.f32 %v375, %v399
    %v408 = vadd.f32 %v376, %v400
    %v409 = vadd.f32 %v377, %v401
    %v410 = vmul.f32 %v402, 0.7978846
    %v411 = vmul.f32 %v403, 0.7978846
    %v412 = vmul.f32 %v404, 0.7978846
    %v413 = vmul.f32 %v405, 0.7978846
    %v414 = vmul.f32 %v406, 0.7978846
    %v415 = vmul.f32 %v407, 0.7978846
    %v416 = vmul.f32 %v408, 0.7978846
    %v417 = vmul.f32 %v409, 0.7978846
    %v418 = vtanh.pop %v410
    %v419 = vtanh.pop %v411
    %v420 = vtanh.pop %v412
    %v421 = vtanh.pop %v413
    %v422 = vtanh.pop %v414
    %v423 = vtanh.pop %v415
    %v424 = vtanh.pop %v416
    %v425 = vtanh.pop %v417
    %v426 = vadd.f32 %v418, 1.0
    %v427 = vadd.f32 %v419, 1.0
    %v428 = vadd.f32 %v420, 1.0
    %v429 = vadd.f32 %v421, 1.0
    %v430 = vadd.f32 %v422, 1.0
    %v431 = vadd.f32 %v423, 1.0
    %v432 = vadd.f32 %v424, 1.0
    %v433 = vadd.f32 %v425, 1.0
    %v434 = vmul.f32 %v426, 0.5
    %v435 = vmul.f32 %v427, 0.5
    %v436 = vmul.f32 %v428, 0.5
    %v437 = vmul.f32 %v429, 0.5
    %v438 = vmul.f32 %v430, 0.5
    %v439 = vmul.f32 %v431, 0.5
    %v440 = vmul.f32 %v432, 0.5
    %v441 = vmul.f32 %v433, 0.5
    %v442 = vmul.f32 %v370, %v434
    %v443 = vmul.f32 %v371, %v435
    %v444 = vmul.f32 %v372, %v436
    %v445 = vmul.f32 %v373, %v437
    %v446 = vmul.f32 %v374, %v438
    %v447 = vmul.f32 %v375, %v439
    %v448 = vmul.f32 %v376, %v440
    %v449 = vmul.f32 %v377, %v441
    %v450 = vpack.c.bf16 %v446, %v442
    %v451 = vpack.c.bf16 %v447, %v443
    %v452 = vpack.c.bf16 %v448, %v444
    %v453 = vpack.c.bf16 %v449, %v445
    %v458 = vunpack.c.l.b16 %v450
    %v459 = vunpack.c.l.b16 %v451
    %v460 = vunpack.c.l.b16 %v452
    %v461 = vunpack.c.l.b16 %v453
    %v462 = vunpack.c.h.b16 %v450
    %v463 = vunpack.c.h.b16 %v451
    %v464 = vunpack.c.h.b16 %v452
    %v465 = vunpack.c.h.b16 %v453
    %v466 = vpack.c.b16 %v459, %v458
    %v467 = vpack.c.b16 %v461, %v460
    %v468 = vpack.c.b16 %v463, %v462
    %v469 = vpack.c.b16 %v465, %v464
    %474 = vst [vmem:[%s3] sm:$0xff] %v466
    %475 = vst [vmem:[%s3 + $0x8] sm:$0xff] %v467
    %476 = vst [vmem:[%s3 + $0x10] sm:$0xff] %v468
    %477 = vst [vmem:[%s3 + $0x18] sm:$0xff] %v469
  $region21: #{model_forward.36} parent=0 // pred_fallthru
    _
  // Predicated region
  $region22: #{model_forward.36} parent=0 // pred_check
    _
  $region23: #{model_forward.36} parent=0 // pred_check_branch
    %479 = sbr.rel (0) target = $region25
  $region24: #{model_forward.36} parent=0 // pred_region
    _
  $region25: #{model_forward.36} parent=0 // pred_fallthru
    _
  // Predicated region
  $region26: #{model_forward.36} parent=0 // pred_check
    _
  $region27: #{model_forward.36} parent=0 // pred_check_branch
    %481 = sbr.rel (0) target = $region29
  $region28: #{model_forward.36} parent=0 // pred_region
    _
  $region29: #{model_forward.36} parent=0 // pred_fallthru
    _

// kernel: model_forward.35
$region0: #{model_forward.35}
  #allocation0 [shape = 'u32[]', space=smem, size = 0x4, offset = 0x4, fixed_abs, tag = 'smem constant byte address 0x4 - core index']
  #allocation1 [shape = 'u32[144,128]{1,0:T(1,128)}', space=vmem, size = 0x12000, scoped, tag = 'internal scratch']
  %s0 = inlined_call_operand.vmem [shape: bf16[16,128], index: 0, kind: input, shape index: {}]
  %s1 = inlined_call_operand.vmem [shape: bf16[16,128], index: 1, kind: input, shape index: {}]
  %s2 = inlined_call_operand.vmem [shape: f32[1,128], index: 2, kind: input, shape index: {}]
  %s3 = inlined_call_operand.vmem [shape: f32[1,128], index: 3, kind: input, shape index: {}]
  %s4 = inlined_call_operand.vmem [shape: bf16[16,128], index: 4, kind: output, shape index: {}]
  %s5 = sld [smem:[#allocation0]]
  $region26: #{model_forward.35} parent=0
    _
  %s7 = ssub.s32 1, %s5
  %s8 = scalar_select 0, %s7, %s5
  // Predicated region
  $region2: #{model_forward.35} parent=0 // pred_check
    _
  $region3: #{model_forward.35} parent=0 // pred_check_branch
    %10 = sbr.rel (0) target = $region5
  $region4: #{model_forward.35} parent=0 // pred_region
    _
  $region5: #{model_forward.35} parent=0 // pred_fallthru
    _
  // Predicated region
  $region6: #{model_forward.35} parent=0 // pred_check
    _
  $region7: #{model_forward.35} parent=0 // pred_check_branch
    %12 = sbr.rel (0) target = $region9
  $region8: #{model_forward.35} parent=0 // pred_region
    _
  $region9: #{model_forward.35} parent=0 // pred_fallthru
    _
  // Predicated region
  $region10: #{model_forward.35} parent=0 // pred_check
    _
  $region11: #{model_forward.35} parent=0 // pred_check_branch
    %14 = sbr.rel (0) target = $region13
  $region12: #{model_forward.35} parent=0 // pred_region
    _
  $region13: #{model_forward.35} parent=0 // pred_fallthru
    _
  // Predicated region
  $region14: #{model_forward.35} parent=0 // pred_check
    _
  $region15: #{model_forward.35} parent=0 // pred_check_branch
    %16 = sbr.rel (0) target = $region17
  $region16: #{model_forward.35} parent=0 // pred_region
    _
  $region17: #{model_forward.35} parent=0 // pred_fallthru
    _
  %v17 = vld [vmem:[%s0] sm:$0xf]
  %v18 = vld [vmem:[%s0 + $0x4] sm:$0xf]
  %v19 = vunpack.c.l.bf16 %v17
  %v20 = vunpack.c.l.bf16 %v18
  %v21 = vld [vmem:[%s1] sm:$0xf]
  %v22 = vld [vmem:[%s1 + $0x4] sm:$0xf]
  %v23 = vunpack.c.l.bf16 %v21
  %v24 = vunpack.c.l.bf16 %v22
  %v25 = vadd.f32 %v19, %v23
  %v26 = vadd.f32 %v20, %v24
  %v27 = vld [vmem:[%s2] sm:$0x1]
  %v28 = vld [vmem:[%s3] sm:$0x1]
  %29 = vadd.xlane.f32.xlu0 %v25
  %v30 = vpop.xlane.xlu0 %29
  %31 = vadd.xlane.f32.xlu0 %v26
  %v32 = vpop.xlane.xlu0 %31
  %v33 = vrcp.pop 128.0
  %v34 = vmul.f32 %v30, %v33
  %v35 = vmul.f32 %v32, %v33
  %v36 = vsub.f32 %v25, %v34
  %v37 = vsub.f32 %v26, %v35
  %v38 = vmul.f32 %v36, %v36
  %v39 = vmul.f32 %v37, %v37
  %40 = vadd.xlane.f32.xlu0 %v38
  %v41 = vpop.xlane.xlu0 %40
  %42 = vadd.xlane.f32.xlu0 %v39
  %v43 = vpop.xlane.xlu0 %42
  %v44 = vmul.f32 %v41, %v33
  %v45 = vmul.f32 %v43, %v33
  %v46 = vadd.f32 %v44, 1e-12
  %v47 = vadd.f32 %v45, 1e-12
  %v48 = vrsqrt.pop %v46
  %v49 = vrsqrt.pop %v47
  %v50 = vmul.f32 %v36, %v48
  %v51 = vmul.f32 %v37, %v49
  %v53 = vlaneseq
  %v54 = vshrl.u32 %v53, 7
  %v55 = vsub.s32 0, %v54
  %v56 = vrot.slane %v27, %v55
  %v58 = vmul.f32 %v50, %v56
  %v59 = vmul.f32 %v51, %v56
  %v61 = vlaneseq
  %v62 = vshrl.u32 %v61, 7
  %v63 = vsub.s32 0, %v62
  %v64 = vrot.slane %v28, %v63
  %v66 = vadd.f32 %v58, %v64
  %v67 = vadd.f32 %v59, %v64
  %v68 = vpack.c.bf16 %v67, %v66
  %v70 = vunpack.c.l.b16 %v68
  %v71 = vunpack.c.h.b16 %v68
  %v72 = vpack.c.b16 %v70, %v70
  %v73 = vpack.c.b16 %v71, %v71
  %76 = vst [vmem:[%s4] sm:$0xf] %v72
  %77 = vst [vmem:[%s4 + $0x4] sm:$0xf] %v73
  // Predicated region
  $region18: #{model_forward.35} parent=0 // pred_check
    _
  $region19: #{model_forward.35} parent=0 // pred_check_branch
    %79 = sbr.rel (0) target = $region21
  $region20: #{model_forward.35} parent=0 // pred_region
    _
  $region21: #{model_forward.35} parent=0 // pred_fallthru
    _
  // Predicated region
  $region22: #{model_forward.35} parent=0 // pred_check
    _
  $region23: #{model_forward.35} parent=0 // pred_check_branch
    %81 = sbr.rel (0) target = $region25
  $region24: #{model_forward.35} parent=0 // pred_region
    _
  $region25: #{model_forward.35} parent=0 // pred_fallthru
    _

// kernel: model_forward.33
$region0: #{model_forward.33}
  #allocation0 [shape = 'u32[]', space=smem, size = 0x4, offset = 0x4, fixed_abs, tag = 'smem constant byte address 0x4 - core index']
  #allocation1 [shape = 'u32[144,128]{1,0:T(1,128)}', space=vmem, size = 0x12000, scoped, tag = 'internal scratch']
  %s0 = inlined_call_operand.vmem [shape: bf16[2,8,384], index: 0, kind: input, shape index: {}, may-alias: {0,1,2}]
  %s1 = inlined_call_operand.vmem [shape: bf16[2,8,384], index: 1, kind: input, shape index: {}, may-alias: {0,1,2}]
  %s2 = inlined_call_operand.vmem [shape: bf16[2,8,384], index: 2, kind: input, shape index: {}, may-alias: {0,1,2}]
  %s3 = inlined_call_operand.vmem [shape: f32[2,1,8], index: 3, kind: input, shape index: {}]
  %s4 = inlined_call_operand.vmem [shape: bf16[2,8,128], index: 4, kind: output, shape index: {}]
  %s5 = sld [smem:[#allocation0]]
  $region49: #{model_forward.33} parent=0
    _
  %s7 = ssub.s32 1, %s5
  %s8 = scalar_select 0, %s7, %s5
  loop: start=0, step=1, limit=4
  $region2: #{model_forward.33} parent=0 // loop_pre_header
    _
  $region3: #{model_forward.33} parent=0 // loop_header
    %s10 = sphi 0, %s14
    %p11 = scmp.ge.s32.totalorder %s10, 4
    %s20 = sphi 0, %s22
    %s23 = sphi 0, %s20
    %s24 = sphi 0, %s23
    %s40 = sphi 0, %s24
    %s46 = sphi 0, %s48
    %s49 = sphi 0, %s46
    %s50 = sphi 0, %s49
    %s66 = sphi 0, %s50
    %s72 = sphi 0, %s74
    %s75 = sphi 0, %s72
    %s76 = sphi 0, %s75
    %s92 = sphi 0, %s76
    %s98 = sphi 0, %s100
    %s101 = sphi 0, %s98
    %s102 = sphi 0, %s101
    %s118 = sphi 0, %s102
    %s124 = sphi 0, %s126
    %s127 = sphi 0, %s124
    %s128 = sphi 0, %s127
    %s144 = sphi 0, %s128
  $region4: #{model_forward.33} parent=0 // loop_header_branch
    %13 = sbr.rel (%p11) target = $region8
  $region5: #{model_forward.33} parent=0 // loop_body
    %s15 = ssub.s32 %s10, 1
    %s16 = ssub.s32 %s10, 2
    %s17 = sadd.s32 %s10, 1
    %s18 = ssub.s32 %s10, %s17
    %p19 = scmp.eq.s32.totalorder %s18, 0
    %s21 = sadd.s32 %s20, 1
    %s22 = scalar_select %p19, %s20, %s21
    %p25 = pneg %p19
    %p26 = scmp.eq.s32.totalorder %s10, 1
    %p27 = por %p25, %p26
    %p28 = scmp.ne.s32.totalorder %s20, %s23
    %p29 = scmp.eq.s32.totalorder %s10, 0
    %p30 = por %p28, %p29
    %p31 = scmp.ne.s32.totalorder %s20, %s23
    %p32 = scmp.eq.s32.totalorder %s15, 1
    %p33 = por %p31, %p32
    %p34 = scmp.ne.s32.totalorder %s23, %s24
    %p35 = scmp.eq.s32.totalorder %s15, 0
    %p36 = por %p34, %p35
    %p37 = scmp.ne.s32.totalorder %s23, %s24
    %p38 = scmp.eq.s32.totalorder %s16, 1
    %p39 = por %p37, %p38
    %p41 = scmp.ne.s32.totalorder %s24, %s40
    %p42 = scmp.eq.s32.totalorder %s16, 0
    %p43 = por %p41, %p42
    %s44 = ssub.s32 %s10, %s17
    %p45 = scmp.eq.s32.totalorder %s44, 0
    %s47 = sadd.s32 %s46, 1
    %s48 = scalar_select %p45, %s46, %s47
    %p51 = pneg %p45
    %p52 = scmp.eq.s32.totalorder %s10, 1
    %p53 = por %p51, %p52
    %p54 = scmp.ne.s32.totalorder %s46, %s49
    %p55 = scmp.eq.s32.totalorder %s10, 0
    %p56 = por %p54, %p55
    %p57 = scmp.ne.s32.totalorder %s46, %s49
    %p58 = scmp.eq.s32.totalorder %s15, 1
    %p59 = por %p57, %p58
    %p60 = scmp.ne.s32.totalorder %s49, %s50
    %p61 = scmp.eq.s32.totalorder %s15, 0
    %p62 = por %p60, %p61
    %p63 = scmp.ne.s32.totalorder %s49, %s50
    %p64 = scmp.eq.s32.totalorder %s16, 1
    %p65 = por %p63, %p64
    %p67 = scmp.ne.s32.totalorder %s50, %s66
    %p68 = scmp.eq.s32.totalorder %s16, 0
    %p69 = por %p67, %p68
    %s70 = ssub.s32 %s10, %s17
    %p71 = scmp.eq.s32.totalorder %s70, 0
    %s73 = sadd.s32 %s72, 1
    %s74 = scalar_select %p71, %s72, %s73
    %p77 = pneg %p71
    %p78 = scmp.eq.s32.totalorder %s10, 1
    %p79 = por %p77, %p78
    %p80 = scmp.ne.s32.totalorder %s72, %s75
    %p81 = scmp.eq.s32.totalorder %s10, 0
    %p82 = por %p80, %p81
    %p83 = scmp.ne.s32.totalorder %s72, %s75
    %p84 = scmp.eq.s32.totalorder %s15, 1
    %p85 = por %p83, %p84
    %p86 = scmp.ne.s32.totalorder %s75, %s76
    %p87 = scmp.eq.s32.totalorder %s15, 0
    %p88 = por %p86, %p87
    %p89 = scmp.ne.s32.totalorder %s75, %s76
    %p90 = scmp.eq.s32.totalorder %s16, 1
    %p91 = por %p89, %p90
    %p93 = scmp.ne.s32.totalorder %s76, %s92
    %p94 = scmp.eq.s32.totalorder %s16, 0
    %p95 = por %p93, %p94
    %s96 = ssub.s32 %s10, %s17
    %p97 = scmp.eq.s32.totalorder %s96, 0
    %s99 = sadd.s32 %s98, 1
    %s100 = scalar_select %p97, %s98, %s99
    %p103 = pneg %p97
    %p104 = scmp.eq.s32.totalorder %s10, 1
    %p105 = por %p103, %p104
    %p106 = scmp.ne.s32.totalorder %s98, %s101
    %p107 = scmp.eq.s32.totalorder %s10, 0
    %p108 = por %p106, %p107
    %p109 = scmp.ne.s32.totalorder %s98, %s101
    %p110 = scmp.eq.s32.totalorder %s15, 1
    %p111 = por %p109, %p110
    %p112 = scmp.ne.s32.totalorder %s101, %s102
    %p113 = scmp.eq.s32.totalorder %s15, 0
    %p114 = por %p112, %p113
    %p115 = scmp.ne.s32.totalorder %s101, %s102
    %p116 = scmp.eq.s32.totalorder %s16, 1
    %p117 = por %p115, %p116
    %p119 = scmp.ne.s32.totalorder %s102, %s118
    %p120 = scmp.eq.s32.totalorder %s16, 0
    %p121 = por %p119, %p120
    %s122 = ssub.s32 %s10, %s17
    %p123 = scmp.eq.s32.totalorder %s122, 0
    %s125 = sadd.s32 %s124, 1
    %s126 = scalar_select %p123, %s124, %s125
    %p129 = pneg %p123
    %p130 = scmp.eq.s32.totalorder %s10, 1
    %p131 = por %p129, %p130
    %p132 = scmp.ne.s32.totalorder %s124, %s127
    %p133 = scmp.eq.s32.totalorder %s10, 0
    %p134 = por %p132, %p133
    %p135 = scmp.ne.s32.totalorder %s124, %s127
    %p136 = scmp.eq.s32.totalorder %s15, 1
    %p137 = por %p135, %p136
    %p138 = scmp.ne.s32.totalorder %s127, %s128
    %p139 = scmp.eq.s32.totalorder %s15, 0
    %p140 = por %p138, %p139
    %p141 = scmp.ne.s32.totalorder %s127, %s128
    %p142 = scmp.eq.s32.totalorder %s16, 1
    %p143 = por %p141, %p142
    %p145 = scmp.ne.s32.totalorder %s128, %s144
    %p146 = scmp.eq.s32.totalorder %s16, 0
    %p147 = por %p145, %p146
    %p148 = scmp.le.s32.totalorder 1, %s10
    %p149 = scmp.lt.s32.totalorder %s10, 3
    %p150 = pnand %p148, %p149
    %p151 = pneg %p150
    // Predicated region
    $region9: #{model_forward.33} parent=5 // pred_check
      _
    $region10: #{model_forward.33} parent=5 // pred_check_branch
      %153 = sbr.rel (%p150) target = $region12
    $region11: #{model_forward.33} parent=5 // pred_region
      %s154 = ssub.s32 %s10, 1
    $region12: #{model_forward.33} parent=5 // pred_fallthru
      _
    %p155 = scmp.lt.s32.totalorder %s10, 2
    // Predicated region
    $region13: #{model_forward.33} parent=5 // pred_check
      %p156 = pneg %p155
    $region14: #{model_forward.33} parent=5 // pred_check_branch
      %158 = sbr.rel (%p156) target = $region16
    $region15: #{model_forward.33} parent=5 // pred_region
      // Predicated region
      $region17: #{model_forward.33} parent=15 // pred_check
        %p159 = pneg %p30
      $region18: #{model_forward.33} parent=15 // pred_check_branch
        %161 = sbr.rel (%p159) target = $region20
      $region19: #{model_forward.33} parent=15 // pred_region
        %p162 = scmp.lt.s32.totalorder %s10, 1
        %s163 = scalar_select %p162, %s10, 1
        %s164 = smul.addr %s163, 3
        %s165 = smul.addr %s164, 4
        %s166 = scalar_lea.vmem %s0, %s165
      $region20: #{model_forward.33} parent=15 // pred_fallthru
        _
      // Predicated region
      $region21: #{model_forward.33} parent=15 // pred_check
        %p167 = pneg %p56
      $region22: #{model_forward.33} parent=15 // pred_check_branch
        %169 = sbr.rel (%p167) target = $region24
      $region23: #{model_forward.33} parent=15 // pred_region
        %p170 = scmp.lt.s32.totalorder %s10, 1
        %s171 = scalar_select %p170, %s10, 1
        %s172 = smul.addr %s171, 3
        %s173 = sadd.s32 1, %s172
        %s174 = smul.addr %s173, 4
        %s175 = scalar_lea.vmem %s1, %s174
      $region24: #{model_forward.33} parent=15 // pred_fallthru
        _
      // Predicated region
      $region25: #{model_forward.33} parent=15 // pred_check
        %p176 = pneg %p82
      $region26: #{model_forward.33} parent=15 // pred_check_branch
        %178 = sbr.rel (%p176) target = $region28
      $region27: #{model_forward.33} parent=15 // pred_region
        %p179 = scmp.lt.s32.totalorder %s10, 1
        %s180 = scalar_select %p179, %s10, 1
        %s181 = smul.addr %s180, 3
        %s182 = sadd.s32 2, %s181
        %s183 = smul.addr %s182, 4
        %s184 = scalar_lea.vmem %s2, %s183
      $region28: #{model_forward.33} parent=15 // pred_fallthru
        _
      // Predicated region
      $region29: #{model_forward.33} parent=15 // pred_check
        %p185 = pneg %p108
      $region30: #{model_forward.33} parent=15 // pred_check_branch
        %187 = sbr.rel (%p185) target = $region32
      $region31: #{model_forward.33} parent=15 // pred_region
        %p188 = scmp.lt.s32.totalorder %s10, 1
        %s189 = scalar_select %p188, %s10, 1
        %s190 = scalar_lea.vmem %s3, %s189
      $region32: #{model_forward.33} parent=15 // pred_fallthru
        _
    $region16: #{model_forward.33} parent=5 // pred_fallthru
      _
    %p191 = scmp.le.s32.totalorder 1, %s10
    %p192 = scmp.lt.s32.totalorder %s10, 3
    %p193 = pnand %p191, %p192
    %p194 = pneg %p193
    // Predicated region
    $region33: #{model_forward.33} parent=5 // pred_check
      _
    $region34: #{model_forward.33} parent=5 // pred_check_branch
      %196 = sbr.rel (%p193) target = $region36
    $region35: #{model_forward.33} parent=5 // pred_region
      %s197 = ssub.s32 %s10, 1
      %p198 = scmp.lt.s32.totalorder %s15, 1
      %s199 = scalar_select %p198, %s15, 1
      %s200 = smul.addr %s199, 3
      %s201 = smul.addr %s200, 4
      %s202 = scalar_lea.vmem %s0, %s201
      %p203 = pneg %p36
      %p204 = pneg %p33
      %p205 = scmp.lt.s32.totalorder %s15, 1
      %s206 = scalar_select %p205, %s15, 1
      %s207 = smul.addr %s206, 3
      %s208 = sadd.s32 1, %s207
      %s209 = smul.addr %s208, 4
      %s210 = scalar_lea.vmem %s1, %s209
      %p211 = pneg %p62
      %p212 = pneg %p59
      %p213 = scmp.lt.s32.totalorder %s15, 1
      %s214 = scalar_select %p213, %s15, 1
      %s215 = smul.addr %s214, 3
      %s216 = sadd.s32 2, %s215
      %s217 = smul.addr %s216, 4
      %s218 = scalar_lea.vmem %s2, %s217
      %p219 = pneg %p88
      %p220 = pneg %p85
      %p221 = scmp.lt.s32.totalorder %s15, 1
      %s222 = scalar_select %p221, %s15, 1
      %s223 = scalar_lea.vmem %s3, %s222
      %p224 = pneg %p114
      %p225 = pneg %p111
      %p226 = pneg %p140
      %p227 = pneg %p137
      %p228 = scmp.lt.s32.totalorder %s15, 1
      %s229 = scalar_select %p228, %s15, 1
      %s230 = smul.addr %s229, 4
      %s231 = scalar_lea.vmem %s4, %s230
      %p232 = scmp.lt.s32.totalorder %s15, 1
      %s233 = scalar_select %p232, %s15, 1
      %s234 = smul.addr %s233, 3
      %s235 = smul.addr %s234, 4
      %s236 = scalar_lea.vmem %s0, %s235
      %p237 = scmp.lt.s32.totalorder %s15, 1
      %s238 = scalar_select %p237, %s15, 1
      %s239 = smul.addr %s238, 3
      %s240 = sadd.s32 1, %s239
      %s241 = smul.addr %s240, 4
      %s242 = scalar_lea.vmem %s1, %s241
      %p243 = scmp.lt.s32.totalorder %s15, 1
      %s244 = scalar_select %p243, %s15, 1
      %s245 = smul.addr %s244, 3
      %s246 = sadd.s32 2, %s245
      %s247 = smul.addr %s246, 4
      %s248 = scalar_lea.vmem %s2, %s247
      %p249 = scmp.lt.s32.totalorder %s15, 1
      %s250 = scalar_select %p249, %s15, 1
      %s251 = scalar_lea.vmem %s3, %s250
      %p252 = scmp.lt.s32.totalorder %s15, 1
      %s253 = scalar_select %p252, %s15, 1
      %s254 = smul.addr %s253, 4
      %s255 = scalar_lea.vmem %s4, %s254
      %v256 = vld [vmem:[%s251] sm:$0x1]
      %v257 = vld [vmem:[%s236] sm:$0xf]
      %v258 = vunpack.c.l.bf16 %v257
      %v259 = vmul.f32 %v258, 0.25
      %v260 = vld [vmem:[%s242] sm:$0xf]
      %v261 = vunpack.c.l.bf16 %v260
      %v262 = vld [vmem:[%s248] sm:$0xf]
      %v263 = vunpack.c.l.bf16 %v262
      %v265 = vlaneseq
      %v266 = vshrl.u32 %v265, 7
      %v267 = vsub.s32 0, %v266
      %v268 = vrot.slane %v256, %v267
      %vm270 = vcmask 130048
      %v272 = vsel %vm270, %v259, 0
      %v275 = vsel %vm270, %v261, 0
      %277 = vmatprep.subr.mxu0 0.0
      %278 = vmatpush1.xpose.msra.mxu0 0.0
      %279 = vmatprep.subr.mxu0 0.0
      %280 = vmatpush1.xpose.msra.mxu0 0.0
      %281 = vmatprep.subr.mxu0 0.0
      %282 = vmatpush1.xpose.msra.mxu0 0.0
      %283 = vmatprep.subr.mxu0 0.0
      %284 = vmatpush1.xpose.msra.mxu0 0.0
      %285 = vmatprep.subr.mxu0 0.0
      %286 = vmatpush1.xpose.msra.mxu0 0.0
      %287 = vmatprep.subr.mxu0 0.0
      %288 = vmatpush1.xpose.msra.mxu0 0.0
      %289 = vmatprep.subr.mxu0 0.0
      %290 = vmatpush1.xpose.msra.mxu0 0.0
      %291 = vmatprep.subr.mxu0 0.0
      %292 = vmatpush1.xpose.msra.mxu0 0.0
      %293 = vmatprep.subr.mxu0 0.0
      %294 = vmatpush1.xpose.msra.mxu0 0.0
      %295 = vmatprep.subr.mxu0 0.0
      %296 = vmatpush1.xpose.msra.mxu0 0.0
      %297 = vmatprep.subr.mxu0 0.0
      %298 = vmatpush1.xpose.msra.mxu0 0.0
      %299 = vmatprep.subr.mxu0 0.0
      %300 = vmatpush1.xpose.msra.mxu0 0.0
      %301 = vmatprep.subr.mxu0 0.0
      %302 = vmatpush1.xpose.msra.mxu0 0.0
      %303 = vmatprep.subr.mxu0 0.0
      %304 = vmatpush1.xpose.msra.mxu0 0.0
      %305 = vmatprep.subr.mxu0 0.0
      %306 = vmatpush1.xpose.msra.mxu0 0.0
      %307 = vmatprep.subr.mxu0 0.0
      %308 = vmatpush1.xpose.msra.mxu0 %v275
      %309 = vmatprep.subr.mxu0 0.0
      %310 = vmatpush2.xpose.msra.mxu0 0.0
      %311 = vmatprep.subr.mxu0 0.0
      %312 = vmatpush2.xpose.msra.mxu0 0.0
      %313 = vmatprep.subr.mxu0 0.0
      %314 = vmatpush2.xpose.msra.mxu0 0.0
      %315 = vmatprep.subr.mxu0 0.0
      %316 = vmatpush2.xpose.msra.mxu0 0.0
      %317 = vmatprep.subr.mxu0 0.0
      %318 = vmatpush2.xpose.msra.mxu0 0.0
      %319 = vmatprep.subr.mxu0 0.0
      %320 = vmatpush2.xpose.msra.mxu0 0.0
      %321 = vmatprep.subr.mxu0 0.0
      %322 = vmatpush2.xpose.msra.mxu0 0.0
      %323 = vmatprep.subr.mxu0 0.0
      %324 = vmatpush2.xpose.msra.mxu0 0.0
      %325 = vmatprep.subr.mxu0 0.0
      %326 = vmatpush2.xpose.msra.mxu0 0.0
      %327 = vmatprep.subr.mxu0 0.0
      %328 = vmatpush2.xpose.msra.mxu0 0.0
      %329 = vmatprep.subr.mxu0 0.0
      %330 = vmatpush2.xpose.msra.mxu0 0.0
      %331 = vmatprep.subr.mxu0 0.0
      %332 = vmatpush2.xpose.msra.mxu0 0.0
      %333 = vmatprep.subr.mxu0 0.0
      %334 = vmatpush2.xpose.msra.mxu0 0.0
      %335 = vmatprep.subr.mxu0 0.0
      %336 = vmatpush2.xpose.msra.mxu0 0.0
      %337 = vmatprep.subr.mxu0 0.0
      %338 = vmatpush2.xpose.msra.mxu0 0.0
      %339 = vmatprep.subr.mxu0 0.0
      %340 = vmatpush2.xpose.msra.mxu0 0.0
      %341 = vmatprep.mubr.f32.mxu0 0.0
      %342 = vmatmul.mubr.f32.gmra.mxu0 %v272
      %v343 = vpop.f32.mrf.mxu0
      %v344 = vadd.f32 %v268, %v343
      %v345 = vpop.f32.mrf.mxu0
      %346 = vdwg.mxu0
      %vm347 = vcmask 64512
      %v348 = vsel %vm347, %v344, -inf
      %349 = vmax.xlane.f32.xlu0 %v348
      %v350 = vpop.xlane.xlu0 %349
      %v351 = vsub.f32 %v344, %v350
      %v352 = vmul.f32 %v351, 1.442695
      %v353 = vpow.pop %v352
      %v354 = vsel %vm347, %v353, 0.0
      %355 = vadd.xlane.f32.xlu0 %v354
      %v356 = vpop.xlane.xlu0 %355
      %v357 = vrcp.pop %v356
      %v358 = vmul.f32 %v353, %v357
      %v360 = vsel %vm347, %v358, 0
      %362 = vmatprep.subr.mxu0 0.0
      %363 = vmatpush1.msra.mxu0 0.0
      %364 = vmatprep.subr.mxu0 0.0
      %365 = vmatpush1.msra.mxu0 0.0
      %366 = vmatprep.subr.mxu0 0.0
      %367 = vmatpush1.msra.mxu0 0.0
      %368 = vmatprep.subr.mxu0 0.0
      %369 = vmatpush1.msra.mxu0 0.0
      %370 = vmatprep.subr.mxu0 0.0
      %371 = vmatpush1.msra.mxu0 0.0
      %372 = vmatprep.subr.mxu0 0.0
      %373 = vmatpush1.msra.mxu0 0.0
      %374 = vmatprep.subr.mxu0 0.0
      %375 = vmatpush1.msra.mxu0 0.0
      %376 = vmatprep.subr.mxu0 0.0
      %377 = vmatpush1.msra.mxu0 0.0
      %378 = vmatprep.subr.mxu0 0.0
      %379 = vmatpush1.msra.mxu0 0.0
      %380 = vmatprep.subr.mxu0 0.0
      %381 = vmatpush1.msra.mxu0 0.0
      %382 = vmatprep.subr.mxu0 0.0
      %383 = vmatpush1.msra.mxu0 0.0
      %384 = vmatprep.subr.mxu0 0.0
      %385 = vmatpush1.msra.mxu0 0.0
      %386 = vmatprep.subr.mxu0 0.0
      %387 = vmatpush1.msra.mxu0 0.0
      %388 = vmatprep.subr.mxu0 0.0
      %389 = vmatpush1.msra.mxu0 0.0
      %390 = vmatprep.subr.mxu0 0.0
      %391 = vmatpush1.msra.mxu0 0.0
      %392 = vmatprep.subr.mxu0 0.0
      %393 = vmatpush1.msra.mxu0 %v263
      %394 = vmatprep.subr.mxu0 0.0
      %395 = vmatpush2.msra.mxu0 0.0
      %396 = vmatprep.subr.mxu0 0.0
      %397 = vmatpush2.msra.mxu0 0.0
      %398 = vmatprep.subr.mxu0 0.0
      %399 = vmatpush2.msra.mxu0 0.0
      %400 = vmatprep.subr.mxu0 0.0
      %401 = vmatpush2.msra.mxu0 0.0
      %402 = vmatprep.subr.mxu0 0.0
      %403 = vmatpush2.msra.mxu0 0.0
      %404 = vmatprep.subr.mxu0 0.0
      %405 = vmatpush2.msra.mxu0 0.0
      %406 = vmatprep.subr.mxu0 0.0
      %407 = vmatpush2.msra.mxu0 0.0
      %408 = vmatprep.subr.mxu0 0.0
      %409 = vmatpush2.msra.mxu0 0.0
      %410 = vmatprep.subr.mxu0 0.0
      %411 = vmatpush2.msra.mxu0 0.0
      %412 = vmatprep.subr.mxu0 0.0
      %413 = vmatpush2.msra.mxu0 0.0
      %414 = vmatprep.subr.mxu0 0.0
      %415 = vmatpush2.msra.mxu0 0.0
      %416 = vmatprep.subr.mxu0 0.0
      %417 = vmatpush2.msra.mxu0 0.0
      %418 = vmatprep.subr.mxu0 0.0
      %419 = vmatpush2.msra.mxu0 0.0
      %420 = vmatprep.subr.mxu0 0.0
      %421 = vmatpush2.msra.mxu0 0.0
      %422 = vmatprep.subr.mxu0 0.0
      %423 = vmatpush2.msra.mxu0 0.0
      %424 = vmatprep.subr.mxu0 0.0
      %425 = vmatpush2.msra.mxu0 0.0
      %426 = vmatprep.mubr.f32.mxu0 0.0
      %427 = vmatmul.mubr.f32.gmra.mxu0 %v360
      %v428 = vpop.f32.mrf.mxu0
      %v429 = vadd.f32 0.0, %v428
      %v430 = vpop.f32.mrf.mxu0
      %431 = vdwg.mxu0
      %432 = vrot.lane.b32.xlu0 %v259, 112
      %v433 = vpop.permute.xlu0 %432
      %434 = vrot.lane.b32.xlu0 %v261, 112
      %v435 = vpop.permute.xlu0 %434
      %v436 = vsel %vm270, %v433, 0
      %v438 = vsel %vm270, %v435, 0
      %440 = vmatprep.subr.mxu0 0.0
      %441 = vmatpush1.xpose.msra.mxu0 0.0
      %442 = vmatprep.subr.mxu0 0.0
      %443 = vmatpush1.xpose.msra.mxu0 0.0
      %444 = vmatprep.subr.mxu0 0.0
      %445 = vmatpush1.xpose.msra.mxu0 0.0
      %446 = vmatprep.subr.mxu0 0.0
      %447 = vmatpush1.xpose.msra.mxu0 0.0
      %448 = vmatprep.subr.mxu0 0.0
      %449 = vmatpush1.xpose.msra.mxu0 0.0
      %450 = vmatprep.subr.mxu0 0.0
      %451 = vmatpush1.xpose.msra.mxu0 0.0
      %452 = vmatprep.subr.mxu0 0.0
      %453 = vmatpush1.xpose.msra.mxu0 0.0
      %454 = vmatprep.subr.mxu0 0.0
      %455 = vmatpush1.xpose.msra.mxu0 0.0
      %456 = vmatprep.subr.mxu0 0.0
      %457 = vmatpush1.xpose.msra.mxu0 0.0
      %458 = vmatprep.subr.mxu0 0.0
      %459 = vmatpush1.xpose.msra.mxu0 0.0
      %460 = vmatprep.subr.mxu0 0.0
      %461 = vmatpush1.xpose.msra.mxu0 0.0
      %462 = vmatprep.subr.mxu0 0.0
      %463 = vmatpush1.xpose.msra.mxu0 0.0
      %464 = vmatprep.subr.mxu0 0.0
      %465 = vmatpush1.xpose.msra.mxu0 0.0
      %466 = vmatprep.subr.mxu0 0.0
      %467 = vmatpush1.xpose.msra.mxu0 0.0
      %468 = vmatprep.subr.mxu0 0.0
      %469 = vmatpush1.xpose.msra.mxu0 0.0
      %470 = vmatprep.subr.mxu0 0.0
      %471 = vmatpush1.xpose.msra.mxu0 %v438
      %472 = vmatprep.subr.mxu0 0.0
      %473 = vmatpush2.xpose.msra.mxu0 0.0
      %474 = vmatprep.subr.mxu0 0.0
      %475 = vmatpush2.xpose.msra.mxu0 0.0
      %476 = vmatprep.subr.mxu0 0.0
      %477 = vmatpush2.xpose.msra.mxu0 0.0
      %478 = vmatprep.subr.mxu0 0.0
      %479 = vmatpush2.xpose.msra.mxu0 0.0
      %480 = vmatprep.subr.mxu0 0.0
      %481 = vmatpush2.xpose.msra.mxu0 0.0
      %482 = vmatprep.subr.mxu0 0.0
      %483 = vmatpush2.xpose.msra.mxu0 0.0
      %484 = vmatprep.subr.mxu0 0.0
      %485 = vmatpush2.xpose.msra.mxu0 0.0
      %486 = vmatprep.subr.mxu0 0.0
      %487 = vmatpush2.xpose.msra.mxu0 0.0
      %488 = vmatprep.subr.mxu0 0.0
      %489 = vmatpush2.xpose.msra.mxu0 0.0
      %490 = vmatprep.subr.mxu0 0.0
      %491 = vmatpush2.xpose.msra.mxu0 0.0
      %492 = vmatprep.subr.mxu0 0.0
      %493 = vmatpush2.xpose.msra.mxu0 0.0
      %494 = vmatprep.subr.mxu0 0.0
      %495 = vmatpush2.xpose.msra.mxu0 0.0
      %496 = vmatprep.subr.mxu0 0.0
      %497 = vmatpush2.xpose.msra.mxu0 0.0
      %498 = vmatprep.subr.mxu0 0.0
      %499 = vmatpush2.xpose.msra.mxu0 0.0
      %500 = vmatprep.subr.mxu0 0.0
      %501 = vmatpush2.xpose.msra.mxu0 0.0
      %502 = vmatprep.subr.mxu0 0.0
      %503 = vmatpush2.xpose.msra.mxu0 0.0
      %504 = vmatprep.mubr.f32.mxu0 0.0
      %505 = vmatmul.mubr.f32.gmra.mxu0 %v436
      %v506 = vpop.f32.mrf.mxu0
      %v507 = vadd.f32 %v268, %v506
      %v508 = vpop.f32.mrf.mxu0
      %509 = vdwg.mxu0
      %v510 = vsel %vm347, %v507, -inf
      %511 = vmax.xlane.f32.xlu0 %v510
      %v512 = vpop.xlane.xlu0 %511
      %v513 = vsub.f32 %v507, %v512
      %v514 = vmul.f32 %v513, 1.442695
      %v515 = vpow.pop %v514
      %v516 = vsel %vm347, %v515, 0.0
      %517 = vadd.xlane.f32.xlu0 %v516
      %v518 = vpop.xlane.xlu0 %517
      %v519 = vrcp.pop %v518
      %v520 = vmul.f32 %v515, %v519
      %522 = vrot.lane.b32.xlu0 %v263, 112
      %v523 = vpop.permute.xlu0 %522
      %v526 = vsel %vm347, %v520, 0
      %528 = vmatprep.subr.mxu0 0.0
      %529 = vmatpush1.msra.mxu0 0.0
      %530 = vmatprep.subr.mxu0 0.0
      %531 = vmatpush1.msra.mxu0 0.0
      %532 = vmatprep.subr.mxu0 0.0
      %533 = vmatpush1.msra.mxu0 0.0
      %534 = vmatprep.subr.mxu0 0.0
      %535 = vmatpush1.msra.mxu0 0.0
      %536 = vmatprep.subr.mxu0 0.0
      %537 = vmatpush1.msra.mxu0 0.0
      %538 = vmatprep.subr.mxu0 0.0
      %539 = vmatpush1.msra.mxu0 0.0
      %540 = vmatprep.subr.mxu0 0.0
      %541 = vmatpush1.msra.mxu0 0.0
      %542 = vmatprep.subr.mxu0 0.0
      %543 = vmatpush1.msra.mxu0 0.0
      %544 = vmatprep.subr.mxu0 0.0
      %545 = vmatpush1.msra.mxu0 0.0
      %546 = vmatprep.subr.mxu0 0.0
      %547 = vmatpush1.msra.mxu0 0.0
      %548 = vmatprep.subr.mxu0 0.0
      %549 = vmatpush1.msra.mxu0 0.0
      %550 = vmatprep.subr.mxu0 0.0
      %551 = vmatpush1.msra.mxu0 0.0
      %552 = vmatprep.subr.mxu0 0.0
      %553 = vmatpush1.msra.mxu0 0.0
      %554 = vmatprep.subr.mxu0 0.0
      %555 = vmatpush1.msra.mxu0 0.0
      %556 = vmatprep.subr.mxu0 0.0
      %557 = vmatpush1.msra.mxu0 0.0
      %558 = vmatprep.subr.mxu0 0.0
      %559 = vmatpush1.msra.mxu0 %v523
      %560 = vmatprep.subr.mxu0 0.0
      %561 = vmatpush2.msra.mxu0 0.0
      %562 = vmatprep.subr.mxu0 0.0
      %563 = vmatpush2.msra.mxu0 0.0
      %564 = vmatprep.subr.mxu0 0.0
      %565 = vmatpush2.msra.mxu0 0.0
      %566 = vmatprep.subr.mxu0 0.0
      %567 = vmatpush2.msra.mxu0 0.0
      %568 = vmatprep.subr.mxu0 0.0
      %569 = vmatpush2.msra.mxu0 0.0
      %570 = vmatprep.subr.mxu0 0.0
      %571 = vmatpush2.msra.mxu0 0.0
      %572 = vmatprep.subr.mxu0 0.0
      %573 = vmatpush2.msra.mxu0 0.0
      %574 = vmatprep.subr.mxu0 0.0
      %575 = vmatpush2.msra.mxu0 0.0
      %576 = vmatprep.subr.mxu0 0.0
      %577 = vmatpush2.msra.mxu0 0.0
      %578 = vmatprep.subr.mxu0 0.0
      %579 = vmatpush2.msra.mxu0 0.0
      %580 = vmatprep.subr.mxu0 0.0
      %581 = vmatpush2.msra.mxu0 0.0
      %582 = vmatprep.subr.mxu0 0.0
      %583 = vmatpush2.msra.mxu0 0.0
      %584 = vmatprep.subr.mxu0 0.0
      %585 = vmatpush2.msra.mxu0 0.0
      %586 = vmatprep.subr.mxu0 0.0
      %587 = vmatpush2.msra.mxu0 0.0
      %588 = vmatprep.subr.mxu0 0.0
      %589 = vmatpush2.msra.mxu0 0.0
      %590 = vmatprep.subr.mxu0 0.0
      %591 = vmatpush2.msra.mxu0 0.0
      %592 = vmatprep.mubr.f32.mxu0 0.0
      %593 = vmatmul.mubr.f32.gmra.mxu0 %v526
      %v594 = vpop.f32.mrf.mxu0
      %v595 = vadd.f32 0.0, %v594
      %v596 = vpop.f32.mrf.mxu0
      %597 = vdwg.mxu0
      %598 = vrot.lane.b32.xlu0 %v259, 96
      %v599 = vpop.permute.xlu0 %598
      %600 = vrot.lane.b32.xlu0 %v261, 96
      %v601 = vpop.permute.xlu0 %600
      %v602 = vsel %vm270, %v599, 0
      %v604 = vsel %vm270, %v601, 0
      %606 = vmatprep.subr.mxu0 0.0
      %607 = vmatpush1.xpose.msra.mxu0 0.0
      %608 = vmatprep.subr.mxu0 0.0
      %609 = vmatpush1.xpose.msra.mxu0 0.0
      %610 = vmatprep.subr.mxu0 0.0
      %611 = vmatpush1.xpose.msra.mxu0 0.0
      %612 = vmatprep.subr.mxu0 0.0
      %613 = vmatpush1.xpose.msra.mxu0 0.0
      %614 = vmatprep.subr.mxu0 0.0
      %615 = vmatpush1.xpose.msra.mxu0 0.0
      %616 = vmatprep.subr.mxu0 0.0
      %617 = vmatpush1.xpose.msra.mxu0 0.0
      %618 = vmatprep.subr.mxu0 0.0
      %619 = vmatpush1.xpose.msra.mxu0 0.0
      %620 = vmatprep.subr.mxu0 0.0
      %621 = vmatpush1.xpose.msra.mxu0 0.0
      %622 = vmatprep.subr.mxu0 0.0
      %623 = vmatpush1.xpose.msra.mxu0 0.0
      %624 = vmatprep.subr.mxu0 0.0
      %625 = vmatpush1.xpose.msra.mxu0 0.0
      %626 = vmatprep.subr.mxu0 0.0
      %627 = vmatpush1.xpose.msra.mxu0 0.0
      %628 = vmatprep.subr.mxu0 0.0
      %629 = vmatpush1.xpose.msra.mxu0 0.0
      %630 = vmatprep.subr.mxu0 0.0
      %631 = vmatpush1.xpose.msra.mxu0 0.0
      %632 = vmatprep.subr.mxu0 0.0
      %633 = vmatpush1.xpose.msra.mxu0 0.0
      %634 = vmatprep.subr.mxu0 0.0
      %635 = vmatpush1.xpose.msra.mxu0 0.0
      %636 = vmatprep.subr.mxu0 0.0
      %637 = vmatpush1.xpose.msra.mxu0 %v604
      %638 = vmatprep.subr.mxu0 0.0
      %639 = vmatpush2.xpose.msra.mxu0 0.0
      %640 = vmatprep.subr.mxu0 0.0
      %641 = vmatpush2.xpose.msra.mxu0 0.0
      %642 = vmatprep.subr.mxu0 0.0
      %643 = vmatpush2.xpose.msra.mxu0 0.0
      %644 = vmatprep.subr.mxu0 0.0
      %645 = vmatpush2.xpose.msra.mxu0 0.0
      %646 = vmatprep.subr.mxu0 0.0
      %647 = vmatpush2.xpose.msra.mxu0 0.0
      %648 = vmatprep.subr.mxu0 0.0
      %649 = vmatpush2.xpose.msra.mxu0 0.0
      %650 = vmatprep.subr.mxu0 0.0
      %651 = vmatpush2.xpose.msra.mxu0 0.0
      %652 = vmatprep.subr.mxu0 0.0
      %653 = vmatpush2.xpose.msra.mxu0 0.0
      %654 = vmatprep.subr.mxu0 0.0
      %655 = vmatpush2.xpose.msra.mxu0 0.0
      %656 = vmatprep.subr.mxu0 0.0
      %657 = vmatpush2.xpose.msra.mxu0 0.0
      %658 = vmatprep.subr.mxu0 0.0
      %659 = vmatpush2.xpose.msra.mxu0 0.0
      %660 = vmatprep.subr.mxu0 0.0
      %661 = vmatpush2.xpose.msra.mxu0 0.0
      %662 = vmatprep.subr.mxu0 0.0
      %663 = vmatpush2.xpose.msra.mxu0 0.0
      %664 = vmatprep.subr.mxu0 0.0
      %665 = vmatpush2.xpose.msra.mxu0 0.0
      %666 = vmatprep.subr.mxu0 0.0
      %667 = vmatpush2.xpose.msra.mxu0 0.0
      %668 = vmatprep.subr.mxu0 0.0
      %669 = vmatpush2.xpose.msra.mxu0 0.0
      %670 = vmatprep.mubr.f32.mxu0 0.0
      %671 = vmatmul.mubr.f32.gmra.mxu0 %v602
      %v672 = vpop.f32.mrf.mxu0
      %v673 = vadd.f32 %v268, %v672
      %v674 = vpop.f32.mrf.mxu0
      %675 = vdwg.mxu0
      %v676 = vsel %vm347, %v673, -inf
      %677 = vmax.xlane.f32.xlu0 %v676
      %v678 = vpop.xlane.xlu0 %677
      %v679 = vsub.f32 %v673, %v678
      %v680 = vmul.f32 %v679, 1.442695
      %v681 = vpow.pop %v680
      %v682 = vsel %vm347, %v681, 0.0
      %683 = vadd.xlane.f32.xlu0 %v682
      %v684 = vpop.xlane.xlu0 %683
      %v685 = vrcp.pop %v684
      %v686 = vmul.f32 %v681, %v685
      %687 = vrot.lane.b32.xlu0 %v263, 96
      %v688 = vpop.permute.xlu0 %687
      %v691 = vsel %vm347, %v686, 0
      %693 = vmatprep.subr.mxu0 0.0
      %694 = vmatpush1.msra.mxu0 0.0
      %695 = vmatprep.subr.mxu0 0.0
      %696 = vmatpush1.msra.mxu0 0.0
      %697 = vmatprep.subr.mxu0 0.0
      %698 = vmatpush1.msra.mxu0 0.0
      %699 = vmatprep.subr.mxu0 0.0
      %700 = vmatpush1.msra.mxu0 0.0
      %701 = vmatprep.subr.mxu0 0.0
      %702 = vmatpush1.msra.mxu0 0.0
      %703 = vmatprep.subr.mxu0 0.0
      %704 = vmatpush1.msra.mxu0 0.0
      %705 = vmatprep.subr.mxu0 0.0
      %706 = vmatpush1.msra.mxu0 0.0
      %707 = vmatprep.subr.mxu0 0.0
      %708 = vmatpush1.msra.mxu0 0.0
      %709 = vmatprep.subr.mxu0 0.0
      %710 = vmatpush1.msra.mxu0 0.0
      %711 = vmatprep.subr.mxu0 0.0
      %712 = vmatpush1.msra.mxu0 0.0
      %713 = vmatprep.subr.mxu0 0.0
      %714 = vmatpush1.msra.mxu0 0.0
      %715 = vmatprep.subr.mxu0 0.0
      %716 = vmatpush1.msra.mxu0 0.0
      %717 = vmatprep.subr.mxu0 0.0
      %718 = vmatpush1.msra.mxu0 0.0
      %719 = vmatprep.subr.mxu0 0.0
      %720 = vmatpush1.msra.mxu0 0.0
      %721 = vmatprep.subr.mxu0 0.0
      %722 = vmatpush1.msra.mxu0 0.0
      %723 = vmatprep.subr.mxu0 0.0
      %724 = vmatpush1.msra.mxu0 %v688
      %725 = vmatprep.subr.mxu0 0.0
      %726 = vmatpush2.msra.mxu0 0.0
      %727 = vmatprep.subr.mxu0 0.0
      %728 = vmatpush2.msra.mxu0 0.0
      %729 = vmatprep.subr.mxu0 0.0
      %730 = vmatpush2.msra.mxu0 0.0
      %731 = vmatprep.subr.mxu0 0.0
      %732 = vmatpush2.msra.mxu0 0.0
      %733 = vmatprep.subr.mxu0 0.0
      %734 = vmatpush2.msra.mxu0 0.0
      %735 = vmatprep.subr.mxu0 0.0
      %736 = vmatpush2.msra.mxu0 0.0
      %737 = vmatprep.subr.mxu0 0.0
      %738 = vmatpush2.msra.mxu0 0.0
      %739 = vmatprep.subr.mxu0 0.0
      %740 = vmatpush2.msra.mxu0 0.0
      %741 = vmatprep.subr.mxu0 0.0
      %742 = vmatpush2.msra.mxu0 0.0
      %743 = vmatprep.subr.mxu0 0.0
      %744 = vmatpush2.msra.mxu0 0.0
      %745 = vmatprep.subr.mxu0 0.0
      %746 = vmatpush2.msra.mxu0 0.0
      %747 = vmatprep.subr.mxu0 0.0
      %748 = vmatpush2.msra.mxu0 0.0
      %749 = vmatprep.subr.mxu0 0.0
      %750 = vmatpush2.msra.mxu0 0.0
      %751 = vmatprep.subr.mxu0 0.0
      %752 = vmatpush2.msra.mxu0 0.0
      %753 = vmatprep.subr.mxu0 0.0
      %754 = vmatpush2.msra.mxu0 0.0
      %755 = vmatprep.subr.mxu0 0.0
      %756 = vmatpush2.msra.mxu0 0.0
      %757 = vmatprep.mubr.f32.mxu0 0.0
      %758 = vmatmul.mubr.f32.gmra.mxu0 %v691
      %v759 = vpop.f32.mrf.mxu0
      %v760 = vadd.f32 0.0, %v759
      %v761 = vpop.f32.mrf.mxu0
      %762 = vdwg.mxu0
      %763 = vrot.lane.b32.xlu0 %v259, 80
      %v764 = vpop.permute.xlu0 %763
      %765 = vrot.lane.b32.xlu0 %v261, 80
      %v766 = vpop.permute.xlu0 %765
      %v767 = vsel %vm270, %v764, 0
      %v769 = vsel %vm270, %v766, 0
      %771 = vmatprep.subr.mxu0 0.0
      %772 = vmatpush1.xpose.msra.mxu0 0.0
      %773 = vmatprep.subr.mxu0 0.0
      %774 = vmatpush1.xpose.msra.mxu0 0.0
      %775 = vmatprep.subr.mxu0 0.0
      %776 = vmatpush1.xpose.msra.mxu0 0.0
      %777 = vmatprep.subr.mxu0 0.0
      %778 = vmatpush1.xpose.msra.mxu0 0.0
      %779 = vmatprep.subr.mxu0 0.0
      %780 = vmatpush1.xpose.msra.mxu0 0.0
      %781 = vmatprep.subr.mxu0 0.0
      %782 = vmatpush1.xpose.msra.mxu0 0.0
      %783 = vmatprep.subr.mxu0 0.0
      %784 = vmatpush1.xpose.msra.mxu0 0.0
      %785 = vmatprep.subr.mxu0 0.0
      %786 = vmatpush1.xpose.msra.mxu0 0.0
      %787 = vmatprep.subr.mxu0 0.0
      %788 = vmatpush1.xpose.msra.mxu0 0.0
      %789 = vmatprep.subr.mxu0 0.0
      %790 = vmatpush1.xpose.msra.mxu0 0.0
      %791 = vmatprep.subr.mxu0 0.0
      %792 = vmatpush1.xpose.msra.mxu0 0.0
      %793 = vmatprep.subr.mxu0 0.0
      %794 = vmatpush1.xpose.msra.mxu0 0.0
      %795 = vmatprep.subr.mxu0 0.0
      %796 = vmatpush1.xpose.msra.mxu0 0.0
      %797 = vmatprep.subr.mxu0 0.0
      %798 = vmatpush1.xpose.msra.mxu0 0.0
      %799 = vmatprep.subr.mxu0 0.0
      %800 = vmatpush1.xpose.msra.mxu0 0.0
      %801 = vmatprep.subr.mxu0 0.0
      %802 = vmatpush1.xpose.msra.mxu0 %v769
      %803 = vmatprep.subr.mxu0 0.0
      %804 = vmatpush2.xpose.msra.mxu0 0.0
      %805 = vmatprep.subr.mxu0 0.0
      %806 = vmatpush2.xpose.msra.mxu0 0.0
      %807 = vmatprep.subr.mxu0 0.0
      %808 = vmatpush2.xpose.msra.mxu0 0.0
      %809 = vmatprep.subr.mxu0 0.0
      %810 = vmatpush2.xpose.msra.mxu0 0.0
      %811 = vmatprep.subr.mxu0 0.0
      %812 = vmatpush2.xpose.msra.mxu0 0.0
      %813 = vmatprep.subr.mxu0 0.0
      %814 = vmatpush2.xpose.msra.mxu0 0.0
      %815 = vmatprep.subr.mxu0 0.0
      %816 = vmatpush2.xpose.msra.mxu0 0.0
      %817 = vmatprep.subr.mxu0 0.0
      %818 = vmatpush2.xpose.msra.mxu0 0.0
      %819 = vmatprep.subr.mxu0 0.0
      %820 = vmatpush2.xpose.msra.mxu0 0.0
      %821 = vmatprep.subr.mxu0 0.0
      %822 = vmatpush2.xpose.msra.mxu0 0.0
      %823 = vmatprep.subr.mxu0 0.0
      %824 = vmatpush2.xpose.msra.mxu0 0.0
      %825 = vmatprep.subr.mxu0 0.0
      %826 = vmatpush2.xpose.msra.mxu0 0.0
      %827 = vmatprep.subr.mxu0 0.0
      %828 = vmatpush2.xpose.msra.mxu0 0.0
      %829 = vmatprep.subr.mxu0 0.0
      %830 = vmatpush2.xpose.msra.mxu0 0.0
      %831 = vmatprep.subr.mxu0 0.0
      %832 = vmatpush2.xpose.msra.mxu0 0.0
      %833 = vmatprep.subr.mxu0 0.0
      %834 = vmatpush2.xpose.msra.mxu0 0.0
      %835 = vmatprep.mubr.f32.mxu0 0.0
      %836 = vmatmul.mubr.f32.gmra.mxu0 %v767
      %v837 = vpop.f32.mrf.mxu0
      %v838 = vadd.f32 %v268, %v837
      %v839 = vpop.f32.mrf.mxu0
      %840 = vdwg.mxu0
      %v841 = vsel %vm347, %v838, -inf
      %842 = vmax.xlane.f32.xlu0 %v841
      %v843 = vpop.xlane.xlu0 %842
      %v844 = vsub.f32 %v838, %v843
      %v845 = vmul.f32 %v844, 1.442695
      %v846 = vpow.pop %v845
      %v847 = vsel %vm347, %v846, 0.0
      %848 = vadd.xlane.f32.xlu0 %v847
      %v849 = vpop.xlane.xlu0 %848
      %v850 = vrcp.pop %v849
      %v851 = vmul.f32 %v846, %v850
      %852 = vrot.lane.b32.xlu0 %v263, 80
      %v853 = vpop.permute.xlu0 %852
      %v856 = vsel %vm347, %v851, 0
      %858 = vmatprep.subr.mxu0 0.0
      %859 = vmatpush1.msra.mxu0 0.0
      %860 = vmatprep.subr.mxu0 0.0
      %861 = vmatpush1.msra.mxu0 0.0
      %862 = vmatprep.subr.mxu0 0.0
      %863 = vmatpush1.msra.mxu0 0.0
      %864 = vmatprep.subr.mxu0 0.0
      %865 = vmatpush1.msra.mxu0 0.0
      %866 = vmatprep.subr.mxu0 0.0
      %867 = vmatpush1.msra.mxu0 0.0
      %868 = vmatprep.subr.mxu0 0.0
      %869 = vmatpush1.msra.mxu0 0.0
      %870 = vmatprep.subr.mxu0 0.0
      %871 = vmatpush1.msra.mxu0 0.0
      %872 = vmatprep.subr.mxu0 0.0
      %873 = vmatpush1.msra.mxu0 0.0
      %874 = vmatprep.subr.mxu0 0.0
      %875 = vmatpush1.msra.mxu0 0.0
      %876 = vmatprep.subr.mxu0 0.0
      %877 = vmatpush1.msra.mxu0 0.0
      %878 = vmatprep.subr.mxu0 0.0
      %879 = vmatpush1.msra.mxu0 0.0
      %880 = vmatprep.subr.mxu0 0.0
      %881 = vmatpush1.msra.mxu0 0.0
      %882 = vmatprep.subr.mxu0 0.0
      %883 = vmatpush1.msra.mxu0 0.0
      %884 = vmatprep.subr.mxu0 0.0
      %885 = vmatpush1.msra.mxu0 0.0
      %886 = vmatprep.subr.mxu0 0.0
      %887 = vmatpush1.msra.mxu0 0.0
      %888 = vmatprep.subr.mxu0 0.0
      %889 = vmatpush1.msra.mxu0 %v853
      %890 = vmatprep.subr.mxu0 0.0
      %891 = vmatpush2.msra.mxu0 0.0
      %892 = vmatprep.subr.mxu0 0.0
      %893 = vmatpush2.msra.mxu0 0.0
      %894 = vmatprep.subr.mxu0 0.0
      %895 = vmatpush2.msra.mxu0 0.0
      %896 = vmatprep.subr.mxu0 0.0
      %897 = vmatpush2.msra.mxu0 0.0
      %898 = vmatprep.subr.mxu0 0.0
      %899 = vmatpush2.msra.mxu0 0.0
      %900 = vmatprep.subr.mxu0 0.0
      %901 = vmatpush2.msra.mxu0 0.0
      %902 = vmatprep.subr.mxu0 0.0
      %903 = vmatpush2.msra.mxu0 0.0
      %904 = vmatprep.subr.mxu0 0.0
      %905 = vmatpush2.msra.mxu0 0.0
      %906 = vmatprep.subr.mxu0 0.0
      %907 = vmatpush2.msra.mxu0 0.0
      %908 = vmatprep.subr.mxu0 0.0
      %909 = vmatpush2.msra.mxu0 0.0
      %910 = vmatprep.subr.mxu0 0.0
      %911 = vmatpush2.msra.mxu0 0.0
      %912 = vmatprep.subr.mxu0 0.0
      %913 = vmatpush2.msra.mxu0 0.0
      %914 = vmatprep.subr.mxu0 0.0
      %915 = vmatpush2.msra.mxu0 0.0
      %916 = vmatprep.subr.mxu0 0.0
      %917 = vmatpush2.msra.mxu0 0.0
      %918 = vmatprep.subr.mxu0 0.0
      %919 = vmatpush2.msra.mxu0 0.0
      %920 = vmatprep.subr.mxu0 0.0
      %921 = vmatpush2.msra.mxu0 0.0
      %922 = vmatprep.mubr.f32.mxu0 0.0
      %923 = vmatmul.mubr.f32.gmra.mxu0 %v856
      %v924 = vpop.f32.mrf.mxu0
      %v925 = vadd.f32 0.0, %v924
      %v926 = vpop.f32.mrf.mxu0
      %927 = vdwg.mxu0
      %928 = vrot.lane.b32.xlu0 %v259, 64
      %v929 = vpop.permute.xlu0 %928
      %930 = vrot.lane.b32.xlu0 %v261, 64
      %v931 = vpop.permute.xlu0 %930
      %v932 = vsel %vm270, %v929, 0
      %v934 = vsel %vm270, %v931, 0
      %936 = vmatprep.subr.mxu0 0.0
      %937 = vmatpush1.xpose.msra.mxu0 0.0
      %938 = vmatprep.subr.mxu0 0.0
      %939 = vmatpush1.xpose.msra.mxu0 0.0
      %940 = vmatprep.subr.mxu0 0.0
      %941 = vmatpush1.xpose.msra.mxu0 0.0
      %942 = vmatprep.subr.mxu0 0.0
      %943 = vmatpush1.xpose.msra.mxu0 0.0
      %944 = vmatprep.subr.mxu0 0.0
      %945 = vmatpush1.xpose.msra.mxu0 0.0
      %946 = vmatprep.subr.mxu0 0.0
      %947 = vmatpush1.xpose.msra.mxu0 0.0
      %948 = vmatprep.subr.mxu0 0.0
      %949 = vmatpush1.xpose.msra.mxu0 0.0
      %950 = vmatprep.subr.mxu0 0.0
      %951 = vmatpush1.xpose.msra.mxu0 0.0
      %952 = vmatprep.subr.mxu0 0.0
      %953 = vmatpush1.xpose.msra.mxu0 0.0
      %954 = vmatprep.subr.mxu0 0.0
      %955 = vmatpush1.xpose.msra.mxu0 0.0
      %956 = vmatprep.subr.mxu0 0.0
      %957 = vmatpush1.xpose.msra.mxu0 0.0
      %958 = vmatprep.subr.mxu0 0.0
      %959 = vmatpush1.xpose.msra.mxu0 0.0
      %960 = vmatprep.subr.mxu0 0.0
      %961 = vmatpush1.xpose.msra.mxu0 0.0
      %962 = vmatprep.subr.mxu0 0.0
      %963 = vmatpush1.xpose.msra.mxu0 0.0
      %964 = vmatprep.subr.mxu0 0.0
      %965 = vmatpush1.xpose.msra.mxu0 0.0
      %966 = vmatprep.subr.mxu0 0.0
      %967 = vmatpush1.xpose.msra.mxu0 %v934
      %968 = vmatprep.subr.mxu0 0.0
      %969 = vmatpush2.xpose.msra.mxu0 0.0
      %970 = vmatprep.subr.mxu0 0.0
      %971 = vmatpush2.xpose.msra.mxu0 0.0
      %972 = vmatprep.subr.mxu0 0.0
      %973 = vmatpush2.xpose.msra.mxu0 0.0
      %974 = vmatprep.subr.mxu0 0.0
      %975 = vmatpush2.xpose.msra.mxu0 0.0
      %976 = vmatprep.subr.mxu0 0.0
      %977 = vmatpush2.xpose.msra.mxu0 0.0
      %978 = vmatprep.subr.mxu0 0.0
      %979 = vmatpush2.xpose.msra.mxu0 0.0
      %980 = vmatprep.subr.mxu0 0.0
      %981 = vmatpush2.xpose.msra.mxu0 0.0
      %982 = vmatprep.subr.mxu0 0.0
      %983 = vmatpush2.xpose.msra.mxu0 0.0
      %984 = vmatprep.subr.mxu0 0.0
      %985 = vmatpush2.xpose.msra.mxu0 0.0
      %986 = vmatprep.subr.mxu0 0.0
      %987 = vmatpush2.xpose.msra.mxu0 0.0
      %988 = vmatprep.subr.mxu0 0.0
      %989 = vmatpush2.xpose.msra.mxu0 0.0
      %990 = vmatprep.subr.mxu0 0.0
      %991 = vmatpush2.xpose.msra.mxu0 0.0
      %992 = vmatprep.subr.mxu0 0.0
      %993 = vmatpush2.xpose.msra.mxu0 0.0
      %994 = vmatprep.subr.mxu0 0.0
      %995 = vmatpush2.xpose.msra.mxu0 0.0
      %996 = vmatprep.subr.mxu0 0.0
      %997 = vmatpush2.xpose.msra.mxu0 0.0
      %998 = vmatprep.subr.mxu0 0.0
      %999 = vmatpush2.xpose.msra.mxu0 0.0
      %1000 = vmatprep.mubr.f32.mxu0 0.0
      %1001 = vmatmul.mubr.f32.gmra.mxu0 %v932
      %v1002 = vpop.f32.mrf.mxu0
      %v1003 = vadd.f32 %v268, %v1002
      %v1004 = vpop.f32.mrf.mxu0
      %1005 = vdwg.mxu0
      %v1006 = vsel %vm347, %v1003, -inf
      %1007 = vmax.xlane.f32.xlu0 %v1006
      %v1008 = vpop.xlane.xlu0 %1007
      %v1009 = vsub.f32 %v1003, %v1008
      %v1010 = vmul.f32 %v1009, 1.442695
      %v1011 = vpow.pop %v1010
      %v1012 = vsel %vm347, %v1011, 0.0
      %1013 = vadd.xlane.f32.xlu0 %v1012
      %v1014 = vpop.xlane.xlu0 %1013
      %v1015 = vrcp.pop %v1014
      %v1016 = vmul.f32 %v1011, %v1015
      %1017 = vrot.lane.b32.xlu0 %v263, 64
      %v1018 = vpop.permute.xlu0 %1017
      %v1021 = vsel %vm347, %v1016, 0
      %1023 = vmatprep.subr.mxu0 0.0
      %1024 = vmatpush1.msra.mxu0 0.0
      %1025 = vmatprep.subr.mxu0 0.0
      %1026 = vmatpush1.msra.mxu0 0.0
      %1027 = vmatprep.subr.mxu0 0.0
      %1028 = vmatpush1.msra.mxu0 0.0
      %1029 = vmatprep.subr.mxu0 0.0
      %1030 = vmatpush1.msra.mxu0 0.0
      %1031 = vmatprep.subr.mxu0 0.0
      %1032 = vmatpush1.msra.mxu0 0.0
      %1033 = vmatprep.subr.mxu0 0.0
      %1034 = vmatpush1.msra.mxu0 0.0
      %1035 = vmatprep.subr.mxu0 0.0
      %1036 = vmatpush1.msra.mxu0 0.0
      %1037 = vmatprep.subr.mxu0 0.0
      %1038 = vmatpush1.msra.mxu0 0.0
      %1039 = vmatprep.subr.mxu0 0.0
      %1040 = vmatpush1.msra.mxu0 0.0
      %1041 = vmatprep.subr.mxu0 0.0
      %1042 = vmatpush1.msra.mxu0 0.0
      %1043 = vmatprep.subr.mxu0 0.0
      %1044 = vmatpush1.msra.mxu0 0.0
      %1045 = vmatprep.subr.mxu0 0.0
      %1046 = vmatpush1.msra.mxu0 0.0
      %1047 = vmatprep.subr.mxu0 0.0
      %1048 = vmatpush1.msra.mxu0 0.0
      %1049 = vmatprep.subr.mxu0 0.0
      %1050 = vmatpush1.msra.mxu0 0.0
      %1051 = vmatprep.subr.mxu0 0.0
      %1052 = vmatpush1.msra.mxu0 0.0
      %1053 = vmatprep.subr.mxu0 0.0
      %1054 = vmatpush1.msra.mxu0 %v1018
      %1055 = vmatprep.subr.mxu0 0.0
      %1056 = vmatpush2.msra.mxu0 0.0
      %1057 = vmatprep.subr.mxu0 0.0
      %1058 = vmatpush2.msra.mxu0 0.0
      %1059 = vmatprep.subr.mxu0 0.0
      %1060 = vmatpush2.msra.mxu0 0.0
      %1061 = vmatprep.subr.mxu0 0.0
      %1062 = vmatpush2.msra.mxu0 0.0
      %1063 = vmatprep.subr.mxu0 0.0
      %1064 = vmatpush2.msra.mxu0 0.0
      %1065 = vmatprep.subr.mxu0 0.0
      %1066 = vmatpush2.msra.mxu0 0.0
      %1067 = vmatprep.subr.mxu0 0.0
      %1068 = vmatpush2.msra.mxu0 0.0
      %1069 = vmatprep.subr.mxu0 0.0
      %1070 = vmatpush2.msra.mxu0 0.0
      %1071 = vmatprep.subr.mxu0 0.0
      %1072 = vmatpush2.msra.mxu0 0.0
      %1073 = vmatprep.subr.mxu0 0.0
      %1074 = vmatpush2.msra.mxu0 0.0
      %1075 = vmatprep.subr.mxu0 0.0
      %1076 = vmatpush2.msra.mxu0 0.0
      %1077 = vmatprep.subr.mxu0 0.0
      %1078 = vmatpush2.msra.mxu0 0.0
      %1079 = vmatprep.subr.mxu0 0.0
      %1080 = vmatpush2.msra.mxu0 0.0
      %1081 = vmatprep.subr.mxu0 0.0
      %1082 = vmatpush2.msra.mxu0 0.0
      %1083 = vmatprep.subr.mxu0 0.0
      %1084 = vmatpush2.msra.mxu0 0.0
      %1085 = vmatprep.subr.mxu0 0.0
      %1086 = vmatpush2.msra.mxu0 0.0
      %1087 = vmatprep.mubr.f32.mxu0 0.0
      %1088 = vmatmul.mubr.f32.gmra.mxu0 %v1021
      %v1089 = vpop.f32.mrf.mxu0
      %v1090 = vadd.f32 0.0, %v1089
      %v1091 = vpop.f32.mrf.mxu0
      %1092 = vdwg.mxu0
      %1093 = vrot.lane.b32.xlu0 %v259, 48
      %v1094 = vpop.permute.xlu0 %1093
      %1095 = vrot.lane.b32.xlu0 %v261, 48
      %v1096 = vpop.permute.xlu0 %1095
      %v1097 = vsel %vm270, %v1094, 0
      %v1099 = vsel %vm270, %v1096, 0
      %1101 = vmatprep.subr.mxu0 0.0
      %1102 = vmatpush1.xpose.msra.mxu0 0.0
      %1103 = vmatprep.subr.mxu0 0.0
      %1104 = vmatpush1.xpose.msra.mxu0 0.0
      %1105 = vmatprep.subr.mxu0 0.0
      %1106 = vmatpush1.xpose.msra.mxu0 0.0
      %1107 = vmatprep.subr.mxu0 0.0
      %1108 = vmatpush1.xpose.msra.mxu0 0.0
      %1109 = vmatprep.subr.mxu0 0.0
      %1110 = vmatpush1.xpose.msra.mxu0 0.0
      %1111 = vmatprep.subr.mxu0 0.0
      %1112 = vmatpush1.xpose.msra.mxu0 0.0
      %1113 = vmatprep.subr.mxu0 0.0
      %1114 = vmatpush1.xpose.msra.mxu0 0.0
      %1115 = vmatprep.subr.mxu0 0.0
      %1116 = vmatpush1.xpose.msra.mxu0 0.0
      %1117 = vmatprep.subr.mxu0 0.0
      %1118 = vmatpush1.xpose.msra.mxu0 0.0
      %1119 = vmatprep.subr.mxu0 0.0
      %1120 = vmatpush1.xpose.msra.mxu0 0.0
      %1121 = vmatprep.subr.mxu0 0.0
      %1122 = vmatpush1.xpose.msra.mxu0 0.0
      %1123 = vmatprep.subr.mxu0 0.0
      %1124 = vmatpush1.xpose.msra.mxu0 0.0
      %1125 = vmatprep.subr.mxu0 0.0
      %1126 = vmatpush1.xpose.msra.mxu0 0.0
      %1127 = vmatprep.subr.mxu0 0.0
      %1128 = vmatpush1.xpose.msra.mxu0 0.0
      %1129 = vmatprep.subr.mxu0 0.0
      %1130 = vmatpush1.xpose.msra.mxu0 0.0
      %1131 = vmatprep.subr.mxu0 0.0
      %1132 = vmatpush1.xpose.msra.mxu0 %v1099
      %1133 = vmatprep.subr.mxu0 0.0
      %1134 = vmatpush2.xpose.msra.mxu0 0.0
      %1135 = vmatprep.subr.mxu0 0.0
      %1136 = vmatpush2.xpose.msra.mxu0 0.0
      %1137 = vmatprep.subr.mxu0 0.0
      %1138 = vmatpush2.xpose.msra.mxu0 0.0
      %1139 = vmatprep.subr.mxu0 0.0
      %1140 = vmatpush2.xpose.msra.mxu0 0.0
      %1141 = vmatprep.subr.mxu0 0.0
      %1142 = vmatpush2.xpose.msra.mxu0 0.0
      %1143 = vmatprep.subr.mxu0 0.0
      %1144 = vmatpush2.xpose.msra.mxu0 0.0
      %1145 = vmatprep.subr.mxu0 0.0
      %1146 = vmatpush2.xpose.msra.mxu0 0.0
      %1147 = vmatprep.subr.mxu0 0.0
      %1148 = vmatpush2.xpose.msra.mxu0 0.0
      %1149 = vmatprep.subr.mxu0 0.0
      %1150 = vmatpush2.xpose.msra.mxu0 0.0
      %1151 = vmatprep.subr.mxu0 0.0
      %1152 = vmatpush2.xpose.msra.mxu0 0.0
      %1153 = vmatprep.subr.mxu0 0.0
      %1154 = vmatpush2.xpose.msra.mxu0 0.0
      %1155 = vmatprep.subr.mxu0 0.0
      %1156 = vmatpush2.xpose.msra.mxu0 0.0
      %1157 = vmatprep.subr.mxu0 0.0
      %1158 = vmatpush2.xpose.msra.mxu0 0.0
      %1159 = vmatprep.subr.mxu0 0.0
      %1160 = vmatpush2.xpose.msra.mxu0 0.0
      %1161 = vmatprep.subr.mxu0 0.0
      %1162 = vmatpush2.xpose.msra.mxu0 0.0
      %1163 = vmatprep.subr.mxu0 0.0
      %1164 = vmatpush2.xpose.msra.mxu0 0.0
      %1165 = vmatprep.mubr.f32.mxu0 0.0
      %1166 = vmatmul.mubr.f32.gmra.mxu0 %v1097
      %v1167 = vpop.f32.mrf.mxu0
      %v1168 = vadd.f32 %v268, %v1167
      %v1169 = vpop.f32.mrf.mxu0
      %1170 = vdwg.mxu0
      %v1171 = vsel %vm347, %v1168, -inf
      %1172 = vmax.xlane.f32.xlu0 %v1171
      %v1173 = vpop.xlane.xlu0 %1172
      %v1174 = vsub.f32 %v1168, %v1173
      %v1175 = vmul.f32 %v1174, 1.442695
      %v1176 = vpow.pop %v1175
      %v1177 = vsel %vm347, %v1176, 0.0
      %1178 = vadd.xlane.f32.xlu0 %v1177
      %v1179 = vpop.xlane.xlu0 %1178
      %v1180 = vrcp.pop %v1179
      %v1181 = vmul.f32 %v1176, %v1180
      %1182 = vrot.lane.b32.xlu0 %v263, 48
      %v1183 = vpop.permute.xlu0 %1182
      %v1186 = vsel %vm347, %v1181, 0
      %1188 = vmatprep.subr.mxu0 0.0
      %1189 = vmatpush1.msra.mxu0 0.0
      %1190 = vmatprep.subr.mxu0 0.0
      %1191 = vmatpush1.msra.mxu0 0.0
      %1192 = vmatprep.subr.mxu0 0.0
      %1193 = vmatpush1.msra.mxu0 0.0
      %1194 = vmatprep.subr.mxu0 0.0
      %1195 = vmatpush1.msra.mxu0 0.0
      %1196 = vmatprep.subr.mxu0 0.0
      %1197 = vmatpush1.msra.mxu0 0.0
      %1198 = vmatprep.subr.mxu0 0.0
      %1199 = vmatpush1.msra.mxu0 0.0
      %1200 = vmatprep.subr.mxu0 0.0
      %1201 = vmatpush1.msra.mxu0 0.0
      %1202 = vmatprep.subr.mxu0 0.0
      %1203 = vmatpush1.msra.mxu0 0.0
      %1204 = vmatprep.subr.mxu0 0.0
      %1205 = vmatpush1.msra.mxu0 0.0
      %1206 = vmatprep.subr.mxu0 0.0
      %1207 = vmatpush1.msra.mxu0 0.0
      %1208 = vmatprep.subr.mxu0 0.0
      %1209 = vmatpush1.msra.mxu0 0.0
      %1210 = vmatprep.subr.mxu0 0.0
      %1211 = vmatpush1.msra.mxu0 0.0
      %1212 = vmatprep.subr.mxu0 0.0
      %1213 = vmatpush1.msra.mxu0 0.0
      %1214 = vmatprep.subr.mxu0 0.0
      %1215 = vmatpush1.msra.mxu0 0.0
      %1216 = vmatprep.subr.mxu0 0.0
      %1217 = vmatpush1.msra.mxu0 0.0
      %1218 = vmatprep.subr.mxu0 0.0
      %1219 = vmatpush1.msra.mxu0 %v1183
      %1220 = vmatprep.subr.mxu0 0.0
      %1221 = vmatpush2.msra.mxu0 0.0
      %1222 = vmatprep.subr.mxu0 0.0
      %1223 = vmatpush2.msra.mxu0 0.0
      %1224 = vmatprep.subr.mxu0 0.0
      %1225 = vmatpush2.msra.mxu0 0.0
      %1226 = vmatprep.subr.mxu0 0.0
      %1227 = vmatpush2.msra.mxu0 0.0
      %1228 = vmatprep.subr.mxu0 0.0
      %1229 = vmatpush2.msra.mxu0 0.0
      %1230 = vmatprep.subr.mxu0 0.0
      %1231 = vmatpush2.msra.mxu0 0.0
      %1232 = vmatprep.subr.mxu0 0.0
      %1233 = vmatpush2.msra.mxu0 0.0
      %1234 = vmatprep.subr.mxu0 0.0
      %1235 = vmatpush2.msra.mxu0 0.0
      %1236 = vmatprep.subr.mxu0 0.0
      %1237 = vmatpush2.msra.mxu0 0.0
      %1238 = vmatprep.subr.mxu0 0.0
      %1239 = vmatpush2.msra.mxu0 0.0
      %1240 = vmatprep.subr.mxu0 0.0
      %1241 = vmatpush2.msra.mxu0 0.0
      %1242 = vmatprep.subr.mxu0 0.0
      %1243 = vmatpush2.msra.mxu0 0.0
      %1244 = vmatprep.subr.mxu0 0.0
      %1245 = vmatpush2.msra.mxu0 0.0
      %1246 = vmatprep.subr.mxu0 0.0
      %1247 = vmatpush2.msra.mxu0 0.0
      %1248 = vmatprep.subr.mxu0 0.0
      %1249 = vmatpush2.msra.mxu0 0.0
      %1250 = vmatprep.subr.mxu0 0.0
      %1251 = vmatpush2.msra.mxu0 0.0
      %1252 = vmatprep.mubr.f32.mxu0 0.0
      %1253 = vmatmul.mubr.f32.gmra.mxu0 %v1186
      %v1254 = vpop.f32.mrf.mxu0
      %v1255 = vadd.f32 0.0, %v1254
      %v1256 = vpop.f32.mrf.mxu0
      %1257 = vdwg.mxu0
      %1258 = vrot.lane.b32.xlu0 %v259, 32
      %v1259 = vpop.permute.xlu0 %1258
      %1260 = vrot.lane.b32.xlu0 %v261, 32
      %v1261 = vpop.permute.xlu0 %1260
      %v1262 = vsel %vm270, %v1259, 0
      %v1264 = vsel %vm270, %v1261, 0
      %1266 = vmatprep.subr.mxu0 0.0
      %1267 = vmatpush1.xpose.msra.mxu0 0.0
      %1268 = vmatprep.subr.mxu0 0.0
      %1269 = vmatpush1.xpose.msra.mxu0 0.0
      %1270 = vmatprep.subr.mxu0 0.0
      %1271 = vmatpush1.xpose.msra.mxu0 0.0
      %1272 = vmatprep.subr.mxu0 0.0
      %1273 = vmatpush1.xpose.msra.mxu0 0.0
      %1274 = vmatprep.subr.mxu0 0.0
      %1275 = vmatpush1.xpose.msra.mxu0 0.0
      %1276 = vmatprep.subr.mxu0 0.0
      %1277 = vmatpush1.xpose.msra.mxu0 0.0
      %1278 = vmatprep.subr.mxu0 0.0
      %1279 = vmatpush1.xpose.msra.mxu0 0.0
      %1280 = vmatprep.subr.mxu0 0.0
      %1281 = vmatpush1.xpose.msra.mxu0 0.0
      %1282 = vmatprep.subr.mxu0 0.0
      %1283 = vmatpush1.xpose.msra.mxu0 0.0
      %1284 = vmatprep.subr.mxu0 0.0
      %1285 = vmatpush1.xpose.msra.mxu0 0.0
      %1286 = vmatprep.subr.mxu0 0.0
      %1287 = vmatpush1.xpose.msra.mxu0 0.0
      %1288 = vmatprep.subr.mxu0 0.0
      %1289 = vmatpush1.xpose.msra.mxu0 0.0
      %1290 = vmatprep.subr.mxu0 0.0
      %1291 = vmatpush1.xpose.msra.mxu0 0.0
      %1292 = vmatprep.subr.mxu0 0.0
      %1293 = vmatpush1.xpose.msra.mxu0 0.0
      %1294 = vmatprep.subr.mxu0 0.0
      %1295 = vmatpush1.xpose.msra.mxu0 0.0
      %1296 = vmatprep.subr.mxu0 0.0
      %1297 = vmatpush1.xpose.msra.mxu0 %v1264
      %1298 = vmatprep.subr.mxu0 0.0
      %1299 = vmatpush2.xpose.msra.mxu0 0.0
      %1300 = vmatprep.subr.mxu0 0.0
      %1301 = vmatpush2.xpose.msra.mxu0 0.0
      %1302 = vmatprep.subr.mxu0 0.0
      %1303 = vmatpush2.xpose.msra.mxu0 0.0
      %1304 = vmatprep.subr.mxu0 0.0
      %1305 = vmatpush2.xpose.msra.mxu0 0.0
      %1306 = vmatprep.subr.mxu0 0.0
      %1307 = vmatpush2.xpose.msra.mxu0 0.0
      %1308 = vmatprep.subr.mxu0 0.0
      %1309 = vmatpush2.xpose.msra.mxu0 0.0
      %1310 = vmatprep.subr.mxu0 0.0
      %1311 = vmatpush2.xpose.msra.mxu0 0.0
      %1312 = vmatprep.subr.mxu0 0.0
      %1313 = vmatpush2.xpose.msra.mxu0 0.0
      %1314 = vmatprep.subr.mxu0 0.0
      %1315 = vmatpush2.xpose.msra.mxu0 0.0
      %1316 = vmatprep.subr.mxu0 0.0
      %1317 = vmatpush2.xpose.msra.mxu0 0.0
      %1318 = vmatprep.subr.mxu0 0.0
      %1319 = vmatpush2.xpose.msra.mxu0 0.0
      %1320 = vmatprep.subr.mxu0 0.0
      %1321 = vmatpush2.xpose.msra.mxu0 0.0
      %1322 = vmatprep.subr.mxu0 0.0
      %1323 = vmatpush2.xpose.msra.mxu0 0.0
      %1324 = vmatprep.subr.mxu0 0.0
      %1325 = vmatpush2.xpose.msra.mxu0 0.0
      %1326 = vmatprep.subr.mxu0 0.0
      %1327 = vmatpush2.xpose.msra.mxu0 0.0
      %1328 = vmatprep.subr.mxu0 0.0
      %1329 = vmatpush2.xpose.msra.mxu0 0.0
      %1330 = vmatprep.mubr.f32.mxu0 0.0
      %1331 = vmatmul.mubr.f32.gmra.mxu0 %v1262
      %v1332 = vpop.f32.mrf.mxu0
      %v1333 = vadd.f32 %v268, %v1332
      %v1334 = vpop.f32.mrf.mxu0
      %1335 = vdwg.mxu0
      %v1336 = vsel %vm347, %v1333, -inf
      %1337 = vmax.xlane.f32.xlu0 %v1336
      %v1338 = vpop.xlane.xlu0 %1337
      %v1339 = vsub.f32 %v1333, %v1338
      %v1340 = vmul.f32 %v1339, 1.442695
      %v1341 = vpow.pop %v1340
      %v1342 = vsel %vm347, %v1341, 0.0
      %1343 = vadd.xlane.f32.xlu0 %v1342
      %v1344 = vpop.xlane.xlu0 %1343
      %v1345 = vrcp.pop %v1344
      %v1346 = vmul.f32 %v1341, %v1345
      %1347 = vrot.lane.b32.xlu0 %v263, 32
      %v1348 = vpop.permute.xlu0 %1347
      %v1351 = vsel %vm347, %v1346, 0
      %1353 = vmatprep.subr.mxu0 0.0
      %1354 = vmatpush1.msra.mxu0 0.0
      %1355 = vmatprep.subr.mxu0 0.0
      %1356 = vmatpush1.msra.mxu0 0.0
      %1357 = vmatprep.subr.mxu0 0.0
      %1358 = vmatpush1.msra.mxu0 0.0
      %1359 = vmatprep.subr.mxu0 0.0
      %1360 = vmatpush1.msra.mxu0 0.0
      %1361 = vmatprep.subr.mxu0 0.0
      %1362 = vmatpush1.msra.mxu0 0.0
      %1363 = vmatprep.subr.mxu0 0.0
      %1364 = vmatpush1.msra.mxu0 0.0
      %1365 = vmatprep.subr.mxu0 0.0
      %1366 = vmatpush1.msra.mxu0 0.0
      %1367 = vmatprep.subr.mxu0 0.0
      %1368 = vmatpush1.msra.mxu0 0.0
      %1369 = vmatprep.subr.mxu0 0.0
      %1370 = vmatpush1.msra.mxu0 0.0
      %1371 = vmatprep.subr.mxu0 0.0
      %1372 = vmatpush1.msra.mxu0 0.0
      %1373 = vmatprep.subr.mxu0 0.0
      %1374 = vmatpush1.msra.mxu0 0.0
      %1375 = vmatprep.subr.mxu0 0.0
      %1376 = vmatpush1.msra.mxu0 0.0
      %1377 = vmatprep.subr.mxu0 0.0
      %1378 = vmatpush1.msra.mxu0 0.0
      %1379 = vmatprep.subr.mxu0 0.0
      %1380 = vmatpush1.msra.mxu0 0.0
      %1381 = vmatprep.subr.mxu0 0.0
      %1382 = vmatpush1.msra.mxu0 0.0
      %1383 = vmatprep.subr.mxu0 0.0
      %1384 = vmatpush1.msra.mxu0 %v1348
      %1385 = vmatprep.subr.mxu0 0.0
      %1386 = vmatpush2.msra.mxu0 0.0
      %1387 = vmatprep.subr.mxu0 0.0
      %1388 = vmatpush2.msra.mxu0 0.0
      %1389 = vmatprep.subr.mxu0 0.0
      %1390 = vmatpush2.msra.mxu0 0.0
      %1391 = vmatprep.subr.mxu0 0.0
      %1392 = vmatpush2.msra.mxu0 0.0
      %1393 = vmatprep.subr.mxu0 0.0
      %1394 = vmatpush2.msra.mxu0 0.0
      %1395 = vmatprep.subr.mxu0 0.0
      %1396 = vmatpush2.msra.mxu0 0.0
      %1397 = vmatprep.subr.mxu0 0.0
      %1398 = vmatpush2.msra.mxu0 0.0
      %1399 = vmatprep.subr.mxu0 0.0
      %1400 = vmatpush2.msra.mxu0 0.0
      %1401 = vmatprep.subr.mxu0 0.0
      %1402 = vmatpush2.msra.mxu0 0.0
      %1403 = vmatprep.subr.mxu0 0.0
      %1404 = vmatpush2.msra.mxu0 0.0
      %1405 = vmatprep.subr.mxu0 0.0
      %1406 = vmatpush2.msra.mxu0 0.0
      %1407 = vmatprep.subr.mxu0 0.0
      %1408 = vmatpush2.msra.mxu0 0.0
      %1409 = vmatprep.subr.mxu0 0.0
      %1410 = vmatpush2.msra.mxu0 0.0
      %1411 = vmatprep.subr.mxu0 0.0
      %1412 = vmatpush2.msra.mxu0 0.0
      %1413 = vmatprep.subr.mxu0 0.0
      %1414 = vmatpush2.msra.mxu0 0.0
      %1415 = vmatprep.subr.mxu0 0.0
      %1416 = vmatpush2.msra.mxu0 0.0
      %1417 = vmatprep.mubr.f32.mxu0 0.0
      %1418 = vmatmul.mubr.f32.gmra.mxu0 %v1351
      %v1419 = vpop.f32.mrf.mxu0
      %v1420 = vadd.f32 0.0, %v1419
      %v1421 = vpop.f32.mrf.mxu0
      %1422 = vdwg.mxu0
      %1423 = vrot.lane.b32.xlu0 %v259, 16
      %v1424 = vpop.permute.xlu0 %1423
      %1425 = vrot.lane.b32.xlu0 %v261, 16
      %v1426 = vpop.permute.xlu0 %1425
      %v1427 = vsel %vm270, %v1424, 0
      %v1429 = vsel %vm270, %v1426, 0
      %1431 = vmatprep.subr.mxu0 0.0
      %1432 = vmatpush1.xpose.msra.mxu0 0.0
      %1433 = vmatprep.subr.mxu0 0.0
      %1434 = vmatpush1.xpose.msra.mxu0 0.0
      %1435 = vmatprep.subr.mxu0 0.0
      %1436 = vmatpush1.xpose.msra.mxu0 0.0
      %1437 = vmatprep.subr.mxu0 0.0
      %1438 = vmatpush1.xpose.msra.mxu0 0.0
      %1439 = vmatprep.subr.mxu0 0.0
      %1440 = vmatpush1.xpose.msra.mxu0 0.0
      %1441 = vmatprep.subr.mxu0 0.0
      %1442 = vmatpush1.xpose.msra.mxu0 0.0
      %1443 = vmatprep.subr.mxu0 0.0
      %1444 = vmatpush1.xpose.msra.mxu0 0.0
      %1445 = vmatprep.subr.mxu0 0.0
      %1446 = vmatpush1.xpose.msra.mxu0 0.0
      %1447 = vmatprep.subr.mxu0 0.0
      %1448 = vmatpush1.xpose.msra.mxu0 0.0
      %1449 = vmatprep.subr.mxu0 0.0
      %1450 = vmatpush1.xpose.msra.mxu0 0.0
      %1451 = vmatprep.subr.mxu0 0.0
      %1452 = vmatpush1.xpose.msra.mxu0 0.0
      %1453 = vmatprep.subr.mxu0 0.0
      %1454 = vmatpush1.xpose.msra.mxu0 0.0
      %1455 = vmatprep.subr.mxu0 0.0
      %1456 = vmatpush1.xpose.msra.mxu0 0.0
      %1457 = vmatprep.subr.mxu0 0.0
      %1458 = vmatpush1.xpose.msra.mxu0 0.0
      %1459 = vmatprep.subr.mxu0 0.0
      %1460 = vmatpush1.xpose.msra.mxu0 0.0
      %1461 = vmatprep.subr.mxu0 0.0
      %1462 = vmatpush1.xpose.msra.mxu0 %v1429
      %1463 = vmatprep.subr.mxu0 0.0
      %1464 = vmatpush2.xpose.msra.mxu0 0.0
      %1465 = vmatprep.subr.mxu0 0.0
      %1466 = vmatpush2.xpose.msra.mxu0 0.0
      %1467 = vmatprep.subr.mxu0 0.0
      %1468 = vmatpush2.xpose.msra.mxu0 0.0
      %1469 = vmatprep.subr.mxu0 0.0
      %1470 = vmatpush2.xpose.msra.mxu0 0.0
      %1471 = vmatprep.subr.mxu0 0.0
      %1472 = vmatpush2.xpose.msra.mxu0 0.0
      %1473 = vmatprep.subr.mxu0 0.0
      %1474 = vmatpush2.xpose.msra.mxu0 0.0
      %1475 = vmatprep.subr.mxu0 0.0
      %1476 = vmatpush2.xpose.msra.mxu0 0.0
      %1477 = vmatprep.subr.mxu0 0.0
      %1478 = vmatpush2.xpose.msra.mxu0 0.0
      %1479 = vmatprep.subr.mxu0 0.0
      %1480 = vmatpush2.xpose.msra.mxu0 0.0
      %1481 = vmatprep.subr.mxu0 0.0
      %1482 = vmatpush2.xpose.msra.mxu0 0.0
      %1483 = vmatprep.subr.mxu0 0.0
      %1484 = vmatpush2.xpose.msra.mxu0 0.0
      %1485 = vmatprep.subr.mxu0 0.0
      %1486 = vmatpush2.xpose.msra.mxu0 0.0
      %1487 = vmatprep.subr.mxu0 0.0
      %1488 = vmatpush2.xpose.msra.mxu0 0.0
      %1489 = vmatprep.subr.mxu0 0.0
      %1490 = vmatpush2.xpose.msra.mxu0 0.0
      %1491 = vmatprep.subr.mxu0 0.0
      %1492 = vmatpush2.xpose.msra.mxu0 0.0
      %1493 = vmatprep.subr.mxu0 0.0
      %1494 = vmatpush2.xpose.msra.mxu0 0.0
      %1495 = vmatprep.mubr.f32.mxu0 0.0
      %1496 = vmatmul.mubr.f32.gmra.mxu0 %v1427
      %v1497 = vpop.f32.mrf.mxu0
      %v1498 = vadd.f32 %v268, %v1497
      %v1499 = vpop.f32.mrf.mxu0
      %1500 = vdwg.mxu0
      %v1501 = vsel %vm347, %v1498, -inf
      %1502 = vmax.xlane.f32.xlu0 %v1501
      %v1503 = vpop.xlane.xlu0 %1502
      %v1504 = vsub.f32 %v1498, %v1503
      %v1505 = vmul.f32 %v1504, 1.442695
      %v1506 = vpow.pop %v1505
      %v1507 = vsel %vm347, %v1506, 0.0
      %1508 = vadd.xlane.f32.xlu0 %v1507
      %v1509 = vpop.xlane.xlu0 %1508
      %v1510 = vrcp.pop %v1509
      %v1511 = vmul.f32 %v1506, %v1510
      %1512 = vrot.lane.b32.xlu0 %v263, 16
      %v1513 = vpop.permute.xlu0 %1512
      %v1516 = vsel %vm347, %v1511, 0
      %1518 = vmatprep.subr.mxu0 0.0
      %1519 = vmatpush1.msra.mxu0 0.0
      %1520 = vmatprep.subr.mxu0 0.0
      %1521 = vmatpush1.msra.mxu0 0.0
      %1522 = vmatprep.subr.mxu0 0.0
      %1523 = vmatpush1.msra.mxu0 0.0
      %1524 = vmatprep.subr.mxu0 0.0
      %1525 = vmatpush1.msra.mxu0 0.0
      %1526 = vmatprep.subr.mxu0 0.0
      %1527 = vmatpush1.msra.mxu0 0.0
      %1528 = vmatprep.subr.mxu0 0.0
      %1529 = vmatpush1.msra.mxu0 0.0
      %1530 = vmatprep.subr.mxu0 0.0
      %1531 = vmatpush1.msra.mxu0 0.0
      %1532 = vmatprep.subr.mxu0 0.0
      %1533 = vmatpush1.msra.mxu0 0.0
      %1534 = vmatprep.subr.mxu0 0.0
      %1535 = vmatpush1.msra.mxu0 0.0
      %1536 = vmatprep.subr.mxu0 0.0
      %1537 = vmatpush1.msra.mxu0 0.0
      %1538 = vmatprep.subr.mxu0 0.0
      %1539 = vmatpush1.msra.mxu0 0.0
      %1540 = vmatprep.subr.mxu0 0.0
      %1541 = vmatpush1.msra.mxu0 0.0
      %1542 = vmatprep.subr.mxu0 0.0
      %1543 = vmatpush1.msra.mxu0 0.0
      %1544 = vmatprep.subr.mxu0 0.0
      %1545 = vmatpush1.msra.mxu0 0.0
      %1546 = vmatprep.subr.mxu0 0.0
      %1547 = vmatpush1.msra.mxu0 0.0
      %1548 = vmatprep.subr.mxu0 0.0
      %1549 = vmatpush1.msra.mxu0 %v1513
      %1550 = vmatprep.subr.mxu0 0.0
      %1551 = vmatpush2.msra.mxu0 0.0
      %1552 = vmatprep.subr.mxu0 0.0
      %1553 = vmatpush2.msra.mxu0 0.0
      %1554 = vmatprep.subr.mxu0 0.0
      %1555 = vmatpush2.msra.mxu0 0.0
      %1556 = vmatprep.subr.mxu0 0.0
      %1557 = vmatpush2.msra.mxu0 0.0
      %1558 = vmatprep.subr.mxu0 0.0
      %1559 = vmatpush2.msra.mxu0 0.0
      %1560 = vmatprep.subr.mxu0 0.0
      %1561 = vmatpush2.msra.mxu0 0.0
      %1562 = vmatprep.subr.mxu0 0.0
      %1563 = vmatpush2.msra.mxu0 0.0
      %1564 = vmatprep.subr.mxu0 0.0
      %1565 = vmatpush2.msra.mxu0 0.0
      %1566 = vmatprep.subr.mxu0 0.0
      %1567 = vmatpush2.msra.mxu0 0.0
      %1568 = vmatprep.subr.mxu0 0.0
      %1569 = vmatpush2.msra.mxu0 0.0
      %1570 = vmatprep.subr.mxu0 0.0
      %1571 = vmatpush2.msra.mxu0 0.0
      %1572 = vmatprep.subr.mxu0 0.0
      %1573 = vmatpush2.msra.mxu0 0.0
      %1574 = vmatprep.subr.mxu0 0.0
      %1575 = vmatpush2.msra.mxu0 0.0
      %1576 = vmatprep.subr.mxu0 0.0
      %1577 = vmatpush2.msra.mxu0 0.0
      %1578 = vmatprep.subr.mxu0 0.0
      %1579 = vmatpush2.msra.mxu0 0.0
      %1580 = vmatprep.subr.mxu0 0.0
      %1581 = vmatpush2.msra.mxu0 0.0
      %1582 = vmatprep.mubr.f32.mxu0 0.0
      %1583 = vmatmul.mubr.f32.gmra.mxu0 %v1516
      %v1584 = vpop.f32.mrf.mxu0
      %v1585 = vadd.f32 0.0, %v1584
      %v1586 = vpop.f32.mrf.mxu0
      %1587 = vdwg.mxu0
      %1589 = vrot.lane.b32.xlu0 %v595, 16
      %v1590 = vpop.permute.xlu0 %1589
      %1593 = vrot.lane.b32.xlu0 %v760, 32
      %v1594 = vpop.permute.xlu0 %1593
      %1597 = vrot.lane.b32.xlu0 %v925, 48
      %v1598 = vpop.permute.xlu0 %1597
      %1601 = vrot.lane.b32.xlu0 %v1090, 64
      %v1602 = vpop.permute.xlu0 %1601
      %1605 = vrot.lane.b32.xlu0 %v1255, 80
      %v1606 = vpop.permute.xlu0 %1605
      %1609 = vrot.lane.b32.xlu0 %v1420, 96
      %v1610 = vpop.permute.xlu0 %1609
      %1613 = vrot.lane.b32.xlu0 %v1585, 112
      %v1614 = vpop.permute.xlu0 %1613
      %v1616 = vsel %vm270, %v429, %v1590
      %vm1617 = vcmask 261120
      %v1618 = vsel %vm1617, %v1616, %v1594
      %vm1619 = vcmask 392192
      %v1620 = vsel %vm1619, %v1618, %v1598
      %vm1621 = vcmask 523264
      %v1622 = vsel %vm1621, %v1620, %v1602
      %vm1623 = vcmask 654336
      %v1624 = vsel %vm1623, %v1622, %v1606
      %vm1625 = vcmask 785408
      %v1626 = vsel %vm1625, %v1624, %v1610
      %vm1627 = vcmask 916480
      %v1628 = vsel %vm1627, %v1626, %v1614
      %v1629 = vpack.c.bf16 %v1628, %v1628
      %1630 = vst [vmem:[%s255] sm:$0xf] %v1629
      %p1631 = scmp.lt.s32.totalorder %s15, 1
      %s1632 = scalar_select %p1631, %s15, 1
      %s1633 = smul.addr %s1632, 4
      %s1634 = scalar_lea.vmem %s4, %s1633
      // Predicated region
      $region37: #{model_forward.33} parent=35 // pred_check
        %p1635 = pneg %p137
      $region38: #{model_forward.33} parent=35 // pred_check_branch
        %1637 = sbr.rel (%p1635) target = $region40
      $region39: #{model_forward.33} parent=35 // pred_region
        _
      $region40: #{model_forward.33} parent=35 // pred_fallthru
        _
    $region36: #{model_forward.33} parent=5 // pred_fallthru
      _
    %p1638 = scmp.le.s32.totalorder 2, %s10
    // Predicated region
    $region41: #{model_forward.33} parent=5 // pred_check
      %p1639 = pneg %p1638
    $region42: #{model_forward.33} parent=5 // pred_check_branch
      %1641 = sbr.rel (%p1639) target = $region44
    $region43: #{model_forward.33} parent=5 // pred_region
      %s1642 = ssub.s32 %s10, 2
      // Predicated region
      $region45: #{model_forward.33} parent=43 // pred_check
        %p1643 = pneg %p143
      $region46: #{model_forward.33} parent=43 // pred_check_branch
        %1645 = sbr.rel (%p1643) target = $region48
      $region47: #{model_forward.33} parent=43 // pred_region
        %p1646 = scmp.lt.s32.totalorder %s16, 1
        %s1647 = scalar_select %p1646, %s16, 1
        %s1648 = smul.addr %s1647, 4
        %s1649 = scalar_lea.vmem %s4, %s1648
      $region48: #{model_forward.33} parent=43 // pred_fallthru
        _
    $region44: #{model_forward.33} parent=5 // pred_fallthru
      _
  $region6: #{model_forward.33} parent=0 // loop_footer
    %s14 = sadd.s32 1, %s10
  $region7: #{model_forward.33} parent=0 // loop_footer_branch
    %9 = sbr.rel target = $region3
  $region8: #{model_forward.33} parent=0 // loop_exit
    _

// kernel: model_forward.37
$region0: #{model_forward.37}
  #allocation0 [shape = 'u32[]', space=smem, size = 0x4, offset = 0x4, fixed_abs, tag = 'smem constant byte address 0x4 - core index']
  #allocation1 [shape = 'u32[144,128]{1,0:T(1,128)}', space=vmem, size = 0x12000, scoped, tag = 'internal scratch']
  #allocation2 [shape = 'f32[16,128]{1,0:T(8,128)}', space=vmem, size = 0x2000, scoped, tag = 'scratch operand']
  %s0 = inlined_call_operand.vmem [shape: bf16[16,512], index: 0, kind: input, shape index: {}]
  %s1 = inlined_call_operand.vmem [shape: bf16[512,128], index: 1, kind: input, shape index: {}]
  %s2 = inlined_call_operand.vmem [shape: f32[1,128], index: 2, kind: input, shape index: {}]
  %s3 = inlined_call_operand.vmem [shape: bf16[16,128], index: 3, kind: output, shape index: {}]
  %s4 = sld [smem:[#allocation0]]
  $region30: #{model_forward.37} parent=0
    _
  %s6 = ssub.s32 1, %s4
  %s7 = scalar_select 0, %s6, %s4
  // Predicated region
  $region2: #{model_forward.37} parent=0 // pred_check
    _
  $region3: #{model_forward.37} parent=0 // pred_check_branch
    %9 = sbr.rel (0) target = $region5
  $region4: #{model_forward.37} parent=0 // pred_region
    _
  $region5: #{model_forward.37} parent=0 // pred_fallthru
    _
  // Predicated region
  $region6: #{model_forward.37} parent=0 // pred_check
    _
  $region7: #{model_forward.37} parent=0 // pred_check_branch
    %11 = sbr.rel (0) target = $region9
  $region8: #{model_forward.37} parent=0 // pred_region
    _
  $region9: #{model_forward.37} parent=0 // pred_fallthru
    _
  // Predicated region
  $region10: #{model_forward.37} parent=0 // pred_check
    _
  $region11: #{model_forward.37} parent=0 // pred_check_branch
    %13 = sbr.rel (0) target = $region13
  $region12: #{model_forward.37} parent=0 // pred_region
    _
  $region13: #{model_forward.37} parent=0 // pred_fallthru
    _
  %p15 = scmp.eq.s32.totalorder 0, 0
  // Predicated region
  $region14: #{model_forward.37} parent=0 // pred_check
    %p16 = pneg %p15
  $region15: #{model_forward.37} parent=0 // pred_check_branch
    %18 = sbr.rel (%p16) target = $region17
  $region16: #{model_forward.37} parent=0 // pred_region
    %19 = vst [vmem:[#allocation2] sm:$0xff] 0.0
    %20 = vst [vmem:[#allocation2 + $0x8] sm:$0xff] 0.0
  $region17: #{model_forward.37} parent=0 // pred_fallthru
    _
  %v21 = vld [vmem:[#allocation2] sm:$0xff]
  %v22 = vld [vmem:[#allocation2 + $0x8] sm:$0xff]
  %v23 = vld [vmem:[%s0] sm:$0xff]
  %v24 = vld [vmem:[%s0 + $0x8] sm:$0xff]
  %v25 = vld [vmem:[%s0 + $0x10] sm:$0xff]
  %v26 = vld [vmem:[%s0 + $0x18] sm:$0xff]
  %v27 = vld [vmem:[%s1] sm:$0xf]
  %v28 = vld [vmem:[%s1 + $0x4] sm:$0xf]
  %v29 = vld [vmem:[%s1 + $0x8] sm:$0xf]
  %v30 = vld [vmem:[%s1 + $0xc] sm:$0xf]
  %v31 = vld [vmem:[%s1 + $0x10] sm:$0xf]
  %v32 = vld [vmem:[%s1 + $0x14] sm:$0xf]
  %v33 = vld [vmem:[%s1 + $0x18] sm:$0xf]
  %v34 = vld [vmem:[%s1 + $0x1c] sm:$0xf]
  %v35 = vld [vmem:[%s1 + $0x20] sm:$0xf]
  %v36 = vld [vmem:[%s1 + $0x24] sm:$0xf]
  %v37 = vld [vmem:[%s1 + $0x28] sm:$0xf]
  %v38 = vld [vmem:[%s1 + $0x2c] sm:$0xf]
  %v39 = vld [vmem:[%s1 + $0x30] sm:$0xf]
  %v40 = vld [vmem:[%s1 + $0x34] sm:$0xf]
  %v41 = vld [vmem:[%s1 + $0x38] sm:$0xf]
  %v42 = vld [vmem:[%s1 + $0x3c] sm:$0xf]
  %v43 = vld [vmem:[%s1 + $0x40] sm:$0xf]
  %v44 = vld [vmem:[%s1 + $0x44] sm:$0xf]
  %v45 = vld [vmem:[%s1 + $0x48] sm:$0xf]
  %v46 = vld [vmem:[%s1 + $0x4c] sm:$0xf]
  %v47 = vld [vmem:[%s1 + $0x50] sm:$0xf]
  %v48 = vld [vmem:[%s1 + $0x54] sm:$0xf]
  %v49 = vld [vmem:[%s1 + $0x58] sm:$0xf]
  %v50 = vld [vmem:[%s1 + $0x5c] sm:$0xf]
  %v51 = vld [vmem:[%s1 + $0x60] sm:$0xf]
  %v52 = vld [vmem:[%s1 + $0x64] sm:$0xf]
  %v53 = vld [vmem:[%s1 + $0x68] sm:$0xf]
  %v54 = vld [vmem:[%s1 + $0x6c] sm:$0xf]
  %v55 = vld [vmem:[%s1 + $0x70] sm:$0xf]
  %v56 = vld [vmem:[%s1 + $0x74] sm:$0xf]
  %v57 = vld [vmem:[%s1 + $0x78] sm:$0xf]
  %v58 = vld [vmem:[%s1 + $0x7c] sm:$0xf]
  %v59 = vld [vmem:[%s1 + $0x80] sm:$0xf]
  %v60 = vld [vmem:[%s1 + $0x84] sm:$0xf]
  %v61 = vld [vmem:[%s1 + $0x88] sm:$0xf]
  %v62 = vld [vmem:[%s1 + $0x8c] sm:$0xf]
  %v63 = vld [vmem:[%s1 + $0x90] sm:$0xf]
  %v64 = vld [vmem:[%s1 + $0x94] sm:$0xf]
  %v65 = vld [vmem:[%s1 + $0x98] sm:$0xf]
  %v66 = vld [vmem:[%s1 + $0x9c] sm:$0xf]
  %v67 = vld [vmem:[%s1 + $0xa0] sm:$0xf]
  %v68 = vld [vmem:[%s1 + $0xa4] sm:$0xf]
  %v69 = vld [vmem:[%s1 + $0xa8] sm:$0xf]
  %v70 = vld [vmem:[%s1 + $0xac] sm:$0xf]
  %v71 = vld [vmem:[%s1 + $0xb0] sm:$0xf]
  %v72 = vld [vmem:[%s1 + $0xb4] sm:$0xf]
  %v73 = vld [vmem:[%s1 + $0xb8] sm:$0xf]
  %v74 = vld [vmem:[%s1 + $0xbc] sm:$0xf]
  %v75 = vld [vmem:[%s1 + $0xc0] sm:$0xf]
  %v76 = vld [vmem:[%s1 + $0xc4] sm:$0xf]
  %v77 = vld [vmem:[%s1 + $0xc8] sm:$0xf]
  %v78 = vld [vmem:[%s1 + $0xcc] sm:$0xf]
  %v79 = vld [vmem:[%s1 + $0xd0] sm:$0xf]
  %v80 = vld [vmem:[%s1 + $0xd4] sm:$0xf]
  %v81 = vld [vmem:[%s1 + $0xd8] sm:$0xf]
  %v82 = vld [vmem:[%s1 + $0xdc] sm:$0xf]
  %v83 = vld [vmem:[%s1 + $0xe0] sm:$0xf]
  %v84 = vld [vmem:[%s1 + $0xe4] sm:$0xf]
  %v85 = vld [vmem:[%s1 + $0xe8] sm:$0xf]
  %v86 = vld [vmem:[%s1 + $0xec] sm:$0xf]
  %v87 = vld [vmem:[%s1 + $0xf0] sm:$0xf]
  %v88 = vld [vmem:[%s1 + $0xf4] sm:$0xf]
  %v89 = vld [vmem:[%s1 + $0xf8] sm:$0xf]
  %v90 = vld [vmem:[%s1 + $0xfc] sm:$0xf]
  %v95 = vunpack.c.l.b16 %v23
  %v96 = vunpack.c.h.b16 %v23
  %v97 = vunpack.c.l.b16 %v24
  %v98 = vunpack.c.h.b16 %v24
  %v99 = vunpack.c.l.b16 %v25
  %v100 = vunpack.c.h.b16 %v25
  %v101 = vunpack.c.l.b16 %v26
  %v102 = vunpack.c.h.b16 %v26
  %v103 = vpack.c.b16 %v99, %v95
  %v104 = vpack.c.b16 %v100, %v96
  %v105 = vpack.c.b16 %v101, %v97
  %v106 = vpack.c.b16 %v102, %v98
  %v175 = vunpack.c.l.b16 %v27
  %v176 = vunpack.c.l.b16 %v28
  %v177 = vunpack.c.l.b16 %v29
  %v178 = vunpack.c.l.b16 %v30
  %v179 = vunpack.c.l.b16 %v31
  %v180 = vunpack.c.l.b16 %v32
  %v181 = vunpack.c.l.b16 %v33
  %v182 = vunpack.c.l.b16 %v34
  %v183 = vunpack.c.l.b16 %v35
  %v184 = vunpack.c.l.b16 %v36
  %v185 = vunpack.c.l.b16 %v37
  %v186 = vunpack.c.l.b16 %v38
  %v187 = vunpack.c.l.b16 %v39
  %v188 = vunpack.c.l.b16 %v40
  %v189 = vunpack.c.l.b16 %v41
  %v190 = vunpack.c.l.b16 %v42
  %v191 = vunpack.c.l.b16 %v43
  %v192 = vunpack.c.l.b16 %v44
  %v193 = vunpack.c.l.b16 %v45
  %v194 = vunpack.c.l.b16 %v46
  %v195 = vunpack.c.l.b16 %v47
  %v196 = vunpack.c.l.b16 %v48
  %v197 = vunpack.c.l.b16 %v49
  %v198 = vunpack.c.l.b16 %v50
  %v199 = vunpack.c.l.b16 %v51
  %v200 = vunpack.c.l.b16 %v52
  %v201 = vunpack.c.l.b16 %v53
  %v202 = vunpack.c.l.b16 %v54
  %v203 = vunpack.c.l.b16 %v55
  %v204 = vunpack.c.l.b16 %v56
  %v205 = vunpack.c.l.b16 %v57
  %v206 = vunpack.c.l.b16 %v58
  %v207 = vunpack.c.l.b16 %v59
  %v208 = vunpack.c.l.b16 %v60
  %v209 = vunpack.c.l.b16 %v61
  %v210 = vunpack.c.l.b16 %v62
  %v211 = vunpack.c.l.b16 %v63
  %v212 = vunpack.c.l.b16 %v64
  %v213 = vunpack.c.l.b16 %v65
  %v214 = vunpack.c.l.b16 %v66
  %v215 = vunpack.c.l.b16 %v67
  %v216 = vunpack.c.l.b16 %v68
  %v217 = vunpack.c.l.b16 %v69
  %v218 = vunpack.c.l.b16 %v70
  %v219 = vunpack.c.l.b16 %v71
  %v220 = vunpack.c.l.b16 %v72
  %v221 = vunpack.c.l.b16 %v73
  %v222 = vunpack.c.l.b16 %v74
  %v223 = vunpack.c.l.b16 %v75
  %v224 = vunpack.c.l.b16 %v76
  %v225 = vunpack.c.l.b16 %v77
  %v226 = vunpack.c.l.b16 %v78
  %v227 = vunpack.c.l.b16 %v79
  %v228 = vunpack.c.l.b16 %v80
  %v229 = vunpack.c.l.b16 %v81
  %v230 = vunpack.c.l.b16 %v82
  %v231 = vunpack.c.l.b16 %v83
  %v232 = vunpack.c.l.b16 %v84
  %v233 = vunpack.c.l.b16 %v85
  %v234 = vunpack.c.l.b16 %v86
  %v235 = vunpack.c.l.b16 %v87
  %v236 = vunpack.c.l.b16 %v88
  %v237 = vunpack.c.l.b16 %v89
  %v238 = vunpack.c.l.b16 %v90
  %v239 = vpack.c.b16 %v176, %v175
  %v240 = vpack.c.b16 %v178, %v177
  %v241 = vpack.c.b16 %v180, %v179
  %v242 = vpack.c.b16 %v182, %v181
  %v243 = vpack.c.b16 %v184, %v183
  %v244 = vpack.c.b16 %v186, %v185
  %v245 = vpack.c.b16 %v188, %v187
  %v246 = vpack.c.b16 %v190, %v189
  %v247 = vpack.c.b16 %v192, %v191
  %v248 = vpack.c.b16 %v194, %v193
  %v249 = vpack.c.b16 %v196, %v195
  %v250 = vpack.c.b16 %v198, %v197
  %v251 = vpack.c.b16 %v200, %v199
  %v252 = vpack.c.b16 %v202, %v201
  %v253 = vpack.c.b16 %v204, %v203
  %v254 = vpack.c.b16 %v206, %v205
  %v255 = vpack.c.b16 %v208, %v207
  %v256 = vpack.c.b16 %v210, %v209
  %v257 = vpack.c.b16 %v212, %v211
  %v258 = vpack.c.b16 %v214, %v213
  %v259 = vpack.c.b16 %v216, %v215
  %v260 = vpack.c.b16 %v218, %v217
  %v261 = vpack.c.b16 %v220, %v219
  %v262 = vpack.c.b16 %v222, %v221
  %v263 = vpack.c.b16 %v224, %v223
  %v264 = vpack.c.b16 %v226, %v225
  %v265 = vpack.c.b16 %v228, %v227
  %v266 = vpack.c.b16 %v230, %v229
  %v267 = vpack.c.b16 %v232, %v231
  %v268 = vpack.c.b16 %v234, %v233
  %v269 = vpack.c.b16 %v236, %v235
  %v270 = vpack.c.b16 %v238, %v237
  %303 = vmatprep.subr.bf16.mxu0 0
  %304 = vmatpush1.bf16.msra.mxu0 %v246
  %305 = vmatprep.subr.bf16.mxu0 0
  %306 = vmatpush1.bf16.msra.mxu0 %v245
  %307 = vmatprep.subr.bf16.mxu0 0
  %308 = vmatpush1.bf16.msra.mxu0 %v244
  %309 = vmatprep.subr.bf16.mxu0 0
  %310 = vmatpush1.bf16.msra.mxu0 %v243
  %311 = vmatprep.subr.bf16.mxu0 0
  %312 = vmatpush1.bf16.msra.mxu0 %v242
  %313 = vmatprep.subr.bf16.mxu0 0
  %314 = vmatpush1.bf16.msra.mxu0 %v241
  %315 = vmatprep.subr.bf16.mxu0 0
  %316 = vmatpush1.bf16.msra.mxu0 %v240
  %317 = vmatprep.subr.bf16.mxu0 0
  %318 = vmatpush1.bf16.msra.mxu0 %v239
  %319 = vmatprep.subr.bf16.mxu0 0
  %320 = vmatpush2.bf16.msra.mxu0 %v254
  %321 = vmatprep.subr.bf16.mxu0 0
  %322 = vmatpush2.bf16.msra.mxu0 %v253
  %323 = vmatprep.subr.bf16.mxu0 0
  %324 = vmatpush2.bf16.msra.mxu0 %v252
  %325 = vmatprep.subr.bf16.mxu0 0
  %326 = vmatpush2.bf16.msra.mxu0 %v251
  %327 = vmatprep.subr.bf16.mxu0 0
  %328 = vmatpush2.bf16.msra.mxu0 %v250
  %329 = vmatprep.subr.bf16.mxu0 0
  %330 = vmatpush2.bf16.msra.mxu0 %v249
  %331 = vmatprep.subr.bf16.mxu0 0
  %332 = vmatpush2.bf16.msra.mxu0 %v248
  %333 = vmatprep.subr.bf16.mxu0 0
  %334 = vmatpush2.bf16.msra.mxu0 %v247
  %335 = vmatprep.mubr.bf16.mxu0 %v104
  %336 = vmatmul.mubr.bf16.gmra.mxu0 %v103
  %v337 = vpop.f32.mrf.mxu0
  %v338 = vadd.f32 0.0, %v337
  %v339 = vpop.f32.mrf.mxu0
  %v340 = vpop.f32.mrf.mxu0
  %v341 = vadd.f32 0.0, %v340
  %v342 = vpop.f32.mrf.mxu0
  %343 = vdwg.mxu0
  %344 = vmatprep.subr.bf16.mxu0 0
  %345 = vmatpush1.bf16.msra.mxu0 %v262
  %346 = vmatprep.subr.bf16.mxu0 0
  %347 = vmatpush1.bf16.msra.mxu0 %v261
  %348 = vmatprep.subr.bf16.mxu0 0
  %349 = vmatpush1.bf16.msra.mxu0 %v260
  %350 = vmatprep.subr.bf16.mxu0 0
  %351 = vmatpush1.bf16.msra.mxu0 %v259
  %352 = vmatprep.subr.bf16.mxu0 0
  %353 = vmatpush1.bf16.msra.mxu0 %v258
  %354 = vmatprep.subr.bf16.mxu0 0
  %355 = vmatpush1.bf16.msra.mxu0 %v257
  %356 = vmatprep.subr.bf16.mxu0 0
  %357 = vmatpush1.bf16.msra.mxu0 %v256
  %358 = vmatprep.subr.bf16.mxu0 0
  %359 = vmatpush1.bf16.msra.mxu0 %v255
  %360 = vmatprep.subr.bf16.mxu0 0
  %361 = vmatpush2.bf16.msra.mxu0 %v270
  %362 = vmatprep.subr.bf16.mxu0 0
  %363 = vmatpush2.bf16.msra.mxu0 %v269
  %364 = vmatprep.subr.bf16.mxu0 0
  %365 = vmatpush2.bf16.msra.mxu0 %v268
  %366 = vmatprep.subr.bf16.mxu0 0
  %367 = vmatpush2.bf16.msra.mxu0 %v267
  %368 = vmatprep.subr.bf16.mxu0 0
  %369 = vmatpush2.bf16.msra.mxu0 %v266
  %370 = vmatprep.subr.bf16.mxu0 0
  %371 = vmatpush2.bf16.msra.mxu0 %v265
  %372 = vmatprep.subr.bf16.mxu0 0
  %373 = vmatpush2.bf16.msra.mxu0 %v264
  %374 = vmatprep.subr.bf16.mxu0 0
  %375 = vmatpush2.bf16.msra.mxu0 %v263
  %376 = vmatprep.mubr.bf16.mxu0 %v106
  %377 = vmatmul.mubr.bf16.gmra.mxu0 %v105
  %v378 = vpop.f32.mrf.mxu0
  %v379 = vadd.f32 %v338, %v378
  %v380 = vpop.f32.mrf.mxu0
  %v381 = vpop.f32.mrf.mxu0
  %v382 = vadd.f32 %v341, %v381
  %v383 = vpop.f32.mrf.mxu0
  %384 = vdwg.mxu0
  %v385 = vadd.f32 %v21, %v379
  %v386 = vadd.f32 %v22, %v382
  %387 = vst [vmem:[#allocation2] sm:$0xff] %v385
  %388 = vst [vmem:[#allocation2 + $0x8] sm:$0xff] %v386
  // Predicated region
  $region18: #{model_forward.37} parent=0 // pred_check
    %p389 = pneg %p15
  $region19: #{model_forward.37} parent=0 // pred_check_branch
    %391 = sbr.rel (%p389) target = $region21
  $region20: #{model_forward.37} parent=0 // pred_region
    %v392 = vld [vmem:[#allocation2] sm:$0xff]
    %v393 = vld [vmem:[#allocation2 + $0x8] sm:$0xff]
    %v394 = vld [vmem:[%s2] sm:$0x1]
    %v396 = vlaneseq
    %v397 = vshrl.u32 %v396, 7
    %v398 = vsub.s32 0, %v397
    %v399 = vrot.slane %v394, %v398
    %v401 = vadd.f32 %v392, %v399
    %v402 = vadd.f32 %v393, %v399
    %v403 = vpack.c.bf16 %v402, %v401
    %v405 = vunpack.c.l.b16 %v403
    %v406 = vunpack.c.h.b16 %v403
    %v407 = vpack.c.b16 %v405, %v405
    %v408 = vpack.c.b16 %v406, %v406
    %411 = vst [vmem:[%s3] sm:$0xf] %v407
    %412 = vst [vmem:[%s3 + $0x4] sm:$0xf] %v408
  $region21: #{model_forward.37} parent=0 // pred_fallthru
    _
  // Predicated region
  $region22: #{model_forward.37} parent=0 // pred_check
    _
  $region23: #{model_forward.37} parent=0 // pred_check_branch
    %414 = sbr.rel (0) target = $region25
  $region24: #{model_forward.37} parent=0 // pred_region
    _
  $region25: #{model_forward.37} parent=0 // pred_fallthru
    _
  // Predicated region
  $region26: #{model_forward.37} parent=0 // pred_check
    _
  $region27: #{model_forward.37} parent=0 // pred_check_branch
    %416 = sbr.rel (0) target = $region29
  $region28: #{model_forward.37} parent=0 // pred_region
    _
  $region29: #{model_forward.37} parent=0 // pred_fallthru
    _

// kernel: model_forward.49
$region0: #{model_forward.49}
  #allocation0 [shape = 'u32[]', space=smem, size = 0x4, offset = 0x4, fixed_abs, tag = 'smem constant byte address 0x4 - core index']
  #allocation1 [shape = 'u32[144,128]{1,0:T(1,128)}', space=vmem, size = 0x12000, scoped, tag = 'internal scratch']
  %s0 = inlined_call_operand.vmem [shape: bf16[16,128], index: 0, kind: input, shape index: {}]
  %s1 = inlined_call_operand.vmem [shape: bf16[16,128], index: 1, kind: input, shape index: {}]
  %s2 = inlined_call_operand.vmem [shape: f32[1,128], index: 2, kind: input, shape index: {}]
  %s3 = inlined_call_operand.vmem [shape: f32[1,128], index: 3, kind: input, shape index: {}]
  %s4 = inlined_call_operand.vmem [shape: bf16[16,128], index: 4, kind: output, shape index: {}]
  %s5 = sld [smem:[#allocation0]]
  $region26: #{model_forward.49} parent=0
    _
  %s7 = ssub.s32 1, %s5
  %s8 = scalar_select 0, %s7, %s5
  // Predicated region
  $region2: #{model_forward.49} parent=0 // pred_check
    _
  $region3: #{model_forward.49} parent=0 // pred_check_branch
    %10 = sbr.rel (0) target = $region5
  $region4: #{model_forward.49} parent=0 // pred_region
    _
  $region5: #{model_forward.49} parent=0 // pred_fallthru
    _
  // Predicated region
  $region6: #{model_forward.49} parent=0 // pred_check
    _
  $region7: #{model_forward.49} parent=0 // pred_check_branch
    %12 = sbr.rel (0) target = $region9
  $region8: #{model_forward.49} parent=0 // pred_region
    _
  $region9: #{model_forward.49} parent=0 // pred_fallthru
    _
  // Predicated region
  $region10: #{model_forward.49} parent=0 // pred_check
    _
  $region11: #{model_forward.49} parent=0 // pred_check_branch
    %14 = sbr.rel (0) target = $region13
  $region12: #{model_forward.49} parent=0 // pred_region
    _
  $region13: #{model_forward.49} parent=0 // pred_fallthru
    _
  // Predicated region
  $region14: #{model_forward.49} parent=0 // pred_check
    _
  $region15: #{model_forward.49} parent=0 // pred_check_branch
    %16 = sbr.rel (0) target = $region17
  $region16: #{model_forward.49} parent=0 // pred_region
    _
  $region17: #{model_forward.49} parent=0 // pred_fallthru
    _
  %v17 = vld [vmem:[%s0] sm:$0xf]
  %v18 = vld [vmem:[%s0 + $0x4] sm:$0xf]
  %v19 = vunpack.c.l.bf16 %v17
  %v20 = vunpack.c.l.bf16 %v18
  %v21 = vld [vmem:[%s1] sm:$0xf]
  %v22 = vld [vmem:[%s1 + $0x4] sm:$0xf]
  %v23 = vunpack.c.l.bf16 %v21
  %v24 = vunpack.c.l.bf16 %v22
  %v25 = vadd.f32 %v19, %v23
  %v26 = vadd.f32 %v20, %v24
  %v27 = vld [vmem:[%s2] sm:$0x1]
  %v28 = vld [vmem:[%s3] sm:$0x1]
  %29 = vadd.xlane.f32.xlu0 %v25
  %v30 = vpop.xlane.xlu0 %29
  %31 = vadd.xlane.f32.xlu0 %v26
  %v32 = vpop.xlane.xlu0 %31
  %v33 = vrcp.pop 128.0
  %v34 = vmul.f32 %v30, %v33
  %v35 = vmul.f32 %v32, %v33
  %v36 = vsub.f32 %v25, %v34
  %v37 = vsub.f32 %v26, %v35
  %v38 = vmul.f32 %v36, %v36
  %v39 = vmul.f32 %v37, %v37
  %40 = vadd.xlane.f32.xlu0 %v38
  %v41 = vpop.xlane.xlu0 %40
  %42 = vadd.xlane.f32.xlu0 %v39
  %v43 = vpop.xlane.xlu0 %42
  %v44 = vmul.f32 %v41, %v33
  %v45 = vmul.f32 %v43, %v33
  %v46 = vadd.f32 %v44, 1e-05
  %v47 = vadd.f32 %v45, 1e-05
  %v48 = vrsqrt.pop %v46
  %v49 = vrsqrt.pop %v47
  %v50 = vmul.f32 %v36, %v48
  %v51 = vmul.f32 %v37, %v49
  %v53 = vlaneseq
  %v54 = vshrl.u32 %v53, 7
  %v55 = vsub.s32 0, %v54
  %v56 = vrot.slane %v27, %v55
  %v58 = vmul.f32 %v50, %v56
  %v59 = vmul.f32 %v51, %v56
  %v61 = vlaneseq
  %v62 = vshrl.u32 %v61, 7
  %v63 = vsub.s32 0, %v62
  %v64 = vrot.slane %v28, %v63
  %v66 = vadd.f32 %v58, %v64
  %v67 = vadd.f32 %v59, %v64
  %v68 = vpack.c.bf16 %v67, %v66
  %v70 = vunpack.c.l.b16 %v68
  %v71 = vunpack.c.h.b16 %v68
  %v72 = vpack.c.b16 %v70, %v70
  %v73 = vpack.c.b16 %v71, %v71
  %76 = vst [vmem:[%s4] sm:$0xf] %v72
  %77 = vst [vmem:[%s4 + $0x4] sm:$0xf] %v73
  // Predicated region
  $region18: #{model_forward.49} parent=0 // pred_check
    _
  $region19: #{model_forward.49} parent=0 // pred_check_branch
    %79 = sbr.rel (0) target = $region21
  $region20: #{model_forward.49} parent=0 // pred_region
    _
  $region21: #{model_forward.49} parent=0 // pred_fallthru
    _
  // Predicated region
  $region22: #{model_forward.49} parent=0 // pred_check
    _
  $region23: #{model_forward.49} parent=0 // pred_check_branch
    %81 = sbr.rel (0) target = $region25
  $region24: #{model_forward.49} parent=0 // pred_region
    _
  $region25: #{model_forward.49} parent=0 // pred_fallthru
    _

// kernel: model_forward.60
$region0: #{model_forward.60}
  #allocation0 [shape = 'u32[]', space=smem, size = 0x4, offset = 0x4, fixed_abs, tag = 'smem constant byte address 0x4 - core index']
  #allocation1 [shape = 'u32[144,128]{1,0:T(1,128)}', space=vmem, size = 0x12000, scoped, tag = 'internal scratch']
  %s0 = inlined_call_operand.vmem [shape: bf16[2,8,128], index: 0, kind: input, shape index: {}]
  %s1 = inlined_call_operand.vmem [shape: bf16[2,128], index: 1, kind: output, shape index: {}]
  %s2 = sld [smem:[#allocation0]]
  $region14: #{model_forward.60} parent=0
    _
  %s4 = ssub.s32 1, %s2
  %s5 = scalar_select 0, %s4, %s2
  // Predicated region
  $region2: #{model_forward.60} parent=0 // pred_check
    _
  $region3: #{model_forward.60} parent=0 // pred_check_branch
    %7 = sbr.rel (0) target = $region5
  $region4: #{model_forward.60} parent=0 // pred_region
    _
  $region5: #{model_forward.60} parent=0 // pred_fallthru
    _
  %v8 = vld [vmem:[%s0] sm:$0xf]
  %v9 = vld [vmem:[%s0 + $0x4] sm:$0xf]
  %v10 = vunpack.c.l.bf16 %v8
  %v11 = vunpack.c.l.bf16 %v9
  %v12 = vrot.slane %v10, 4
  %v13 = vadd.f32 %v10, %v12
  %v14 = vrot.slane %v13, 2
  %v15 = vadd.f32 %v13, %v14
  %v16 = vrot.slane %v15, 1
  %v17 = vadd.f32 %v15, %v16
  %v18 = vrot.slane %v11, 4
  %v19 = vadd.f32 %v11, %v18
  %v20 = vrot.slane %v19, 2
  %v21 = vadd.f32 %v19, %v20
  %v22 = vrot.slane %v21, 1
  %v23 = vadd.f32 %v21, %v22
  %v24 = vrcp.pop 8.0
  %v25 = vmul.f32 %v17, %v24
  %v26 = vmul.f32 %v23, %v24
  %v27 = vpack.c.bf16 %v25, %v25
  %v28 = vpack.c.bf16 %v26, %v26
  %v32 = vunpack.c.l.s4 1966171168
  %v33 = vunpack.c.0.s8 %v32
  %v34 = vlaneseq
  %v35 = vshrl.u32 %v34, 7
  %v36 = vsub.s32 %v33, %v35
  %v37 = vrot.slane %v27, %v36
  %v39 = vunpack.c.l.s4 1966171168
  %v40 = vunpack.c.0.s8 %v39
  %v41 = vlaneseq
  %v42 = vshrl.u32 %v41, 7
  %v43 = vsub.s32 %v40, %v42
  %v44 = vrot.slane %v37, %v43
  %v46 = vunpack.c.l.s4 1966171168
  %v47 = vunpack.c.0.s8 %v46
  %v48 = vlaneseq
  %v49 = vshrl.u32 %v48, 7
  %v50 = vsub.s32 %v47, %v49
  %v51 = vrot.slane %v28, %v50
  %v53 = vunpack.c.l.s4 1966171168
  %v54 = vunpack.c.0.s8 %v53
  %v55 = vlaneseq
  %v56 = vshrl.u32 %v55, 7
  %v57 = vsub.s32 %v54, %v56
  %v58 = vrot.slane %v51, %v57
  %v60 = vunpack.c.l.s4 1935823168
  %v61 = vunpack.c.0.s8 %v60
  %v62 = vlaneseq
  %v63 = vshrl.u32 %v62, 7
  %v64 = vsub.s32 %v61, %v63
  %v65 = vrot.slane %v44, %v64
  %v67 = vunpack.c.l.s4 1935823168
  %v68 = vunpack.c.0.s8 %v67
  %v69 = vlaneseq
  %v70 = vshrl.u32 %v69, 7
  %v71 = vsub.s32 %v68, %v70
  %v72 = vrot.slane %v65, %v71
  %v74 = vunpack.c.l.s4 1935823168
  %v75 = vunpack.c.0.s8 %v74
  %v76 = vlaneseq
  %v77 = vshrl.u32 %v76, 7
  %v78 = vsub.s32 %v75, %v77
  %v79 = vrot.slane %v58, %v78
  %v81 = vunpack.c.l.s4 1935823168
  %v82 = vunpack.c.0.s8 %v81
  %v83 = vlaneseq
  %v84 = vshrl.u32 %v83, 7
  %v85 = vsub.s32 %v82, %v84
  %v86 = vrot.slane %v79, %v85
  %v87 = vunpack.c.l.b16 %v72
  %v88 = vunpack.c.l.b16 %v86
  %v89 = vrot.slane %v88, 7
  %vm90 = vcmask 1041409
  %v91 = vsel %vm90, %v89, %v87
  %v92 = vpack.c.b16 %v91, %v91
  %v94 = vunpack.c.l.s4 1966171168
  %v95 = vunpack.c.0.s8 %v94
  %v96 = vlaneseq
  %v97 = vshrl.u32 %v96, 7
  %v98 = vsub.s32 %v95, %v97
  %v99 = vrot.slane %v92, %v98
  %v101 = vunpack.c.l.s4 1966171168
  %v102 = vunpack.c.0.s8 %v101
  %v103 = vlaneseq
  %v104 = vshrl.u32 %v103, 7
  %v105 = vsub.s32 %v102, %v104
  %v106 = vrot.slane %v99, %v105
  %108 = vst [vmem:[%s1] sm:$0x1] %v106
  // Predicated region
  $region6: #{model_forward.60} parent=0 // pred_check
    _
  $region7: #{model_forward.60} parent=0 // pred_check_branch
    %110 = sbr.rel (0) target = $region9
  $region8: #{model_forward.60} parent=0 // pred_region
    _
  $region9: #{model_forward.60} parent=0 // pred_fallthru
    _
  // Predicated region
  $region10: #{model_forward.60} parent=0 // pred_check
    _
  $region11: #{model_forward.60} parent=0 // pred_check_branch
    %112 = sbr.rel (0) target = $region13
  $region12: #{model_forward.60} parent=0 // pred_region
    _
  $region13: #{model_forward.60} parent=0 // pred_fallthru
    _

// kernel: model_forward.50
$region0: #{model_forward.50}
  #allocation0 [shape = 'u32[]', space=smem, size = 0x4, offset = 0x4, fixed_abs, tag = 'smem constant byte address 0x4 - core index']
  #allocation1 [shape = 'u32[144,128]{1,0:T(1,128)}', space=vmem, size = 0x12000, scoped, tag = 'internal scratch']
  #allocation2 [shape = 'f32[16,512]{1,0:T(8,128)}', space=vmem, size = 0x8000, scoped, tag = 'scratch operand']
  %s0 = inlined_call_operand.vmem [shape: bf16[16,128], index: 0, kind: input, shape index: {}]
  %s1 = inlined_call_operand.vmem [shape: bf16[128,512], index: 1, kind: input, shape index: {}]
  %s2 = inlined_call_operand.vmem [shape: f32[1,512], index: 2, kind: input, shape index: {}]
  %s3 = inlined_call_operand.vmem [shape: bf16[16,512], index: 3, kind: output, shape index: {}]
  %s4 = sld [smem:[#allocation0]]
  $region30: #{model_forward.50} parent=0
    _
  %s6 = ssub.s32 1, %s4
  %s7 = scalar_select 0, %s6, %s4
  // Predicated region
  $region2: #{model_forward.50} parent=0 // pred_check
    _
  $region3: #{model_forward.50} parent=0 // pred_check_branch
    %9 = sbr.rel (0) target = $region5
  $region4: #{model_forward.50} parent=0 // pred_region
    _
  $region5: #{model_forward.50} parent=0 // pred_fallthru
    _
  // Predicated region
  $region6: #{model_forward.50} parent=0 // pred_check
    _
  $region7: #{model_forward.50} parent=0 // pred_check_branch
    %11 = sbr.rel (0) target = $region9
  $region8: #{model_forward.50} parent=0 // pred_region
    _
  $region9: #{model_forward.50} parent=0 // pred_fallthru
    _
  // Predicated region
  $region10: #{model_forward.50} parent=0 // pred_check
    _
  $region11: #{model_forward.50} parent=0 // pred_check_branch
    %13 = sbr.rel (0) target = $region13
  $region12: #{model_forward.50} parent=0 // pred_region
    _
  $region13: #{model_forward.50} parent=0 // pred_fallthru
    _
  %p15 = scmp.eq.s32.totalorder 0, 0
  // Predicated region
  $region14: #{model_forward.50} parent=0 // pred_check
    %p16 = pneg %p15
  $region15: #{model_forward.50} parent=0 // pred_check_branch
    %18 = sbr.rel (%p16) target = $region17
  $region16: #{model_forward.50} parent=0 // pred_region
    %19 = vst [vmem:[#allocation2] sm:$0xff] 0.0
    %20 = vst [vmem:[#allocation2 + $0x8] sm:$0xff] 0.0
    %21 = vst [vmem:[#allocation2 + $0x10] sm:$0xff] 0.0
    %22 = vst [vmem:[#allocation2 + $0x18] sm:$0xff] 0.0
    %23 = vst [vmem:[#allocation2 + $0x20] sm:$0xff] 0.0
    %24 = vst [vmem:[#allocation2 + $0x28] sm:$0xff] 0.0
    %25 = vst [vmem:[#allocation2 + $0x30] sm:$0xff] 0.0
    %26 = vst [vmem:[#allocation2 + $0x38] sm:$0xff] 0.0
  $region17: #{model_forward.50} parent=0 // pred_fallthru
    _
  %v27 = vld [vmem:[#allocation2] sm:$0xff]
  %v28 = vld [vmem:[#allocation2 + $0x8] sm:$0xff]
  %v29 = vld [vmem:[#allocation2 + $0x10] sm:$0xff]
  %v30 = vld [vmem:[#allocation2 + $0x18] sm:$0xff]
  %v31 = vld [vmem:[#allocation2 + $0x20] sm:$0xff]
  %v32 = vld [vmem:[#allocation2 + $0x28] sm:$0xff]
  %v33 = vld [vmem:[#allocation2 + $0x30] sm:$0xff]
  %v34 = vld [vmem:[#allocation2 + $0x38] sm:$0xff]
  %v35 = vld [vmem:[%s0] sm:$0xf]
  %v36 = vld [vmem:[%s0 + $0x4] sm:$0xf]
  %v37 = vld [vmem:[%s1] sm:$0xff]
  %v38 = vld [vmem:[%s1 + $0x8] sm:$0xff]
  %v39 = vld [vmem:[%s1 + $0x10] sm:$0xff]
  %v40 = vld [vmem:[%s1 + $0x18] sm:$0xff]
  %v41 = vld [vmem:[%s1 + $0x20] sm:$0xff]
  %v42 = vld [vmem:[%s1 + $0x28] sm:$0xff]
  %v43 = vld [vmem:[%s1 + $0x30] sm:$0xff]
  %v44 = vld [vmem:[%s1 + $0x38] sm:$0xff]
  %v45 = vld [vmem:[%s1 + $0x40] sm:$0xff]
  %v46 = vld [vmem:[%s1 + $0x48] sm:$0xff]
  %v47 = vld [vmem:[%s1 + $0x50] sm:$0xff]
  %v48 = vld [vmem:[%s1 + $0x58] sm:$0xff]
  %v49 = vld [vmem:[%s1 + $0x60] sm:$0xff]
  %v50 = vld [vmem:[%s1 + $0x68] sm:$0xff]
  %v51 = vld [vmem:[%s1 + $0x70] sm:$0xff]
  %v52 = vld [vmem:[%s1 + $0x78] sm:$0xff]
  %v53 = vld [vmem:[%s1 + $0x80] sm:$0xff]
  %v54 = vld [vmem:[%s1 + $0x88] sm:$0xff]
  %v55 = vld [vmem:[%s1 + $0x90] sm:$0xff]
  %v56 = vld [vmem:[%s1 + $0x98] sm:$0xff]
  %v57 = vld [vmem:[%s1 + $0xa0] sm:$0xff]
  %v58 = vld [vmem:[%s1 + $0xa8] sm:$0xff]
  %v59 = vld [vmem:[%s1 + $0xb0] sm:$0xff]
  %v60 = vld [vmem:[%s1 + $0xb8] sm:$0xff]
  %v61 = vld [vmem:[%s1 + $0xc0] sm:$0xff]
  %v62 = vld [vmem:[%s1 + $0xc8] sm:$0xff]
  %v63 = vld [vmem:[%s1 + $0xd0] sm:$0xff]
  %v64 = vld [vmem:[%s1 + $0xd8] sm:$0xff]
  %v65 = vld [vmem:[%s1 + $0xe0] sm:$0xff]
  %v66 = vld [vmem:[%s1 + $0xe8] sm:$0xff]
  %v67 = vld [vmem:[%s1 + $0xf0] sm:$0xff]
  %v68 = vld [vmem:[%s1 + $0xf8] sm:$0xff]
  %v71 = vunpack.c.l.b16 %v35
  %v72 = vunpack.c.l.b16 %v36
  %v73 = vpack.c.b16 %v72, %v71
  %v107 = vunpack.c.l.b16 %v37
  %v108 = vunpack.c.h.b16 %v37
  %v109 = vunpack.c.l.b16 %v38
  %v110 = vunpack.c.h.b16 %v38
  %v111 = vunpack.c.l.b16 %v39
  %v112 = vunpack.c.h.b16 %v39
  %v113 = vunpack.c.l.b16 %v40
  %v114 = vunpack.c.h.b16 %v40
  %v115 = vunpack.c.l.b16 %v41
  %v116 = vunpack.c.h.b16 %v41
  %v117 = vunpack.c.l.b16 %v42
  %v118 = vunpack.c.h.b16 %v42
  %v119 = vunpack.c.l.b16 %v43
  %v120 = vunpack.c.h.b16 %v43
  %v121 = vunpack.c.l.b16 %v44
  %v122 = vunpack.c.h.b16 %v44
  %v123 = vunpack.c.l.b16 %v45
  %v124 = vunpack.c.h.b16 %v45
  %v125 = vunpack.c.l.b16 %v46
  %v126 = vunpack.c.h.b16 %v46
  %v127 = vunpack.c.l.b16 %v47
  %v128 = vunpack.c.h.b16 %v47
  %v129 = vunpack.c.l.b16 %v48
  %v130 = vunpack.c.h.b16 %v48
  %v131 = vunpack.c.l.b16 %v49
  %v132 = vunpack.c.h.b16 %v49
  %v133 = vunpack.c.l.b16 %v50
  %v134 = vunpack.c.h.b16 %v50
  %v135 = vunpack.c.l.b16 %v51
  %v136 = vunpack.c.h.b16 %v51
  %v137 = vunpack.c.l.b16 %v52
  %v138 = vunpack.c.h.b16 %v52
  %v139 = vunpack.c.l.b16 %v53
  %v140 = vunpack.c.h.b16 %v53
  %v141 = vunpack.c.l.b16 %v54
  %v142 = vunpack.c.h.b16 %v54
  %v143 = vunpack.c.l.b16 %v55
  %v144 = vunpack.c.h.b16 %v55
  %v145 = vunpack.c.l.b16 %v56
  %v146 = vunpack.c.h.b16 %v56
  %v147 = vunpack.c.l.b16 %v57
  %v148 = vunpack.c.h.b16 %v57
  %v149 = vunpack.c.l.b16 %v58
  %v150 = vunpack.c.h.b16 %v58
  %v151 = vunpack.c.l.b16 %v59
  %v152 = vunpack.c.h.b16 %v59
  %v153 = vunpack.c.l.b16 %v60
  %v154 = vunpack.c.h.b16 %v60
  %v155 = vunpack.c.l.b16 %v61
  %v156 = vunpack.c.h.b16 %v61
  %v157 = vunpack.c.l.b16 %v62
  %v158 = vunpack.c.h.b16 %v62
  %v159 = vunpack.c.l.b16 %v63
  %v160 = vunpack.c.h.b16 %v63
  %v161 = vunpack.c.l.b16 %v64
  %v162 = vunpack.c.h.b16 %v64
  %v163 = vunpack.c.l.b16 %v65
  %v164 = vunpack.c.h.b16 %v65
  %v165 = vunpack.c.l.b16 %v66
  %v166 = vunpack.c.h.b16 %v66
  %v167 = vunpack.c.l.b16 %v67
  %v168 = vunpack.c.h.b16 %v67
  %v169 = vunpack.c.l.b16 %v68
  %v170 = vunpack.c.h.b16 %v68
  %v171 = vpack.c.b16 %v111, %v107
  %v172 = vpack.c.b16 %v112, %v108
  %v173 = vpack.c.b16 %v113, %v109
  %v174 = vpack.c.b16 %v114, %v110
  %v175 = vpack.c.b16 %v119, %v115
  %v176 = vpack.c.b16 %v120, %v116
  %v177 = vpack.c.b16 %v121, %v117
  %v178 = vpack.c.b16 %v122, %v118
  %v179 = vpack.c.b16 %v127, %v123
  %v180 = vpack.c.b16 %v128, %v124
  %v181 = vpack.c.b16 %v129, %v125
  %v182 = vpack.c.b16 %v130, %v126
  %v183 = vpack.c.b16 %v135, %v131
  %v184 = vpack.c.b16 %v136, %v132
  %v185 = vpack.c.b16 %v137, %v133
  %v186 = vpack.c.b16 %v138, %v134
  %v187 = vpack.c.b16 %v143, %v139
  %v188 = vpack.c.b16 %v144, %v140
  %v189 = vpack.c.b16 %v145, %v141
  %v190 = vpack.c.b16 %v146, %v142
  %v191 = vpack.c.b16 %v151, %v147
  %v192 = vpack.c.b16 %v152, %v148
  %v193 = vpack.c.b16 %v153, %v149
  %v194 = vpack.c.b16 %v154, %v150
  %v195 = vpack.c.b16 %v159, %v155
  %v196 = vpack.c.b16 %v160, %v156
  %v197 = vpack.c.b16 %v161, %v157
  %v198 = vpack.c.b16 %v162, %v158
  %v199 = vpack.c.b16 %v167, %v163
  %v200 = vpack.c.b16 %v168, %v164
  %v201 = vpack.c.b16 %v169, %v165
  %v202 = vpack.c.b16 %v170, %v166
  %235 = vmatprep.subr.bf16.mxu0 %v200
  %236 = vmatpush1.bf16.msra.mxu0 %v199
  %237 = vmatprep.subr.bf16.mxu0 %v196
  %238 = vmatpush1.bf16.msra.mxu0 %v195
  %239 = vmatprep.subr.bf16.mxu0 %v192
  %240 = vmatpush1.bf16.msra.mxu0 %v191
  %241 = vmatprep.subr.bf16.mxu0 %v188
  %242 = vmatpush1.bf16.msra.mxu0 %v187
  %243 = vmatprep.subr.bf16.mxu0 %v184
  %244 = vmatpush1.bf16.msra.mxu0 %v183
  %245 = vmatprep.subr.bf16.mxu0 %v180
  %246 = vmatpush1.bf16.msra.mxu0 %v179
  %247 = vmatprep.subr.bf16.mxu0 %v176
  %248 = vmatpush1.bf16.msra.mxu0 %v175
  %249 = vmatprep.subr.bf16.mxu0 %v172
  %250 = vmatpush1.bf16.msra.mxu0 %v171
  %251 = vmatprep.subr.bf16.mxu0 0
  %252 = vmatpush2.bf16.msra.mxu0 0
  %253 = vmatprep.subr.bf16.mxu0 0
  %254 = vmatpush2.bf16.msra.mxu0 0
  %255 = vmatprep.subr.bf16.mxu0 0
  %256 = vmatpush2.bf16.msra.mxu0 0
  %257 = vmatprep.subr.bf16.mxu0 0
  %258 = vmatpush2.bf16.msra.mxu0 0
  %259 = vmatprep.subr.bf16.mxu0 0
  %260 = vmatpush2.bf16.msra.mxu0 0
  %261 = vmatprep.subr.bf16.mxu0 0
  %262 = vmatpush2.bf16.msra.mxu0 0
  %263 = vmatprep.subr.bf16.mxu0 0
  %264 = vmatpush2.bf16.msra.mxu0 0
  %265 = vmatprep.subr.bf16.mxu0 0
  %266 = vmatpush2.bf16.msra.mxu0 0
  %267 = vmatprep.mubr.bf16.mxu0 0
  %268 = vmatmul.mubr.bf16.gmra.mxu0 %v73
  %v269 = vpop.f32.mrf.mxu0
  %v270 = vadd.f32 0.0, %v269
  %v271 = vpop.f32.mrf.mxu0
  %v272 = vadd.f32 0.0, %v271
  %v273 = vpop.f32.mrf.mxu0
  %v274 = vadd.f32 0.0, %v273
  %v275 = vpop.f32.mrf.mxu0
  %v276 = vadd.f32 0.0, %v275
  %277 = vdwg.mxu0
  %278 = vmatprep.subr.bf16.mxu0 %v202
  %279 = vmatpush1.bf16.msra.mxu0 %v201
  %280 = vmatprep.subr.bf16.mxu0 %v198
  %281 = vmatpush1.bf16.msra.mxu0 %v197
  %282 = vmatprep.subr.bf16.mxu0 %v194
  %283 = vmatpush1.bf16.msra.mxu0 %v193
  %284 = vmatprep.subr.bf16.mxu0 %v190
  %285 = vmatpush1.bf16.msra.mxu0 %v189
  %286 = vmatprep.subr.bf16.mxu0 %v186
  %287 = vmatpush1.bf16.msra.mxu0 %v185
  %288 = vmatprep.subr.bf16.mxu0 %v182
  %289 = vmatpush1.bf16.msra.mxu0 %v181
  %290 = vmatprep.subr.bf16.mxu0 %v178
  %291 = vmatpush1.bf16.msra.mxu0 %v177
  %292 = vmatprep.subr.bf16.mxu0 %v174
  %293 = vmatpush1.bf16.msra.mxu0 %v173
  %294 = vmatprep.subr.bf16.mxu0 0
  %295 = vmatpush2.bf16.msra.mxu0 0
  %296 = vmatprep.subr.bf16.mxu0 0
  %297 = vmatpush2.bf16.msra.mxu0 0
  %298 = vmatprep.subr.bf16.mxu0 0
  %299 = vmatpush2.bf16.msra.mxu0 0
  %300 = vmatprep.subr.bf16.mxu0 0
  %301 = vmatpush2.bf16.msra.mxu0 0
  %302 = vmatprep.subr.bf16.mxu0 0
  %303 = vmatpush2.bf16.msra.mxu0 0
  %304 = vmatprep.subr.bf16.mxu0 0
  %305 = vmatpush2.bf16.msra.mxu0 0
  %306 = vmatprep.subr.bf16.mxu0 0
  %307 = vmatpush2.bf16.msra.mxu0 0
  %308 = vmatprep.subr.bf16.mxu0 0
  %309 = vmatpush2.bf16.msra.mxu0 0
  %310 = vmatprep.mubr.bf16.mxu0 0
  %311 = vmatmul.mubr.bf16.gmra.mxu0 %v73
  %v312 = vpop.f32.mrf.mxu0
  %v313 = vadd.f32 0.0, %v312
  %v314 = vpop.f32.mrf.mxu0
  %v315 = vadd.f32 0.0, %v314
  %v316 = vpop.f32.mrf.mxu0
  %v317 = vadd.f32 0.0, %v316
  %v318 = vpop.f32.mrf.mxu0
  %v319 = vadd.f32 0.0, %v318
  %320 = vdwg.mxu0
  %v321 = vadd.f32 %v27, %v270
  %v322 = vadd.f32 %v28, %v272
  %v323 = vadd.f32 %v29, %v313
  %v324 = vadd.f32 %v30, %v315
  %v325 = vadd.f32 %v31, %v274
  %v326 = vadd.f32 %v32, %v276
  %v327 = vadd.f32 %v33, %v317
  %v328 = vadd.f32 %v34, %v319
  %329 = vst [vmem:[#allocation2] sm:$0xff] %v321
  %330 = vst [vmem:[#allocation2 + $0x8] sm:$0xff] %v322
  %331 = vst [vmem:[#allocation2 + $0x10] sm:$0xff] %v323
  %332 = vst [vmem:[#allocation2 + $0x18] sm:$0xff] %v324
  %333 = vst [vmem:[#allocation2 + $0x20] sm:$0xff] %v325
  %334 = vst [vmem:[#allocation2 + $0x28] sm:$0xff] %v326
  %335 = vst [vmem:[#allocation2 + $0x30] sm:$0xff] %v327
  %336 = vst [vmem:[#allocation2 + $0x38] sm:$0xff] %v328
  // Predicated region
  $region18: #{model_forward.50} parent=0 // pred_check
    %p337 = pneg %p15
  $region19: #{model_forward.50} parent=0 // pred_check_branch
    %339 = sbr.rel (%p337) target = $region21
  $region20: #{model_forward.50} parent=0 // pred_region
    %v340 = vld [vmem:[#allocation2] sm:$0xff]
    %v341 = vld [vmem:[#allocation2 + $0x8] sm:$0xff]
    %v342 = vld [vmem:[#allocation2 + $0x10] sm:$0xff]
    %v343 = vld [vmem:[#allocation2 + $0x18] sm:$0xff]
    %v344 = vld [vmem:[#allocation2 + $0x20] sm:$0xff]
    %v345 = vld [vmem:[#allocation2 + $0x28] sm:$0xff]
    %v346 = vld [vmem:[#allocation2 + $0x30] sm:$0xff]
    %v347 = vld [vmem:[#allocation2 + $0x38] sm:$0xff]
    %v348 = vld [vmem:[%s2] sm:$0xf]
    %v350 = vlaneseq
    %v351 = vshrl.u32 %v350, 7
    %v352 = vsub.s32 0, %v351
    %v353 = vrot.slane %v348, %v352
    %v354 = vlaneseq
    %v355 = vshrl.u32 %v354, 7
    %v356 = vsub.s32 1, %v355
    %v357 = vrot.slane %v348, %v356
    %v358 = vlaneseq
    %v359 = vshrl.u32 %v358, 7
    %v360 = vsub.s32 2, %v359
    %v361 = vrot.slane %v348, %v360
    %v362 = vlaneseq
    %v363 = vshrl.u32 %v362, 7
    %v364 = vsub.s32 3, %v363
    %v365 = vrot.slane %v348, %v364
    %v370 = vadd.f32 %v340, %v353
    %v371 = vadd.f32 %v341, %v357
    %v372 = vadd.f32 %v342, %v361
    %v373 = vadd.f32 %v343, %v365
    %v374 = vadd.f32 %v344, %v353
    %v375 = vadd.f32 %v345, %v357
    %v376 = vadd.f32 %v346, %v361
    %v377 = vadd.f32 %v347, %v365
    %v378 = vmax.f32 %v370, 0.0
    %v379 = vmax.f32 %v371, 0.0
    %v380 = vmax.f32 %v372, 0.0
    %v381 = vmax.f32 %v373, 0.0
    %v382 = vmax.f32 %v374, 0.0
    %v383 = vmax.f32 %v375, 0.0
    %v384 = vmax.f32 %v376, 0.0
    %v385 = vmax.f32 %v377, 0.0
    %v386 = vpack.c.bf16 %v382, %v378
    %v387 = vpack.c.bf16 %v383, %v379
    %v388 = vpack.c.bf16 %v384, %v380
    %v389 = vpack.c.bf16 %v385, %v381
    %v394 = vunpack.c.l.b16 %v386
    %v395 = vunpack.c.l.b16 %v387
    %v396 = vunpack.c.l.b16 %v388
    %v397 = vunpack.c.l.b16 %v389
    %v398 = vunpack.c.h.b16 %v386
    %v399 = vunpack.c.h.b16 %v387
    %v400 = vunpack.c.h.b16 %v388
    %v401 = vunpack.c.h.b16 %v389
    %v402 = vpack.c.b16 %v395, %v394
    %v403 = vpack.c.b16 %v397, %v396
    %v404 = vpack.c.b16 %v399, %v398
    %v405 = vpack.c.b16 %v401, %v400
    %410 = vst [vmem:[%s3] sm:$0xff] %v402
    %411 = vst [vmem:[%s3 + $0x8] sm:$0xff] %v403
    %412 = vst [vmem:[%s3 + $0x10] sm:$0xff] %v404
    %413 = vst [vmem:[%s3 + $0x18] sm:$0xff] %v405
  $region21: #{model_forward.50} parent=0 // pred_fallthru
    _
  // Predicated region
  $region22: #{model_forward.50} parent=0 // pred_check
    _
  $region23: #{model_forward.50} parent=0 // pred_check_branch
    %415 = sbr.rel (0) target = $region25
  $region24: #{model_forward.50} parent=0 // pred_region
    _
  $region25: #{model_forward.50} parent=0 // pred_fallthru
    _
  // Predicated region
  $region26: #{model_forward.50} parent=0 // pred_check
    _
  $region27: #{model_forward.50} parent=0 // pred_check_branch
    %417 = sbr.rel (0) target = $region29
  $region28: #{model_forward.50} parent=0 // pred_region
    _
  $region29: #{model_forward.50} parent=0 // pred_fallthru
    _

// kernel: model_forward.47
$region0: #{model_forward.47}
  #allocation0 [shape = 'u32[]', space=smem, size = 0x4, offset = 0x4, fixed_abs, tag = 'smem constant byte address 0x4 - core index']
  #allocation1 [shape = 'u32[144,128]{1,0:T(1,128)}', space=vmem, size = 0x12000, scoped, tag = 'internal scratch']
  %s0 = inlined_call_operand.vmem [shape: bf16[2,8,384], index: 0, kind: input, shape index: {}, may-alias: {0,1,2}]
  %s1 = inlined_call_operand.vmem [shape: bf16[2,8,384], index: 1, kind: input, shape index: {}, may-alias: {0,1,2}]
  %s2 = inlined_call_operand.vmem [shape: bf16[2,8,384], index: 2, kind: input, shape index: {}, may-alias: {0,1,2}]
  %s3 = inlined_call_operand.vmem [shape: bf16[2,8,128], index: 3, kind: output, shape index: {}]
  %s4 = sld [smem:[#allocation0]]
  $region45: #{model_forward.47} parent=0
    _
  %s6 = ssub.s32 1, %s4
  %s7 = scalar_select 0, %s6, %s4
  loop: start=0, step=1, limit=4
  $region2: #{model_forward.47} parent=0 // loop_pre_header
    _
  $region3: #{model_forward.47} parent=0 // loop_header
    %s9 = sphi 0, %s13
    %p10 = scmp.ge.s32.totalorder %s9, 4
    %s19 = sphi 0, %s21
    %s22 = sphi 0, %s19
    %s23 = sphi 0, %s22
    %s39 = sphi 0, %s23
    %s45 = sphi 0, %s47
    %s48 = sphi 0, %s45
    %s49 = sphi 0, %s48
    %s65 = sphi 0, %s49
    %s71 = sphi 0, %s73
    %s74 = sphi 0, %s71
    %s75 = sphi 0, %s74
    %s91 = sphi 0, %s75
    %s97 = sphi 0, %s99
    %s100 = sphi 0, %s97
    %s101 = sphi 0, %s100
    %s117 = sphi 0, %s101
  $region4: #{model_forward.47} parent=0 // loop_header_branch
    %12 = sbr.rel (%p10) target = $region8
  $region5: #{model_forward.47} parent=0 // loop_body
    %s14 = ssub.s32 %s9, 1
    %s15 = ssub.s32 %s9, 2
    %s16 = sadd.s32 %s9, 1
    %s17 = ssub.s32 %s9, %s16
    %p18 = scmp.eq.s32.totalorder %s17, 0
    %s20 = sadd.s32 %s19, 1
    %s21 = scalar_select %p18, %s19, %s20
    %p24 = pneg %p18
    %p25 = scmp.eq.s32.totalorder %s9, 1
    %p26 = por %p24, %p25
    %p27 = scmp.ne.s32.totalorder %s19, %s22
    %p28 = scmp.eq.s32.totalorder %s9, 0
    %p29 = por %p27, %p28
    %p30 = scmp.ne.s32.totalorder %s19, %s22
    %p31 = scmp.eq.s32.totalorder %s14, 1
    %p32 = por %p30, %p31
    %p33 = scmp.ne.s32.totalorder %s22, %s23
    %p34 = scmp.eq.s32.totalorder %s14, 0
    %p35 = por %p33, %p34
    %p36 = scmp.ne.s32.totalorder %s22, %s23
    %p37 = scmp.eq.s32.totalorder %s15, 1
    %p38 = por %p36, %p37
    %p40 = scmp.ne.s32.totalorder %s23, %s39
    %p41 = scmp.eq.s32.totalorder %s15, 0
    %p42 = por %p40, %p41
    %s43 = ssub.s32 %s9, %s16
    %p44 = scmp.eq.s32.totalorder %s43, 0
    %s46 = sadd.s32 %s45, 1
    %s47 = scalar_select %p44, %s45, %s46
    %p50 = pneg %p44
    %p51 = scmp.eq.s32.totalorder %s9, 1
    %p52 = por %p50, %p51
    %p53 = scmp.ne.s32.totalorder %s45, %s48
    %p54 = scmp.eq.s32.totalorder %s9, 0
    %p55 = por %p53, %p54
    %p56 = scmp.ne.s32.totalorder %s45, %s48
    %p57 = scmp.eq.s32.totalorder %s14, 1
    %p58 = por %p56, %p57
    %p59 = scmp.ne.s32.totalorder %s48, %s49
    %p60 = scmp.eq.s32.totalorder %s14, 0
    %p61 = por %p59, %p60
    %p62 = scmp.ne.s32.totalorder %s48, %s49
    %p63 = scmp.eq.s32.totalorder %s15, 1
    %p64 = por %p62, %p63
    %p66 = scmp.ne.s32.totalorder %s49, %s65
    %p67 = scmp.eq.s32.totalorder %s15, 0
    %p68 = por %p66, %p67
    %s69 = ssub.s32 %s9, %s16
    %p70 = scmp.eq.s32.totalorder %s69, 0
    %s72 = sadd.s32 %s71, 1
    %s73 = scalar_select %p70, %s71, %s72
    %p76 = pneg %p70
    %p77 = scmp.eq.s32.totalorder %s9, 1
    %p78 = por %p76, %p77
    %p79 = scmp.ne.s32.totalorder %s71, %s74
    %p80 = scmp.eq.s32.totalorder %s9, 0
    %p81 = por %p79, %p80
    %p82 = scmp.ne.s32.totalorder %s71, %s74
    %p83 = scmp.eq.s32.totalorder %s14, 1
    %p84 = por %p82, %p83
    %p85 = scmp.ne.s32.totalorder %s74, %s75
    %p86 = scmp.eq.s32.totalorder %s14, 0
    %p87 = por %p85, %p86
    %p88 = scmp.ne.s32.totalorder %s74, %s75
    %p89 = scmp.eq.s32.totalorder %s15, 1
    %p90 = por %p88, %p89
    %p92 = scmp.ne.s32.totalorder %s75, %s91
    %p93 = scmp.eq.s32.totalorder %s15, 0
    %p94 = por %p92, %p93
    %s95 = ssub.s32 %s9, %s16
    %p96 = scmp.eq.s32.totalorder %s95, 0
    %s98 = sadd.s32 %s97, 1
    %s99 = scalar_select %p96, %s97, %s98
    %p102 = pneg %p96
    %p103 = scmp.eq.s32.totalorder %s9, 1
    %p104 = por %p102, %p103
    %p105 = scmp.ne.s32.totalorder %s97, %s100
    %p106 = scmp.eq.s32.totalorder %s9, 0
    %p107 = por %p105, %p106
    %p108 = scmp.ne.s32.totalorder %s97, %s100
    %p109 = scmp.eq.s32.totalorder %s14, 1
    %p110 = por %p108, %p109
    %p111 = scmp.ne.s32.totalorder %s100, %s101
    %p112 = scmp.eq.s32.totalorder %s14, 0
    %p113 = por %p111, %p112
    %p114 = scmp.ne.s32.totalorder %s100, %s101
    %p115 = scmp.eq.s32.totalorder %s15, 1
    %p116 = por %p114, %p115
    %p118 = scmp.ne.s32.totalorder %s101, %s117
    %p119 = scmp.eq.s32.totalorder %s15, 0
    %p120 = por %p118, %p119
    %p121 = scmp.le.s32.totalorder 1, %s9
    %p122 = scmp.lt.s32.totalorder %s9, 3
    %p123 = pnand %p121, %p122
    %p124 = pneg %p123
    // Predicated region
    $region9: #{model_forward.47} parent=5 // pred_check
      _
    $region10: #{model_forward.47} parent=5 // pred_check_branch
      %126 = sbr.rel (%p123) target = $region12
    $region11: #{model_forward.47} parent=5 // pred_region
      %s127 = ssub.s32 %s9, 1
    $region12: #{model_forward.47} parent=5 // pred_fallthru
      _
    %p128 = scmp.lt.s32.totalorder %s9, 2
    // Predicated region
    $region13: #{model_forward.47} parent=5 // pred_check
      %p129 = pneg %p128
    $region14: #{model_forward.47} parent=5 // pred_check_branch
      %131 = sbr.rel (%p129) target = $region16
    $region15: #{model_forward.47} parent=5 // pred_region
      // Predicated region
      $region17: #{model_forward.47} parent=15 // pred_check
        %p132 = pneg %p29
      $region18: #{model_forward.47} parent=15 // pred_check_branch
        %134 = sbr.rel (%p132) target = $region20
      $region19: #{model_forward.47} parent=15 // pred_region
        %p135 = scmp.lt.s32.totalorder %s9, 1
        %s136 = scalar_select %p135, %s9, 1
        %s137 = smul.addr %s136, 3
        %s138 = smul.addr %s137, 4
        %s139 = scalar_lea.vmem %s0, %s138
      $region20: #{model_forward.47} parent=15 // pred_fallthru
        _
      // Predicated region
      $region21: #{model_forward.47} parent=15 // pred_check
        %p140 = pneg %p55
      $region22: #{model_forward.47} parent=15 // pred_check_branch
        %142 = sbr.rel (%p140) target = $region24
      $region23: #{model_forward.47} parent=15 // pred_region
        %p143 = scmp.lt.s32.totalorder %s9, 1
        %s144 = scalar_select %p143, %s9, 1
        %s145 = smul.addr %s144, 3
        %s146 = sadd.s32 1, %s145
        %s147 = smul.addr %s146, 4
        %s148 = scalar_lea.vmem %s1, %s147
      $region24: #{model_forward.47} parent=15 // pred_fallthru
        _
      // Predicated region
      $region25: #{model_forward.47} parent=15 // pred_check
        %p149 = pneg %p81
      $region26: #{model_forward.47} parent=15 // pred_check_branch
        %151 = sbr.rel (%p149) target = $region28
      $region27: #{model_forward.47} parent=15 // pred_region
        %p152 = scmp.lt.s32.totalorder %s9, 1
        %s153 = scalar_select %p152, %s9, 1
        %s154 = smul.addr %s153, 3
        %s155 = sadd.s32 2, %s154
        %s156 = smul.addr %s155, 4
        %s157 = scalar_lea.vmem %s2, %s156
      $region28: #{model_forward.47} parent=15 // pred_fallthru
        _
    $region16: #{model_forward.47} parent=5 // pred_fallthru
      _
    %p158 = scmp.le.s32.totalorder 1, %s9
    %p159 = scmp.lt.s32.totalorder %s9, 3
    %p160 = pnand %p158, %p159
    %p161 = pneg %p160
    // Predicated region
    $region29: #{model_forward.47} parent=5 // pred_check
      _
    $region30: #{model_forward.47} parent=5 // pred_check_branch
      %163 = sbr.rel (%p160) target = $region32
    $region31: #{model_forward.47} parent=5 // pred_region
      %s164 = ssub.s32 %s9, 1
      %p165 = scmp.lt.s32.totalorder %s14, 1
      %s166 = scalar_select %p165, %s14, 1
      %s167 = smul.addr %s166, 3
      %s168 = smul.addr %s167, 4
      %s169 = scalar_lea.vmem %s0, %s168
      %p170 = pneg %p35
      %p171 = pneg %p32
      %p172 = scmp.lt.s32.totalorder %s14, 1
      %s173 = scalar_select %p172, %s14, 1
      %s174 = smul.addr %s173, 3
      %s175 = sadd.s32 1, %s174
      %s176 = smul.addr %s175, 4
      %s177 = scalar_lea.vmem %s1, %s176
      %p178 = pneg %p61
      %p179 = pneg %p58
      %p180 = scmp.lt.s32.totalorder %s14, 1
      %s181 = scalar_select %p180, %s14, 1
      %s182 = smul.addr %s181, 3
      %s183 = sadd.s32 2, %s182
      %s184 = smul.addr %s183, 4
      %s185 = scalar_lea.vmem %s2, %s184
      %p186 = pneg %p87
      %p187 = pneg %p84
      %p188 = pneg %p113
      %p189 = pneg %p110
      %p190 = scmp.lt.s32.totalorder %s14, 1
      %s191 = scalar_select %p190, %s14, 1
      %s192 = smul.addr %s191, 4
      %s193 = scalar_lea.vmem %s3, %s192
      %p194 = scmp.lt.s32.totalorder %s14, 1
      %s195 = scalar_select %p194, %s14, 1
      %s196 = smul.addr %s195, 3
      %s197 = smul.addr %s196, 4
      %s198 = scalar_lea.vmem %s0, %s197
      %p199 = scmp.lt.s32.totalorder %s14, 1
      %s200 = scalar_select %p199, %s14, 1
      %s201 = smul.addr %s200, 3
      %s202 = sadd.s32 1, %s201
      %s203 = smul.addr %s202, 4
      %s204 = scalar_lea.vmem %s1, %s203
      %p205 = scmp.lt.s32.totalorder %s14, 1
      %s206 = scalar_select %p205, %s14, 1
      %s207 = smul.addr %s206, 3
      %s208 = sadd.s32 2, %s207
      %s209 = smul.addr %s208, 4
      %s210 = scalar_lea.vmem %s2, %s209
      %p211 = scmp.lt.s32.totalorder %s14, 1
      %s212 = scalar_select %p211, %s14, 1
      %s213 = smul.addr %s212, 4
      %s214 = scalar_lea.vmem %s3, %s213
      %v215 = vld [vmem:[%s198] sm:$0xf]
      %v216 = vunpack.c.l.bf16 %v215
      %v217 = vmul.f32 %v216, 0.25
      %v218 = vld [vmem:[%s204] sm:$0xf]
      %v219 = vunpack.c.l.bf16 %v218
      %v220 = vld [vmem:[%s210] sm:$0xf]
      %v221 = vunpack.c.l.bf16 %v220
      %vm222 = vcmask 130048
      %v224 = vsel %vm222, %v217, 0
      %v227 = vsel %vm222, %v219, 0
      %229 = vmatprep.subr.mxu0 0.0
      %230 = vmatpush1.xpose.msra.mxu0 0.0
      %231 = vmatprep.subr.mxu0 0.0
      %232 = vmatpush1.xpose.msra.mxu0 0.0
      %233 = vmatprep.subr.mxu0 0.0
      %234 = vmatpush1.xpose.msra.mxu0 0.0
      %235 = vmatprep.subr.mxu0 0.0
      %236 = vmatpush1.xpose.msra.mxu0 0.0
      %237 = vmatprep.subr.mxu0 0.0
      %238 = vmatpush1.xpose.msra.mxu0 0.0
      %239 = vmatprep.subr.mxu0 0.0
      %240 = vmatpush1.xpose.msra.mxu0 0.0
      %241 = vmatprep.subr.mxu0 0.0
      %242 = vmatpush1.xpose.msra.mxu0 0.0
      %243 = vmatprep.subr.mxu0 0.0
      %244 = vmatpush1.xpose.msra.mxu0 0.0
      %245 = vmatprep.subr.mxu0 0.0
      %246 = vmatpush1.xpose.msra.mxu0 0.0
      %247 = vmatprep.subr.mxu0 0.0
      %248 = vmatpush1.xpose.msra.mxu0 0.0
      %249 = vmatprep.subr.mxu0 0.0
      %250 = vmatpush1.xpose.msra.mxu0 0.0
      %251 = vmatprep.subr.mxu0 0.0
      %252 = vmatpush1.xpose.msra.mxu0 0.0
      %253 = vmatprep.subr.mxu0 0.0
      %254 = vmatpush1.xpose.msra.mxu0 0.0
      %255 = vmatprep.subr.mxu0 0.0
      %256 = vmatpush1.xpose.msra.mxu0 0.0
      %257 = vmatprep.subr.mxu0 0.0
      %258 = vmatpush1.xpose.msra.mxu0 0.0
      %259 = vmatprep.subr.mxu0 0.0
      %260 = vmatpush1.xpose.msra.mxu0 %v227
      %261 = vmatprep.subr.mxu0 0.0
      %262 = vmatpush2.xpose.msra.mxu0 0.0
      %263 = vmatprep.subr.mxu0 0.0
      %264 = vmatpush2.xpose.msra.mxu0 0.0
      %265 = vmatprep.subr.mxu0 0.0
      %266 = vmatpush2.xpose.msra.mxu0 0.0
      %267 = vmatprep.subr.mxu0 0.0
      %268 = vmatpush2.xpose.msra.mxu0 0.0
      %269 = vmatprep.subr.mxu0 0.0
      %270 = vmatpush2.xpose.msra.mxu0 0.0
      %271 = vmatprep.subr.mxu0 0.0
      %272 = vmatpush2.xpose.msra.mxu0 0.0
      %273 = vmatprep.subr.mxu0 0.0
      %274 = vmatpush2.xpose.msra.mxu0 0.0
      %275 = vmatprep.subr.mxu0 0.0
      %276 = vmatpush2.xpose.msra.mxu0 0.0
      %277 = vmatprep.subr.mxu0 0.0
      %278 = vmatpush2.xpose.msra.mxu0 0.0
      %279 = vmatprep.subr.mxu0 0.0
      %280 = vmatpush2.xpose.msra.mxu0 0.0
      %281 = vmatprep.subr.mxu0 0.0
      %282 = vmatpush2.xpose.msra.mxu0 0.0
      %283 = vmatprep.subr.mxu0 0.0
      %284 = vmatpush2.xpose.msra.mxu0 0.0
      %285 = vmatprep.subr.mxu0 0.0
      %286 = vmatpush2.xpose.msra.mxu0 0.0
      %287 = vmatprep.subr.mxu0 0.0
      %288 = vmatpush2.xpose.msra.mxu0 0.0
      %289 = vmatprep.subr.mxu0 0.0
      %290 = vmatpush2.xpose.msra.mxu0 0.0
      %291 = vmatprep.subr.mxu0 0.0
      %292 = vmatpush2.xpose.msra.mxu0 0.0
      %293 = vmatprep.mubr.f32.mxu0 0.0
      %294 = vmatmul.mubr.f32.gmra.mxu0 %v224
      %v295 = vpop.f32.mrf.mxu0
      %v296 = vadd.f32 0.0, %v295
      %v297 = vpop.f32.mrf.mxu0
      %298 = vdwg.mxu0
      %vm299 = vcmask 64512
      %v300 = vsel %vm299, %v296, -inf
      %301 = vmax.xlane.f32.xlu0 %v300
      %v302 = vpop.xlane.xlu0 %301
      %v303 = vsub.f32 %v296, %v302
      %v304 = vmul.f32 %v303, 1.442695
      %v305 = vpow.pop %v304
      %v306 = vsel %vm299, %v305, 0.0
      %307 = vadd.xlane.f32.xlu0 %v306
      %v308 = vpop.xlane.xlu0 %307
      %v309 = vrcp.pop %v308
      %v310 = vmul.f32 %v305, %v309
      %v312 = vsel %vm299, %v310, 0
      %314 = vmatprep.subr.mxu0 0.0
      %315 = vmatpush1.msra.mxu0 0.0
      %316 = vmatprep.subr.mxu0 0.0
      %317 = vmatpush1.msra.mxu0 0.0
      %318 = vmatprep.subr.mxu0 0.0
      %319 = vmatpush1.msra.mxu0 0.0
      %320 = vmatprep.subr.mxu0 0.0
      %321 = vmatpush1.msra.mxu0 0.0
      %322 = vmatprep.subr.mxu0 0.0
      %323 = vmatpush1.msra.mxu0 0.0
      %324 = vmatprep.subr.mxu0 0.0
      %325 = vmatpush1.msra.mxu0 0.0
      %326 = vmatprep.subr.mxu0 0.0
      %327 = vmatpush1.msra.mxu0 0.0
      %328 = vmatprep.subr.mxu0 0.0
      %329 = vmatpush1.msra.mxu0 0.0
      %330 = vmatprep.subr.mxu0 0.0
      %331 = vmatpush1.msra.mxu0 0.0
      %332 = vmatprep.subr.mxu0 0.0
      %333 = vmatpush1.msra.mxu0 0.0
      %334 = vmatprep.subr.mxu0 0.0
      %335 = vmatpush1.msra.mxu0 0.0
      %336 = vmatprep.subr.mxu0 0.0
      %337 = vmatpush1.msra.mxu0 0.0
      %338 = vmatprep.subr.mxu0 0.0
      %339 = vmatpush1.msra.mxu0 0.0
      %340 = vmatprep.subr.mxu0 0.0
      %341 = vmatpush1.msra.mxu0 0.0
      %342 = vmatprep.subr.mxu0 0.0
      %343 = vmatpush1.msra.mxu0 0.0
      %344 = vmatprep.subr.mxu0 0.0
      %345 = vmatpush1.msra.mxu0 %v221
      %346 = vmatprep.subr.mxu0 0.0
      %347 = vmatpush2.msra.mxu0 0.0
      %348 = vmatprep.subr.mxu0 0.0
      %349 = vmatpush2.msra.mxu0 0.0
      %350 = vmatprep.subr.mxu0 0.0
      %351 = vmatpush2.msra.mxu0 0.0
      %352 = vmatprep.subr.mxu0 0.0
      %353 = vmatpush2.msra.mxu0 0.0
      %354 = vmatprep.subr.mxu0 0.0
      %355 = vmatpush2.msra.mxu0 0.0
      %356 = vmatprep.subr.mxu0 0.0
      %357 = vmatpush2.msra.mxu0 0.0
      %358 = vmatprep.subr.mxu0 0.0
      %359 = vmatpush2.msra.mxu0 0.0
      %360 = vmatprep.subr.mxu0 0.0
      %361 = vmatpush2.msra.mxu0 0.0
      %362 = vmatprep.subr.mxu0 0.0
      %363 = vmatpush2.msra.mxu0 0.0
      %364 = vmatprep.subr.mxu0 0.0
      %365 = vmatpush2.msra.mxu0 0.0
      %366 = vmatprep.subr.mxu0 0.0
      %367 = vmatpush2.msra.mxu0 0.0
      %368 = vmatprep.subr.mxu0 0.0
      %369 = vmatpush2.msra.mxu0 0.0
      %370 = vmatprep.subr.mxu0 0.0
      %371 = vmatpush2.msra.mxu0 0.0
      %372 = vmatprep.subr.mxu0 0.0
      %373 = vmatpush2.msra.mxu0 0.0
      %374 = vmatprep.subr.mxu0 0.0
      %375 = vmatpush2.msra.mxu0 0.0
      %376 = vmatprep.subr.mxu0 0.0
      %377 = vmatpush2.msra.mxu0 0.0
      %378 = vmatprep.mubr.f32.mxu0 0.0
      %379 = vmatmul.mubr.f32.gmra.mxu0 %v312
      %v380 = vpop.f32.mrf.mxu0
      %v381 = vadd.f32 0.0, %v380
      %v382 = vpop.f32.mrf.mxu0
      %383 = vdwg.mxu0
      %384 = vrot.lane.b32.xlu0 %v217, 112
      %v385 = vpop.permute.xlu0 %384
      %386 = vrot.lane.b32.xlu0 %v219, 112
      %v387 = vpop.permute.xlu0 %386
      %v388 = vsel %vm222, %v385, 0
      %v390 = vsel %vm222, %v387, 0
      %392 = vmatprep.subr.mxu0 0.0
      %393 = vmatpush1.xpose.msra.mxu0 0.0
      %394 = vmatprep.subr.mxu0 0.0
      %395 = vmatpush1.xpose.msra.mxu0 0.0
      %396 = vmatprep.subr.mxu0 0.0
      %397 = vmatpush1.xpose.msra.mxu0 0.0
      %398 = vmatprep.subr.mxu0 0.0
      %399 = vmatpush1.xpose.msra.mxu0 0.0
      %400 = vmatprep.subr.mxu0 0.0
      %401 = vmatpush1.xpose.msra.mxu0 0.0
      %402 = vmatprep.subr.mxu0 0.0
      %403 = vmatpush1.xpose.msra.mxu0 0.0
      %404 = vmatprep.subr.mxu0 0.0
      %405 = vmatpush1.xpose.msra.mxu0 0.0
      %406 = vmatprep.subr.mxu0 0.0
      %407 = vmatpush1.xpose.msra.mxu0 0.0
      %408 = vmatprep.subr.mxu0 0.0
      %409 = vmatpush1.xpose.msra.mxu0 0.0
      %410 = vmatprep.subr.mxu0 0.0
      %411 = vmatpush1.xpose.msra.mxu0 0.0
      %412 = vmatprep.subr.mxu0 0.0
      %413 = vmatpush1.xpose.msra.mxu0 0.0
      %414 = vmatprep.subr.mxu0 0.0
      %415 = vmatpush1.xpose.msra.mxu0 0.0
      %416 = vmatprep.subr.mxu0 0.0
      %417 = vmatpush1.xpose.msra.mxu0 0.0
      %418 = vmatprep.subr.mxu0 0.0
      %419 = vmatpush1.xpose.msra.mxu0 0.0
      %420 = vmatprep.subr.mxu0 0.0
      %421 = vmatpush1.xpose.msra.mxu0 0.0
      %422 = vmatprep.subr.mxu0 0.0
      %423 = vmatpush1.xpose.msra.mxu0 %v390
      %424 = vmatprep.subr.mxu0 0.0
      %425 = vmatpush2.xpose.msra.mxu0 0.0
      %426 = vmatprep.subr.mxu0 0.0
      %427 = vmatpush2.xpose.msra.mxu0 0.0
      %428 = vmatprep.subr.mxu0 0.0
      %429 = vmatpush2.xpose.msra.mxu0 0.0
      %430 = vmatprep.subr.mxu0 0.0
      %431 = vmatpush2.xpose.msra.mxu0 0.0
      %432 = vmatprep.subr.mxu0 0.0
      %433 = vmatpush2.xpose.msra.mxu0 0.0
      %434 = vmatprep.subr.mxu0 0.0
      %435 = vmatpush2.xpose.msra.mxu0 0.0
      %436 = vmatprep.subr.mxu0 0.0
      %437 = vmatpush2.xpose.msra.mxu0 0.0
      %438 = vmatprep.subr.mxu0 0.0
      %439 = vmatpush2.xpose.msra.mxu0 0.0
      %440 = vmatprep.subr.mxu0 0.0
      %441 = vmatpush2.xpose.msra.mxu0 0.0
      %442 = vmatprep.subr.mxu0 0.0
      %443 = vmatpush2.xpose.msra.mxu0 0.0
      %444 = vmatprep.subr.mxu0 0.0
      %445 = vmatpush2.xpose.msra.mxu0 0.0
      %446 = vmatprep.subr.mxu0 0.0
      %447 = vmatpush2.xpose.msra.mxu0 0.0
      %448 = vmatprep.subr.mxu0 0.0
      %449 = vmatpush2.xpose.msra.mxu0 0.0
      %450 = vmatprep.subr.mxu0 0.0
      %451 = vmatpush2.xpose.msra.mxu0 0.0
      %452 = vmatprep.subr.mxu0 0.0
      %453 = vmatpush2.xpose.msra.mxu0 0.0
      %454 = vmatprep.subr.mxu0 0.0
      %455 = vmatpush2.xpose.msra.mxu0 0.0
      %456 = vmatprep.mubr.f32.mxu0 0.0
      %457 = vmatmul.mubr.f32.gmra.mxu0 %v388
      %v458 = vpop.f32.mrf.mxu0
      %v459 = vadd.f32 0.0, %v458
      %v460 = vpop.f32.mrf.mxu0
      %461 = vdwg.mxu0
      %v462 = vsel %vm299, %v459, -inf
      %463 = vmax.xlane.f32.xlu0 %v462
      %v464 = vpop.xlane.xlu0 %463
      %v465 = vsub.f32 %v459, %v464
      %v466 = vmul.f32 %v465, 1.442695
      %v467 = vpow.pop %v466
      %v468 = vsel %vm299, %v467, 0.0
      %469 = vadd.xlane.f32.xlu0 %v468
      %v470 = vpop.xlane.xlu0 %469
      %v471 = vrcp.pop %v470
      %v472 = vmul.f32 %v467, %v471
      %474 = vrot.lane.b32.xlu0 %v221, 112
      %v475 = vpop.permute.xlu0 %474
      %v478 = vsel %vm299, %v472, 0
      %480 = vmatprep.subr.mxu0 0.0
      %481 = vmatpush1.msra.mxu0 0.0
      %482 = vmatprep.subr.mxu0 0.0
      %483 = vmatpush1.msra.mxu0 0.0
      %484 = vmatprep.subr.mxu0 0.0
      %485 = vmatpush1.msra.mxu0 0.0
      %486 = vmatprep.subr.mxu0 0.0
      %487 = vmatpush1.msra.mxu0 0.0
      %488 = vmatprep.subr.mxu0 0.0
      %489 = vmatpush1.msra.mxu0 0.0
      %490 = vmatprep.subr.mxu0 0.0
      %491 = vmatpush1.msra.mxu0 0.0
      %492 = vmatprep.subr.mxu0 0.0
      %493 = vmatpush1.msra.mxu0 0.0
      %494 = vmatprep.subr.mxu0 0.0
      %495 = vmatpush1.msra.mxu0 0.0
      %496 = vmatprep.subr.mxu0 0.0
      %497 = vmatpush1.msra.mxu0 0.0
      %498 = vmatprep.subr.mxu0 0.0
      %499 = vmatpush1.msra.mxu0 0.0
      %500 = vmatprep.subr.mxu0 0.0
      %501 = vmatpush1.msra.mxu0 0.0
      %502 = vmatprep.subr.mxu0 0.0
      %503 = vmatpush1.msra.mxu0 0.0
      %504 = vmatprep.subr.mxu0 0.0
      %505 = vmatpush1.msra.mxu0 0.0
      %506 = vmatprep.subr.mxu0 0.0
      %507 = vmatpush1.msra.mxu0 0.0
      %508 = vmatprep.subr.mxu0 0.0
      %509 = vmatpush1.msra.mxu0 0.0
      %510 = vmatprep.subr.mxu0 0.0
      %511 = vmatpush1.msra.mxu0 %v475
      %512 = vmatprep.subr.mxu0 0.0
      %513 = vmatpush2.msra.mxu0 0.0
      %514 = vmatprep.subr.mxu0 0.0
      %515 = vmatpush2.msra.mxu0 0.0
      %516 = vmatprep.subr.mxu0 0.0
      %517 = vmatpush2.msra.mxu0 0.0
      %518 = vmatprep.subr.mxu0 0.0
      %519 = vmatpush2.msra.mxu0 0.0
      %520 = vmatprep.subr.mxu0 0.0
      %521 = vmatpush2.msra.mxu0 0.0
      %522 = vmatprep.subr.mxu0 0.0
      %523 = vmatpush2.msra.mxu0 0.0
      %524 = vmatprep.subr.mxu0 0.0
      %525 = vmatpush2.msra.mxu0 0.0
      %526 = vmatprep.subr.mxu0 0.0
      %527 = vmatpush2.msra.mxu0 0.0
      %528 = vmatprep.subr.mxu0 0.0
      %529 = vmatpush2.msra.mxu0 0.0
      %530 = vmatprep.subr.mxu0 0.0
      %531 = vmatpush2.msra.mxu0 0.0
      %532 = vmatprep.subr.mxu0 0.0
      %533 = vmatpush2.msra.mxu0 0.0
      %534 = vmatprep.subr.mxu0 0.0
      %535 = vmatpush2.msra.mxu0 0.0
      %536 = vmatprep.subr.mxu0 0.0
      %537 = vmatpush2.msra.mxu0 0.0
      %538 = vmatprep.subr.mxu0 0.0
      %539 = vmatpush2.msra.mxu0 0.0
      %540 = vmatprep.subr.mxu0 0.0
      %541 = vmatpush2.msra.mxu0 0.0
      %542 = vmatprep.subr.mxu0 0.0
      %543 = vmatpush2.msra.mxu0 0.0
      %544 = vmatprep.mubr.f32.mxu0 0.0
      %545 = vmatmul.mubr.f32.gmra.mxu0 %v478
      %v546 = vpop.f32.mrf.mxu0
      %v547 = vadd.f32 0.0, %v546
      %v548 = vpop.f32.mrf.mxu0
      %549 = vdwg.mxu0
      %550 = vrot.lane.b32.xlu0 %v217, 96
      %v551 = vpop.permute.xlu0 %550
      %552 = vrot.lane.b32.xlu0 %v219, 96
      %v553 = vpop.permute.xlu0 %552
      %v554 = vsel %vm222, %v551, 0
      %v556 = vsel %vm222, %v553, 0
      %558 = vmatprep.subr.mxu0 0.0
      %559 = vmatpush1.xpose.msra.mxu0 0.0
      %560 = vmatprep.subr.mxu0 0.0
      %561 = vmatpush1.xpose.msra.mxu0 0.0
      %562 = vmatprep.subr.mxu0 0.0
      %563 = vmatpush1.xpose.msra.mxu0 0.0
      %564 = vmatprep.subr.mxu0 0.0
      %565 = vmatpush1.xpose.msra.mxu0 0.0
      %566 = vmatprep.subr.mxu0 0.0
      %567 = vmatpush1.xpose.msra.mxu0 0.0
      %568 = vmatprep.subr.mxu0 0.0
      %569 = vmatpush1.xpose.msra.mxu0 0.0
      %570 = vmatprep.subr.mxu0 0.0
      %571 = vmatpush1.xpose.msra.mxu0 0.0
      %572 = vmatprep.subr.mxu0 0.0
      %573 = vmatpush1.xpose.msra.mxu0 0.0
      %574 = vmatprep.subr.mxu0 0.0
      %575 = vmatpush1.xpose.msra.mxu0 0.0
      %576 = vmatprep.subr.mxu0 0.0
      %577 = vmatpush1.xpose.msra.mxu0 0.0
      %578 = vmatprep.subr.mxu0 0.0
      %579 = vmatpush1.xpose.msra.mxu0 0.0
      %580 = vmatprep.subr.mxu0 0.0
      %581 = vmatpush1.xpose.msra.mxu0 0.0
      %582 = vmatprep.subr.mxu0 0.0
      %583 = vmatpush1.xpose.msra.mxu0 0.0
      %584 = vmatprep.subr.mxu0 0.0
      %585 = vmatpush1.xpose.msra.mxu0 0.0
      %586 = vmatprep.subr.mxu0 0.0
      %587 = vmatpush1.xpose.msra.mxu0 0.0
      %588 = vmatprep.subr.mxu0 0.0
      %589 = vmatpush1.xpose.msra.mxu0 %v556
      %590 = vmatprep.subr.mxu0 0.0
      %591 = vmatpush2.xpose.msra.mxu0 0.0
      %592 = vmatprep.subr.mxu0 0.0
      %593 = vmatpush2.xpose.msra.mxu0 0.0
      %594 = vmatprep.subr.mxu0 0.0
      %595 = vmatpush2.xpose.msra.mxu0 0.0
      %596 = vmatprep.subr.mxu0 0.0
      %597 = vmatpush2.xpose.msra.mxu0 0.0
      %598 = vmatprep.subr.mxu0 0.0
      %599 = vmatpush2.xpose.msra.mxu0 0.0
      %600 = vmatprep.subr.mxu0 0.0
      %601 = vmatpush2.xpose.msra.mxu0 0.0
      %602 = vmatprep.subr.mxu0 0.0
      %603 = vmatpush2.xpose.msra.mxu0 0.0
      %604 = vmatprep.subr.mxu0 0.0
      %605 = vmatpush2.xpose.msra.mxu0 0.0
      %606 = vmatprep.subr.mxu0 0.0
      %607 = vmatpush2.xpose.msra.mxu0 0.0
      %608 = vmatprep.subr.mxu0 0.0
      %609 = vmatpush2.xpose.msra.mxu0 0.0
      %610 = vmatprep.subr.mxu0 0.0
      %611 = vmatpush2.xpose.msra.mxu0 0.0
      %612 = vmatprep.subr.mxu0 0.0
      %613 = vmatpush2.xpose.msra.mxu0 0.0
      %614 = vmatprep.subr.mxu0 0.0
      %615 = vmatpush2.xpose.msra.mxu0 0.0
      %616 = vmatprep.subr.mxu0 0.0
      %617 = vmatpush2.xpose.msra.mxu0 0.0
      %618 = vmatprep.subr.mxu0 0.0
      %619 = vmatpush2.xpose.msra.mxu0 0.0
      %620 = vmatprep.subr.mxu0 0.0
      %621 = vmatpush2.xpose.msra.mxu0 0.0
      %622 = vmatprep.mubr.f32.mxu0 0.0
      %623 = vmatmul.mubr.f32.gmra.mxu0 %v554
      %v624 = vpop.f32.mrf.mxu0
      %v625 = vadd.f32 0.0, %v624
      %v626 = vpop.f32.mrf.mxu0
      %627 = vdwg.mxu0
      %v628 = vsel %vm299, %v625, -inf
      %629 = vmax.xlane.f32.xlu0 %v628
      %v630 = vpop.xlane.xlu0 %629
      %v631 = vsub.f32 %v625, %v630
      %v632 = vmul.f32 %v631, 1.442695
      %v633 = vpow.pop %v632
      %v634 = vsel %vm299, %v633, 0.0
      %635 = vadd.xlane.f32.xlu0 %v634
      %v636 = vpop.xlane.xlu0 %635
      %v637 = vrcp.pop %v636
      %v638 = vmul.f32 %v633, %v637
      %639 = vrot.lane.b32.xlu0 %v221, 96
      %v640 = vpop.permute.xlu0 %639
      %v643 = vsel %vm299, %v638, 0
      %645 = vmatprep.subr.mxu0 0.0
      %646 = vmatpush1.msra.mxu0 0.0
      %647 = vmatprep.subr.mxu0 0.0
      %648 = vmatpush1.msra.mxu0 0.0
      %649 = vmatprep.subr.mxu0 0.0
      %650 = vmatpush1.msra.mxu0 0.0
      %651 = vmatprep.subr.mxu0 0.0
      %652 = vmatpush1.msra.mxu0 0.0
      %653 = vmatprep.subr.mxu0 0.0
      %654 = vmatpush1.msra.mxu0 0.0
      %655 = vmatprep.subr.mxu0 0.0
      %656 = vmatpush1.msra.mxu0 0.0
      %657 = vmatprep.subr.mxu0 0.0
      %658 = vmatpush1.msra.mxu0 0.0
      %659 = vmatprep.subr.mxu0 0.0
      %660 = vmatpush1.msra.mxu0 0.0
      %661 = vmatprep.subr.mxu0 0.0
      %662 = vmatpush1.msra.mxu0 0.0
      %663 = vmatprep.subr.mxu0 0.0
      %664 = vmatpush1.msra.mxu0 0.0
      %665 = vmatprep.subr.mxu0 0.0
      %666 = vmatpush1.msra.mxu0 0.0
      %667 = vmatprep.subr.mxu0 0.0
      %668 = vmatpush1.msra.mxu0 0.0
      %669 = vmatprep.subr.mxu0 0.0
      %670 = vmatpush1.msra.mxu0 0.0
      %671 = vmatprep.subr.mxu0 0.0
      %672 = vmatpush1.msra.mxu0 0.0
      %673 = vmatprep.subr.mxu0 0.0
      %674 = vmatpush1.msra.mxu0 0.0
      %675 = vmatprep.subr.mxu0 0.0
      %676 = vmatpush1.msra.mxu0 %v640
      %677 = vmatprep.subr.mxu0 0.0
      %678 = vmatpush2.msra.mxu0 0.0
      %679 = vmatprep.subr.mxu0 0.0
      %680 = vmatpush2.msra.mxu0 0.0
      %681 = vmatprep.subr.mxu0 0.0
      %682 = vmatpush2.msra.mxu0 0.0
      %683 = vmatprep.subr.mxu0 0.0
      %684 = vmatpush2.msra.mxu0 0.0
      %685 = vmatprep.subr.mxu0 0.0
      %686 = vmatpush2.msra.mxu0 0.0
      %687 = vmatprep.subr.mxu0 0.0
      %688 = vmatpush2.msra.mxu0 0.0
      %689 = vmatprep.subr.mxu0 0.0
      %690 = vmatpush2.msra.mxu0 0.0
      %691 = vmatprep.subr.mxu0 0.0
      %692 = vmatpush2.msra.mxu0 0.0
      %693 = vmatprep.subr.mxu0 0.0
      %694 = vmatpush2.msra.mxu0 0.0
      %695 = vmatprep.subr.mxu0 0.0
      %696 = vmatpush2.msra.mxu0 0.0
      %697 = vmatprep.subr.mxu0 0.0
      %698 = vmatpush2.msra.mxu0 0.0
      %699 = vmatprep.subr.mxu0 0.0
      %700 = vmatpush2.msra.mxu0 0.0
      %701 = vmatprep.subr.mxu0 0.0
      %702 = vmatpush2.msra.mxu0 0.0
      %703 = vmatprep.subr.mxu0 0.0
      %704 = vmatpush2.msra.mxu0 0.0
      %705 = vmatprep.subr.mxu0 0.0
      %706 = vmatpush2.msra.mxu0 0.0
      %707 = vmatprep.subr.mxu0 0.0
      %708 = vmatpush2.msra.mxu0 0.0
      %709 = vmatprep.mubr.f32.mxu0 0.0
      %710 = vmatmul.mubr.f32.gmra.mxu0 %v643
      %v711 = vpop.f32.mrf.mxu0
      %v712 = vadd.f32 0.0, %v711
      %v713 = vpop.f32.mrf.mxu0
      %714 = vdwg.mxu0
      %715 = vrot.lane.b32.xlu0 %v217, 80
      %v716 = vpop.permute.xlu0 %715
      %717 = vrot.lane.b32.xlu0 %v219, 80
      %v718 = vpop.permute.xlu0 %717
      %v719 = vsel %vm222, %v716, 0
      %v721 = vsel %vm222, %v718, 0
      %723 = vmatprep.subr.mxu0 0.0
      %724 = vmatpush1.xpose.msra.mxu0 0.0
      %725 = vmatprep.subr.mxu0 0.0
      %726 = vmatpush1.xpose.msra.mxu0 0.0
      %727 = vmatprep.subr.mxu0 0.0
      %728 = vmatpush1.xpose.msra.mxu0 0.0
      %729 = vmatprep.subr.mxu0 0.0
      %730 = vmatpush1.xpose.msra.mxu0 0.0
      %731 = vmatprep.subr.mxu0 0.0
      %732 = vmatpush1.xpose.msra.mxu0 0.0
      %733 = vmatprep.subr.mxu0 0.0
      %734 = vmatpush1.xpose.msra.mxu0 0.0
      %735 = vmatprep.subr.mxu0 0.0
      %736 = vmatpush1.xpose.msra.mxu0 0.0
      %737 = vmatprep.subr.mxu0 0.0
      %738 = vmatpush1.xpose.msra.mxu0 0.0
      %739 = vmatprep.subr.mxu0 0.0
      %740 = vmatpush1.xpose.msra.mxu0 0.0
      %741 = vmatprep.subr.mxu0 0.0
      %742 = vmatpush1.xpose.msra.mxu0 0.0
      %743 = vmatprep.subr.mxu0 0.0
      %744 = vmatpush1.xpose.msra.mxu0 0.0
      %745 = vmatprep.subr.mxu0 0.0
      %746 = vmatpush1.xpose.msra.mxu0 0.0
      %747 = vmatprep.subr.mxu0 0.0
      %748 = vmatpush1.xpose.msra.mxu0 0.0
      %749 = vmatprep.subr.mxu0 0.0
      %750 = vmatpush1.xpose.msra.mxu0 0.0
      %751 = vmatprep.subr.mxu0 0.0
      %752 = vmatpush1.xpose.msra.mxu0 0.0
      %753 = vmatprep.subr.mxu0 0.0
      %754 = vmatpush1.xpose.msra.mxu0 %v721
      %755 = vmatprep.subr.mxu0 0.0
      %756 = vmatpush2.xpose.msra.mxu0 0.0
      %757 = vmatprep.subr.mxu0 0.0
      %758 = vmatpush2.xpose.msra.mxu0 0.0
      %759 = vmatprep.subr.mxu0 0.0
      %760 = vmatpush2.xpose.msra.mxu0 0.0
      %761 = vmatprep.subr.mxu0 0.0
      %762 = vmatpush2.xpose.msra.mxu0 0.0
      %763 = vmatprep.subr.mxu0 0.0
      %764 = vmatpush2.xpose.msra.mxu0 0.0
      %765 = vmatprep.subr.mxu0 0.0
      %766 = vmatpush2.xpose.msra.mxu0 0.0
      %767 = vmatprep.subr.mxu0 0.0
      %768 = vmatpush2.xpose.msra.mxu0 0.0
      %769 = vmatprep.subr.mxu0 0.0
      %770 = vmatpush2.xpose.msra.mxu0 0.0
      %771 = vmatprep.subr.mxu0 0.0
      %772 = vmatpush2.xpose.msra.mxu0 0.0
      %773 = vmatprep.subr.mxu0 0.0
      %774 = vmatpush2.xpose.msra.mxu0 0.0
      %775 = vmatprep.subr.mxu0 0.0
      %776 = vmatpush2.xpose.msra.mxu0 0.0
      %777 = vmatprep.subr.mxu0 0.0
      %778 = vmatpush2.xpose.msra.mxu0 0.0
      %779 = vmatprep.subr.mxu0 0.0
      %780 = vmatpush2.xpose.msra.mxu0 0.0
      %781 = vmatprep.subr.mxu0 0.0
      %782 = vmatpush2.xpose.msra.mxu0 0.0
      %783 = vmatprep.subr.mxu0 0.0
      %784 = vmatpush2.xpose.msra.mxu0 0.0
      %785 = vmatprep.subr.mxu0 0.0
      %786 = vmatpush2.xpose.msra.mxu0 0.0
      %787 = vmatprep.mubr.f32.mxu0 0.0
      %788 = vmatmul.mubr.f32.gmra.mxu0 %v719
      %v789 = vpop.f32.mrf.mxu0
      %v790 = vadd.f32 0.0, %v789
      %v791 = vpop.f32.mrf.mxu0
      %792 = vdwg.mxu0
      %v793 = vsel %vm299, %v790, -inf
      %794 = vmax.xlane.f32.xlu0 %v793
      %v795 = vpop.xlane.xlu0 %794
      %v796 = vsub.f32 %v790, %v795
      %v797 = vmul.f32 %v796, 1.442695
      %v798 = vpow.pop %v797
      %v799 = vsel %vm299, %v798, 0.0
      %800 = vadd.xlane.f32.xlu0 %v799
      %v801 = vpop.xlane.xlu0 %800
      %v802 = vrcp.pop %v801
      %v803 = vmul.f32 %v798, %v802
      %804 = vrot.lane.b32.xlu0 %v221, 80
      %v805 = vpop.permute.xlu0 %804
      %v808 = vsel %vm299, %v803, 0
      %810 = vmatprep.subr.mxu0 0.0
      %811 = vmatpush1.msra.mxu0 0.0
      %812 = vmatprep.subr.mxu0 0.0
      %813 = vmatpush1.msra.mxu0 0.0
      %814 = vmatprep.subr.mxu0 0.0
      %815 = vmatpush1.msra.mxu0 0.0
      %816 = vmatprep.subr.mxu0 0.0
      %817 = vmatpush1.msra.mxu0 0.0
      %818 = vmatprep.subr.mxu0 0.0
      %819 = vmatpush1.msra.mxu0 0.0
      %820 = vmatprep.subr.mxu0 0.0
      %821 = vmatpush1.msra.mxu0 0.0
      %822 = vmatprep.subr.mxu0 0.0
      %823 = vmatpush1.msra.mxu0 0.0
      %824 = vmatprep.subr.mxu0 0.0
      %825 = vmatpush1.msra.mxu0 0.0
      %826 = vmatprep.subr.mxu0 0.0
      %827 = vmatpush1.msra.mxu0 0.0
      %828 = vmatprep.subr.mxu0 0.0
      %829 = vmatpush1.msra.mxu0 0.0
      %830 = vmatprep.subr.mxu0 0.0
      %831 = vmatpush1.msra.mxu0 0.0
      %832 = vmatprep.subr.mxu0 0.0
      %833 = vmatpush1.msra.mxu0 0.0
      %834 = vmatprep.subr.mxu0 0.0
      %835 = vmatpush1.msra.mxu0 0.0
      %836 = vmatprep.subr.mxu0 0.0
      %837 = vmatpush1.msra.mxu0 0.0
      %838 = vmatprep.subr.mxu0 0.0
      %839 = vmatpush1.msra.mxu0 0.0
      %840 = vmatprep.subr.mxu0 0.0
      %841 = vmatpush1.msra.mxu0 %v805
      %842 = vmatprep.subr.mxu0 0.0
      %843 = vmatpush2.msra.mxu0 0.0
      %844 = vmatprep.subr.mxu0 0.0
      %845 = vmatpush2.msra.mxu0 0.0
      %846 = vmatprep.subr.mxu0 0.0
      %847 = vmatpush2.msra.mxu0 0.0
      %848 = vmatprep.subr.mxu0 0.0
      %849 = vmatpush2.msra.mxu0 0.0
      %850 = vmatprep.subr.mxu0 0.0
      %851 = vmatpush2.msra.mxu0 0.0
      %852 = vmatprep.subr.mxu0 0.0
      %853 = vmatpush2.msra.mxu0 0.0
      %854 = vmatprep.subr.mxu0 0.0
      %855 = vmatpush2.msra.mxu0 0.0
      %856 = vmatprep.subr.mxu0 0.0
      %857 = vmatpush2.msra.mxu0 0.0
      %858 = vmatprep.subr.mxu0 0.0
      %859 = vmatpush2.msra.mxu0 0.0
      %860 = vmatprep.subr.mxu0 0.0
      %861 = vmatpush2.msra.mxu0 0.0
      %862 = vmatprep.subr.mxu0 0.0
      %863 = vmatpush2.msra.mxu0 0.0
      %864 = vmatprep.subr.mxu0 0.0
      %865 = vmatpush2.msra.mxu0 0.0
      %866 = vmatprep.subr.mxu0 0.0
      %867 = vmatpush2.msra.mxu0 0.0
      %868 = vmatprep.subr.mxu0 0.0
      %869 = vmatpush2.msra.mxu0 0.0
      %870 = vmatprep.subr.mxu0 0.0
      %871 = vmatpush2.msra.mxu0 0.0
      %872 = vmatprep.subr.mxu0 0.0
      %873 = vmatpush2.msra.mxu0 0.0
      %874 = vmatprep.mubr.f32.mxu0 0.0
      %875 = vmatmul.mubr.f32.gmra.mxu0 %v808
      %v876 = vpop.f32.mrf.mxu0
      %v877 = vadd.f32 0.0, %v876
      %v878 = vpop.f32.mrf.mxu0
      %879 = vdwg.mxu0
      %880 = vrot.lane.b32.xlu0 %v217, 64
      %v881 = vpop.permute.xlu0 %880
      %882 = vrot.lane.b32.xlu0 %v219, 64
      %v883 = vpop.permute.xlu0 %882
      %v884 = vsel %vm222, %v881, 0
      %v886 = vsel %vm222, %v883, 0
      %888 = vmatprep.subr.mxu0 0.0
      %889 = vmatpush1.xpose.msra.mxu0 0.0
      %890 = vmatprep.subr.mxu0 0.0
      %891 = vmatpush1.xpose.msra.mxu0 0.0
      %892 = vmatprep.subr.mxu0 0.0
      %893 = vmatpush1.xpose.msra.mxu0 0.0
      %894 = vmatprep.subr.mxu0 0.0
      %895 = vmatpush1.xpose.msra.mxu0 0.0
      %896 = vmatprep.subr.mxu0 0.0
      %897 = vmatpush1.xpose.msra.mxu0 0.0
      %898 = vmatprep.subr.mxu0 0.0
      %899 = vmatpush1.xpose.msra.mxu0 0.0
      %900 = vmatprep.subr.mxu0 0.0
      %901 = vmatpush1.xpose.msra.mxu0 0.0
      %902 = vmatprep.subr.mxu0 0.0
      %903 = vmatpush1.xpose.msra.mxu0 0.0
      %904 = vmatprep.subr.mxu0 0.0
      %905 = vmatpush1.xpose.msra.mxu0 0.0
      %906 = vmatprep.subr.mxu0 0.0
      %907 = vmatpush1.xpose.msra.mxu0 0.0
      %908 = vmatprep.subr.mxu0 0.0
      %909 = vmatpush1.xpose.msra.mxu0 0.0
      %910 = vmatprep.subr.mxu0 0.0
      %911 = vmatpush1.xpose.msra.mxu0 0.0
      %912 = vmatprep.subr.mxu0 0.0
      %913 = vmatpush1.xpose.msra.mxu0 0.0
      %914 = vmatprep.subr.mxu0 0.0
      %915 = vmatpush1.xpose.msra.mxu0 0.0
      %916 = vmatprep.subr.mxu0 0.0
      %917 = vmatpush1.xpose.msra.mxu0 0.0
      %918 = vmatprep.subr.mxu0 0.0
      %919 = vmatpush1.xpose.msra.mxu0 %v886
      %920 = vmatprep.subr.mxu0 0.0
      %921 = vmatpush2.xpose.msra.mxu0 0.0
      %922 = vmatprep.subr.mxu0 0.0
      %923 = vmatpush2.xpose.msra.mxu0 0.0
      %924 = vmatprep.subr.mxu0 0.0
      %925 = vmatpush2.xpose.msra.mxu0 0.0
      %926 = vmatprep.subr.mxu0 0.0
      %927 = vmatpush2.xpose.msra.mxu0 0.0
      %928 = vmatprep.subr.mxu0 0.0
      %929 = vmatpush2.xpose.msra.mxu0 0.0
      %930 = vmatprep.subr.mxu0 0.0
      %931 = vmatpush2.xpose.msra.mxu0 0.0
      %932 = vmatprep.subr.mxu0 0.0
      %933 = vmatpush2.xpose.msra.mxu0 0.0
      %934 = vmatprep.subr.mxu0 0.0
      %935 = vmatpush2.xpose.msra.mxu0 0.0
      %936 = vmatprep.subr.mxu0 0.0
      %937 = vmatpush2.xpose.msra.mxu0 0.0
      %938 = vmatprep.subr.mxu0 0.0
      %939 = vmatpush2.xpose.msra.mxu0 0.0
      %940 = vmatprep.subr.mxu0 0.0
      %941 = vmatpush2.xpose.msra.mxu0 0.0
      %942 = vmatprep.subr.mxu0 0.0
      %943 = vmatpush2.xpose.msra.mxu0 0.0
      %944 = vmatprep.subr.mxu0 0.0
      %945 = vmatpush2.xpose.msra.mxu0 0.0
      %946 = vmatprep.subr.mxu0 0.0
      %947 = vmatpush2.xpose.msra.mxu0 0.0
      %948 = vmatprep.subr.mxu0 0.0
      %949 = vmatpush2.xpose.msra.mxu0 0.0
      %950 = vmatprep.subr.mxu0 0.0
      %951 = vmatpush2.xpose.msra.mxu0 0.0
      %952 = vmatprep.mubr.f32.mxu0 0.0
      %953 = vmatmul.mubr.f32.gmra.mxu0 %v884
      %v954 = vpop.f32.mrf.mxu0
      %v955 = vadd.f32 0.0, %v954
      %v956 = vpop.f32.mrf.mxu0
      %957 = vdwg.mxu0
      %v958 = vsel %vm299, %v955, -inf
      %959 = vmax.xlane.f32.xlu0 %v958
      %v960 = vpop.xlane.xlu0 %959
      %v961 = vsub.f32 %v955, %v960
      %v962 = vmul.f32 %v961, 1.442695
      %v963 = vpow.pop %v962
      %v964 = vsel %vm299, %v963, 0.0
      %965 = vadd.xlane.f32.xlu0 %v964
      %v966 = vpop.xlane.xlu0 %965
      %v967 = vrcp.pop %v966
      %v968 = vmul.f32 %v963, %v967
      %969 = vrot.lane.b32.xlu0 %v221, 64
      %v970 = vpop.permute.xlu0 %969
      %v973 = vsel %vm299, %v968, 0
      %975 = vmatprep.subr.mxu0 0.0
      %976 = vmatpush1.msra.mxu0 0.0
      %977 = vmatprep.subr.mxu0 0.0
      %978 = vmatpush1.msra.mxu0 0.0
      %979 = vmatprep.subr.mxu0 0.0
      %980 = vmatpush1.msra.mxu0 0.0
      %981 = vmatprep.subr.mxu0 0.0
      %982 = vmatpush1.msra.mxu0 0.0
      %983 = vmatprep.subr.mxu0 0.0
      %984 = vmatpush1.msra.mxu0 0.0
      %985 = vmatprep.subr.mxu0 0.0
      %986 = vmatpush1.msra.mxu0 0.0
      %987 = vmatprep.subr.mxu0 0.0
      %988 = vmatpush1.msra.mxu0 0.0
      %989 = vmatprep.subr.mxu0 0.0
      %990 = vmatpush1.msra.mxu0 0.0
      %991 = vmatprep.subr.mxu0 0.0
      %992 = vmatpush1.msra.mxu0 0.0
      %993 = vmatprep.subr.mxu0 0.0
      %994 = vmatpush1.msra.mxu0 0.0
      %995 = vmatprep.subr.mxu0 0.0
      %996 = vmatpush1.msra.mxu0 0.0
      %997 = vmatprep.subr.mxu0 0.0
      %998 = vmatpush1.msra.mxu0 0.0
      %999 = vmatprep.subr.mxu0 0.0
      %1000 = vmatpush1.msra.mxu0 0.0
      %1001 = vmatprep.subr.mxu0 0.0
      %1002 = vmatpush1.msra.mxu0 0.0
      %1003 = vmatprep.subr.mxu0 0.0
      %1004 = vmatpush1.msra.mxu0 0.0
      %1005 = vmatprep.subr.mxu0 0.0
      %1006 = vmatpush1.msra.mxu0 %v970
      %1007 = vmatprep.subr.mxu0 0.0
      %1008 = vmatpush2.msra.mxu0 0.0
      %1009 = vmatprep.subr.mxu0 0.0
      %1010 = vmatpush2.msra.mxu0 0.0
      %1011 = vmatprep.subr.mxu0 0.0
      %1012 = vmatpush2.msra.mxu0 0.0
      %1013 = vmatprep.subr.mxu0 0.0
      %1014 = vmatpush2.msra.mxu0 0.0
      %1015 = vmatprep.subr.mxu0 0.0
      %1016 = vmatpush2.msra.mxu0 0.0
      %1017 = vmatprep.subr.mxu0 0.0
      %1018 = vmatpush2.msra.mxu0 0.0
      %1019 = vmatprep.subr.mxu0 0.0
      %1020 = vmatpush2.msra.mxu0 0.0
      %1021 = vmatprep.subr.mxu0 0.0
      %1022 = vmatpush2.msra.mxu0 0.0
      %1023 = vmatprep.subr.mxu0 0.0
      %1024 = vmatpush2.msra.mxu0 0.0
      %1025 = vmatprep.subr.mxu0 0.0
      %1026 = vmatpush2.msra.mxu0 0.0
      %1027 = vmatprep.subr.mxu0 0.0
      %1028 = vmatpush2.msra.mxu0 0.0
      %1029 = vmatprep.subr.mxu0 0.0
      %1030 = vmatpush2.msra.mxu0 0.0
      %1031 = vmatprep.subr.mxu0 0.0
      %1032 = vmatpush2.msra.mxu0 0.0
      %1033 = vmatprep.subr.mxu0 0.0
      %1034 = vmatpush2.msra.mxu0 0.0
      %1035 = vmatprep.subr.mxu0 0.0
      %1036 = vmatpush2.msra.mxu0 0.0
      %1037 = vmatprep.subr.mxu0 0.0
      %1038 = vmatpush2.msra.mxu0 0.0
      %1039 = vmatprep.mubr.f32.mxu0 0.0
      %1040 = vmatmul.mubr.f32.gmra.mxu0 %v973
      %v1041 = vpop.f32.mrf.mxu0
      %v1042 = vadd.f32 0.0, %v1041
      %v1043 = vpop.f32.mrf.mxu0
      %1044 = vdwg.mxu0
      %1045 = vrot.lane.b32.xlu0 %v217, 48
      %v1046 = vpop.permute.xlu0 %1045
      %1047 = vrot.lane.b32.xlu0 %v219, 48
      %v1048 = vpop.permute.xlu0 %1047
      %v1049 = vsel %vm222, %v1046, 0
      %v1051 = vsel %vm222, %v1048, 0
      %1053 = vmatprep.subr.mxu0 0.0
      %1054 = vmatpush1.xpose.msra.mxu0 0.0
      %1055 = vmatprep.subr.mxu0 0.0
      %1056 = vmatpush1.xpose.msra.mxu0 0.0
      %1057 = vmatprep.subr.mxu0 0.0
      %1058 = vmatpush1.xpose.msra.mxu0 0.0
      %1059 = vmatprep.subr.mxu0 0.0
      %1060 = vmatpush1.xpose.msra.mxu0 0.0
      %1061 = vmatprep.subr.mxu0 0.0
      %1062 = vmatpush1.xpose.msra.mxu0 0.0
      %1063 = vmatprep.subr.mxu0 0.0
      %1064 = vmatpush1.xpose.msra.mxu0 0.0
      %1065 = vmatprep.subr.mxu0 0.0
      %1066 = vmatpush1.xpose.msra.mxu0 0.0
      %1067 = vmatprep.subr.mxu0 0.0
      %1068 = vmatpush1.xpose.msra.mxu0 0.0
      %1069 = vmatprep.subr.mxu0 0.0
      %1070 = vmatpush1.xpose.msra.mxu0 0.0
      %1071 = vmatprep.subr.mxu0 0.0
      %1072 = vmatpush1.xpose.msra.mxu0 0.0
      %1073 = vmatprep.subr.mxu0 0.0
      %1074 = vmatpush1.xpose.msra.mxu0 0.0
      %1075 = vmatprep.subr.mxu0 0.0
      %1076 = vmatpush1.xpose.msra.mxu0 0.0
      %1077 = vmatprep.subr.mxu0 0.0
      %1078 = vmatpush1.xpose.msra.mxu0 0.0
      %1079 = vmatprep.subr.mxu0 0.0
      %1080 = vmatpush1.xpose.msra.mxu0 0.0
      %1081 = vmatprep.subr.mxu0 0.0
      %1082 = vmatpush1.xpose.msra.mxu0 0.0
      %1083 = vmatprep.subr.mxu0 0.0
      %1084 = vmatpush1.xpose.msra.mxu0 %v1051
      %1085 = vmatprep.subr.mxu0 0.0
      %1086 = vmatpush2.xpose.msra.mxu0 0.0
      %1087 = vmatprep.subr.mxu0 0.0
      %1088 = vmatpush2.xpose.msra.mxu0 0.0
      %1089 = vmatprep.subr.mxu0 0.0
      %1090 = vmatpush2.xpose.msra.mxu0 0.0
      %1091 = vmatprep.subr.mxu0 0.0
      %1092 = vmatpush2.xpose.msra.mxu0 0.0
      %1093 = vmatprep.subr.mxu0 0.0
      %1094 = vmatpush2.xpose.msra.mxu0 0.0
      %1095 = vmatprep.subr.mxu0 0.0
      %1096 = vmatpush2.xpose.msra.mxu0 0.0
      %1097 = vmatprep.subr.mxu0 0.0
      %1098 = vmatpush2.xpose.msra.mxu0 0.0
      %1099 = vmatprep.subr.mxu0 0.0
      %1100 = vmatpush2.xpose.msra.mxu0 0.0
      %1101 = vmatprep.subr.mxu0 0.0
      %1102 = vmatpush2.xpose.msra.mxu0 0.0
      %1103 = vmatprep.subr.mxu0 0.0
      %1104 = vmatpush2.xpose.msra.mxu0 0.0
      %1105 = vmatprep.subr.mxu0 0.0
      %1106 = vmatpush2.xpose.msra.mxu0 0.0
      %1107 = vmatprep.subr.mxu0 0.0
      %1108 = vmatpush2.xpose.msra.mxu0 0.0
      %1109 = vmatprep.subr.mxu0 0.0
      %1110 = vmatpush2.xpose.msra.mxu0 0.0
      %1111 = vmatprep.subr.mxu0 0.0
      %1112 = vmatpush2.xpose.msra.mxu0 0.0
      %1113 = vmatprep.subr.mxu0 0.0
      %1114 = vmatpush2.xpose.msra.mxu0 0.0
      %1115 = vmatprep.subr.mxu0 0.0
      %1116 = vmatpush2.xpose.msra.mxu0 0.0
      %1117 = vmatprep.mubr.f32.mxu0 0.0
      %1118 = vmatmul.mubr.f32.gmra.mxu0 %v1049
      %v1119 = vpop.f32.mrf.mxu0
      %v1120 = vadd.f32 0.0, %v1119
      %v1121 = vpop.f32.mrf.mxu0
      %1122 = vdwg.mxu0
      %v1123 = vsel %vm299, %v1120, -inf
      %1124 = vmax.xlane.f32.xlu0 %v1123
      %v1125 = vpop.xlane.xlu0 %1124
      %v1126 = vsub.f32 %v1120, %v1125
      %v1127 = vmul.f32 %v1126, 1.442695
      %v1128 = vpow.pop %v1127
      %v1129 = vsel %vm299, %v1128, 0.0
      %1130 = vadd.xlane.f32.xlu0 %v1129
      %v1131 = vpop.xlane.xlu0 %1130
      %v1132 = vrcp.pop %v1131
      %v1133 = vmul.f32 %v1128, %v1132
      %1134 = vrot.lane.b32.xlu0 %v221, 48
      %v1135 = vpop.permute.xlu0 %1134
      %v1138 = vsel %vm299, %v1133, 0
      %1140 = vmatprep.subr.mxu0 0.0
      %1141 = vmatpush1.msra.mxu0 0.0
      %1142 = vmatprep.subr.mxu0 0.0
      %1143 = vmatpush1.msra.mxu0 0.0
      %1144 = vmatprep.subr.mxu0 0.0
      %1145 = vmatpush1.msra.mxu0 0.0
      %1146 = vmatprep.subr.mxu0 0.0
      %1147 = vmatpush1.msra.mxu0 0.0
      %1148 = vmatprep.subr.mxu0 0.0
      %1149 = vmatpush1.msra.mxu0 0.0
      %1150 = vmatprep.subr.mxu0 0.0
      %1151 = vmatpush1.msra.mxu0 0.0
      %1152 = vmatprep.subr.mxu0 0.0
      %1153 = vmatpush1.msra.mxu0 0.0
      %1154 = vmatprep.subr.mxu0 0.0
      %1155 = vmatpush1.msra.mxu0 0.0
      %1156 = vmatprep.subr.mxu0 0.0
      %1157 = vmatpush1.msra.mxu0 0.0
      %1158 = vmatprep.subr.mxu0 0.0
      %1159 = vmatpush1.msra.mxu0 0.0
      %1160 = vmatprep.subr.mxu0 0.0
      %1161 = vmatpush1.msra.mxu0 0.0
      %1162 = vmatprep.subr.mxu0 0.0
      %1163 = vmatpush1.msra.mxu0 0.0
      %1164 = vmatprep.subr.mxu0 0.0
      %1165 = vmatpush1.msra.mxu0 0.0
      %1166 = vmatprep.subr.mxu0 0.0
      %1167 = vmatpush1.msra.mxu0 0.0
      %1168 = vmatprep.subr.mxu0 0.0
      %1169 = vmatpush1.msra.mxu0 0.0
      %1170 = vmatprep.subr.mxu0 0.0
      %1171 = vmatpush1.msra.mxu0 %v1135
      %1172 = vmatprep.subr.mxu0 0.0
      %1173 = vmatpush2.msra.mxu0 0.0
      %1174 = vmatprep.subr.mxu0 0.0
      %1175 = vmatpush2.msra.mxu0 0.0
      %1176 = vmatprep.subr.mxu0 0.0
      %1177 = vmatpush2.msra.mxu0 0.0
      %1178 = vmatprep.subr.mxu0 0.0
      %1179 = vmatpush2.msra.mxu0 0.0
      %1180 = vmatprep.subr.mxu0 0.0
      %1181 = vmatpush2.msra.mxu0 0.0
      %1182 = vmatprep.subr.mxu0 0.0
      %1183 = vmatpush2.msra.mxu0 0.0
      %1184 = vmatprep.subr.mxu0 0.0
      %1185 = vmatpush2.msra.mxu0 0.0
      %1186 = vmatprep.subr.mxu0 0.0
      %1187 = vmatpush2.msra.mxu0 0.0
      %1188 = vmatprep.subr.mxu0 0.0
      %1189 = vmatpush2.msra.mxu0 0.0
      %1190 = vmatprep.subr.mxu0 0.0
      %1191 = vmatpush2.msra.mxu0 0.0
      %1192 = vmatprep.subr.mxu0 0.0
      %1193 = vmatpush2.msra.mxu0 0.0
      %1194 = vmatprep.subr.mxu0 0.0
      %1195 = vmatpush2.msra.mxu0 0.0
      %1196 = vmatprep.subr.mxu0 0.0
      %1197 = vmatpush2.msra.mxu0 0.0
      %1198 = vmatprep.subr.mxu0 0.0
      %1199 = vmatpush2.msra.mxu0 0.0
      %1200 = vmatprep.subr.mxu0 0.0
      %1201 = vmatpush2.msra.mxu0 0.0
      %1202 = vmatprep.subr.mxu0 0.0
      %1203 = vmatpush2.msra.mxu0 0.0
      %1204 = vmatprep.mubr.f32.mxu0 0.0
      %1205 = vmatmul.mubr.f32.gmra.mxu0 %v1138
      %v1206 = vpop.f32.mrf.mxu0
      %v1207 = vadd.f32 0.0, %v1206
      %v1208 = vpop.f32.mrf.mxu0
      %1209 = vdwg.mxu0
      %1210 = vrot.lane.b32.xlu0 %v217, 32
      %v1211 = vpop.permute.xlu0 %1210
      %1212 = vrot.lane.b32.xlu0 %v219, 32
      %v1213 = vpop.permute.xlu0 %1212
      %v1214 = vsel %vm222, %v1211, 0
      %v1216 = vsel %vm222, %v1213, 0
      %1218 = vmatprep.subr.mxu0 0.0
      %1219 = vmatpush1.xpose.msra.mxu0 0.0
      %1220 = vmatprep.subr.mxu0 0.0
      %1221 = vmatpush1.xpose.msra.mxu0 0.0
      %1222 = vmatprep.subr.mxu0 0.0
      %1223 = vmatpush1.xpose.msra.mxu0 0.0
      %1224 = vmatprep.subr.mxu0 0.0
      %1225 = vmatpush1.xpose.msra.mxu0 0.0
      %1226 = vmatprep.subr.mxu0 0.0
      %1227 = vmatpush1.xpose.msra.mxu0 0.0
      %1228 = vmatprep.subr.mxu0 0.0
      %1229 = vmatpush1.xpose.msra.mxu0 0.0
      %1230 = vmatprep.subr.mxu0 0.0
      %1231 = vmatpush1.xpose.msra.mxu0 0.0
      %1232 = vmatprep.subr.mxu0 0.0
      %1233 = vmatpush1.xpose.msra.mxu0 0.0
      %1234 = vmatprep.subr.mxu0 0.0
      %1235 = vmatpush1.xpose.msra.mxu0 0.0
      %1236 = vmatprep.subr.mxu0 0.0
      %1237 = vmatpush1.xpose.msra.mxu0 0.0
      %1238 = vmatprep.subr.mxu0 0.0
      %1239 = vmatpush1.xpose.msra.mxu0 0.0
      %1240 = vmatprep.subr.mxu0 0.0
      %1241 = vmatpush1.xpose.msra.mxu0 0.0
      %1242 = vmatprep.subr.mxu0 0.0
      %1243 = vmatpush1.xpose.msra.mxu0 0.0
      %1244 = vmatprep.subr.mxu0 0.0
      %1245 = vmatpush1.xpose.msra.mxu0 0.0
      %1246 = vmatprep.subr.mxu0 0.0
      %1247 = vmatpush1.xpose.msra.mxu0 0.0
      %1248 = vmatprep.subr.mxu0 0.0
      %1249 = vmatpush1.xpose.msra.mxu0 %v1216
      %1250 = vmatprep.subr.mxu0 0.0
      %1251 = vmatpush2.xpose.msra.mxu0 0.0
      %1252 = vmatprep.subr.mxu0 0.0
      %1253 = vmatpush2.xpose.msra.mxu0 0.0
      %1254 = vmatprep.subr.mxu0 0.0
      %1255 = vmatpush2.xpose.msra.mxu0 0.0
      %1256 = vmatprep.subr.mxu0 0.0
      %1257 = vmatpush2.xpose.msra.mxu0 0.0
      %1258 = vmatprep.subr.mxu0 0.0
      %1259 = vmatpush2.xpose.msra.mxu0 0.0
      %1260 = vmatprep.subr.mxu0 0.0
      %1261 = vmatpush2.xpose.msra.mxu0 0.0
      %1262 = vmatprep.subr.mxu0 0.0
      %1263 = vmatpush2.xpose.msra.mxu0 0.0
      %1264 = vmatprep.subr.mxu0 0.0
      %1265 = vmatpush2.xpose.msra.mxu0 0.0
      %1266 = vmatprep.subr.mxu0 0.0
      %1267 = vmatpush2.xpose.msra.mxu0 0.0
      %1268 = vmatprep.subr.mxu0 0.0
      %1269 = vmatpush2.xpose.msra.mxu0 0.0
      %1270 = vmatprep.subr.mxu0 0.0
      %1271 = vmatpush2.xpose.msra.mxu0 0.0
      %1272 = vmatprep.subr.mxu0 0.0
      %1273 = vmatpush2.xpose.msra.mxu0 0.0
      %1274 = vmatprep.subr.mxu0 0.0
      %1275 = vmatpush2.xpose.msra.mxu0 0.0
      %1276 = vmatprep.subr.mxu0 0.0
      %1277 = vmatpush2.xpose.msra.mxu0 0.0
      %1278 = vmatprep.subr.mxu0 0.0
      %1279 = vmatpush2.xpose.msra.mxu0 0.0
      %1280 = vmatprep.subr.mxu0 0.0
      %1281 = vmatpush2.xpose.msra.mxu0 0.0
      %1282 = vmatprep.mubr.f32.mxu0 0.0
      %1283 = vmatmul.mubr.f32.gmra.mxu0 %v1214
      %v1284 = vpop.f32.mrf.mxu0
      %v1285 = vadd.f32 0.0, %v1284
      %v1286 = vpop.f32.mrf.mxu0
      %1287 = vdwg.mxu0
      %v1288 = vsel %vm299, %v1285, -inf
      %1289 = vmax.xlane.f32.xlu0 %v1288
      %v1290 = vpop.xlane.xlu0 %1289
      %v1291 = vsub.f32 %v1285, %v1290
      %v1292 = vmul.f32 %v1291, 1.442695
      %v1293 = vpow.pop %v1292
      %v1294 = vsel %vm299, %v1293, 0.0
      %1295 = vadd.xlane.f32.xlu0 %v1294
      %v1296 = vpop.xlane.xlu0 %1295
      %v1297 = vrcp.pop %v1296
      %v1298 = vmul.f32 %v1293, %v1297
      %1299 = vrot.lane.b32.xlu0 %v221, 32
      %v1300 = vpop.permute.xlu0 %1299
      %v1303 = vsel %vm299, %v1298, 0
      %1305 = vmatprep.subr.mxu0 0.0
      %1306 = vmatpush1.msra.mxu0 0.0
      %1307 = vmatprep.subr.mxu0 0.0
      %1308 = vmatpush1.msra.mxu0 0.0
      %1309 = vmatprep.subr.mxu0 0.0
      %1310 = vmatpush1.msra.mxu0 0.0
      %1311 = vmatprep.subr.mxu0 0.0
      %1312 = vmatpush1.msra.mxu0 0.0
      %1313 = vmatprep.subr.mxu0 0.0
      %1314 = vmatpush1.msra.mxu0 0.0
      %1315 = vmatprep.subr.mxu0 0.0
      %1316 = vmatpush1.msra.mxu0 0.0
      %1317 = vmatprep.subr.mxu0 0.0
      %1318 = vmatpush1.msra.mxu0 0.0
      %1319 = vmatprep.subr.mxu0 0.0
      %1320 = vmatpush1.msra.mxu0 0.0
      %1321 = vmatprep.subr.mxu0 0.0
      %1322 = vmatpush1.msra.mxu0 0.0
      %1323 = vmatprep.subr.mxu0 0.0
      %1324 = vmatpush1.msra.mxu0 0.0
      %1325 = vmatprep.subr.mxu0 0.0
      %1326 = vmatpush1.msra.mxu0 0.0
      %1327 = vmatprep.subr.mxu0 0.0
      %1328 = vmatpush1.msra.mxu0 0.0
      %1329 = vmatprep.subr.mxu0 0.0
      %1330 = vmatpush1.msra.mxu0 0.0
      %1331 = vmatprep.subr.mxu0 0.0
      %1332 = vmatpush1.msra.mxu0 0.0
      %1333 = vmatprep.subr.mxu0 0.0
      %1334 = vmatpush1.msra.mxu0 0.0
      %1335 = vmatprep.subr.mxu0 0.0
      %1336 = vmatpush1.msra.mxu0 %v1300
      %1337 = vmatprep.subr.mxu0 0.0
      %1338 = vmatpush2.msra.mxu0 0.0
      %1339 = vmatprep.subr.mxu0 0.0
      %1340 = vmatpush2.msra.mxu0 0.0
      %1341 = vmatprep.subr.mxu0 0.0
      %1342 = vmatpush2.msra.mxu0 0.0
      %1343 = vmatprep.subr.mxu0 0.0
      %1344 = vmatpush2.msra.mxu0 0.0
      %1345 = vmatprep.subr.mxu0 0.0
      %1346 = vmatpush2.msra.mxu0 0.0
      %1347 = vmatprep.subr.mxu0 0.0
      %1348 = vmatpush2.msra.mxu0 0.0
      %1349 = vmatprep.subr.mxu0 0.0
      %1350 = vmatpush2.msra.mxu0 0.0
      %1351 = vmatprep.subr.mxu0 0.0
      %1352 = vmatpush2.msra.mxu0 0.0
      %1353 = vmatprep.subr.mxu0 0.0
      %1354 = vmatpush2.msra.mxu0 0.0
      %1355 = vmatprep.subr.mxu0 0.0
      %1356 = vmatpush2.msra.mxu0 0.0
      %1357 = vmatprep.subr.mxu0 0.0
      %1358 = vmatpush2.msra.mxu0 0.0
      %1359 = vmatprep.subr.mxu0 0.0
      %1360 = vmatpush2.msra.mxu0 0.0
      %1361 = vmatprep.subr.mxu0 0.0
      %1362 = vmatpush2.msra.mxu0 0.0
      %1363 = vmatprep.subr.mxu0 0.0
      %1364 = vmatpush2.msra.mxu0 0.0
      %1365 = vmatprep.subr.mxu0 0.0
      %1366 = vmatpush2.msra.mxu0 0.0
      %1367 = vmatprep.subr.mxu0 0.0
      %1368 = vmatpush2.msra.mxu0 0.0
      %1369 = vmatprep.mubr.f32.mxu0 0.0
      %1370 = vmatmul.mubr.f32.gmra.mxu0 %v1303
      %v1371 = vpop.f32.mrf.mxu0
      %v1372 = vadd.f32 0.0, %v1371
      %v1373 = vpop.f32.mrf.mxu0
      %1374 = vdwg.mxu0
      %1375 = vrot.lane.b32.xlu0 %v217, 16
      %v1376 = vpop.permute.xlu0 %1375
      %1377 = vrot.lane.b32.xlu0 %v219, 16
      %v1378 = vpop.permute.xlu0 %1377
      %v1379 = vsel %vm222, %v1376, 0
      %v1381 = vsel %vm222, %v1378, 0
      %1383 = vmatprep.subr.mxu0 0.0
      %1384 = vmatpush1.xpose.msra.mxu0 0.0
      %1385 = vmatprep.subr.mxu0 0.0
      %1386 = vmatpush1.xpose.msra.mxu0 0.0
      %1387 = vmatprep.subr.mxu0 0.0
      %1388 = vmatpush1.xpose.msra.mxu0 0.0
      %1389 = vmatprep.subr.mxu0 0.0
      %1390 = vmatpush1.xpose.msra.mxu0 0.0
      %1391 = vmatprep.subr.mxu0 0.0
      %1392 = vmatpush1.xpose.msra.mxu0 0.0
      %1393 = vmatprep.subr.mxu0 0.0
      %1394 = vmatpush1.xpose.msra.mxu0 0.0
      %1395 = vmatprep.subr.mxu0 0.0
      %1396 = vmatpush1.xpose.msra.mxu0 0.0
      %1397 = vmatprep.subr.mxu0 0.0
      %1398 = vmatpush1.xpose.msra.mxu0 0.0
      %1399 = vmatprep.subr.mxu0 0.0
      %1400 = vmatpush1.xpose.msra.mxu0 0.0
      %1401 = vmatprep.subr.mxu0 0.0
      %1402 = vmatpush1.xpose.msra.mxu0 0.0
      %1403 = vmatprep.subr.mxu0 0.0
      %1404 = vmatpush1.xpose.msra.mxu0 0.0
      %1405 = vmatprep.subr.mxu0 0.0
      %1406 = vmatpush1.xpose.msra.mxu0 0.0
      %1407 = vmatprep.subr.mxu0 0.0
      %1408 = vmatpush1.xpose.msra.mxu0 0.0
      %1409 = vmatprep.subr.mxu0 0.0
      %1410 = vmatpush1.xpose.msra.mxu0 0.0
      %1411 = vmatprep.subr.mxu0 0.0
      %1412 = vmatpush1.xpose.msra.mxu0 0.0
      %1413 = vmatprep.subr.mxu0 0.0
      %1414 = vmatpush1.xpose.msra.mxu0 %v1381
      %1415 = vmatprep.subr.mxu0 0.0
      %1416 = vmatpush2.xpose.msra.mxu0 0.0
      %1417 = vmatprep.subr.mxu0 0.0
      %1418 = vmatpush2.xpose.msra.mxu0 0.0
      %1419 = vmatprep.subr.mxu0 0.0
      %1420 = vmatpush2.xpose.msra.mxu0 0.0
      %1421 = vmatprep.subr.mxu0 0.0
      %1422 = vmatpush2.xpose.msra.mxu0 0.0
      %1423 = vmatprep.subr.mxu0 0.0
      %1424 = vmatpush2.xpose.msra.mxu0 0.0
      %1425 = vmatprep.subr.mxu0 0.0
      %1426 = vmatpush2.xpose.msra.mxu0 0.0
      %1427 = vmatprep.subr.mxu0 0.0
      %1428 = vmatpush2.xpose.msra.mxu0 0.0
      %1429 = vmatprep.subr.mxu0 0.0
      %1430 = vmatpush2.xpose.msra.mxu0 0.0
      %1431 = vmatprep.subr.mxu0 0.0
      %1432 = vmatpush2.xpose.msra.mxu0 0.0
      %1433 = vmatprep.subr.mxu0 0.0
      %1434 = vmatpush2.xpose.msra.mxu0 0.0
      %1435 = vmatprep.subr.mxu0 0.0
      %1436 = vmatpush2.xpose.msra.mxu0 0.0
      %1437 = vmatprep.subr.mxu0 0.0
      %1438 = vmatpush2.xpose.msra.mxu0 0.0
      %1439 = vmatprep.subr.mxu0 0.0
      %1440 = vmatpush2.xpose.msra.mxu0 0.0
      %1441 = vmatprep.subr.mxu0 0.0
      %1442 = vmatpush2.xpose.msra.mxu0 0.0
      %1443 = vmatprep.subr.mxu0 0.0
      %1444 = vmatpush2.xpose.msra.mxu0 0.0
      %1445 = vmatprep.subr.mxu0 0.0
      %1446 = vmatpush2.xpose.msra.mxu0 0.0
      %1447 = vmatprep.mubr.f32.mxu0 0.0
      %1448 = vmatmul.mubr.f32.gmra.mxu0 %v1379
      %v1449 = vpop.f32.mrf.mxu0
      %v1450 = vadd.f32 0.0, %v1449
      %v1451 = vpop.f32.mrf.mxu0
      %1452 = vdwg.mxu0
      %v1453 = vsel %vm299, %v1450, -inf
      %1454 = vmax.xlane.f32.xlu0 %v1453
      %v1455 = vpop.xlane.xlu0 %1454
      %v1456 = vsub.f32 %v1450, %v1455
      %v1457 = vmul.f32 %v1456, 1.442695
      %v1458 = vpow.pop %v1457
      %v1459 = vsel %vm299, %v1458, 0.0
      %1460 = vadd.xlane.f32.xlu0 %v1459
      %v1461 = vpop.xlane.xlu0 %1460
      %v1462 = vrcp.pop %v1461
      %v1463 = vmul.f32 %v1458, %v1462
      %1464 = vrot.lane.b32.xlu0 %v221, 16
      %v1465 = vpop.permute.xlu0 %1464
      %v1468 = vsel %vm299, %v1463, 0
      %1470 = vmatprep.subr.mxu0 0.0
      %1471 = vmatpush1.msra.mxu0 0.0
      %1472 = vmatprep.subr.mxu0 0.0
      %1473 = vmatpush1.msra.mxu0 0.0
      %1474 = vmatprep.subr.mxu0 0.0
      %1475 = vmatpush1.msra.mxu0 0.0
      %1476 = vmatprep.subr.mxu0 0.0
      %1477 = vmatpush1.msra.mxu0 0.0
      %1478 = vmatprep.subr.mxu0 0.0
      %1479 = vmatpush1.msra.mxu0 0.0
      %1480 = vmatprep.subr.mxu0 0.0
      %1481 = vmatpush1.msra.mxu0 0.0
      %1482 = vmatprep.subr.mxu0 0.0
      %1483 = vmatpush1.msra.mxu0 0.0
      %1484 = vmatprep.subr.mxu0 0.0
      %1485 = vmatpush1.msra.mxu0 0.0
      %1486 = vmatprep.subr.mxu0 0.0
      %1487 = vmatpush1.msra.mxu0 0.0
      %1488 = vmatprep.subr.mxu0 0.0
      %1489 = vmatpush1.msra.mxu0 0.0
      %1490 = vmatprep.subr.mxu0 0.0
      %1491 = vmatpush1.msra.mxu0 0.0
      %1492 = vmatprep.subr.mxu0 0.0
      %1493 = vmatpush1.msra.mxu0 0.0
      %1494 = vmatprep.subr.mxu0 0.0
      %1495 = vmatpush1.msra.mxu0 0.0
      %1496 = vmatprep.subr.mxu0 0.0
      %1497 = vmatpush1.msra.mxu0 0.0
      %1498 = vmatprep.subr.mxu0 0.0
      %1499 = vmatpush1.msra.mxu0 0.0
      %1500 = vmatprep.subr.mxu0 0.0
      %1501 = vmatpush1.msra.mxu0 %v1465
      %1502 = vmatprep.subr.mxu0 0.0
      %1503 = vmatpush2.msra.mxu0 0.0
      %1504 = vmatprep.subr.mxu0 0.0
      %1505 = vmatpush2.msra.mxu0 0.0
      %1506 = vmatprep.subr.mxu0 0.0
      %1507 = vmatpush2.msra.mxu0 0.0
      %1508 = vmatprep.subr.mxu0 0.0
      %1509 = vmatpush2.msra.mxu0 0.0
      %1510 = vmatprep.subr.mxu0 0.0
      %1511 = vmatpush2.msra.mxu0 0.0
      %1512 = vmatprep.subr.mxu0 0.0
      %1513 = vmatpush2.msra.mxu0 0.0
      %1514 = vmatprep.subr.mxu0 0.0
      %1515 = vmatpush2.msra.mxu0 0.0
      %1516 = vmatprep.subr.mxu0 0.0
      %1517 = vmatpush2.msra.mxu0 0.0
      %1518 = vmatprep.subr.mxu0 0.0
      %1519 = vmatpush2.msra.mxu0 0.0
      %1520 = vmatprep.subr.mxu0 0.0
      %1521 = vmatpush2.msra.mxu0 0.0
      %1522 = vmatprep.subr.mxu0 0.0
      %1523 = vmatpush2.msra.mxu0 0.0
      %1524 = vmatprep.subr.mxu0 0.0
      %1525 = vmatpush2.msra.mxu0 0.0
      %1526 = vmatprep.subr.mxu0 0.0
      %1527 = vmatpush2.msra.mxu0 0.0
      %1528 = vmatprep.subr.mxu0 0.0
      %1529 = vmatpush2.msra.mxu0 0.0
      %1530 = vmatprep.subr.mxu0 0.0
      %1531 = vmatpush2.msra.mxu0 0.0
      %1532 = vmatprep.subr.mxu0 0.0
      %1533 = vmatpush2.msra.mxu0 0.0
      %1534 = vmatprep.mubr.f32.mxu0 0.0
      %1535 = vmatmul.mubr.f32.gmra.mxu0 %v1468
      %v1536 = vpop.f32.mrf.mxu0
      %v1537 = vadd.f32 0.0, %v1536
      %v1538 = vpop.f32.mrf.mxu0
      %1539 = vdwg.mxu0
      %1541 = vrot.lane.b32.xlu0 %v547, 16
      %v1542 = vpop.permute.xlu0 %1541
      %1545 = vrot.lane.b32.xlu0 %v712, 32
      %v1546 = vpop.permute.xlu0 %1545
      %1549 = vrot.lane.b32.xlu0 %v877, 48
      %v1550 = vpop.permute.xlu0 %1549
      %1553 = vrot.lane.b32.xlu0 %v1042, 64
      %v1554 = vpop.permute.xlu0 %1553
      %1557 = vrot.lane.b32.xlu0 %v1207, 80
      %v1558 = vpop.permute.xlu0 %1557
      %1561 = vrot.lane.b32.xlu0 %v1372, 96
      %v1562 = vpop.permute.xlu0 %1561
      %1565 = vrot.lane.b32.xlu0 %v1537, 112
      %v1566 = vpop.permute.xlu0 %1565
      %v1568 = vsel %vm222, %v381, %v1542
      %vm1569 = vcmask 261120
      %v1570 = vsel %vm1569, %v1568, %v1546
      %vm1571 = vcmask 392192
      %v1572 = vsel %vm1571, %v1570, %v1550
      %vm1573 = vcmask 523264
      %v1574 = vsel %vm1573, %v1572, %v1554
      %vm1575 = vcmask 654336
      %v1576 = vsel %vm1575, %v1574, %v1558
      %vm1577 = vcmask 785408
      %v1578 = vsel %vm1577, %v1576, %v1562
      %vm1579 = vcmask 916480
      %v1580 = vsel %vm1579, %v1578, %v1566
      %v1581 = vpack.c.bf16 %v1580, %v1580
      %1582 = vst [vmem:[%s214] sm:$0xf] %v1581
      %p1583 = scmp.lt.s32.totalorder %s14, 1
      %s1584 = scalar_select %p1583, %s14, 1
      %s1585 = smul.addr %s1584, 4
      %s1586 = scalar_lea.vmem %s3, %s1585
      // Predicated region
      $region33: #{model_forward.47} parent=31 // pred_check
        %p1587 = pneg %p110
      $region34: #{model_forward.47} parent=31 // pred_check_branch
        %1589 = sbr.rel (%p1587) target = $region36
      $region35: #{model_forward.47} parent=31 // pred_region
        _
      $region36: #{model_forward.47} parent=31 // pred_fallthru
        _
    $region32: #{model_forward.47} parent=5 // pred_fallthru
      _
    %p1590 = scmp.le.s32.totalorder 2, %s9
    // Predicated region
    $region37: #{model_forward.47} parent=5 // pred_check
      %p1591 = pneg %p1590
    $region38: #{model_forward.47} parent=5 // pred_check_branch
      %1593 = sbr.rel (%p1591) target = $region40
    $region39: #{model_forward.47} parent=5 // pred_region
      %s1594 = ssub.s32 %s9, 2
      // Predicated region
      $region41: #{model_forward.47} parent=39 // pred_check
        %p1595 = pneg %p116
      $region42: #{model_forward.47} parent=39 // pred_check_branch
        %1597 = sbr.rel (%p1595) target = $region44
      $region43: #{model_forward.47} parent=39 // pred_region
        %p1598 = scmp.lt.s32.totalorder %s15, 1
        %s1599 = scalar_select %p1598, %s15, 1
        %s1600 = smul.addr %s1599, 4
        %s1601 = scalar_lea.vmem %s3, %s1600
      $region44: #{model_forward.47} parent=39 // pred_fallthru
        _
    $region40: #{model_forward.47} parent=5 // pred_fallthru
      _
  $region6: #{model_forward.47} parent=0 // loop_footer
    %s13 = sadd.s32 1, %s9
  $region7: #{model_forward.47} parent=0 // loop_footer_branch
    %8 = sbr.rel target = $region3
  $region8: #{model_forward.47} parent=0 // loop_exit
    _

// kernel: model_forward.61
$region0: #{model_forward.61}
  #allocation0 [shape = 'u32[]', space=smem, size = 0x4, offset = 0x4, fixed_abs, tag = 'smem constant byte address 0x4 - core index']
  #allocation1 [shape = 'u32[144,128]{1,0:T(1,128)}', space=vmem, size = 0x12000, scoped, tag = 'internal scratch']
  #allocation2 [shape = 'f32[2,128]{1,0:T(2,128)}', space=vmem, size = 0x400, scoped, tag = 'scratch operand']
  %s0 = inlined_call_operand.vmem [shape: bf16[2,128], index: 0, kind: input, shape index: {}]
  %s1 = inlined_call_operand.vmem [shape: bf16[128,128], index: 1, kind: input, shape index: {}]
  %s2 = inlined_call_operand.vmem [shape: f32[1,128], index: 2, kind: input, shape index: {}]
  %s3 = inlined_call_operand.hbm [shape: f32[2,128], index: 3, kind: output, shape index: {}]
  %s4 = sld [smem:[#allocation0]]
  $region30: #{model_forward.61} parent=0
    _
  %s6 = ssub.s32 1, %s4
  %s7 = scalar_select 0, %s6, %s4
  $region1: #{model_forward.61} parent=0
    #allocation3 [shape = 'u8[1024]{0}', space=vmem, size = 0x400, scoped, tag = 'output window, operand 0, single buffered']
    #allocation4 [shape = 's32[1]{0}', space=sflag, size = 0x4, scoped, tag = 'scoped memory for model_forward.61']
    %8 = vsyncpa [#allocation4], 0
    // Predicated region
    $region2: #{model_forward.61} parent=1 // pred_check
      _
    $region3: #{model_forward.61} parent=1 // pred_check_branch
      %10 = sbr.rel (0) target = $region5
    $region4: #{model_forward.61} parent=1 // pred_region
      _
    $region5: #{model_forward.61} parent=1 // pred_fallthru
      _
    // Predicated region
    $region6: #{model_forward.61} parent=1 // pred_check
      _
    $region7: #{model_forward.61} parent=1 // pred_check_branch
      %12 = sbr.rel (0) target = $region9
    $region8: #{model_forward.61} parent=1 // pred_region
      _
    $region9: #{model_forward.61} parent=1 // pred_fallthru
      _
    // Predicated region
    $region10: #{model_forward.61} parent=1 // pred_check
      _
    $region11: #{model_forward.61} parent=1 // pred_check_branch
      %14 = sbr.rel (0) target = $region13
    $region12: #{model_forward.61} parent=1 // pred_region
      _
    $region13: #{model_forward.61} parent=1 // pred_fallthru
      _
    %p16 = scmp.eq.s32.totalorder 0, 0
    // Predicated region
    $region14: #{model_forward.61} parent=1 // pred_check
      %p17 = pneg %p16
    $region15: #{model_forward.61} parent=1 // pred_check_branch
      %19 = sbr.rel (%p17) target = $region17
    $region16: #{model_forward.61} parent=1 // pred_region
      %20 = vst [vmem:[#allocation2] sm:$0x3] 0.0
    $region17: #{model_forward.61} parent=1 // pred_fallthru
      _
    %v21 = vld [vmem:[#allocation2] sm:$0x3]
    %v22 = vld [vmem:[%s0] sm:$0x1]
    %v23 = vld [vmem:[%s1] sm:$0xf]
    %v24 = vld [vmem:[%s1 + $0x4] sm:$0xf]
    %v25 = vld [vmem:[%s1 + $0x8] sm:$0xf]
    %v26 = vld [vmem:[%s1 + $0xc] sm:$0xf]
    %v27 = vld [vmem:[%s1 + $0x10] sm:$0xf]
    %v28 = vld [vmem:[%s1 + $0x14] sm:$0xf]
    %v29 = vld [vmem:[%s1 + $0x18] sm:$0xf]
    %v30 = vld [vmem:[%s1 + $0x1c] sm:$0xf]
    %v31 = vld [vmem:[%s1 + $0x20] sm:$0xf]
    %v32 = vld [vmem:[%s1 + $0x24] sm:$0xf]
    %v33 = vld [vmem:[%s1 + $0x28] sm:$0xf]
    %v34 = vld [vmem:[%s1 + $0x2c] sm:$0xf]
    %v35 = vld [vmem:[%s1 + $0x30] sm:$0xf]
    %v36 = vld [vmem:[%s1 + $0x34] sm:$0xf]
    %v37 = vld [vmem:[%s1 + $0x38] sm:$0xf]
    %v38 = vld [vmem:[%s1 + $0x3c] sm:$0xf]
    %v55 = vunpack.c.l.b16 %v23
    %v56 = vunpack.c.l.b16 %v24
    %v57 = vunpack.c.l.b16 %v25
    %v58 = vunpack.c.l.b16 %v26
    %v59 = vunpack.c.l.b16 %v27
    %v60 = vunpack.c.l.b16 %v28
    %v61 = vunpack.c.l.b16 %v29
    %v62 = vunpack.c.l.b16 %v30
    %v63 = vunpack.c.l.b16 %v31
    %v64 = vunpack.c.l.b16 %v32
    %v65 = vunpack.c.l.b16 %v33
    %v66 = vunpack.c.l.b16 %v34
    %v67 = vunpack.c.l.b16 %v35
    %v68 = vunpack.c.l.b16 %v36
    %v69 = vunpack.c.l.b16 %v37
    %v70 = vunpack.c.l.b16 %v38
    %v71 = vpack.c.b16 %v56, %v55
    %v72 = vpack.c.b16 %v58, %v57
    %v73 = vpack.c.b16 %v60, %v59
    %v74 = vpack.c.b16 %v62, %v61
    %v75 = vpack.c.b16 %v64, %v63
    %v76 = vpack.c.b16 %v66, %v65
    %v77 = vpack.c.b16 %v68, %v67
    %v78 = vpack.c.b16 %v70, %v69
    %87 = vmatprep.subr.bf16.mxu0 0
    %88 = vmatpush1.bf16.msra.mxu0 %v78
    %89 = vmatprep.subr.bf16.mxu0 0
    %90 = vmatpush1.bf16.msra.mxu0 %v77
    %91 = vmatprep.subr.bf16.mxu0 0
    %92 = vmatpush1.bf16.msra.mxu0 %v76
    %93 = vmatprep.subr.bf16.mxu0 0
    %94 = vmatpush1.bf16.msra.mxu0 %v75
    %95 = vmatprep.subr.bf16.mxu0 0
    %96 = vmatpush1.bf16.msra.mxu0 %v74
    %97 = vmatprep.subr.bf16.mxu0 0
    %98 = vmatpush1.bf16.msra.mxu0 %v73
    %99 = vmatprep.subr.bf16.mxu0 0
    %100 = vmatpush1.bf16.msra.mxu0 %v72
    %101 = vmatprep.subr.bf16.mxu0 0
    %102 = vmatpush1.bf16.msra.mxu0 %v71
    %103 = vmatprep.subr.bf16.mxu0 0
    %104 = vmatpush2.bf16.msra.mxu0 0
    %105 = vmatprep.subr.bf16.mxu0 0
    %106 = vmatpush2.bf16.msra.mxu0 0
    %107 = vmatprep.subr.bf16.mxu0 0
    %108 = vmatpush2.bf16.msra.mxu0 0
    %109 = vmatprep.subr.bf16.mxu0 0
    %110 = vmatpush2.bf16.msra.mxu0 0
    %111 = vmatprep.subr.bf16.mxu0 0
    %112 = vmatpush2.bf16.msra.mxu0 0
    %113 = vmatprep.subr.bf16.mxu0 0
    %114 = vmatpush2.bf16.msra.mxu0 0
    %115 = vmatprep.subr.bf16.mxu0 0
    %116 = vmatpush2.bf16.msra.mxu0 0
    %117 = vmatprep.subr.bf16.mxu0 0
    %118 = vmatpush2.bf16.msra.mxu0 0
    %119 = vmatprep.mubr.bf16.mxu0 0
    %120 = vmatmul.mubr.bf16.gmra.mxu0 %v22
    %v121 = vpop.f32.mrf.mxu0
    %v122 = vadd.f32 0.0, %v121
    %v123 = vpop.f32.mrf.mxu0
    %v124 = vpop.f32.mrf.mxu0
    %v125 = vpop.f32.mrf.mxu0
    %126 = vdwg.mxu0
    %v127 = vadd.f32 %v21, %v122
    %128 = vst [vmem:[#allocation2] sm:$0x3] %v127
    // Predicated region
    $region18: #{model_forward.61} parent=1 // pred_check
      %p129 = pneg %p16
    $region19: #{model_forward.61} parent=1 // pred_check_branch
      %131 = sbr.rel (%p129) target = $region21
    $region20: #{model_forward.61} parent=1 // pred_region
      %v132 = vld [vmem:[#allocation2] sm:$0x3]
      %v133 = vld [vmem:[%s2] sm:$0x1]
      %v135 = vlaneseq
      %v136 = vshrl.u32 %v135, 7
      %v137 = vsub.s32 0, %v136
      %v138 = vrot.slane %v133, %v137
      %v140 = vadd.f32 %v132, %v138
      %141 = vst [vmem:[#allocation3] sm:$0x3] %v140
    $region21: #{model_forward.61} parent=1 // pred_fallthru
      _
    // Predicated region
    $region22: #{model_forward.61} parent=1 // pred_check
      _
    $region23: #{model_forward.61} parent=1 // pred_check_branch
      %143 = sbr.rel (0) target = $region25
    $region24: #{model_forward.61} parent=1 // pred_region
      %s145 = ssub.s32 32, 32
      %146 = vsyncadd [#allocation4], %s145
      %s148 = sshll.u32 [#allocation3], 4
      %s149 = int_to_ptr.vmem [resolvable:$true] %s148
      %151 = dma.vmem_to_hbm [thread:$0]  %s149, 32, %s3, [#allocation4]
    $region25: #{model_forward.61} parent=1 // pred_fallthru
      _
    // Predicated region
    $region26: #{model_forward.61} parent=1 // pred_check
      _
    $region27: #{model_forward.61} parent=1 // pred_check_branch
      %153 = sbr.rel (0) target = $region29
    $region28: #{model_forward.61} parent=1 // pred_region
      %154 = dma.done [#allocation4], 32
    $region29: #{model_forward.61} parent=1 // pred_fallthru
      _
    %155 = vsyncpa [#allocation4], 1

</llo_original>
